<compile_context>
chip_gen: v6e
topology: v6e:2x2x1
jax: 0.10.0
libtpu: 0.0.40
codegen_flags: <defaults>
</compile_context>

<pallas_src>
import functools
import math

import jax
import jax.numpy as jnp
import numpy as np
from jax.experimental import pallas as pl
from jax.experimental.pallas import tpu as pltpu

NS = 6        # attention / encoder streams per stage (a, ui, ur, ap, ar, u)
STEP_W = 64   # lane-padded width of each packed per-step activation row


# ----------------------------------------------------------------------------
# Pallas kernel: entire CAS_Decoder forward (mode='test')
# ----------------------------------------------------------------------------
def _cas_kernel(enc_ref, step_ref,
                attn_wh_ref, attn_we_ref, attn_b_ref, attn_v_ref,
                in_w64_ref, in_ws_ref, b32_ref,
                g_wx_ref, g_wh_ref,
                out_wh_ref, out_wc_ref, out_b_ref,
                y_ref, *, H):
    f32 = jnp.float32
    B, S, F = enc_ref.shape                       # F = NS * H

    def dot(a, b):
        return jnp.dot(a, b, preferred_element_type=f32)

    enc3 = enc_ref[...]                           # (B, S, F)  packed encoders
    enc2 = enc3.reshape(B * S, F)

    cont_x = step_ref[0]                          # (B, 64)  [qh|lcont|lact|lslot|0]
    actslot_x = step_ref[1]                       # (B, 64)  [lact|lslot|0]
    kb_x = step_ref[2]                            # (B, 64)  [kb|0]
    h0 = step_ref[3][:, :H]                       # (B, H)   cas_last_hidden

    # 0/1 "spread" matrix (NS, F): row k is 1 on lanes [k*H, (k+1)*H).
    rk = jax.lax.broadcasted_iota(jnp.int32, (NS, F), 0)
    ck = jax.lax.broadcasted_iota(jnp.int32, (NS, F), 1)
    spread = ((ck >= rk * H) & (ck < (rk + 1) * H)).astype(f32)

    def softmax_lanes(x):
        m = jnp.max(x, axis=-1, keepdims=True)
        e = jnp.exp(x - m)
        return e * pl.reciprocal(jnp.sum(e, axis=-1, keepdims=True), approx=True)

    def fused_attention(s, hid):
        # all NS attention heads of stage s at once; returns packed contexts (B, F)
        hp = dot(hid, attn_wh_ref[s])                                  # (B, F)
        ep = dot(enc2, attn_we_ref[s]).reshape(B, S, F)                # block-diag We
        energy = jnp.tanh(hp[:, None, :] + ep + attn_b_ref[s][None])   # (B, S, F)
        scores = dot(energy.reshape(B * S, F), attn_v_ref[s]).reshape(B, S, NS)
        m = jnp.max(scores, axis=1, keepdims=True)                     # softmax over S
        e = jnp.exp(scores - m)
        w = e * pl.reciprocal(jnp.sum(e, axis=1, keepdims=True), approx=True)
        w_big = dot(w.reshape(B * S, NS), spread).reshape(B, S, F)
        return jnp.sum(w_big * enc3, axis=1)                           # (B, F)

    def gru(s, x, h):
        # single GRU step; gates r/z/n computed as 3 separate N=H matmuls
        gx = [dot(x, g_wx_ref[s, g]) + b32_ref[3 + 3 * s + g] for g in range(3)]
        gh = [dot(h, g_wh_ref[s, g]) + b32_ref[12 + 3 * s + g] for g in range(3)]
        r = jax.nn.sigmoid(gx[0] + gh[0])
        z = jax.nn.sigmoid(gx[1] + gh[1])
        n = jnp.tanh(gx[2] + r * gh[2])            # b_hh_n stays inside r*(.)
        return (1.0 - z) * n + z * h

    def out_logits(s, h, ctx):
        return dot(h, out_wh_ref[s]) + dot(ctx, out_wc_ref[s]) + out_b_ref[s]

    # =========================== continue stage ===========================
    cont_in = jnp.tanh(dot(cont_x, in_w64_ref[0]) + b32_ref[0])
    cont_ctx = fused_attention(0, cont_in)
    cont_h = gru(0, jnp.concatenate([kb_x, cont_in, cont_ctx], axis=-1), h0)
    cont_out = softmax_lanes(out_logits(0, cont_h, cont_ctx))          # (B, NP)

    # ============================== act stage ==============================
    act_in = jnp.tanh(dot(cont_out, in_ws_ref[0])
                      + dot(actslot_x, in_w64_ref[1]) + b32_ref[1])
    act_ctx = fused_attention(1, act_in)
    act_h = gru(1, jnp.concatenate([kb_x, act_in, act_ctx], axis=-1), cont_h)
    act_out = softmax_lanes(out_logits(1, act_h, act_ctx))             # (B, NP)

    # ============================== slot stage =============================
    slot_in = jnp.tanh(dot(cont_out, in_ws_ref[1]) + dot(act_out, in_ws_ref[2])
                       + dot(actslot_x, in_w64_ref[2]) + b32_ref[2])
    slot_ctx = fused_attention(2, slot_in)
    slot_h = gru(2, jnp.concatenate([kb_x, slot_in, slot_ctx], axis=-1), act_h)
    slot_out = jax.nn.sigmoid(out_logits(2, slot_h, slot_ctx))         # (B, NP)

    # single lane-contiguous packed output: [cont | act | slot | slot_hidden]
    y_ref[...] = jnp.concatenate([cont_out, act_out, slot_out, slot_h], axis=-1)


# ----------------------------------------------------------------------------
# Parameters (deterministic synthetic init; shapes from CAS_Decoder.__init__,
# kept in PyTorch layout)
# ----------------------------------------------------------------------------
def init_params(key, H, D, C, A, SL):
    ks = jax.random.split(key, 19)

    def nrm(k, shape, scale=0.1):
        return (scale * jax.random.normal(k, shape)).astype(jnp.float32)

    # 18 Attn modules stacked: stage base (0/6/12) + {u:0, a:1, ui:2, ur:3, ar:4, ap:5}
    return dict(
        cin_W=nrm(ks[0], (H, H + C + A + SL)),
        cin_b=nrm(ks[1], (1, H)),
        ain_W=nrm(ks[2], (H, C + A + SL)),
        ain_b=nrm(ks[3], (1, H)),
        sin_W=nrm(ks[4], (H, C + 2 * A + SL)),
        sin_b=nrm(ks[5], (1, H)),
        attn_W=nrm(ks[6], (18, H, 2 * H)),
        attn_b=nrm(ks[7], (18, 1, H)),
        attn_v=nrm(ks[8], (18, 1, H), scale=1.0 / math.sqrt(H)),
        cout_W=nrm(ks[9], (C, 7 * H)),
        cout_b=nrm(ks[10], (1, C)),
        aout_W=nrm(ks[11], (A, 7 * H)),
        aout_b=nrm(ks[12], (1, A)),
        sout_W=nrm(ks[13], (SL, 7 * H)),
        sout_b=nrm(ks[14], (1, SL)),
        gWih=nrm(ks[15], (3, 3 * H, 7 * H + D)),
        gWhh=nrm(ks[16], (3, 3 * H, H)),
        gbih=nrm(ks[17], (3, 1, 3 * H)),
        gbhh=nrm(ks[18], (3, 1, 3 * H)),
    )


# ----------------------------------------------------------------------------
# One-time packing of PyTorch-layout params into the kernel layout
# (pre-transposed, pre-split, pre-permuted: zero in-kernel lane slicing)
# ----------------------------------------------------------------------------
def pack_params(params, H, D, C, A, SL):
    p = {k: np.asarray(v, np.float32) for k, v in params.items()}
    NP = max(C, A, SL)
    F = NS * H
    XK = STEP_W + H + F                       # GRU input width inside the kernel
    assert D <= STEP_W and H + C + A + SL <= STEP_W and A + SL <= STEP_W and H <= STEP_W

    # packed stream order P = [a, ui, ur, ap, ar, u]
    # per-stage attention param offsets: {u:0, a:1, ui:2, ur:3, ar:4, ap:5}
    p_off = [1, 2, 3, 5, 4, 0]
    # torch concat position of pack-stream k, per stage:
    #   continue GRU/out uses [a, ui, ur, ar, ap, u]; act & slot use [a, ui, ur, ap, ar, u]
    perm = [[0, 1, 2, 4, 3, 5], [0, 1, 2, 3, 4, 5], [0, 1, 2, 3, 4, 5]]

    attn_wh = np.zeros((3, H, F), np.float32)
    attn_we = np.zeros((3, F, F), np.float32)
    attn_b = np.zeros((3, 1, F), np.float32)
    attn_v = np.zeros((3, F, NS), np.float32)
    for s in range(3):
        for k, off in enumerate(p_off):
            j = NS * s + off
            W = p["attn_W"][j]                        # (H, 2H)
            blk = slice(k * H, (k + 1) * H)
            attn_wh[s, :, blk] = W[:, :H].T           # acts on the hidden
            attn_we[s, blk, blk] = W[:, H:].T         # block-diagonal, acts on enc
            attn_b[s, 0, blk] = p["attn_b"][j, 0]
            attn_v[s, blk, k] = p["attn_v"][j, 0]

    # input projections (stored (K, H), zero-padded so no slicing is needed)
    in_w64 = np.zeros((3, STEP_W, H), np.float32)
    in_w64[0, :H + C + A + SL] = p["cin_W"].T               # [qh|lcont|lact|lslot]
    in_w64[1, :A + SL] = p["ain_W"][:, C:].T                # [lact|lslot] -> act_in
    in_w64[2, :A + SL] = p["sin_W"][:, C + A:].T            # [lact|lslot] -> slot_in
    in_ws = np.zeros((3, NP, H), np.float32)
    in_ws[0, :C] = p["ain_W"][:, :C].T                      # cont_out -> act_in
    in_ws[1, :C] = p["sin_W"][:, :C].T                      # cont_out -> slot_in
    in_ws[2, :A] = p["sin_W"][:, C:C + A].T                 # act_out  -> slot_in

    # all H-wide biases in one array: 3 in-proj + 9 GRU b_ih + 9 GRU b_hh
    b32 = np.zeros((21, 1, H), np.float32)
    b32[0, 0] = p["cin_b"][0]
    b32[1, 0] = p["ain_b"][0]
    b32[2, 0] = p["sin_b"][0]

    # GRU weights: per stage / per gate (r, z, n), right-multiply layout (K, H)
    g_wx = np.zeros((3, 3, XK, H), np.float32)
    g_wh = np.zeros((3, 3, H, H), np.float32)
    for s in range(3):
        Wih, Whh = p["gWih"][s], p["gWhh"][s]               # (3H, 7H+D), (3H, H)
        bih, bhh = p["gbih"][s, 0], p["gbhh"][s, 0]
        for g in range(3):
            rows = slice(g * H, (g + 1) * H)
            g_wx[s, g, :D] = Wih[rows, :D].T                        # kb block
            g_wx[s, g, STEP_W:STEP_W + H] = Wih[rows, D:D + H].T    # *_in block
            for k in range(NS):                                     # packed contexts
                t = perm[s][k]
                src = slice(D + H + t * H, D + H + (t + 1) * H)
                g_wx[s, g, STEP_W + H + k * H:STEP_W + H + (k + 1) * H] = Wih[rows, src].T
            g_wh[s, g] = Whh[rows].T
            b32[3 + 3 * s + g, 0] = bih[rows]
            b32[12 + 3 * s + g, 0] = bhh[rows]

    # output projections, N padded to NP; padded logits get bias -1e30 so the
    # softmax puts exactly 0 there (downstream weight rows for pads are zero).
    out_wh = np.zeros((3, H, NP), np.float32)
    out_wc = np.zeros((3, F, NP), np.float32)
    out_b = np.full((3, 1, NP), -1e30, np.float32)
    for s, (wn, bn, N) in enumerate((("cout_W", "cout_b", C),
                                     ("aout_W", "aout_b", A),
                                     ("sout_W", "sout_b", SL))):
        W = p[wn]                                           # (N, 7H)
        out_wh[s, :, :N] = W[:, :H].T
        for k in range(NS):
            t = perm[s][k]
            out_wc[s, k * H:(k + 1) * H, :N] = W[:, (1 + t) * H:(2 + t) * H].T
        out_b[s, 0, :N] = p[bn][0]

    packed = dict(attn_wh=attn_wh, attn_we=attn_we, attn_b=attn_b, attn_v=attn_v,
                  in_w64=in_w64, in_ws=in_ws, b32=b32, g_wx=g_wx, g_wh=g_wh,
                  out_wh=out_wh, out_wc=out_wc, out_b=out_b)
    return {k: jnp.asarray(v) for k, v in packed.items()}


# ----------------------------------------------------------------------------
# Wrapper (PyTorch layout in / out)
# ----------------------------------------------------------------------------
@jax.jit
def cas_decoder_forward(packed,
                        last_agent_enc_out, current_user_request_enc_out,
                        current_user_inform_enc_out, current_agent_request_enc_out,
                        current_agent_propose_enc_out, user_enc_out,
                        query_last_hidden, kb_turn, last_continue, last_act,
                        last_slot, cas_last_hidden):
    # encoder streams in the packed order P = [a, ui, ur, ap, ar, u]
    encs = (last_agent_enc_out, current_user_inform_enc_out,
            current_user_request_enc_out, current_agent_propose_enc_out,
            current_agent_request_enc_out, user_enc_out)
    S, B, H = encs[0].shape
    F = NS * H
    # (S,B,H) x6 -> one lane-packed (B, S, 6H) array (single fused transpose)
    enc_packed = jnp.transpose(jnp.stack(encs, axis=2), (1, 0, 2, 3)).reshape(B, S, F)

    qh, kb = query_last_hidden[0], kb_turn[0]
    lcont, lact, lslot = last_continue[0], last_act[0], last_slot[0]
    cas_h = cas_last_hidden[0]
    C, A, SL, D = lcont.shape[-1], lact.shape[-1], lslot.shape[-1], kb.shape[-1]
    NP = max(C, A, SL)

    pad = lambda x: jnp.pad(x, ((0, 0), (0, STEP_W - x.shape[-1])))
    step = jnp.stack([pad(jnp.concatenate([qh, lcont, lact, lslot], axis=-1)),
                      pad(jnp.concatenate([lact, lslot], axis=-1)),
                      pad(kb), pad(cas_h)], axis=0)              # (4, B, 64)

    inputs = (enc_packed, step,
              packed["attn_wh"], packed["attn_we"], packed["attn_b"], packed["attn_v"],
              packed["in_w64"], packed["in_ws"], packed["b32"],
              packed["g_wx"], packed["g_wh"],
              packed["out_wh"], packed["out_wc"], packed["out_b"])

    flops = 3 * (2 * B * S * F * F + 2 * B * H * F + 4 * B * S * F * NS
                 + 6 * B * (STEP_W + H + F) * H + 6 * B * H * H
                 + 2 * B * (H + F) * NP)
    transcendentals = 3 * (B * S * F + B * S * NS + 8 * B * H + 2 * B * NP)
    bytes_accessed = sum(int(a.size) * 4 for a in inputs) + B * (3 * NP + H) * 4

    vmem = pl.BlockSpec(memory_space=pltpu.MemorySpace.VMEM)
    y = pl.pallas_call(
        functools.partial(_cas_kernel, H=H),
        out_shape=jax.ShapeDtypeStruct((B, 3 * NP + H), jnp.float32),
        in_specs=[vmem] * len(inputs),
        out_specs=vmem,
        cost_estimate=pl.CostEstimate(flops=flops, transcendentals=transcendentals,
                                      bytes_accessed=bytes_accessed),
    )(*inputs)

    cont_out = y[:, :C]
    act_out = y[:, NP:NP + A]
    slot_out = y[:, 2 * NP:2 * NP + SL]
    slot_hidden = y[:, 3 * NP:3 * NP + H]
    # back to PyTorch layout (1, B, F)
    return cont_out[None], act_out[None], slot_out[None], slot_hidden[None]


# ----------------------------------------------------------------------------
# Pure-JAX reference (mirrors the PyTorch module), used as a numerical check
# ----------------------------------------------------------------------------
def cas_decoder_reference(params,
                          last_agent_enc_out, current_user_request_enc_out,
                          current_user_inform_enc_out, current_agent_request_enc_out,
                          current_agent_propose_enc_out, user_enc_out,
                          query_last_hidden, kb_turn, last_continue, last_act,
                          last_slot, cas_last_hidden):
    hi = jax.lax.Precision.HIGHEST
    lin = lambda x, W, b: jnp.matmul(x, W.T, precision=hi) + b
    sm = lambda x: jax.nn.softmax(x, axis=-1)
    to_bsh = lambda x: jnp.transpose(x, (1, 0, 2))

    enc = {"a": to_bsh(last_agent_enc_out), "ui": to_bsh(current_user_inform_enc_out),
           "ur": to_bsh(current_user_request_enc_out),
           "ap": to_bsh(current_agent_propose_enc_out),
           "ar": to_bsh(current_agent_request_enc_out), "u": to_bsh(user_enc_out)}
    qh, kb = query_last_hidden[0], kb_turn[0]
    lcont, lact, lslot = last_continue[0], last_act[0], last_slot[0]
    cas_h = cas_last_hidden[0]
    H = qh.shape[-1]
    off = {"u": 0, "a": 1, "ui": 2, "ur": 3, "ar": 4, "ap": 5}

    def attn(j, hid, e):
        W, b, v = params["attn_W"][j], params["attn_b"][j], params["attn_v"][j]
        x = jnp.concatenate([jnp.broadcast_to(hid[:, None, :], e.shape), e], axis=-1)
        energy = jnp.tanh(jnp.matmul(x, W.T, precision=hi) + b)
        scores = jnp.einsum("bsh,h->bs", energy, v[0], precision=hi)
        w = jax.nn.softmax(scores, axis=-1)
        return jnp.einsum("bs,bsh->bh", w, e, precision=hi)

    def gru(i, x, h):
        Wih, Whh = params["gWih"][i], params["gWhh"][i]
        bih, bhh = params["gbih"][i][0], params["gbhh"][i][0]
        gi = jnp.matmul(x, Wih.T, precision=hi) + bih
        gh = jnp.matmul(h, Whh.T, precision=hi) + bhh
        r = jax.nn.sigmoid(gi[:, :H] + gh[:, :H])
        z = jax.nn.sigmoid(gi[:, H:2 * H] + gh[:, H:2 * H])
        n = jnp.tanh(gi[:, 2 * H:] + r * gh[:, 2 * H:])
        return (1.0 - z) * n + z * h

    cont_in = jnp.tanh(lin(jnp.concatenate([qh, lcont, lact, lslot], -1),
                           params["cin_W"], params["cin_b"]))
    c = {k: attn(0 + off[k], cont_in, enc[k]) for k in enc}
    cont_h = gru(0, jnp.concatenate([kb, cont_in, c["a"], c["ui"], c["ur"],
                                     c["ar"], c["ap"], c["u"]], -1), cas_h)
    cont_out = sm(lin(jnp.concatenate([cont_h, c["a"], c["ui"], c["ur"],
                                       c["ar"], c["ap"], c["u"]], -1),
                      params["cout_W"], params["cout_b"]))

    act_in = jnp.tanh(lin(jnp.concatenate([cont_out, lact, lslot], -1),
                          params["ain_W"], params["ain_b"]))
    a = {k: attn(6 + off[k], act_in, enc[k]) for k in enc}
    act_h = gru(1, jnp.concatenate([kb, act_in, a["a"], a["ui"], a["ur"],
                                    a["ap"], a["ar"], a["u"]], -1), cont_h)
    act_out = sm(lin(jnp.concatenate([act_h, a["a"], a["ui"], a["ur"],
                                      a["ap"], a["ar"], a["u"]], -1),
                     params["aout_W"], params["aout_b"]))

    slot_in = jnp.tanh(lin(jnp.concatenate([cont_out, act_out, lact, lslot], -1),
                           params["sin_W"], params["sin_b"]))
    s = {k: attn(12 + off[k], slot_in, enc[k]) for k in enc}
    slot_h = gru(2, jnp.concatenate([kb, slot_in, s["a"], s["ui"], s["ur"],
                                     s["ap"], s["ar"], s["u"]], -1), act_h)
    slot_out = jax.nn.sigmoid(lin(jnp.concatenate([slot_h, s["a"], s["ui"], s["ur"],
                                                   s["ap"], s["ar"], s["u"]], -1),
                                  params["sout_W"], params["sout_b"]))
    return cont_out[None], act_out[None], slot_out[None], slot_h[None]


# ----------------------------------------------------------------------------
# main
# ----------------------------------------------------------------------------
if __name__ == "__main__":
    B, S, H, D, C, A, SL = 2, 8, 32, 5, 4, 8, 16

    root = jax.random.PRNGKey(0)
    pkey, ikey = jax.random.split(root)
    params = init_params(pkey, H, D, C, A, SL)
    packed = pack_params(params, H, D, C, A, SL)

    iks = jax.random.split(ikey, 12)
    rnd = lambda k, shape: jax.random.normal(k, shape, jnp.float32)

    # PyTorch-convention inputs
    last_agent_enc_out = rnd(iks[0], (S, B, H))
    current_user_request_enc_out = rnd(iks[1], (S, B, H))
    current_user_inform_enc_out = rnd(iks[2], (S, B, H))
    current_agent_request_enc_out = rnd(iks[3], (S, B, H))
    current_agent_propose_enc_out = rnd(iks[4], (S, B, H))
    user_enc_out = rnd(iks[5], (S, B, H))
    query_last_hidden = rnd(iks[6], (1, B, H))
    kb_turn = rnd(iks[7], (1, B, D))
    last_continue = jax.nn.softmax(rnd(iks[8], (1, B, C)), axis=-1)
    last_act = jax.nn.softmax(rnd(iks[9], (1, B, A)), axis=-1)
    last_slot = jax.nn.sigmoid(rnd(iks[10], (1, B, SL)))
    cas_last_hidden = rnd(iks[11], (1, B, H))

    args = (last_agent_enc_out, current_user_request_enc_out,
            current_user_inform_enc_out, current_agent_request_enc_out,
            current_agent_propose_enc_out, user_enc_out,
            query_last_hidden, kb_turn, last_continue, last_act,
            last_slot, cas_last_hidden)

    # TODO(synk): 'train' mode branch (teacher forcing with current_continue /
    # current_act) not implemented; GRU dropout is a no-op for num_layers=1.
    outs = cas_decoder_forward(packed, *args)
    outs = jax.block_until_ready(outs)

    cont_out, act_out, slot_out, slot_hidden = outs
    assert cont_out.shape == (1, B, C)
    assert act_out.shape == (1, B, A)
    assert slot_out.shape == (1, B, SL)
    assert slot_hidden.shape == (1, B, H)
    assert all(bool(jnp.all(jnp.isfinite(o))) for o in outs)

    # numerical check vs. the un-fused pure-JAX reference (loose tolerance
    # because of pl.reciprocal(approx=True) in the softmaxes)
    refs = jax.block_until_ready(jax.jit(cas_decoder_reference)(params, *args))
    for o, r in zip(outs, refs):
        np.testing.assert_allclose(np.asarray(o), np.asarray(r), rtol=2e-2, atol=2e-2)

    print("KERNEL_OK")
</pallas_src>

<mosaic_0001>
module attributes {stable_mosaic.version = 11 : i64} {
  func.func @_cas_kernel(%arg0: memref<2x8x192xf32, #tpu.memory_space<vmem>>, %arg1: memref<4x2x64xf32, #tpu.memory_space<vmem>>, %arg2: memref<3x32x192xf32, #tpu.memory_space<vmem>>, %arg3: memref<3x192x192xf32, #tpu.memory_space<vmem>>, %arg4: memref<3x1x192xf32, #tpu.memory_space<vmem>>, %arg5: memref<3x192x6xf32, #tpu.memory_space<vmem>>, %arg6: memref<3x64x32xf32, #tpu.memory_space<vmem>>, %arg7: memref<3x16x32xf32, #tpu.memory_space<vmem>>, %arg8: memref<21x1x32xf32, #tpu.memory_space<vmem>>, %arg9: memref<3x3x288x32xf32, #tpu.memory_space<vmem>>, %arg10: memref<3x3x32x32xf32, #tpu.memory_space<vmem>>, %arg11: memref<3x32x16xf32, #tpu.memory_space<vmem>>, %arg12: memref<3x192x16xf32, #tpu.memory_space<vmem>>, %arg13: memref<3x1x16xf32, #tpu.memory_space<vmem>>, %arg14: memref<2x80xf32, #tpu.memory_space<vmem>>) attributes {dimension_semantics = [], scalar_prefetch = 0 : i64, scratch_operands = 0 : i64, tpu.core_type = #tpu.core_type<tc>} {
    %c0 = arith.constant 0 : index
    %c0_0 = arith.constant 0 : index
    %c0_1 = arith.constant 0 : index
    %0 = vector.load %arg0[%c0, %c0_0, %c0_1] : memref<2x8x192xf32, #tpu.memory_space<vmem>>, vector<2x8x192xf32>
    %1 = vector.shape_cast %0 : vector<2x8x192xf32> to vector<16x192xf32>
    %c0_2 = arith.constant 0 : index
    %c0_3 = arith.constant 0 : index
    %c0_4 = arith.constant 0 : index
    %2 = vector.load %arg1[%c0_2, %c0_3, %c0_4] : memref<4x2x64xf32, #tpu.memory_space<vmem>>, vector<1x2x64xf32>
    %3 = vector.shape_cast %2 : vector<1x2x64xf32> to vector<2x64xf32>
    %c1 = arith.constant 1 : index
    %c0_5 = arith.constant 0 : index
    %c0_6 = arith.constant 0 : index
    %4 = vector.load %arg1[%c1, %c0_5, %c0_6] : memref<4x2x64xf32, #tpu.memory_space<vmem>>, vector<1x2x64xf32>
    %5 = vector.shape_cast %4 : vector<1x2x64xf32> to vector<2x64xf32>
    %c2 = arith.constant 2 : index
    %c0_7 = arith.constant 0 : index
    %c0_8 = arith.constant 0 : index
    %6 = vector.load %arg1[%c2, %c0_7, %c0_8] : memref<4x2x64xf32, #tpu.memory_space<vmem>>, vector<1x2x64xf32>
    %7 = vector.shape_cast %6 : vector<1x2x64xf32> to vector<2x64xf32>
    %c3 = arith.constant 3 : index
    %c0_9 = arith.constant 0 : index
    %c0_10 = arith.constant 0 : index
    %8 = vector.load %arg1[%c3, %c0_9, %c0_10] : memref<4x2x64xf32, #tpu.memory_space<vmem>>, vector<1x2x64xf32>
    %9 = vector.shape_cast %8 : vector<1x2x64xf32> to vector<2x64xf32>
    %10 = vector.extract_strided_slice %9 {offsets = [0, 0], sizes = [2, 32], strides = [1, 1]} : vector<2x64xf32> to vector<2x32xf32>
    %11 = tpu.iota {dimensions = array<i32: 0>} : vector<6x192xi32>
    %12 = tpu.iota {dimensions = array<i32: 1>} : vector<6x192xi32>
    %c32_i32 = arith.constant 32 : i32
    %13 = vector.broadcast %c32_i32 : i32 to vector<6x192xi32>
    %14 = arith.muli %11, %13 : vector<6x192xi32>
    %15 = arith.cmpi sge, %12, %14 : vector<6x192xi32>
    %c1_i32 = arith.constant 1 : i32
    %16 = vector.broadcast %c1_i32 : i32 to vector<6x192xi32>
    %17 = arith.addi %11, %16 : vector<6x192xi32>
    %c32_i32_11 = arith.constant 32 : i32
    %18 = vector.broadcast %c32_i32_11 : i32 to vector<6x192xi32>
    %19 = arith.muli %17, %18 : vector<6x192xi32>
    %20 = arith.cmpi slt, %12, %19 : vector<6x192xi32>
    %21 = arith.andi %15, %20 : vector<6x192xi1>
    %22 = arith.extui %21 : vector<6x192xi1> to vector<6x192xi32>
    %23 = arith.sitofp %22 : vector<6x192xi32> to vector<6x192xf32>
    %c0_12 = arith.constant 0 : index
    %c0_13 = arith.constant 0 : index
    %c0_14 = arith.constant 0 : index
    %24 = vector.load %arg6[%c0_12, %c0_13, %c0_14] : memref<3x64x32xf32, #tpu.memory_space<vmem>>, vector<1x64x32xf32>
    %25 = vector.shape_cast %24 : vector<1x64x32xf32> to vector<64x32xf32>
    %cst = arith.constant dense<0.000000e+00> : vector<2x32xf32>
    %26 = tpu.matmul %3, %25, %cst {dimension_numbers = #tpu.dot_dimension_numbers<[1], [0], [0], [1], [0, 0, 1, 1], [], []>} : vector<2x64xf32>, vector<64x32xf32>, vector<2x32xf32> -> vector<2x32xf32>
    %c0_15 = arith.constant 0 : index
    %c0_16 = arith.constant 0 : index
    %c0_17 = arith.constant 0 : index
    %27 = vector.load %arg8[%c0_15, %c0_16, %c0_17] : memref<21x1x32xf32, #tpu.memory_space<vmem>>, vector<1x1x32xf32>
    %28 = vector.shape_cast %27 : vector<1x1x32xf32> to vector<1x32xf32>
    %29 = vector.broadcast %28 : vector<1x32xf32> to vector<2x32xf32>
    %30 = arith.addf %26, %29 : vector<2x32xf32>
    %31 = math.tanh %30 : vector<2x32xf32>
    %c0_18 = arith.constant 0 : index
    %c0_19 = arith.constant 0 : index
    %c0_20 = arith.constant 0 : index
    %32 = vector.load %arg2[%c0_18, %c0_19, %c0_20] : memref<3x32x192xf32, #tpu.memory_space<vmem>>, vector<1x32x192xf32>
    %33 = vector.shape_cast %32 : vector<1x32x192xf32> to vector<32x192xf32>
    %cst_21 = arith.constant dense<0.000000e+00> : vector<2x192xf32>
    %34 = tpu.matmul %31, %33, %cst_21 {dimension_numbers = #tpu.dot_dimension_numbers<[1], [0], [0], [1], [0, 0, 1, 1], [], []>} : vector<2x32xf32>, vector<32x192xf32>, vector<2x192xf32> -> vector<2x192xf32>
    %c0_22 = arith.constant 0 : index
    %c0_23 = arith.constant 0 : index
    %c0_24 = arith.constant 0 : index
    %35 = vector.load %arg3[%c0_22, %c0_23, %c0_24] : memref<3x192x192xf32, #tpu.memory_space<vmem>>, vector<1x192x192xf32>
    %36 = vector.shape_cast %35 : vector<1x192x192xf32> to vector<192x192xf32>
    %cst_25 = arith.constant dense<0.000000e+00> : vector<16x192xf32>
    %37 = tpu.matmul %1, %36, %cst_25 {dimension_numbers = #tpu.dot_dimension_numbers<[1], [0], [0], [1], [0, 0, 1, 1], [], []>} : vector<16x192xf32>, vector<192x192xf32>, vector<16x192xf32> -> vector<16x192xf32>
    %38 = vector.shape_cast %37 : vector<16x192xf32> to vector<2x8x192xf32>
    %39 = vector.shape_cast %34 : vector<2x192xf32> to vector<2x1x192xf32>
    %40 = vector.broadcast %39 : vector<2x1x192xf32> to vector<2x8x192xf32>
    %41 = arith.addf %40, %38 : vector<2x8x192xf32>
    %c0_26 = arith.constant 0 : index
    %c0_27 = arith.constant 0 : index
    %c0_28 = arith.constant 0 : index
    %42 = vector.load %arg4[%c0_26, %c0_27, %c0_28] : memref<3x1x192xf32, #tpu.memory_space<vmem>>, vector<1x1x192xf32>
    %43 = vector.shape_cast %42 : vector<1x1x192xf32> to vector<1x192xf32>
    %44 = vector.shape_cast %43 : vector<1x192xf32> to vector<1x1x192xf32>
    %45 = vector.broadcast %44 : vector<1x1x192xf32> to vector<2x8x192xf32>
    %46 = arith.addf %41, %45 : vector<2x8x192xf32>
    %47 = math.tanh %46 : vector<2x8x192xf32>
    %48 = vector.shape_cast %47 : vector<2x8x192xf32> to vector<16x192xf32>
    %c0_29 = arith.constant 0 : index
    %c0_30 = arith.constant 0 : index
    %c0_31 = arith.constant 0 : index
    %49 = vector.load %arg5[%c0_29, %c0_30, %c0_31] : memref<3x192x6xf32, #tpu.memory_space<vmem>>, vector<1x192x6xf32>
    %50 = vector.shape_cast %49 : vector<1x192x6xf32> to vector<192x6xf32>
    %cst_32 = arith.constant dense<0.000000e+00> : vector<16x6xf32>
    %51 = tpu.matmul %48, %50, %cst_32 {dimension_numbers = #tpu.dot_dimension_numbers<[1], [0], [0], [1], [0, 0, 1, 1], [], []>} : vector<16x192xf32>, vector<192x6xf32>, vector<16x6xf32> -> vector<16x6xf32>
    %52 = vector.shape_cast %51 : vector<16x6xf32> to vector<2x8x6xf32>
    %cst_33 = arith.constant dense<0xFF800000> : vector<2x6xf32>
    %53 = vector.multi_reduction <maximumf>, %52, %cst_33 [1] : vector<2x8x6xf32> to vector<2x6xf32>
    %54 = vector.shape_cast %53 : vector<2x6xf32> to vector<2x1x6xf32>
    %55 = vector.broadcast %54 : vector<2x1x6xf32> to vector<2x8x6xf32>
    %56 = arith.subf %52, %55 : vector<2x8x6xf32>
    %57 = math.exp %56 : vector<2x8x6xf32>
    %cst_34 = arith.constant dense<0.000000e+00> : vector<2x6xf32>
    %58 = vector.multi_reduction <add>, %57, %cst_34 [1] : vector<2x8x6xf32> to vector<2x6xf32>
    %59 = vector.shape_cast %58 : vector<2x6xf32> to vector<2x1x6xf32>
    %60 = tpu.reciprocal %59 {approx = true} : vector<2x1x6xf32> -> vector<2x1x6xf32>
    %61 = vector.broadcast %60 : vector<2x1x6xf32> to vector<2x8x6xf32>
    %62 = arith.mulf %57, %61 : vector<2x8x6xf32>
    %63 = vector.shape_cast %62 : vector<2x8x6xf32> to vector<16x6xf32>
    %cst_35 = arith.constant dense<0.000000e+00> : vector<16x192xf32>
    %64 = tpu.matmul %63, %23, %cst_35 {dimension_numbers = #tpu.dot_dimension_numbers<[1], [0], [0], [1], [0, 0, 1, 1], [], []>} : vector<16x6xf32>, vector<6x192xf32>, vector<16x192xf32> -> vector<16x192xf32>
    %65 = vector.shape_cast %64 : vector<16x192xf32> to vector<2x8x192xf32>
    %66 = arith.mulf %65, %0 : vector<2x8x192xf32>
    %cst_36 = arith.constant dense<0.000000e+00> : vector<2x192xf32>
    %67 = vector.multi_reduction <add>, %66, %cst_36 [1] : vector<2x8x192xf32> to vector<2x192xf32>
    %68 = tpu.concatenate %7, %31, %67 in 1 : vector<2x64xf32>, vector<2x32xf32>, vector<2x192xf32> -> vector<2x288xf32>
    %c0_37 = arith.constant 0 : index
    %c0_38 = arith.constant 0 : index
    %c0_39 = arith.constant 0 : index
    %c0_40 = arith.constant 0 : index
    %69 = vector.load %arg9[%c0_37, %c0_38, %c0_39, %c0_40] : memref<3x3x288x32xf32, #tpu.memory_space<vmem>>, vector<1x1x288x32xf32>
    %70 = vector.shape_cast %69 : vector<1x1x288x32xf32> to vector<288x32xf32>
    %cst_41 = arith.constant dense<0.000000e+00> : vector<2x32xf32>
    %71 = tpu.matmul %68, %70, %cst_41 {dimension_numbers = #tpu.dot_dimension_numbers<[1], [0], [0], [1], [0, 0, 1, 1], [], []>} : vector<2x288xf32>, vector<288x32xf32>, vector<2x32xf32> -> vector<2x32xf32>
    %c3_42 = arith.constant 3 : index
    %c0_43 = arith.constant 0 : index
    %c0_44 = arith.constant 0 : index
    %72 = vector.load %arg8[%c3_42, %c0_43, %c0_44] : memref<21x1x32xf32, #tpu.memory_space<vmem>>, vector<1x1x32xf32>
    %73 = vector.shape_cast %72 : vector<1x1x32xf32> to vector<1x32xf32>
    %74 = vector.broadcast %73 : vector<1x32xf32> to vector<2x32xf32>
    %75 = arith.addf %71, %74 : vector<2x32xf32>
    %c0_45 = arith.constant 0 : index
    %c1_46 = arith.constant 1 : index
    %c0_47 = arith.constant 0 : index
    %c0_48 = arith.constant 0 : index
    %76 = vector.load %arg9[%c0_45, %c1_46, %c0_47, %c0_48] : memref<3x3x288x32xf32, #tpu.memory_space<vmem>>, vector<1x1x288x32xf32>
    %77 = vector.shape_cast %76 : vector<1x1x288x32xf32> to vector<288x32xf32>
    %cst_49 = arith.constant dense<0.000000e+00> : vector<2x32xf32>
    %78 = tpu.matmul %68, %77, %cst_49 {dimension_numbers = #tpu.dot_dimension_numbers<[1], [0], [0], [1], [0, 0, 1, 1], [], []>} : vector<2x288xf32>, vector<288x32xf32>, vector<2x32xf32> -> vector<2x32xf32>
    %c4 = arith.constant 4 : index
    %c0_50 = arith.constant 0 : index
    %c0_51 = arith.constant 0 : index
    %79 = vector.load %arg8[%c4, %c0_50, %c0_51] : memref<21x1x32xf32, #tpu.memory_space<vmem>>, vector<1x1x32xf32>
    %80 = vector.shape_cast %79 : vector<1x1x32xf32> to vector<1x32xf32>
    %81 = vector.broadcast %80 : vector<1x32xf32> to vector<2x32xf32>
    %82 = arith.addf %78, %81 : vector<2x32xf32>
    %c0_52 = arith.constant 0 : index
    %c2_53 = arith.constant 2 : index
    %c0_54 = arith.constant 0 : index
    %c0_55 = arith.constant 0 : index
    %83 = vector.load %arg9[%c0_52, %c2_53, %c0_54, %c0_55] : memref<3x3x288x32xf32, #tpu.memory_space<vmem>>, vector<1x1x288x32xf32>
    %84 = vector.shape_cast %83 : vector<1x1x288x32xf32> to vector<288x32xf32>
    %cst_56 = arith.constant dense<0.000000e+00> : vector<2x32xf32>
    %85 = tpu.matmul %68, %84, %cst_56 {dimension_numbers = #tpu.dot_dimension_numbers<[1], [0], [0], [1], [0, 0, 1, 1], [], []>} : vector<2x288xf32>, vector<288x32xf32>, vector<2x32xf32> -> vector<2x32xf32>
    %c5 = arith.constant 5 : index
    %c0_57 = arith.constant 0 : index
    %c0_58 = arith.constant 0 : index
    %86 = vector.load %arg8[%c5, %c0_57, %c0_58] : memref<21x1x32xf32, #tpu.memory_space<vmem>>, vector<1x1x32xf32>
    %87 = vector.shape_cast %86 : vector<1x1x32xf32> to vector<1x32xf32>
    %88 = vector.broadcast %87 : vector<1x32xf32> to vector<2x32xf32>
    %89 = arith.addf %85, %88 : vector<2x32xf32>
    %c0_59 = arith.constant 0 : index
    %c0_60 = arith.constant 0 : index
    %c0_61 = arith.constant 0 : index
    %c0_62 = arith.constant 0 : index
    %90 = vector.load %arg10[%c0_59, %c0_60, %c0_61, %c0_62] : memref<3x3x32x32xf32, #tpu.memory_space<vmem>>, vector<1x1x32x32xf32>
    %91 = vector.shape_cast %90 : vector<1x1x32x32xf32> to vector<32x32xf32>
    %cst_63 = arith.constant dense<0.000000e+00> : vector<2x32xf32>
    %92 = tpu.matmul %10, %91, %cst_63 {dimension_numbers = #tpu.dot_dimension_numbers<[1], [0], [0], [1], [0, 0, 1, 1], [], []>} : vector<2x32xf32>, vector<32x32xf32>, vector<2x32xf32> -> vector<2x32xf32>
    %c12 = arith.constant 12 : index
    %c0_64 = arith.constant 0 : index
    %c0_65 = arith.constant 0 : index
    %93 = vector.load %arg8[%c12, %c0_64, %c0_65] : memref<21x1x32xf32, #tpu.memory_space<vmem>>, vector<1x1x32xf32>
    %94 = vector.shape_cast %93 : vector<1x1x32xf32> to vector<1x32xf32>
    %95 = vector.broadcast %94 : vector<1x32xf32> to vector<2x32xf32>
    %96 = arith.addf %92, %95 : vector<2x32xf32>
    %c0_66 = arith.constant 0 : index
    %c1_67 = arith.constant 1 : index
    %c0_68 = arith.constant 0 : index
    %c0_69 = arith.constant 0 : index
    %97 = vector.load %arg10[%c0_66, %c1_67, %c0_68, %c0_69] : memref<3x3x32x32xf32, #tpu.memory_space<vmem>>, vector<1x1x32x32xf32>
    %98 = vector.shape_cast %97 : vector<1x1x32x32xf32> to vector<32x32xf32>
    %cst_70 = arith.constant dense<0.000000e+00> : vector<2x32xf32>
    %99 = tpu.matmul %10, %98, %cst_70 {dimension_numbers = #tpu.dot_dimension_numbers<[1], [0], [0], [1], [0, 0, 1, 1], [], []>} : vector<2x32xf32>, vector<32x32xf32>, vector<2x32xf32> -> vector<2x32xf32>
    %c13 = arith.constant 13 : index
    %c0_71 = arith.constant 0 : index
    %c0_72 = arith.constant 0 : index
    %100 = vector.load %arg8[%c13, %c0_71, %c0_72] : memref<21x1x32xf32, #tpu.memory_space<vmem>>, vector<1x1x32xf32>
    %101 = vector.shape_cast %100 : vector<1x1x32xf32> to vector<1x32xf32>
    %102 = vector.broadcast %101 : vector<1x32xf32> to vector<2x32xf32>
    %103 = arith.addf %99, %102 : vector<2x32xf32>
    %c0_73 = arith.constant 0 : index
    %c2_74 = arith.constant 2 : index
    %c0_75 = arith.constant 0 : index
    %c0_76 = arith.constant 0 : index
    %104 = vector.load %arg10[%c0_73, %c2_74, %c0_75, %c0_76] : memref<3x3x32x32xf32, #tpu.memory_space<vmem>>, vector<1x1x32x32xf32>
    %105 = vector.shape_cast %104 : vector<1x1x32x32xf32> to vector<32x32xf32>
    %cst_77 = arith.constant dense<0.000000e+00> : vector<2x32xf32>
    %106 = tpu.matmul %10, %105, %cst_77 {dimension_numbers = #tpu.dot_dimension_numbers<[1], [0], [0], [1], [0, 0, 1, 1], [], []>} : vector<2x32xf32>, vector<32x32xf32>, vector<2x32xf32> -> vector<2x32xf32>
    %c14 = arith.constant 14 : index
    %c0_78 = arith.constant 0 : index
    %c0_79 = arith.constant 0 : index
    %107 = vector.load %arg8[%c14, %c0_78, %c0_79] : memref<21x1x32xf32, #tpu.memory_space<vmem>>, vector<1x1x32xf32>
    %108 = vector.shape_cast %107 : vector<1x1x32xf32> to vector<1x32xf32>
    %109 = vector.broadcast %108 : vector<1x32xf32> to vector<2x32xf32>
    %110 = arith.addf %106, %109 : vector<2x32xf32>
    %111 = arith.addf %75, %96 : vector<2x32xf32>
    %112 = arith.negf %111 : vector<2x32xf32>
    %113 = math.exp %112 : vector<2x32xf32>
    %cst_80 = arith.constant 1.000000e+00 : f32
    %114 = vector.broadcast %cst_80 : f32 to vector<2x32xf32>
    %115 = arith.addf %114, %113 : vector<2x32xf32>
    %116 = arith.divf %114, %115 : vector<2x32xf32>
    %117 = arith.addf %82, %103 : vector<2x32xf32>
    %118 = arith.negf %117 : vector<2x32xf32>
    %119 = math.exp %118 : vector<2x32xf32>
    %cst_81 = arith.constant 1.000000e+00 : f32
    %120 = vector.broadcast %cst_81 : f32 to vector<2x32xf32>
    %121 = arith.addf %120, %119 : vector<2x32xf32>
    %122 = arith.divf %120, %121 : vector<2x32xf32>
    %123 = arith.mulf %116, %110 : vector<2x32xf32>
    %124 = arith.addf %89, %123 : vector<2x32xf32>
    %125 = math.tanh %124 : vector<2x32xf32>
    %cst_82 = arith.constant 1.000000e+00 : f32
    %126 = vector.broadcast %cst_82 : f32 to vector<2x32xf32>
    %127 = arith.subf %126, %122 : vector<2x32xf32>
    %128 = arith.mulf %127, %125 : vector<2x32xf32>
    %129 = arith.mulf %122, %10 : vector<2x32xf32>
    %130 = arith.addf %128, %129 : vector<2x32xf32>
    %c0_83 = arith.constant 0 : index
    %c0_84 = arith.constant 0 : index
    %c0_85 = arith.constant 0 : index
    %131 = vector.load %arg11[%c0_83, %c0_84, %c0_85] : memref<3x32x16xf32, #tpu.memory_space<vmem>>, vector<1x32x16xf32>
    %132 = vector.shape_cast %131 : vector<1x32x16xf32> to vector<32x16xf32>
    %cst_86 = arith.constant dense<0.000000e+00> : vector<2x16xf32>
    %133 = tpu.matmul %130, %132, %cst_86 {dimension_numbers = #tpu.dot_dimension_numbers<[1], [0], [0], [1], [0, 0, 1, 1], [], []>} : vector<2x32xf32>, vector<32x16xf32>, vector<2x16xf32> -> vector<2x16xf32>
    %c0_87 = arith.constant 0 : index
    %c0_88 = arith.constant 0 : index
    %c0_89 = arith.constant 0 : index
    %134 = vector.load %arg12[%c0_87, %c0_88, %c0_89] : memref<3x192x16xf32, #tpu.memory_space<vmem>>, vector<1x192x16xf32>
    %135 = vector.shape_cast %134 : vector<1x192x16xf32> to vector<192x16xf32>
    %cst_90 = arith.constant dense<0.000000e+00> : vector<2x16xf32>
    %136 = tpu.matmul %67, %135, %cst_90 {dimension_numbers = #tpu.dot_dimension_numbers<[1], [0], [0], [1], [0, 0, 1, 1], [], []>} : vector<2x192xf32>, vector<192x16xf32>, vector<2x16xf32> -> vector<2x16xf32>
    %137 = arith.addf %133, %136 : vector<2x16xf32>
    %c0_91 = arith.constant 0 : index
    %c0_92 = arith.constant 0 : index
    %c0_93 = arith.constant 0 : index
    %138 = vector.load %arg13[%c0_91, %c0_92, %c0_93] : memref<3x1x16xf32, #tpu.memory_space<vmem>>, vector<1x1x16xf32>
    %139 = vector.shape_cast %138 : vector<1x1x16xf32> to vector<1x16xf32>
    %140 = vector.broadcast %139 : vector<1x16xf32> to vector<2x16xf32>
    %141 = arith.addf %137, %140 : vector<2x16xf32>
    %cst_94 = arith.constant dense<0xFF800000> : vector<2xf32>
    %142 = vector.multi_reduction <maximumf>, %141, %cst_94 [1] : vector<2x16xf32> to vector<2xf32>
    %143 = vector.shape_cast %142 : vector<2xf32> to vector<2x1xf32>
    %144 = vector.broadcast %143 : vector<2x1xf32> to vector<2x16xf32>
    %145 = arith.subf %141, %144 : vector<2x16xf32>
    %146 = math.exp %145 : vector<2x16xf32>
    %cst_95 = arith.constant dense<0.000000e+00> : vector<2xf32>
    %147 = vector.multi_reduction <add>, %146, %cst_95 [1] : vector<2x16xf32> to vector<2xf32>
    %148 = vector.shape_cast %147 : vector<2xf32> to vector<2x1xf32>
    %149 = tpu.reciprocal %148 {approx = true} : vector<2x1xf32> -> vector<2x1xf32>
    %150 = vector.broadcast %149 : vector<2x1xf32> to vector<2x16xf32>
    %151 = arith.mulf %146, %150 : vector<2x16xf32>
    %c0_96 = arith.constant 0 : index
    %c0_97 = arith.constant 0 : index
    %c0_98 = arith.constant 0 : index
    %152 = vector.load %arg7[%c0_96, %c0_97, %c0_98] : memref<3x16x32xf32, #tpu.memory_space<vmem>>, vector<1x16x32xf32>
    %153 = vector.shape_cast %152 : vector<1x16x32xf32> to vector<16x32xf32>
    %cst_99 = arith.constant dense<0.000000e+00> : vector<2x32xf32>
    %154 = tpu.matmul %151, %153, %cst_99 {dimension_numbers = #tpu.dot_dimension_numbers<[1], [0], [0], [1], [0, 0, 1, 1], [], []>} : vector<2x16xf32>, vector<16x32xf32>, vector<2x32xf32> -> vector<2x32xf32>
    %c1_100 = arith.constant 1 : index
    %c0_101 = arith.constant 0 : index
    %c0_102 = arith.constant 0 : index
    %155 = vector.load %arg6[%c1_100, %c0_101, %c0_102] : memref<3x64x32xf32, #tpu.memory_space<vmem>>, vector<1x64x32xf32>
    %156 = vector.shape_cast %155 : vector<1x64x32xf32> to vector<64x32xf32>
    %cst_103 = arith.constant dense<0.000000e+00> : vector<2x32xf32>
    %157 = tpu.matmul %5, %156, %cst_103 {dimension_numbers = #tpu.dot_dimension_numbers<[1], [0], [0], [1], [0, 0, 1, 1], [], []>} : vector<2x64xf32>, vector<64x32xf32>, vector<2x32xf32> -> vector<2x32xf32>
    %158 = arith.addf %154, %157 : vector<2x32xf32>
    %c1_104 = arith.constant 1 : index
    %c0_105 = arith.constant 0 : index
    %c0_106 = arith.constant 0 : index
    %159 = vector.load %arg8[%c1_104, %c0_105, %c0_106] : memref<21x1x32xf32, #tpu.memory_space<vmem>>, vector<1x1x32xf32>
    %160 = vector.shape_cast %159 : vector<1x1x32xf32> to vector<1x32xf32>
    %161 = vector.broadcast %160 : vector<1x32xf32> to vector<2x32xf32>
    %162 = arith.addf %158, %161 : vector<2x32xf32>
    %163 = math.tanh %162 : vector<2x32xf32>
    %c1_107 = arith.constant 1 : index
    %c0_108 = arith.constant 0 : index
    %c0_109 = arith.constant 0 : index
    %164 = vector.load %arg2[%c1_107, %c0_108, %c0_109] : memref<3x32x192xf32, #tpu.memory_space<vmem>>, vector<1x32x192xf32>
    %165 = vector.shape_cast %164 : vector<1x32x192xf32> to vector<32x192xf32>
    %cst_110 = arith.constant dense<0.000000e+00> : vector<2x192xf32>
    %166 = tpu.matmul %163, %165, %cst_110 {dimension_numbers = #tpu.dot_dimension_numbers<[1], [0], [0], [1], [0, 0, 1, 1], [], []>} : vector<2x32xf32>, vector<32x192xf32>, vector<2x192xf32> -> vector<2x192xf32>
    %c1_111 = arith.constant 1 : index
    %c0_112 = arith.constant 0 : index
    %c0_113 = arith.constant 0 : index
    %167 = vector.load %arg3[%c1_111, %c0_112, %c0_113] : memref<3x192x192xf32, #tpu.memory_space<vmem>>, vector<1x192x192xf32>
    %168 = vector.shape_cast %167 : vector<1x192x192xf32> to vector<192x192xf32>
    %cst_114 = arith.constant dense<0.000000e+00> : vector<16x192xf32>
    %169 = tpu.matmul %1, %168, %cst_114 {dimension_numbers = #tpu.dot_dimension_numbers<[1], [0], [0], [1], [0, 0, 1, 1], [], []>} : vector<16x192xf32>, vector<192x192xf32>, vector<16x192xf32> -> vector<16x192xf32>
    %170 = vector.shape_cast %169 : vector<16x192xf32> to vector<2x8x192xf32>
    %171 = vector.shape_cast %166 : vector<2x192xf32> to vector<2x1x192xf32>
    %172 = vector.broadcast %171 : vector<2x1x192xf32> to vector<2x8x192xf32>
    %173 = arith.addf %172, %170 : vector<2x8x192xf32>
    %c1_115 = arith.constant 1 : index
    %c0_116 = arith.constant 0 : index
    %c0_117 = arith.constant 0 : index
    %174 = vector.load %arg4[%c1_115, %c0_116, %c0_117] : memref<3x1x192xf32, #tpu.memory_space<vmem>>, vector<1x1x192xf32>
    %175 = vector.shape_cast %174 : vector<1x1x192xf32> to vector<1x192xf32>
    %176 = vector.shape_cast %175 : vector<1x192xf32> to vector<1x1x192xf32>
    %177 = vector.broadcast %176 : vector<1x1x192xf32> to vector<2x8x192xf32>
    %178 = arith.addf %173, %177 : vector<2x8x192xf32>
    %179 = math.tanh %178 : vector<2x8x192xf32>
    %180 = vector.shape_cast %179 : vector<2x8x192xf32> to vector<16x192xf32>
    %c1_118 = arith.constant 1 : index
    %c0_119 = arith.constant 0 : index
    %c0_120 = arith.constant 0 : index
    %181 = vector.load %arg5[%c1_118, %c0_119, %c0_120] : memref<3x192x6xf32, #tpu.memory_space<vmem>>, vector<1x192x6xf32>
    %182 = vector.shape_cast %181 : vector<1x192x6xf32> to vector<192x6xf32>
    %cst_121 = arith.constant dense<0.000000e+00> : vector<16x6xf32>
    %183 = tpu.matmul %180, %182, %cst_121 {dimension_numbers = #tpu.dot_dimension_numbers<[1], [0], [0], [1], [0, 0, 1, 1], [], []>} : vector<16x192xf32>, vector<192x6xf32>, vector<16x6xf32> -> vector<16x6xf32>
    %184 = vector.shape_cast %183 : vector<16x6xf32> to vector<2x8x6xf32>
    %cst_122 = arith.constant dense<0xFF800000> : vector<2x6xf32>
    %185 = vector.multi_reduction <maximumf>, %184, %cst_122 [1] : vector<2x8x6xf32> to vector<2x6xf32>
    %186 = vector.shape_cast %185 : vector<2x6xf32> to vector<2x1x6xf32>
    %187 = vector.broadcast %186 : vector<2x1x6xf32> to vector<2x8x6xf32>
    %188 = arith.subf %184, %187 : vector<2x8x6xf32>
    %189 = math.exp %188 : vector<2x8x6xf32>
    %cst_123 = arith.constant dense<0.000000e+00> : vector<2x6xf32>
    %190 = vector.multi_reduction <add>, %189, %cst_123 [1] : vector<2x8x6xf32> to vector<2x6xf32>
    %191 = vector.shape_cast %190 : vector<2x6xf32> to vector<2x1x6xf32>
    %192 = tpu.reciprocal %191 {approx = true} : vector<2x1x6xf32> -> vector<2x1x6xf32>
    %193 = vector.broadcast %192 : vector<2x1x6xf32> to vector<2x8x6xf32>
    %194 = arith.mulf %189, %193 : vector<2x8x6xf32>
    %195 = vector.shape_cast %194 : vector<2x8x6xf32> to vector<16x6xf32>
    %cst_124 = arith.constant dense<0.000000e+00> : vector<16x192xf32>
    %196 = tpu.matmul %195, %23, %cst_124 {dimension_numbers = #tpu.dot_dimension_numbers<[1], [0], [0], [1], [0, 0, 1, 1], [], []>} : vector<16x6xf32>, vector<6x192xf32>, vector<16x192xf32> -> vector<16x192xf32>
    %197 = vector.shape_cast %196 : vector<16x192xf32> to vector<2x8x192xf32>
    %198 = arith.mulf %197, %0 : vector<2x8x192xf32>
    %cst_125 = arith.constant dense<0.000000e+00> : vector<2x192xf32>
    %199 = vector.multi_reduction <add>, %198, %cst_125 [1] : vector<2x8x192xf32> to vector<2x192xf32>
    %200 = tpu.concatenate %7, %163, %199 in 1 : vector<2x64xf32>, vector<2x32xf32>, vector<2x192xf32> -> vector<2x288xf32>
    %c1_126 = arith.constant 1 : index
    %c0_127 = arith.constant 0 : index
    %c0_128 = arith.constant 0 : index
    %c0_129 = arith.constant 0 : index
    %201 = vector.load %arg9[%c1_126, %c0_127, %c0_128, %c0_129] : memref<3x3x288x32xf32, #tpu.memory_space<vmem>>, vector<1x1x288x32xf32>
    %202 = vector.shape_cast %201 : vector<1x1x288x32xf32> to vector<288x32xf32>
    %cst_130 = arith.constant dense<0.000000e+00> : vector<2x32xf32>
    %203 = tpu.matmul %200, %202, %cst_130 {dimension_numbers = #tpu.dot_dimension_numbers<[1], [0], [0], [1], [0, 0, 1, 1], [], []>} : vector<2x288xf32>, vector<288x32xf32>, vector<2x32xf32> -> vector<2x32xf32>
    %c6 = arith.constant 6 : index
    %c0_131 = arith.constant 0 : index
    %c0_132 = arith.constant 0 : index
    %204 = vector.load %arg8[%c6, %c0_131, %c0_132] : memref<21x1x32xf32, #tpu.memory_space<vmem>>, vector<1x1x32xf32>
    %205 = vector.shape_cast %204 : vector<1x1x32xf32> to vector<1x32xf32>
    %206 = vector.broadcast %205 : vector<1x32xf32> to vector<2x32xf32>
    %207 = arith.addf %203, %206 : vector<2x32xf32>
    %c1_133 = arith.constant 1 : index
    %c1_134 = arith.constant 1 : index
    %c0_135 = arith.constant 0 : index
    %c0_136 = arith.constant 0 : index
    %208 = vector.load %arg9[%c1_133, %c1_134, %c0_135, %c0_136] : memref<3x3x288x32xf32, #tpu.memory_space<vmem>>, vector<1x1x288x32xf32>
    %209 = vector.shape_cast %208 : vector<1x1x288x32xf32> to vector<288x32xf32>
    %cst_137 = arith.constant dense<0.000000e+00> : vector<2x32xf32>
    %210 = tpu.matmul %200, %209, %cst_137 {dimension_numbers = #tpu.dot_dimension_numbers<[1], [0], [0], [1], [0, 0, 1, 1], [], []>} : vector<2x288xf32>, vector<288x32xf32>, vector<2x32xf32> -> vector<2x32xf32>
    %c7 = arith.constant 7 : index
    %c0_138 = arith.constant 0 : index
    %c0_139 = arith.constant 0 : index
    %211 = vector.load %arg8[%c7, %c0_138, %c0_139] : memref<21x1x32xf32, #tpu.memory_space<vmem>>, vector<1x1x32xf32>
    %212 = vector.shape_cast %211 : vector<1x1x32xf32> to vector<1x32xf32>
    %213 = vector.broadcast %212 : vector<1x32xf32> to vector<2x32xf32>
    %214 = arith.addf %210, %213 : vector<2x32xf32>
    %c1_140 = arith.constant 1 : index
    %c2_141 = arith.constant 2 : index
    %c0_142 = arith.constant 0 : index
    %c0_143 = arith.constant 0 : index
    %215 = vector.load %arg9[%c1_140, %c2_141, %c0_142, %c0_143] : memref<3x3x288x32xf32, #tpu.memory_space<vmem>>, vector<1x1x288x32xf32>
    %216 = vector.shape_cast %215 : vector<1x1x288x32xf32> to vector<288x32xf32>
    %cst_144 = arith.constant dense<0.000000e+00> : vector<2x32xf32>
    %217 = tpu.matmul %200, %216, %cst_144 {dimension_numbers = #tpu.dot_dimension_numbers<[1], [0], [0], [1], [0, 0, 1, 1], [], []>} : vector<2x288xf32>, vector<288x32xf32>, vector<2x32xf32> -> vector<2x32xf32>
    %c8 = arith.constant 8 : index
    %c0_145 = arith.constant 0 : index
    %c0_146 = arith.constant 0 : index
    %218 = vector.load %arg8[%c8, %c0_145, %c0_146] : memref<21x1x32xf32, #tpu.memory_space<vmem>>, vector<1x1x32xf32>
    %219 = vector.shape_cast %218 : vector<1x1x32xf32> to vector<1x32xf32>
    %220 = vector.broadcast %219 : vector<1x32xf32> to vector<2x32xf32>
    %221 = arith.addf %217, %220 : vector<2x32xf32>
    %c1_147 = arith.constant 1 : index
    %c0_148 = arith.constant 0 : index
    %c0_149 = arith.constant 0 : index
    %c0_150 = arith.constant 0 : index
    %222 = vector.load %arg10[%c1_147, %c0_148, %c0_149, %c0_150] : memref<3x3x32x32xf32, #tpu.memory_space<vmem>>, vector<1x1x32x32xf32>
    %223 = vector.shape_cast %222 : vector<1x1x32x32xf32> to vector<32x32xf32>
    %cst_151 = arith.constant dense<0.000000e+00> : vector<2x32xf32>
    %224 = tpu.matmul %130, %223, %cst_151 {dimension_numbers = #tpu.dot_dimension_numbers<[1], [0], [0], [1], [0, 0, 1, 1], [], []>} : vector<2x32xf32>, vector<32x32xf32>, vector<2x32xf32> -> vector<2x32xf32>
    %c15 = arith.constant 15 : index
    %c0_152 = arith.constant 0 : index
    %c0_153 = arith.constant 0 : index
    %225 = vector.load %arg8[%c15, %c0_152, %c0_153] : memref<21x1x32xf32, #tpu.memory_space<vmem>>, vector<1x1x32xf32>
    %226 = vector.shape_cast %225 : vector<1x1x32xf32> to vector<1x32xf32>
    %227 = vector.broadcast %226 : vector<1x32xf32> to vector<2x32xf32>
    %228 = arith.addf %224, %227 : vector<2x32xf32>
    %c1_154 = arith.constant 1 : index
    %c1_155 = arith.constant 1 : index
    %c0_156 = arith.constant 0 : index
    %c0_157 = arith.constant 0 : index
    %229 = vector.load %arg10[%c1_154, %c1_155, %c0_156, %c0_157] : memref<3x3x32x32xf32, #tpu.memory_space<vmem>>, vector<1x1x32x32xf32>
    %230 = vector.shape_cast %229 : vector<1x1x32x32xf32> to vector<32x32xf32>
    %cst_158 = arith.constant dense<0.000000e+00> : vector<2x32xf32>
    %231 = tpu.matmul %130, %230, %cst_158 {dimension_numbers = #tpu.dot_dimension_numbers<[1], [0], [0], [1], [0, 0, 1, 1], [], []>} : vector<2x32xf32>, vector<32x32xf32>, vector<2x32xf32> -> vector<2x32xf32>
    %c16 = arith.constant 16 : index
    %c0_159 = arith.constant 0 : index
    %c0_160 = arith.constant 0 : index
    %232 = vector.load %arg8[%c16, %c0_159, %c0_160] : memref<21x1x32xf32, #tpu.memory_space<vmem>>, vector<1x1x32xf32>
    %233 = vector.shape_cast %232 : vector<1x1x32xf32> to vector<1x32xf32>
    %234 = vector.broadcast %233 : vector<1x32xf32> to vector<2x32xf32>
    %235 = arith.addf %231, %234 : vector<2x32xf32>
    %c1_161 = arith.constant 1 : index
    %c2_162 = arith.constant 2 : index
    %c0_163 = arith.constant 0 : index
    %c0_164 = arith.constant 0 : index
    %236 = vector.load %arg10[%c1_161, %c2_162, %c0_163, %c0_164] : memref<3x3x32x32xf32, #tpu.memory_space<vmem>>, vector<1x1x32x32xf32>
    %237 = vector.shape_cast %236 : vector<1x1x32x32xf32> to vector<32x32xf32>
    %cst_165 = arith.constant dense<0.000000e+00> : vector<2x32xf32>
    %238 = tpu.matmul %130, %237, %cst_165 {dimension_numbers = #tpu.dot_dimension_numbers<[1], [0], [0], [1], [0, 0, 1, 1], [], []>} : vector<2x32xf32>, vector<32x32xf32>, vector<2x32xf32> -> vector<2x32xf32>
    %c17 = arith.constant 17 : index
    %c0_166 = arith.constant 0 : index
    %c0_167 = arith.constant 0 : index
    %239 = vector.load %arg8[%c17, %c0_166, %c0_167] : memref<21x1x32xf32, #tpu.memory_space<vmem>>, vector<1x1x32xf32>
    %240 = vector.shape_cast %239 : vector<1x1x32xf32> to vector<1x32xf32>
    %241 = vector.broadcast %240 : vector<1x32xf32> to vector<2x32xf32>
    %242 = arith.addf %238, %241 : vector<2x32xf32>
    %243 = arith.addf %207, %228 : vector<2x32xf32>
    %244 = arith.negf %243 : vector<2x32xf32>
    %245 = math.exp %244 : vector<2x32xf32>
    %cst_168 = arith.constant 1.000000e+00 : f32
    %246 = vector.broadcast %cst_168 : f32 to vector<2x32xf32>
    %247 = arith.addf %246, %245 : vector<2x32xf32>
    %248 = arith.divf %246, %247 : vector<2x32xf32>
    %249 = arith.addf %214, %235 : vector<2x32xf32>
    %250 = arith.negf %249 : vector<2x32xf32>
    %251 = math.exp %250 : vector<2x32xf32>
    %cst_169 = arith.constant 1.000000e+00 : f32
    %252 = vector.broadcast %cst_169 : f32 to vector<2x32xf32>
    %253 = arith.addf %252, %251 : vector<2x32xf32>
    %254 = arith.divf %252, %253 : vector<2x32xf32>
    %255 = arith.mulf %248, %242 : vector<2x32xf32>
    %256 = arith.addf %221, %255 : vector<2x32xf32>
    %257 = math.tanh %256 : vector<2x32xf32>
    %cst_170 = arith.constant 1.000000e+00 : f32
    %258 = vector.broadcast %cst_170 : f32 to vector<2x32xf32>
    %259 = arith.subf %258, %254 : vector<2x32xf32>
    %260 = arith.mulf %259, %257 : vector<2x32xf32>
    %261 = arith.mulf %254, %130 : vector<2x32xf32>
    %262 = arith.addf %260, %261 : vector<2x32xf32>
    %c1_171 = arith.constant 1 : index
    %c0_172 = arith.constant 0 : index
    %c0_173 = arith.constant 0 : index
    %263 = vector.load %arg11[%c1_171, %c0_172, %c0_173] : memref<3x32x16xf32, #tpu.memory_space<vmem>>, vector<1x32x16xf32>
    %264 = vector.shape_cast %263 : vector<1x32x16xf32> to vector<32x16xf32>
    %cst_174 = arith.constant dense<0.000000e+00> : vector<2x16xf32>
    %265 = tpu.matmul %262, %264, %cst_174 {dimension_numbers = #tpu.dot_dimension_numbers<[1], [0], [0], [1], [0, 0, 1, 1], [], []>} : vector<2x32xf32>, vector<32x16xf32>, vector<2x16xf32> -> vector<2x16xf32>
    %c1_175 = arith.constant 1 : index
    %c0_176 = arith.constant 0 : index
    %c0_177 = arith.constant 0 : index
    %266 = vector.load %arg12[%c1_175, %c0_176, %c0_177] : memref<3x192x16xf32, #tpu.memory_space<vmem>>, vector<1x192x16xf32>
    %267 = vector.shape_cast %266 : vector<1x192x16xf32> to vector<192x16xf32>
    %cst_178 = arith.constant dense<0.000000e+00> : vector<2x16xf32>
    %268 = tpu.matmul %199, %267, %cst_178 {dimension_numbers = #tpu.dot_dimension_numbers<[1], [0], [0], [1], [0, 0, 1, 1], [], []>} : vector<2x192xf32>, vector<192x16xf32>, vector<2x16xf32> -> vector<2x16xf32>
    %269 = arith.addf %265, %268 : vector<2x16xf32>
    %c1_179 = arith.constant 1 : index
    %c0_180 = arith.constant 0 : index
    %c0_181 = arith.constant 0 : index
    %270 = vector.load %arg13[%c1_179, %c0_180, %c0_181] : memref<3x1x16xf32, #tpu.memory_space<vmem>>, vector<1x1x16xf32>
    %271 = vector.shape_cast %270 : vector<1x1x16xf32> to vector<1x16xf32>
    %272 = vector.broadcast %271 : vector<1x16xf32> to vector<2x16xf32>
    %273 = arith.addf %269, %272 : vector<2x16xf32>
    %cst_182 = arith.constant dense<0xFF800000> : vector<2xf32>
    %274 = vector.multi_reduction <maximumf>, %273, %cst_182 [1] : vector<2x16xf32> to vector<2xf32>
    %275 = vector.shape_cast %274 : vector<2xf32> to vector<2x1xf32>
    %276 = vector.broadcast %275 : vector<2x1xf32> to vector<2x16xf32>
    %277 = arith.subf %273, %276 : vector<2x16xf32>
    %278 = math.exp %277 : vector<2x16xf32>
    %cst_183 = arith.constant dense<0.000000e+00> : vector<2xf32>
    %279 = vector.multi_reduction <add>, %278, %cst_183 [1] : vector<2x16xf32> to vector<2xf32>
    %280 = vector.shape_cast %279 : vector<2xf32> to vector<2x1xf32>
    %281 = tpu.reciprocal %280 {approx = true} : vector<2x1xf32> -> vector<2x1xf32>
    %282 = vector.broadcast %281 : vector<2x1xf32> to vector<2x16xf32>
    %283 = arith.mulf %278, %282 : vector<2x16xf32>
    %c1_184 = arith.constant 1 : index
    %c0_185 = arith.constant 0 : index
    %c0_186 = arith.constant 0 : index
    %284 = vector.load %arg7[%c1_184, %c0_185, %c0_186] : memref<3x16x32xf32, #tpu.memory_space<vmem>>, vector<1x16x32xf32>
    %285 = vector.shape_cast %284 : vector<1x16x32xf32> to vector<16x32xf32>
    %cst_187 = arith.constant dense<0.000000e+00> : vector<2x32xf32>
    %286 = tpu.matmul %151, %285, %cst_187 {dimension_numbers = #tpu.dot_dimension_numbers<[1], [0], [0], [1], [0, 0, 1, 1], [], []>} : vector<2x16xf32>, vector<16x32xf32>, vector<2x32xf32> -> vector<2x32xf32>
    %c2_188 = arith.constant 2 : index
    %c0_189 = arith.constant 0 : index
    %c0_190 = arith.constant 0 : index
    %287 = vector.load %arg7[%c2_188, %c0_189, %c0_190] : memref<3x16x32xf32, #tpu.memory_space<vmem>>, vector<1x16x32xf32>
    %288 = vector.shape_cast %287 : vector<1x16x32xf32> to vector<16x32xf32>
    %cst_191 = arith.constant dense<0.000000e+00> : vector<2x32xf32>
    %289 = tpu.matmul %283, %288, %cst_191 {dimension_numbers = #tpu.dot_dimension_numbers<[1], [0], [0], [1], [0, 0, 1, 1], [], []>} : vector<2x16xf32>, vector<16x32xf32>, vector<2x32xf32> -> vector<2x32xf32>
    %290 = arith.addf %286, %289 : vector<2x32xf32>
    %c2_192 = arith.constant 2 : index
    %c0_193 = arith.constant 0 : index
    %c0_194 = arith.constant 0 : index
    %291 = vector.load %arg6[%c2_192, %c0_193, %c0_194] : memref<3x64x32xf32, #tpu.memory_space<vmem>>, vector<1x64x32xf32>
    %292 = vector.shape_cast %291 : vector<1x64x32xf32> to vector<64x32xf32>
    %cst_195 = arith.constant dense<0.000000e+00> : vector<2x32xf32>
    %293 = tpu.matmul %5, %292, %cst_195 {dimension_numbers = #tpu.dot_dimension_numbers<[1], [0], [0], [1], [0, 0, 1, 1], [], []>} : vector<2x64xf32>, vector<64x32xf32>, vector<2x32xf32> -> vector<2x32xf32>
    %294 = arith.addf %290, %293 : vector<2x32xf32>
    %c2_196 = arith.constant 2 : index
    %c0_197 = arith.constant 0 : index
    %c0_198 = arith.constant 0 : index
    %295 = vector.load %arg8[%c2_196, %c0_197, %c0_198] : memref<21x1x32xf32, #tpu.memory_space<vmem>>, vector<1x1x32xf32>
    %296 = vector.shape_cast %295 : vector<1x1x32xf32> to vector<1x32xf32>
    %297 = vector.broadcast %296 : vector<1x32xf32> to vector<2x32xf32>
    %298 = arith.addf %294, %297 : vector<2x32xf32>
    %299 = math.tanh %298 : vector<2x32xf32>
    %c2_199 = arith.constant 2 : index
    %c0_200 = arith.constant 0 : index
    %c0_201 = arith.constant 0 : index
    %300 = vector.load %arg2[%c2_199, %c0_200, %c0_201] : memref<3x32x192xf32, #tpu.memory_space<vmem>>, vector<1x32x192xf32>
    %301 = vector.shape_cast %300 : vector<1x32x192xf32> to vector<32x192xf32>
    %cst_202 = arith.constant dense<0.000000e+00> : vector<2x192xf32>
    %302 = tpu.matmul %299, %301, %cst_202 {dimension_numbers = #tpu.dot_dimension_numbers<[1], [0], [0], [1], [0, 0, 1, 1], [], []>} : vector<2x32xf32>, vector<32x192xf32>, vector<2x192xf32> -> vector<2x192xf32>
    %c2_203 = arith.constant 2 : index
    %c0_204 = arith.constant 0 : index
    %c0_205 = arith.constant 0 : index
    %303 = vector.load %arg3[%c2_203, %c0_204, %c0_205] : memref<3x192x192xf32, #tpu.memory_space<vmem>>, vector<1x192x192xf32>
    %304 = vector.shape_cast %303 : vector<1x192x192xf32> to vector<192x192xf32>
    %cst_206 = arith.constant dense<0.000000e+00> : vector<16x192xf32>
    %305 = tpu.matmul %1, %304, %cst_206 {dimension_numbers = #tpu.dot_dimension_numbers<[1], [0], [0], [1], [0, 0, 1, 1], [], []>} : vector<16x192xf32>, vector<192x192xf32>, vector<16x192xf32> -> vector<16x192xf32>
    %306 = vector.shape_cast %305 : vector<16x192xf32> to vector<2x8x192xf32>
    %307 = vector.shape_cast %302 : vector<2x192xf32> to vector<2x1x192xf32>
    %308 = vector.broadcast %307 : vector<2x1x192xf32> to vector<2x8x192xf32>
    %309 = arith.addf %308, %306 : vector<2x8x192xf32>
    %c2_207 = arith.constant 2 : index
    %c0_208 = arith.constant 0 : index
    %c0_209 = arith.constant 0 : index
    %310 = vector.load %arg4[%c2_207, %c0_208, %c0_209] : memref<3x1x192xf32, #tpu.memory_space<vmem>>, vector<1x1x192xf32>
    %311 = vector.shape_cast %310 : vector<1x1x192xf32> to vector<1x192xf32>
    %312 = vector.shape_cast %311 : vector<1x192xf32> to vector<1x1x192xf32>
    %313 = vector.broadcast %312 : vector<1x1x192xf32> to vector<2x8x192xf32>
    %314 = arith.addf %309, %313 : vector<2x8x192xf32>
    %315 = math.tanh %314 : vector<2x8x192xf32>
    %316 = vector.shape_cast %315 : vector<2x8x192xf32> to vector<16x192xf32>
    %c2_210 = arith.constant 2 : index
    %c0_211 = arith.constant 0 : index
    %c0_212 = arith.constant 0 : index
    %317 = vector.load %arg5[%c2_210, %c0_211, %c0_212] : memref<3x192x6xf32, #tpu.memory_space<vmem>>, vector<1x192x6xf32>
    %318 = vector.shape_cast %317 : vector<1x192x6xf32> to vector<192x6xf32>
    %cst_213 = arith.constant dense<0.000000e+00> : vector<16x6xf32>
    %319 = tpu.matmul %316, %318, %cst_213 {dimension_numbers = #tpu.dot_dimension_numbers<[1], [0], [0], [1], [0, 0, 1, 1], [], []>} : vector<16x192xf32>, vector<192x6xf32>, vector<16x6xf32> -> vector<16x6xf32>
    %320 = vector.shape_cast %319 : vector<16x6xf32> to vector<2x8x6xf32>
    %cst_214 = arith.constant dense<0xFF800000> : vector<2x6xf32>
    %321 = vector.multi_reduction <maximumf>, %320, %cst_214 [1] : vector<2x8x6xf32> to vector<2x6xf32>
    %322 = vector.shape_cast %321 : vector<2x6xf32> to vector<2x1x6xf32>
    %323 = vector.broadcast %322 : vector<2x1x6xf32> to vector<2x8x6xf32>
    %324 = arith.subf %320, %323 : vector<2x8x6xf32>
    %325 = math.exp %324 : vector<2x8x6xf32>
    %cst_215 = arith.constant dense<0.000000e+00> : vector<2x6xf32>
    %326 = vector.multi_reduction <add>, %325, %cst_215 [1] : vector<2x8x6xf32> to vector<2x6xf32>
    %327 = vector.shape_cast %326 : vector<2x6xf32> to vector<2x1x6xf32>
    %328 = tpu.reciprocal %327 {approx = true} : vector<2x1x6xf32> -> vector<2x1x6xf32>
    %329 = vector.broadcast %328 : vector<2x1x6xf32> to vector<2x8x6xf32>
    %330 = arith.mulf %325, %329 : vector<2x8x6xf32>
    %331 = vector.shape_cast %330 : vector<2x8x6xf32> to vector<16x6xf32>
    %cst_216 = arith.constant dense<0.000000e+00> : vector<16x192xf32>
    %332 = tpu.matmul %331, %23, %cst_216 {dimension_numbers = #tpu.dot_dimension_numbers<[1], [0], [0], [1], [0, 0, 1, 1], [], []>} : vector<16x6xf32>, vector<6x192xf32>, vector<16x192xf32> -> vector<16x192xf32>
    %333 = vector.shape_cast %332 : vector<16x192xf32> to vector<2x8x192xf32>
    %334 = arith.mulf %333, %0 : vector<2x8x192xf32>
    %cst_217 = arith.constant dense<0.000000e+00> : vector<2x192xf32>
    %335 = vector.multi_reduction <add>, %334, %cst_217 [1] : vector<2x8x192xf32> to vector<2x192xf32>
    %336 = tpu.concatenate %7, %299, %335 in 1 : vector<2x64xf32>, vector<2x32xf32>, vector<2x192xf32> -> vector<2x288xf32>
    %c2_218 = arith.constant 2 : index
    %c0_219 = arith.constant 0 : index
    %c0_220 = arith.constant 0 : index
    %c0_221 = arith.constant 0 : index
    %337 = vector.load %arg9[%c2_218, %c0_219, %c0_220, %c0_221] : memref<3x3x288x32xf32, #tpu.memory_space<vmem>>, vector<1x1x288x32xf32>
    %338 = vector.shape_cast %337 : vector<1x1x288x32xf32> to vector<288x32xf32>
    %cst_222 = arith.constant dense<0.000000e+00> : vector<2x32xf32>
    %339 = tpu.matmul %336, %338, %cst_222 {dimension_numbers = #tpu.dot_dimension_numbers<[1], [0], [0], [1], [0, 0, 1, 1], [], []>} : vector<2x288xf32>, vector<288x32xf32>, vector<2x32xf32> -> vector<2x32xf32>
    %c9 = arith.constant 9 : index
    %c0_223 = arith.constant 0 : index
    %c0_224 = arith.constant 0 : index
    %340 = vector.load %arg8[%c9, %c0_223, %c0_224] : memref<21x1x32xf32, #tpu.memory_space<vmem>>, vector<1x1x32xf32>
    %341 = vector.shape_cast %340 : vector<1x1x32xf32> to vector<1x32xf32>
    %342 = vector.broadcast %341 : vector<1x32xf32> to vector<2x32xf32>
    %343 = arith.addf %339, %342 : vector<2x32xf32>
    %c2_225 = arith.constant 2 : index
    %c1_226 = arith.constant 1 : index
    %c0_227 = arith.constant 0 : index
    %c0_228 = arith.constant 0 : index
    %344 = vector.load %arg9[%c2_225, %c1_226, %c0_227, %c0_228] : memref<3x3x288x32xf32, #tpu.memory_space<vmem>>, vector<1x1x288x32xf32>
    %345 = vector.shape_cast %344 : vector<1x1x288x32xf32> to vector<288x32xf32>
    %cst_229 = arith.constant dense<0.000000e+00> : vector<2x32xf32>
    %346 = tpu.matmul %336, %345, %cst_229 {dimension_numbers = #tpu.dot_dimension_numbers<[1], [0], [0], [1], [0, 0, 1, 1], [], []>} : vector<2x288xf32>, vector<288x32xf32>, vector<2x32xf32> -> vector<2x32xf32>
    %c10 = arith.constant 10 : index
    %c0_230 = arith.constant 0 : index
    %c0_231 = arith.constant 0 : index
    %347 = vector.load %arg8[%c10, %c0_230, %c0_231] : memref<21x1x32xf32, #tpu.memory_space<vmem>>, vector<1x1x32xf32>
    %348 = vector.shape_cast %347 : vector<1x1x32xf32> to vector<1x32xf32>
    %349 = vector.broadcast %348 : vector<1x32xf32> to vector<2x32xf32>
    %350 = arith.addf %346, %349 : vector<2x32xf32>
    %c2_232 = arith.constant 2 : index
    %c2_233 = arith.constant 2 : index
    %c0_234 = arith.constant 0 : index
    %c0_235 = arith.constant 0 : index
    %351 = vector.load %arg9[%c2_232, %c2_233, %c0_234, %c0_235] : memref<3x3x288x32xf32, #tpu.memory_space<vmem>>, vector<1x1x288x32xf32>
    %352 = vector.shape_cast %351 : vector<1x1x288x32xf32> to vector<288x32xf32>
    %cst_236 = arith.constant dense<0.000000e+00> : vector<2x32xf32>
    %353 = tpu.matmul %336, %352, %cst_236 {dimension_numbers = #tpu.dot_dimension_numbers<[1], [0], [0], [1], [0, 0, 1, 1], [], []>} : vector<2x288xf32>, vector<288x32xf32>, vector<2x32xf32> -> vector<2x32xf32>
    %c11 = arith.constant 11 : index
    %c0_237 = arith.constant 0 : index
    %c0_238 = arith.constant 0 : index
    %354 = vector.load %arg8[%c11, %c0_237, %c0_238] : memref<21x1x32xf32, #tpu.memory_space<vmem>>, vector<1x1x32xf32>
    %355 = vector.shape_cast %354 : vector<1x1x32xf32> to vector<1x32xf32>
    %356 = vector.broadcast %355 : vector<1x32xf32> to vector<2x32xf32>
    %357 = arith.addf %353, %356 : vector<2x32xf32>
    %c2_239 = arith.constant 2 : index
    %c0_240 = arith.constant 0 : index
    %c0_241 = arith.constant 0 : index
    %c0_242 = arith.constant 0 : index
    %358 = vector.load %arg10[%c2_239, %c0_240, %c0_241, %c0_242] : memref<3x3x32x32xf32, #tpu.memory_space<vmem>>, vector<1x1x32x32xf32>
    %359 = vector.shape_cast %358 : vector<1x1x32x32xf32> to vector<32x32xf32>
    %cst_243 = arith.constant dense<0.000000e+00> : vector<2x32xf32>
    %360 = tpu.matmul %262, %359, %cst_243 {dimension_numbers = #tpu.dot_dimension_numbers<[1], [0], [0], [1], [0, 0, 1, 1], [], []>} : vector<2x32xf32>, vector<32x32xf32>, vector<2x32xf32> -> vector<2x32xf32>
    %c18 = arith.constant 18 : index
    %c0_244 = arith.constant 0 : index
    %c0_245 = arith.constant 0 : index
    %361 = vector.load %arg8[%c18, %c0_244, %c0_245] : memref<21x1x32xf32, #tpu.memory_space<vmem>>, vector<1x1x32xf32>
    %362 = vector.shape_cast %361 : vector<1x1x32xf32> to vector<1x32xf32>
    %363 = vector.broadcast %362 : vector<1x32xf32> to vector<2x32xf32>
    %364 = arith.addf %360, %363 : vector<2x32xf32>
    %c2_246 = arith.constant 2 : index
    %c1_247 = arith.constant 1 : index
    %c0_248 = arith.constant 0 : index
    %c0_249 = arith.constant 0 : index
    %365 = vector.load %arg10[%c2_246, %c1_247, %c0_248, %c0_249] : memref<3x3x32x32xf32, #tpu.memory_space<vmem>>, vector<1x1x32x32xf32>
    %366 = vector.shape_cast %365 : vector<1x1x32x32xf32> to vector<32x32xf32>
    %cst_250 = arith.constant dense<0.000000e+00> : vector<2x32xf32>
    %367 = tpu.matmul %262, %366, %cst_250 {dimension_numbers = #tpu.dot_dimension_numbers<[1], [0], [0], [1], [0, 0, 1, 1], [], []>} : vector<2x32xf32>, vector<32x32xf32>, vector<2x32xf32> -> vector<2x32xf32>
    %c19 = arith.constant 19 : index
    %c0_251 = arith.constant 0 : index
    %c0_252 = arith.constant 0 : index
    %368 = vector.load %arg8[%c19, %c0_251, %c0_252] : memref<21x1x32xf32, #tpu.memory_space<vmem>>, vector<1x1x32xf32>
    %369 = vector.shape_cast %368 : vector<1x1x32xf32> to vector<1x32xf32>
    %370 = vector.broadcast %369 : vector<1x32xf32> to vector<2x32xf32>
    %371 = arith.addf %367, %370 : vector<2x32xf32>
    %c2_253 = arith.constant 2 : index
    %c2_254 = arith.constant 2 : index
    %c0_255 = arith.constant 0 : index
    %c0_256 = arith.constant 0 : index
    %372 = vector.load %arg10[%c2_253, %c2_254, %c0_255, %c0_256] : memref<3x3x32x32xf32, #tpu.memory_space<vmem>>, vector<1x1x32x32xf32>
    %373 = vector.shape_cast %372 : vector<1x1x32x32xf32> to vector<32x32xf32>
    %cst_257 = arith.constant dense<0.000000e+00> : vector<2x32xf32>
    %374 = tpu.matmul %262, %373, %cst_257 {dimension_numbers = #tpu.dot_dimension_numbers<[1], [0], [0], [1], [0, 0, 1, 1], [], []>} : vector<2x32xf32>, vector<32x32xf32>, vector<2x32xf32> -> vector<2x32xf32>
    %c20 = arith.constant 20 : index
    %c0_258 = arith.constant 0 : index
    %c0_259 = arith.constant 0 : index
    %375 = vector.load %arg8[%c20, %c0_258, %c0_259] : memref<21x1x32xf32, #tpu.memory_space<vmem>>, vector<1x1x32xf32>
    %376 = vector.shape_cast %375 : vector<1x1x32xf32> to vector<1x32xf32>
    %377 = vector.broadcast %376 : vector<1x32xf32> to vector<2x32xf32>
    %378 = arith.addf %374, %377 : vector<2x32xf32>
    %379 = arith.addf %343, %364 : vector<2x32xf32>
    %380 = arith.negf %379 : vector<2x32xf32>
    %381 = math.exp %380 : vector<2x32xf32>
    %cst_260 = arith.constant 1.000000e+00 : f32
    %382 = vector.broadcast %cst_260 : f32 to vector<2x32xf32>
    %383 = arith.addf %382, %381 : vector<2x32xf32>
    %384 = arith.divf %382, %383 : vector<2x32xf32>
    %385 = arith.addf %350, %371 : vector<2x32xf32>
    %386 = arith.negf %385 : vector<2x32xf32>
    %387 = math.exp %386 : vector<2x32xf32>
    %cst_261 = arith.constant 1.000000e+00 : f32
    %388 = vector.broadcast %cst_261 : f32 to vector<2x32xf32>
    %389 = arith.addf %388, %387 : vector<2x32xf32>
    %390 = arith.divf %388, %389 : vector<2x32xf32>
    %391 = arith.mulf %384, %378 : vector<2x32xf32>
    %392 = arith.addf %357, %391 : vector<2x32xf32>
    %393 = math.tanh %392 : vector<2x32xf32>
    %cst_262 = arith.constant 1.000000e+00 : f32
    %394 = vector.broadcast %cst_262 : f32 to vector<2x32xf32>
    %395 = arith.subf %394, %390 : vector<2x32xf32>
    %396 = arith.mulf %395, %393 : vector<2x32xf32>
    %397 = arith.mulf %390, %262 : vector<2x32xf32>
    %398 = arith.addf %396, %397 : vector<2x32xf32>
    %c2_263 = arith.constant 2 : index
    %c0_264 = arith.constant 0 : index
    %c0_265 = arith.constant 0 : index
    %399 = vector.load %arg11[%c2_263, %c0_264, %c0_265] : memref<3x32x16xf32, #tpu.memory_space<vmem>>, vector<1x32x16xf32>
    %400 = vector.shape_cast %399 : vector<1x32x16xf32> to vector<32x16xf32>
    %cst_266 = arith.constant dense<0.000000e+00> : vector<2x16xf32>
    %401 = tpu.matmul %398, %400, %cst_266 {dimension_numbers = #tpu.dot_dimension_numbers<[1], [0], [0], [1], [0, 0, 1, 1], [], []>} : vector<2x32xf32>, vector<32x16xf32>, vector<2x16xf32> -> vector<2x16xf32>
    %c2_267 = arith.constant 2 : index
    %c0_268 = arith.constant 0 : index
    %c0_269 = arith.constant 0 : index
    %402 = vector.load %arg12[%c2_267, %c0_268, %c0_269] : memref<3x192x16xf32, #tpu.memory_space<vmem>>, vector<1x192x16xf32>
    %403 = vector.shape_cast %402 : vector<1x192x16xf32> to vector<192x16xf32>
    %cst_270 = arith.constant dense<0.000000e+00> : vector<2x16xf32>
    %404 = tpu.matmul %335, %403, %cst_270 {dimension_numbers = #tpu.dot_dimension_numbers<[1], [0], [0], [1], [0, 0, 1, 1], [], []>} : vector<2x192xf32>, vector<192x16xf32>, vector<2x16xf32> -> vector<2x16xf32>
    %405 = arith.addf %401, %404 : vector<2x16xf32>
    %c2_271 = arith.constant 2 : index
    %c0_272 = arith.constant 0 : index
    %c0_273 = arith.constant 0 : index
    %406 = vector.load %arg13[%c2_271, %c0_272, %c0_273] : memref<3x1x16xf32, #tpu.memory_space<vmem>>, vector<1x1x16xf32>
    %407 = vector.shape_cast %406 : vector<1x1x16xf32> to vector<1x16xf32>
    %408 = vector.broadcast %407 : vector<1x16xf32> to vector<2x16xf32>
    %409 = arith.addf %405, %408 : vector<2x16xf32>
    %410 = arith.negf %409 : vector<2x16xf32>
    %411 = math.exp %410 : vector<2x16xf32>
    %cst_274 = arith.constant 1.000000e+00 : f32
    %412 = vector.broadcast %cst_274 : f32 to vector<2x16xf32>
    %413 = arith.addf %412, %411 : vector<2x16xf32>
    %414 = arith.divf %412, %413 : vector<2x16xf32>
    %415 = tpu.concatenate %151, %283, %414, %398 in 1 : vector<2x16xf32>, vector<2x16xf32>, vector<2x16xf32>, vector<2x32xf32> -> vector<2x80xf32>
    %c0_275 = arith.constant 0 : index
    %c0_276 = arith.constant 0 : index
    %416 = vector.load %arg14[%c0_275, %c0_276] : memref<2x80xf32, #tpu.memory_space<vmem>>, vector<2x80xf32>
    tpu.vector_store %arg14[%c0_275, %c0_276], %415 {strides = array<i32>} : memref<2x80xf32, #tpu.memory_space<vmem>>, vector<2x80xf32>,
    return
  }
}

</mosaic_0001>

<llo_original>
// kernel: cas_decoder_forward.1
$region0: #{cas_decoder_forward.1}
  #allocation0 [shape = 'u32[]', space=smem, size = 0x4, offset = 0x4, fixed_abs, tag = 'smem constant byte address 0x4 - core index']
  #allocation1 [shape = 'u32[144,128]{1,0:T(1,128)}', space=vmem, size = 0x12000, scoped, tag = 'internal scratch']
  %s0 = inlined_call_operand.vmem [shape: f32[2,8,192], index: 0, kind: input, shape index: {}]
  %s1 = inlined_call_operand.vmem [shape: f32[4,2,64], index: 1, kind: input, shape index: {}]
  %s2 = inlined_call_operand.vmem [shape: f32[3,32,192], index: 2, kind: input, shape index: {}]
  %s3 = inlined_call_operand.vmem [shape: f32[3,192,192], index: 3, kind: input, shape index: {}]
  %s4 = inlined_call_operand.vmem [shape: f32[3,1,192], index: 4, kind: input, shape index: {}]
  %s5 = inlined_call_operand.vmem [shape: f32[3,192,6], index: 5, kind: input, shape index: {}]
  %s6 = inlined_call_operand.vmem [shape: f32[3,64,32], index: 6, kind: input, shape index: {}]
  %s7 = inlined_call_operand.vmem [shape: f32[3,16,32], index: 7, kind: input, shape index: {}]
  %s8 = inlined_call_operand.vmem [shape: f32[21,1,32], index: 8, kind: input, shape index: {}]
  %s9 = inlined_call_operand.vmem [shape: f32[3,3,288,32], index: 9, kind: input, shape index: {}]
  %s10 = inlined_call_operand.vmem [shape: f32[3,3,32,32], index: 10, kind: input, shape index: {}]
  %s11 = inlined_call_operand.vmem [shape: f32[3,32,16], index: 11, kind: input, shape index: {}]
  %s12 = inlined_call_operand.vmem [shape: f32[3,192,16], index: 12, kind: input, shape index: {}]
  %s13 = inlined_call_operand.vmem [shape: f32[3,1,16], index: 13, kind: input, shape index: {}]
  %s14 = inlined_call_operand.vmem [shape: f32[2,80], index: 14, kind: output, shape index: {}]
  %s15 = sld [smem:[#allocation0]]
  $region66: #{cas_decoder_forward.1} parent=0
    _
  %s17 = ssub.s32 1, %s15
  %s18 = scalar_select 0, %s17, %s15
  // Predicated region
  $region2: #{cas_decoder_forward.1} parent=0 // pred_check
    _
  $region3: #{cas_decoder_forward.1} parent=0 // pred_check_branch
    %20 = sbr.rel (0) target = $region5
  $region4: #{cas_decoder_forward.1} parent=0 // pred_region
    _
  $region5: #{cas_decoder_forward.1} parent=0 // pred_fallthru
    _
  // Predicated region
  $region6: #{cas_decoder_forward.1} parent=0 // pred_check
    _
  $region7: #{cas_decoder_forward.1} parent=0 // pred_check_branch
    %22 = sbr.rel (0) target = $region9
  $region8: #{cas_decoder_forward.1} parent=0 // pred_region
    _
  $region9: #{cas_decoder_forward.1} parent=0 // pred_fallthru
    _
  // Predicated region
  $region10: #{cas_decoder_forward.1} parent=0 // pred_check
    _
  $region11: #{cas_decoder_forward.1} parent=0 // pred_check_branch
    %24 = sbr.rel (0) target = $region13
  $region12: #{cas_decoder_forward.1} parent=0 // pred_region
    _
  $region13: #{cas_decoder_forward.1} parent=0 // pred_fallthru
    _
  // Predicated region
  $region14: #{cas_decoder_forward.1} parent=0 // pred_check
    _
  $region15: #{cas_decoder_forward.1} parent=0 // pred_check_branch
    %26 = sbr.rel (0) target = $region17
  $region16: #{cas_decoder_forward.1} parent=0 // pred_region
    _
  $region17: #{cas_decoder_forward.1} parent=0 // pred_fallthru
    _
  // Predicated region
  $region18: #{cas_decoder_forward.1} parent=0 // pred_check
    _
  $region19: #{cas_decoder_forward.1} parent=0 // pred_check_branch
    %28 = sbr.rel (0) target = $region21
  $region20: #{cas_decoder_forward.1} parent=0 // pred_region
    _
  $region21: #{cas_decoder_forward.1} parent=0 // pred_fallthru
    _
  // Predicated region
  $region22: #{cas_decoder_forward.1} parent=0 // pred_check
    _
  $region23: #{cas_decoder_forward.1} parent=0 // pred_check_branch
    %30 = sbr.rel (0) target = $region25
  $region24: #{cas_decoder_forward.1} parent=0 // pred_region
    _
  $region25: #{cas_decoder_forward.1} parent=0 // pred_fallthru
    _
  // Predicated region
  $region26: #{cas_decoder_forward.1} parent=0 // pred_check
    _
  $region27: #{cas_decoder_forward.1} parent=0 // pred_check_branch
    %32 = sbr.rel (0) target = $region29
  $region28: #{cas_decoder_forward.1} parent=0 // pred_region
    _
  $region29: #{cas_decoder_forward.1} parent=0 // pred_fallthru
    _
  // Predicated region
  $region30: #{cas_decoder_forward.1} parent=0 // pred_check
    _
  $region31: #{cas_decoder_forward.1} parent=0 // pred_check_branch
    %34 = sbr.rel (0) target = $region33
  $region32: #{cas_decoder_forward.1} parent=0 // pred_region
    _
  $region33: #{cas_decoder_forward.1} parent=0 // pred_fallthru
    _
  // Predicated region
  $region34: #{cas_decoder_forward.1} parent=0 // pred_check
    _
  $region35: #{cas_decoder_forward.1} parent=0 // pred_check_branch
    %36 = sbr.rel (0) target = $region37
  $region36: #{cas_decoder_forward.1} parent=0 // pred_region
    _
  $region37: #{cas_decoder_forward.1} parent=0 // pred_fallthru
    _
  // Predicated region
  $region38: #{cas_decoder_forward.1} parent=0 // pred_check
    _
  $region39: #{cas_decoder_forward.1} parent=0 // pred_check_branch
    %38 = sbr.rel (0) target = $region41
  $region40: #{cas_decoder_forward.1} parent=0 // pred_region
    _
  $region41: #{cas_decoder_forward.1} parent=0 // pred_fallthru
    _
  // Predicated region
  $region42: #{cas_decoder_forward.1} parent=0 // pred_check
    _
  $region43: #{cas_decoder_forward.1} parent=0 // pred_check_branch
    %40 = sbr.rel (0) target = $region45
  $region44: #{cas_decoder_forward.1} parent=0 // pred_region
    _
  $region45: #{cas_decoder_forward.1} parent=0 // pred_fallthru
    _
  // Predicated region
  $region46: #{cas_decoder_forward.1} parent=0 // pred_check
    _
  $region47: #{cas_decoder_forward.1} parent=0 // pred_check_branch
    %42 = sbr.rel (0) target = $region49
  $region48: #{cas_decoder_forward.1} parent=0 // pred_region
    _
  $region49: #{cas_decoder_forward.1} parent=0 // pred_fallthru
    _
  // Predicated region
  $region50: #{cas_decoder_forward.1} parent=0 // pred_check
    _
  $region51: #{cas_decoder_forward.1} parent=0 // pred_check_branch
    %44 = sbr.rel (0) target = $region53
  $region52: #{cas_decoder_forward.1} parent=0 // pred_region
    _
  $region53: #{cas_decoder_forward.1} parent=0 // pred_fallthru
    _
  // Predicated region
  $region54: #{cas_decoder_forward.1} parent=0 // pred_check
    _
  $region55: #{cas_decoder_forward.1} parent=0 // pred_check_branch
    %46 = sbr.rel (0) target = $region57
  $region56: #{cas_decoder_forward.1} parent=0 // pred_region
    _
  $region57: #{cas_decoder_forward.1} parent=0 // pred_fallthru
    _
  %v47 = vld [vmem:[%s0] sm:$0xff]
  %v48 = vld [vmem:[%s0 + $0x8] sm:$0xff]
  %v49 = vld [vmem:[%s0 + $0x10] sm:$0xff]
  %v50 = vld [vmem:[%s0 + $0x18] sm:$0xff]
  %v51 = vld [vmem:[%s1] sm:$0x3]
  %s52 = scalar_lea.vmem %s1, 2
  %v53 = vld [vmem:[%s52] sm:$0x3]
  %s54 = scalar_lea.vmem %s1, 4
  %v55 = vld [vmem:[%s54] sm:$0x3]
  %s56 = scalar_lea.vmem %s1, 6
  %v57 = vld [vmem:[%s56] sm:$0x3]
  %v58 = vlaneseq
  %v59 = vshrl.u32 %v58, 7
  %v60 = vlaneseq
  %v61 = vand.u32 %v60, 127
  %v62 = vadd.s32 %v61, 128
  %v63 = vmul.u32 %v59, 32
  %vm64 = vcmp.ge.s32.totalorder %v61, %v63
  %vm65 = vcmp.ge.s32.totalorder %v62, %v63
  %v66 = vadd.s32 %v59, 1
  %v67 = vmul.u32 %v66, 32
  %vm68 = vcmp.lt.s32.totalorder %v61, %v67
  %vm69 = vcmp.lt.s32.totalorder %v62, %v67
  %vm70 = vmand %vm64, %vm68
  %vm71 = vmand %vm65, %vm69
  %v72 = vsel %vm70, 1, 0
  %v73 = vsel %vm71, 1, 0
  %v74 = vcvt.s32.f32 %v72
  %v75 = vcvt.s32.f32 %v73
  %v76 = vld [vmem:[%s6] sm:$0xff]
  %v77 = vld [vmem:[%s6 + $0x8] sm:$0xff]
  %v78 = vld [vmem:[%s6 + $0x10] sm:$0xff]
  %v79 = vld [vmem:[%s6 + $0x18] sm:$0xff]
  %v80 = vld [vmem:[%s6 + $0x20] sm:$0xff]
  %v81 = vld [vmem:[%s6 + $0x28] sm:$0xff]
  %v82 = vld [vmem:[%s6 + $0x30] sm:$0xff]
  %v83 = vld [vmem:[%s6 + $0x38] sm:$0xff]
  %v84 = vld [vmem:[%s8] sm:$0x1]
  %v86 = vlaneseq
  %v87 = vshrl.u32 %v86, 7
  %v88 = vsub.s32 0, %v87
  %v89 = vrot.slane %v84, %v88
  %vm91 = vcmask 523264
  %v93 = vsel %vm91, %v51, 0
  %95 = vmatprep.subr.mxu0 0.0
  %96 = vmatpush1.msra.mxu0 0.0
  %97 = vmatprep.subr.mxu0 0.0
  %98 = vmatpush1.msra.mxu0 0.0
  %99 = vmatprep.subr.mxu0 0.0
  %100 = vmatpush1.msra.mxu0 0.0
  %101 = vmatprep.subr.mxu0 0.0
  %102 = vmatpush1.msra.mxu0 0.0
  %103 = vmatprep.subr.mxu0 0.0
  %104 = vmatpush1.msra.mxu0 0.0
  %105 = vmatprep.subr.mxu0 0.0
  %106 = vmatpush1.msra.mxu0 0.0
  %107 = vmatprep.subr.mxu0 0.0
  %108 = vmatpush1.msra.mxu0 0.0
  %109 = vmatprep.subr.mxu0 0.0
  %110 = vmatpush1.msra.mxu0 0.0
  %111 = vmatprep.subr.mxu0 0.0
  %112 = vmatpush1.msra.mxu0 %v83
  %113 = vmatprep.subr.mxu0 0.0
  %114 = vmatpush1.msra.mxu0 %v82
  %115 = vmatprep.subr.mxu0 0.0
  %116 = vmatpush1.msra.mxu0 %v81
  %117 = vmatprep.subr.mxu0 0.0
  %118 = vmatpush1.msra.mxu0 %v80
  %119 = vmatprep.subr.mxu0 0.0
  %120 = vmatpush1.msra.mxu0 %v79
  %121 = vmatprep.subr.mxu0 0.0
  %122 = vmatpush1.msra.mxu0 %v78
  %123 = vmatprep.subr.mxu0 0.0
  %124 = vmatpush1.msra.mxu0 %v77
  %125 = vmatprep.subr.mxu0 0.0
  %126 = vmatpush1.msra.mxu0 %v76
  %127 = vmatprep.subr.mxu0 0.0
  %128 = vmatpush2.msra.mxu0 0.0
  %129 = vmatprep.subr.mxu0 0.0
  %130 = vmatpush2.msra.mxu0 0.0
  %131 = vmatprep.subr.mxu0 0.0
  %132 = vmatpush2.msra.mxu0 0.0
  %133 = vmatprep.subr.mxu0 0.0
  %134 = vmatpush2.msra.mxu0 0.0
  %135 = vmatprep.subr.mxu0 0.0
  %136 = vmatpush2.msra.mxu0 0.0
  %137 = vmatprep.subr.mxu0 0.0
  %138 = vmatpush2.msra.mxu0 0.0
  %139 = vmatprep.subr.mxu0 0.0
  %140 = vmatpush2.msra.mxu0 0.0
  %141 = vmatprep.subr.mxu0 0.0
  %142 = vmatpush2.msra.mxu0 0.0
  %143 = vmatprep.subr.mxu0 0.0
  %144 = vmatpush2.msra.mxu0 0.0
  %145 = vmatprep.subr.mxu0 0.0
  %146 = vmatpush2.msra.mxu0 0.0
  %147 = vmatprep.subr.mxu0 0.0
  %148 = vmatpush2.msra.mxu0 0.0
  %149 = vmatprep.subr.mxu0 0.0
  %150 = vmatpush2.msra.mxu0 0.0
  %151 = vmatprep.subr.mxu0 0.0
  %152 = vmatpush2.msra.mxu0 0.0
  %153 = vmatprep.subr.mxu0 0.0
  %154 = vmatpush2.msra.mxu0 0.0
  %155 = vmatprep.subr.mxu0 0.0
  %156 = vmatpush2.msra.mxu0 0.0
  %157 = vmatprep.subr.mxu0 0.0
  %158 = vmatpush2.msra.mxu0 0.0
  %159 = vmatprep.mubr.f32.mxu0 0.0
  %160 = vmatmul.mubr.f32.gmra.mxu0 %v93
  %v161 = vpop.f32.mrf.mxu0
  %v162 = vadd.f32 %v89, %v161
  %v163 = vpop.f32.mrf.mxu0
  %164 = vdwg.mxu0
  %v165 = vtanh.pop %v162
  %v166 = vld [vmem:[%s2] sm:$0xff]
  %v167 = vld [vmem:[%s2 + $0x8] sm:$0xff]
  %v168 = vld [vmem:[%s2 + $0x10] sm:$0xff]
  %v169 = vld [vmem:[%s2 + $0x18] sm:$0xff]
  %v170 = vld [vmem:[%s2 + $0x20] sm:$0xff]
  %v171 = vld [vmem:[%s2 + $0x28] sm:$0xff]
  %v172 = vld [vmem:[%s2 + $0x30] sm:$0xff]
  %v173 = vld [vmem:[%s2 + $0x38] sm:$0xff]
  %vm174 = vcmask 261120
  %v176 = vsel %vm174, %v165, 0
  %178 = vmatprep.subr.mxu0 0.0
  %179 = vmatpush1.msra.mxu0 0.0
  %180 = vmatprep.subr.mxu0 0.0
  %181 = vmatpush1.msra.mxu0 0.0
  %182 = vmatprep.subr.mxu0 0.0
  %183 = vmatpush1.msra.mxu0 0.0
  %184 = vmatprep.subr.mxu0 0.0
  %185 = vmatpush1.msra.mxu0 0.0
  %186 = vmatprep.subr.mxu0 0.0
  %187 = vmatpush1.msra.mxu0 0.0
  %188 = vmatprep.subr.mxu0 0.0
  %189 = vmatpush1.msra.mxu0 0.0
  %190 = vmatprep.subr.mxu0 0.0
  %191 = vmatpush1.msra.mxu0 0.0
  %192 = vmatprep.subr.mxu0 0.0
  %193 = vmatpush1.msra.mxu0 0.0
  %194 = vmatprep.subr.mxu0 0.0
  %195 = vmatpush1.msra.mxu0 0.0
  %196 = vmatprep.subr.mxu0 0.0
  %197 = vmatpush1.msra.mxu0 0.0
  %198 = vmatprep.subr.mxu0 0.0
  %199 = vmatpush1.msra.mxu0 0.0
  %200 = vmatprep.subr.mxu0 0.0
  %201 = vmatpush1.msra.mxu0 0.0
  %202 = vmatprep.subr.mxu0 %v173
  %203 = vmatpush1.msra.mxu0 %v172
  %204 = vmatprep.subr.mxu0 %v171
  %205 = vmatpush1.msra.mxu0 %v170
  %206 = vmatprep.subr.mxu0 %v169
  %207 = vmatpush1.msra.mxu0 %v168
  %208 = vmatprep.subr.mxu0 %v167
  %209 = vmatpush1.msra.mxu0 %v166
  %210 = vmatprep.subr.mxu0 0.0
  %211 = vmatpush2.msra.mxu0 0.0
  %212 = vmatprep.subr.mxu0 0.0
  %213 = vmatpush2.msra.mxu0 0.0
  %214 = vmatprep.subr.mxu0 0.0
  %215 = vmatpush2.msra.mxu0 0.0
  %216 = vmatprep.subr.mxu0 0.0
  %217 = vmatpush2.msra.mxu0 0.0
  %218 = vmatprep.subr.mxu0 0.0
  %219 = vmatpush2.msra.mxu0 0.0
  %220 = vmatprep.subr.mxu0 0.0
  %221 = vmatpush2.msra.mxu0 0.0
  %222 = vmatprep.subr.mxu0 0.0
  %223 = vmatpush2.msra.mxu0 0.0
  %224 = vmatprep.subr.mxu0 0.0
  %225 = vmatpush2.msra.mxu0 0.0
  %226 = vmatprep.subr.mxu0 0.0
  %227 = vmatpush2.msra.mxu0 0.0
  %228 = vmatprep.subr.mxu0 0.0
  %229 = vmatpush2.msra.mxu0 0.0
  %230 = vmatprep.subr.mxu0 0.0
  %231 = vmatpush2.msra.mxu0 0.0
  %232 = vmatprep.subr.mxu0 0.0
  %233 = vmatpush2.msra.mxu0 0.0
  %234 = vmatprep.subr.mxu0 0.0
  %235 = vmatpush2.msra.mxu0 0.0
  %236 = vmatprep.subr.mxu0 0.0
  %237 = vmatpush2.msra.mxu0 0.0
  %238 = vmatprep.subr.mxu0 0.0
  %239 = vmatpush2.msra.mxu0 0.0
  %240 = vmatprep.subr.mxu0 0.0
  %241 = vmatpush2.msra.mxu0 0.0
  %242 = vmatprep.mubr.f32.mxu0 0.0
  %243 = vmatmul.mubr.f32.gmra.mxu0 %v176
  %v244 = vpop.f32.mrf.mxu0
  %v245 = vadd.f32 0.0, %v244
  %v246 = vpop.f32.mrf.mxu0
  %v247 = vadd.f32 0.0, %v246
  %248 = vdwg.mxu0
  %v249 = vld [vmem:[%s3] sm:$0xff]
  %v250 = vld [vmem:[%s3 + $0x8] sm:$0xff]
  %v251 = vld [vmem:[%s3 + $0x10] sm:$0xff]
  %v252 = vld [vmem:[%s3 + $0x18] sm:$0xff]
  %v253 = vld [vmem:[%s3 + $0x20] sm:$0xff]
  %v254 = vld [vmem:[%s3 + $0x28] sm:$0xff]
  %v255 = vld [vmem:[%s3 + $0x30] sm:$0xff]
  %v256 = vld [vmem:[%s3 + $0x38] sm:$0xff]
  %v257 = vld [vmem:[%s3 + $0x40] sm:$0xff]
  %v258 = vld [vmem:[%s3 + $0x48] sm:$0xff]
  %v259 = vld [vmem:[%s3 + $0x50] sm:$0xff]
  %v260 = vld [vmem:[%s3 + $0x58] sm:$0xff]
  %v261 = vld [vmem:[%s3 + $0x60] sm:$0xff]
  %v262 = vld [vmem:[%s3 + $0x68] sm:$0xff]
  %v263 = vld [vmem:[%s3 + $0x70] sm:$0xff]
  %v264 = vld [vmem:[%s3 + $0x78] sm:$0xff]
  %v265 = vld [vmem:[%s3 + $0x80] sm:$0xff]
  %v266 = vld [vmem:[%s3 + $0x88] sm:$0xff]
  %v267 = vld [vmem:[%s3 + $0x90] sm:$0xff]
  %v268 = vld [vmem:[%s3 + $0x98] sm:$0xff]
  %v269 = vld [vmem:[%s3 + $0xa0] sm:$0xff]
  %v270 = vld [vmem:[%s3 + $0xa8] sm:$0xff]
  %v271 = vld [vmem:[%s3 + $0xb0] sm:$0xff]
  %v272 = vld [vmem:[%s3 + $0xb8] sm:$0xff]
  %v273 = vld [vmem:[%s3 + $0xc0] sm:$0xff]
  %v274 = vld [vmem:[%s3 + $0xc8] sm:$0xff]
  %v275 = vld [vmem:[%s3 + $0xd0] sm:$0xff]
  %v276 = vld [vmem:[%s3 + $0xd8] sm:$0xff]
  %v277 = vld [vmem:[%s3 + $0xe0] sm:$0xff]
  %v278 = vld [vmem:[%s3 + $0xe8] sm:$0xff]
  %v279 = vld [vmem:[%s3 + $0xf0] sm:$0xff]
  %v280 = vld [vmem:[%s3 + $0xf8] sm:$0xff]
  %v281 = vld [vmem:[%s3 + $0x100] sm:$0xff]
  %v282 = vld [vmem:[%s3 + $0x108] sm:$0xff]
  %v283 = vld [vmem:[%s3 + $0x110] sm:$0xff]
  %v284 = vld [vmem:[%s3 + $0x118] sm:$0xff]
  %v285 = vld [vmem:[%s3 + $0x120] sm:$0xff]
  %v286 = vld [vmem:[%s3 + $0x128] sm:$0xff]
  %v287 = vld [vmem:[%s3 + $0x130] sm:$0xff]
  %v288 = vld [vmem:[%s3 + $0x138] sm:$0xff]
  %v289 = vld [vmem:[%s3 + $0x140] sm:$0xff]
  %v290 = vld [vmem:[%s3 + $0x148] sm:$0xff]
  %v291 = vld [vmem:[%s3 + $0x150] sm:$0xff]
  %v292 = vld [vmem:[%s3 + $0x158] sm:$0xff]
  %v293 = vld [vmem:[%s3 + $0x160] sm:$0xff]
  %v294 = vld [vmem:[%s3 + $0x168] sm:$0xff]
  %v295 = vld [vmem:[%s3 + $0x170] sm:$0xff]
  %v296 = vld [vmem:[%s3 + $0x178] sm:$0xff]
  %v298 = vsel %vm91, %v48, 0
  %v301 = vsel %vm91, %v50, 0
  %303 = vmatprep.subr.mxu0 %v280
  %304 = vmatpush1.msra.mxu0 %v279
  %305 = vmatprep.subr.mxu0 %v278
  %306 = vmatpush1.msra.mxu0 %v277
  %307 = vmatprep.subr.mxu0 %v276
  %308 = vmatpush1.msra.mxu0 %v275
  %309 = vmatprep.subr.mxu0 %v274
  %310 = vmatpush1.msra.mxu0 %v273
  %311 = vmatprep.subr.mxu0 %v272
  %312 = vmatpush1.msra.mxu0 %v271
  %313 = vmatprep.subr.mxu0 %v270
  %314 = vmatpush1.msra.mxu0 %v269
  %315 = vmatprep.subr.mxu0 %v268
  %316 = vmatpush1.msra.mxu0 %v267
  %317 = vmatprep.subr.mxu0 %v266
  %318 = vmatpush1.msra.mxu0 %v265
  %319 = vmatprep.subr.mxu0 %v264
  %320 = vmatpush1.msra.mxu0 %v263
  %321 = vmatprep.subr.mxu0 %v262
  %322 = vmatpush1.msra.mxu0 %v261
  %323 = vmatprep.subr.mxu0 %v260
  %324 = vmatpush1.msra.mxu0 %v259
  %325 = vmatprep.subr.mxu0 %v258
  %326 = vmatpush1.msra.mxu0 %v257
  %327 = vmatprep.subr.mxu0 %v256
  %328 = vmatpush1.msra.mxu0 %v255
  %329 = vmatprep.subr.mxu0 %v254
  %330 = vmatpush1.msra.mxu0 %v253
  %331 = vmatprep.subr.mxu0 %v252
  %332 = vmatpush1.msra.mxu0 %v251
  %333 = vmatprep.subr.mxu0 %v250
  %334 = vmatpush1.msra.mxu0 %v249
  %335 = vmatprep.subr.mxu0 0.0
  %336 = vmatpush2.msra.mxu0 0.0
  %337 = vmatprep.subr.mxu0 0.0
  %338 = vmatpush2.msra.mxu0 0.0
  %339 = vmatprep.subr.mxu0 0.0
  %340 = vmatpush2.msra.mxu0 0.0
  %341 = vmatprep.subr.mxu0 0.0
  %342 = vmatpush2.msra.mxu0 0.0
  %343 = vmatprep.subr.mxu0 0.0
  %344 = vmatpush2.msra.mxu0 0.0
  %345 = vmatprep.subr.mxu0 0.0
  %346 = vmatpush2.msra.mxu0 0.0
  %347 = vmatprep.subr.mxu0 0.0
  %348 = vmatpush2.msra.mxu0 0.0
  %349 = vmatprep.subr.mxu0 0.0
  %350 = vmatpush2.msra.mxu0 0.0
  %351 = vmatprep.subr.mxu0 %v296
  %352 = vmatpush2.msra.mxu0 %v295
  %353 = vmatprep.subr.mxu0 %v294
  %354 = vmatpush2.msra.mxu0 %v293
  %355 = vmatprep.subr.mxu0 %v292
  %356 = vmatpush2.msra.mxu0 %v291
  %357 = vmatprep.subr.mxu0 %v290
  %358 = vmatpush2.msra.mxu0 %v289
  %359 = vmatprep.subr.mxu0 %v288
  %360 = vmatpush2.msra.mxu0 %v287
  %361 = vmatprep.subr.mxu0 %v286
  %362 = vmatpush2.msra.mxu0 %v285
  %363 = vmatprep.subr.mxu0 %v284
  %364 = vmatpush2.msra.mxu0 %v283
  %365 = vmatprep.subr.mxu0 %v282
  %366 = vmatpush2.msra.mxu0 %v281
  %367 = vmatprep.mubr.f32.mxu0 %v298
  %368 = vmatmul.mubr.f32.gmra.mxu0 %v47
  %v369 = vpop.f32.mrf.mxu0
  %v370 = vadd.f32 0.0, %v369
  %v371 = vpop.f32.mrf.mxu0
  %v372 = vadd.f32 0.0, %v371
  %373 = vmatprep.mubr.f32.mxu0 %v301
  %374 = vmatmul.mubr.f32.gmra.mxu0 %v49
  %v375 = vpop.f32.mrf.mxu0
  %v376 = vadd.f32 0.0, %v375
  %v377 = vpop.f32.mrf.mxu0
  %v378 = vadd.f32 0.0, %v377
  %379 = vdwg.mxu0
  %v382 = vcombine.low %v245, %v247
  %v384 = vunpack.c.l.s4 1966171168
  %v385 = vunpack.c.0.s8 %v384
  %v386 = vlaneseq
  %v387 = vshrl.u32 %v386, 7
  %v388 = vsub.s32 %v385, %v387
  %v389 = vrot.slane %v382, %v388
  %v390 = vcombine.high %v389, %v389
  %v392 = vunpack.c.l.s4 1966171168
  %v393 = vunpack.c.0.s8 %v392
  %v394 = vlaneseq
  %v395 = vshrl.u32 %v394, 7
  %v396 = vsub.s32 %v393, %v395
  %v397 = vrot.slane %v389, %v396
  %v399 = vunpack.c.l.s4 1966171168
  %v400 = vunpack.c.0.s8 %v399
  %v401 = vlaneseq
  %v402 = vshrl.u32 %v401, 7
  %v403 = vsub.s32 %v400, %v402
  %v404 = vrot.slane %v390, %v403
  %v405 = vlaneseq
  %v406 = vshrl.u32 %v405, 7
  %v407 = vsub.s32 0, %v406
  %v408 = vrot.slane %v397, %v407
  %v409 = vlaneseq
  %v410 = vshrl.u32 %v409, 7
  %v411 = vsub.s32 1, %v410
  %v412 = vrot.slane %v397, %v411
  %v413 = vlaneseq
  %v414 = vshrl.u32 %v413, 7
  %v415 = vsub.s32 0, %v414
  %v416 = vrot.slane %v404, %v415
  %v417 = vlaneseq
  %v418 = vshrl.u32 %v417, 7
  %v419 = vsub.s32 1, %v418
  %v420 = vrot.slane %v404, %v419
  %v425 = vadd.f32 %v408, %v370
  %v426 = vadd.f32 %v412, %v372
  %v427 = vadd.f32 %v416, %v376
  %v428 = vadd.f32 %v420, %v378
  %v429 = vld [vmem:[%s4] sm:$0x3]
  %v431 = vlaneseq
  %v432 = vshrl.u32 %v431, 7
  %v433 = vsub.s32 0, %v432
  %v434 = vrot.slane %v429, %v433
  %v435 = vlaneseq
  %v436 = vshrl.u32 %v435, 7
  %v437 = vsub.s32 1, %v436
  %v438 = vrot.slane %v429, %v437
  %v441 = vadd.f32 %v425, %v434
  %v442 = vadd.f32 %v426, %v438
  %v443 = vadd.f32 %v427, %v434
  %v444 = vadd.f32 %v428, %v438
  %v445 = vtanh.pop %v441
  %v446 = vtanh.pop %v442
  %v447 = vtanh.pop %v443
  %v448 = vtanh.pop %v444
  %v449 = vld [vmem:[%s5] sm:$0xff]
  %v450 = vld [vmem:[%s5 + $0x8] sm:$0xff]
  %v451 = vld [vmem:[%s5 + $0x10] sm:$0xff]
  %v452 = vld [vmem:[%s5 + $0x18] sm:$0xff]
  %v453 = vld [vmem:[%s5 + $0x20] sm:$0xff]
  %v454 = vld [vmem:[%s5 + $0x28] sm:$0xff]
  %v455 = vld [vmem:[%s5 + $0x30] sm:$0xff]
  %v456 = vld [vmem:[%s5 + $0x38] sm:$0xff]
  %v457 = vld [vmem:[%s5 + $0x40] sm:$0xff]
  %v458 = vld [vmem:[%s5 + $0x48] sm:$0xff]
  %v459 = vld [vmem:[%s5 + $0x50] sm:$0xff]
  %v460 = vld [vmem:[%s5 + $0x58] sm:$0xff]
  %v461 = vld [vmem:[%s5 + $0x60] sm:$0xff]
  %v462 = vld [vmem:[%s5 + $0x68] sm:$0xff]
  %v463 = vld [vmem:[%s5 + $0x70] sm:$0xff]
  %v464 = vld [vmem:[%s5 + $0x78] sm:$0xff]
  %v465 = vld [vmem:[%s5 + $0x80] sm:$0xff]
  %v466 = vld [vmem:[%s5 + $0x88] sm:$0xff]
  %v467 = vld [vmem:[%s5 + $0x90] sm:$0xff]
  %v468 = vld [vmem:[%s5 + $0x98] sm:$0xff]
  %v469 = vld [vmem:[%s5 + $0xa0] sm:$0xff]
  %v470 = vld [vmem:[%s5 + $0xa8] sm:$0xff]
  %v471 = vld [vmem:[%s5 + $0xb0] sm:$0xff]
  %v472 = vld [vmem:[%s5 + $0xb8] sm:$0xff]
  %v474 = vsel %vm91, %v446, 0
  %v477 = vsel %vm91, %v448, 0
  %479 = vmatprep.subr.mxu0 0.0
  %480 = vmatpush1.msra.mxu0 %v464
  %481 = vmatprep.subr.mxu0 0.0
  %482 = vmatpush1.msra.mxu0 %v463
  %483 = vmatprep.subr.mxu0 0.0
  %484 = vmatpush1.msra.mxu0 %v462
  %485 = vmatprep.subr.mxu0 0.0
  %486 = vmatpush1.msra.mxu0 %v461
  %487 = vmatprep.subr.mxu0 0.0
  %488 = vmatpush1.msra.mxu0 %v460
  %489 = vmatprep.subr.mxu0 0.0
  %490 = vmatpush1.msra.mxu0 %v459
  %491 = vmatprep.subr.mxu0 0.0
  %492 = vmatpush1.msra.mxu0 %v458
  %493 = vmatprep.subr.mxu0 0.0
  %494 = vmatpush1.msra.mxu0 %v457
  %495 = vmatprep.subr.mxu0 0.0
  %496 = vmatpush1.msra.mxu0 %v456
  %497 = vmatprep.subr.mxu0 0.0
  %498 = vmatpush1.msra.mxu0 %v455
  %499 = vmatprep.subr.mxu0 0.0
  %500 = vmatpush1.msra.mxu0 %v454
  %501 = vmatprep.subr.mxu0 0.0
  %502 = vmatpush1.msra.mxu0 %v453
  %503 = vmatprep.subr.mxu0 0.0
  %504 = vmatpush1.msra.mxu0 %v452
  %505 = vmatprep.subr.mxu0 0.0
  %506 = vmatpush1.msra.mxu0 %v451
  %507 = vmatprep.subr.mxu0 0.0
  %508 = vmatpush1.msra.mxu0 %v450
  %509 = vmatprep.subr.mxu0 0.0
  %510 = vmatpush1.msra.mxu0 %v449
  %511 = vmatprep.subr.mxu0 0.0
  %512 = vmatpush2.msra.mxu0 0.0
  %513 = vmatprep.subr.mxu0 0.0
  %514 = vmatpush2.msra.mxu0 0.0
  %515 = vmatprep.subr.mxu0 0.0
  %516 = vmatpush2.msra.mxu0 0.0
  %517 = vmatprep.subr.mxu0 0.0
  %518 = vmatpush2.msra.mxu0 0.0
  %519 = vmatprep.subr.mxu0 0.0
  %520 = vmatpush2.msra.mxu0 0.0
  %521 = vmatprep.subr.mxu0 0.0
  %522 = vmatpush2.msra.mxu0 0.0
  %523 = vmatprep.subr.mxu0 0.0
  %524 = vmatpush2.msra.mxu0 0.0
  %525 = vmatprep.subr.mxu0 0.0
  %526 = vmatpush2.msra.mxu0 0.0
  %527 = vmatprep.subr.mxu0 0.0
  %528 = vmatpush2.msra.mxu0 %v472
  %529 = vmatprep.subr.mxu0 0.0
  %530 = vmatpush2.msra.mxu0 %v471
  %531 = vmatprep.subr.mxu0 0.0
  %532 = vmatpush2.msra.mxu0 %v470
  %533 = vmatprep.subr.mxu0 0.0
  %534 = vmatpush2.msra.mxu0 %v469
  %535 = vmatprep.subr.mxu0 0.0
  %536 = vmatpush2.msra.mxu0 %v468
  %537 = vmatprep.subr.mxu0 0.0
  %538 = vmatpush2.msra.mxu0 %v467
  %539 = vmatprep.subr.mxu0 0.0
  %540 = vmatpush2.msra.mxu0 %v466
  %541 = vmatprep.subr.mxu0 0.0
  %542 = vmatpush2.msra.mxu0 %v465
  %543 = vmatprep.mubr.f32.mxu0 %v474
  %544 = vmatmul.mubr.f32.gmra.mxu0 %v445
  %v545 = vpop.f32.mrf.mxu0
  %v546 = vadd.f32 0.0, %v545
  %v547 = vpop.f32.mrf.mxu0
  %548 = vmatprep.mubr.f32.mxu0 %v477
  %549 = vmatmul.mubr.f32.gmra.mxu0 %v447
  %v550 = vpop.f32.mrf.mxu0
  %v551 = vadd.f32 0.0, %v550
  %v552 = vpop.f32.mrf.mxu0
  %553 = vdwg.mxu0
  %vm554 = vcmask 48128
  %v555 = vsel %vm554, %v546, -inf
  %v556 = vrot.slane %v555, 4
  %v557 = vmax.f32 %v555, %v556
  %v558 = vrot.slane %v557, 2
  %v559 = vmax.f32 %v557, %v558
  %v560 = vrot.slane %v559, 1
  %v561 = vmax.f32 %v559, %v560
  %v562 = vsel %vm554, %v551, -inf
  %v563 = vrot.slane %v562, 4
  %v564 = vmax.f32 %v562, %v563
  %v565 = vrot.slane %v564, 2
  %v566 = vmax.f32 %v564, %v565
  %v567 = vrot.slane %v566, 1
  %v568 = vmax.f32 %v566, %v567
  %v569 = vsub.f32 %v546, %v561
  %v570 = vsub.f32 %v551, %v568
  %v571 = vmul.f32 %v569, 1.442695
  %v572 = vpow.pop %v571
  %v573 = vmul.f32 %v570, 1.442695
  %v574 = vpow.pop %v573
  %v575 = vsel %vm554, %v572, 0.0
  %v576 = vrot.slane %v575, 4
  %v577 = vadd.f32 %v575, %v576
  %v578 = vrot.slane %v577, 2
  %v579 = vadd.f32 %v577, %v578
  %v580 = vrot.slane %v579, 1
  %v581 = vadd.f32 %v579, %v580
  %v582 = vsel %vm554, %v574, 0.0
  %v583 = vrot.slane %v582, 4
  %v584 = vadd.f32 %v582, %v583
  %v585 = vrot.slane %v584, 2
  %v586 = vadd.f32 %v584, %v585
  %v587 = vrot.slane %v586, 1
  %v588 = vadd.f32 %v586, %v587
  %v589 = vrcp.pop %v581
  %v590 = vrcp.pop %v588
  %v591 = vmul.f32 %v572, %v589
  %v592 = vmul.f32 %v574, %v590
  %v594 = vsel %vm554, %v591, 0
  %v597 = vsel %vm554, %v592, 0
  %vm599 = vcmask 1045504
  %v601 = vsel %vm599, %v74, 0
  %v604 = vsel %vm599, %v75, 0
  %606 = vmatprep.subr.mxu0 0.0
  %607 = vmatpush1.msra.mxu0 0.0
  %608 = vmatprep.subr.mxu0 0.0
  %609 = vmatpush1.msra.mxu0 0.0
  %610 = vmatprep.subr.mxu0 0.0
  %611 = vmatpush1.msra.mxu0 0.0
  %612 = vmatprep.subr.mxu0 0.0
  %613 = vmatpush1.msra.mxu0 0.0
  %614 = vmatprep.subr.mxu0 0.0
  %615 = vmatpush1.msra.mxu0 0.0
  %616 = vmatprep.subr.mxu0 0.0
  %617 = vmatpush1.msra.mxu0 0.0
  %618 = vmatprep.subr.mxu0 0.0
  %619 = vmatpush1.msra.mxu0 0.0
  %620 = vmatprep.subr.mxu0 0.0
  %621 = vmatpush1.msra.mxu0 0.0
  %622 = vmatprep.subr.mxu0 0.0
  %623 = vmatpush1.msra.mxu0 0.0
  %624 = vmatprep.subr.mxu0 0.0
  %625 = vmatpush1.msra.mxu0 0.0
  %626 = vmatprep.subr.mxu0 0.0
  %627 = vmatpush1.msra.mxu0 0.0
  %628 = vmatprep.subr.mxu0 0.0
  %629 = vmatpush1.msra.mxu0 0.0
  %630 = vmatprep.subr.mxu0 0.0
  %631 = vmatpush1.msra.mxu0 0.0
  %632 = vmatprep.subr.mxu0 0.0
  %633 = vmatpush1.msra.mxu0 0.0
  %634 = vmatprep.subr.mxu0 0.0
  %635 = vmatpush1.msra.mxu0 0.0
  %636 = vmatprep.subr.mxu0 %v604
  %637 = vmatpush1.msra.mxu0 %v601
  %638 = vmatprep.subr.mxu0 0.0
  %639 = vmatpush2.msra.mxu0 0.0
  %640 = vmatprep.subr.mxu0 0.0
  %641 = vmatpush2.msra.mxu0 0.0
  %642 = vmatprep.subr.mxu0 0.0
  %643 = vmatpush2.msra.mxu0 0.0
  %644 = vmatprep.subr.mxu0 0.0
  %645 = vmatpush2.msra.mxu0 0.0
  %646 = vmatprep.subr.mxu0 0.0
  %647 = vmatpush2.msra.mxu0 0.0
  %648 = vmatprep.subr.mxu0 0.0
  %649 = vmatpush2.msra.mxu0 0.0
  %650 = vmatprep.subr.mxu0 0.0
  %651 = vmatpush2.msra.mxu0 0.0
  %652 = vmatprep.subr.mxu0 0.0
  %653 = vmatpush2.msra.mxu0 0.0
  %654 = vmatprep.subr.mxu0 0.0
  %655 = vmatpush2.msra.mxu0 0.0
  %656 = vmatprep.subr.mxu0 0.0
  %657 = vmatpush2.msra.mxu0 0.0
  %658 = vmatprep.subr.mxu0 0.0
  %659 = vmatpush2.msra.mxu0 0.0
  %660 = vmatprep.subr.mxu0 0.0
  %661 = vmatpush2.msra.mxu0 0.0
  %662 = vmatprep.subr.mxu0 0.0
  %663 = vmatpush2.msra.mxu0 0.0
  %664 = vmatprep.subr.mxu0 0.0
  %665 = vmatpush2.msra.mxu0 0.0
  %666 = vmatprep.subr.mxu0 0.0
  %667 = vmatpush2.msra.mxu0 0.0
  %668 = vmatprep.subr.mxu0 0.0
  %669 = vmatpush2.msra.mxu0 0.0
  %670 = vmatprep.mubr.f32.mxu0 0.0
  %671 = vmatmul.mubr.f32.gmra.mxu0 %v594
  %v672 = vpop.f32.mrf.mxu0
  %v673 = vadd.f32 0.0, %v672
  %v674 = vpop.f32.mrf.mxu0
  %v675 = vadd.f32 0.0, %v674
  %676 = vmatprep.mubr.f32.mxu0 0.0
  %677 = vmatmul.mubr.f32.gmra.mxu0 %v597
  %v678 = vpop.f32.mrf.mxu0
  %v679 = vadd.f32 0.0, %v678
  %v680 = vpop.f32.mrf.mxu0
  %v681 = vadd.f32 0.0, %v680
  %682 = vdwg.mxu0
  %v683 = vmul.f32 %v673, %v47
  %v684 = vmul.f32 %v675, %v48
  %v685 = vmul.f32 %v679, %v49
  %v686 = vmul.f32 %v681, %v50
  %v687 = vrot.slane %v683, 4
  %v688 = vadd.f32 %v683, %v687
  %v689 = vrot.slane %v688, 2
  %v690 = vadd.f32 %v688, %v689
  %v691 = vrot.slane %v690, 1
  %v692 = vadd.f32 %v690, %v691
  %v693 = vsel %vm91, %v684, 0.0
  %v694 = vrot.slane %v693, 4
  %v695 = vadd.f32 %v693, %v694
  %v696 = vrot.slane %v695, 2
  %v697 = vadd.f32 %v695, %v696
  %v698 = vrot.slane %v697, 1
  %v699 = vadd.f32 %v697, %v698
  %v700 = vrot.slane %v685, 4
  %v701 = vadd.f32 %v685, %v700
  %v702 = vrot.slane %v701, 2
  %v703 = vadd.f32 %v701, %v702
  %v704 = vrot.slane %v703, 1
  %v705 = vadd.f32 %v703, %v704
  %v706 = vsel %vm91, %v686, 0.0
  %v707 = vrot.slane %v706, 4
  %v708 = vadd.f32 %v706, %v707
  %v709 = vrot.slane %v708, 2
  %v710 = vadd.f32 %v708, %v709
  %v711 = vrot.slane %v710, 1
  %v712 = vadd.f32 %v710, %v711
  %713 = vrot.lane.b32.xlu0 %v165, 64
  %v714 = vpop.permute.xlu0 %713
  %vm720 = vcmask 1041409
  %v721 = vsel %vm720, %v705, %v692
  %v722 = vsel %vm720, %v712, %v699
  %723 = vrot.lane.b32.xlu0 %v721, 96
  %v724 = vpop.permute.xlu0 %723
  %725 = vrot.lane.b32.xlu0 %v722, 96
  %v726 = vpop.permute.xlu0 %725
  %vm727 = vcmask 785408
  %v728 = vsel %vm727, %v724, %v726
  %v731 = vsel %vm91, %v55, %v714
  %v732 = vsel %vm727, %v731, %v724
  %v733 = vld [vmem:[%s9] sm:$0xff]
  %v734 = vld [vmem:[%s9 + $0x8] sm:$0xff]
  %v735 = vld [vmem:[%s9 + $0x10] sm:$0xff]
  %v736 = vld [vmem:[%s9 + $0x18] sm:$0xff]
  %v737 = vld [vmem:[%s9 + $0x20] sm:$0xff]
  %v738 = vld [vmem:[%s9 + $0x28] sm:$0xff]
  %v739 = vld [vmem:[%s9 + $0x30] sm:$0xff]
  %v740 = vld [vmem:[%s9 + $0x38] sm:$0xff]
  %v741 = vld [vmem:[%s9 + $0x40] sm:$0xff]
  %v742 = vld [vmem:[%s9 + $0x48] sm:$0xff]
  %v743 = vld [vmem:[%s9 + $0x50] sm:$0xff]
  %v744 = vld [vmem:[%s9 + $0x58] sm:$0xff]
  %v745 = vld [vmem:[%s9 + $0x60] sm:$0xff]
  %v746 = vld [vmem:[%s9 + $0x68] sm:$0xff]
  %v747 = vld [vmem:[%s9 + $0x70] sm:$0xff]
  %v748 = vld [vmem:[%s9 + $0x78] sm:$0xff]
  %v749 = vld [vmem:[%s9 + $0x80] sm:$0xff]
  %v750 = vld [vmem:[%s9 + $0x88] sm:$0xff]
  %v751 = vld [vmem:[%s9 + $0x90] sm:$0xff]
  %v752 = vld [vmem:[%s9 + $0x98] sm:$0xff]
  %v753 = vld [vmem:[%s9 + $0xa0] sm:$0xff]
  %v754 = vld [vmem:[%s9 + $0xa8] sm:$0xff]
  %v755 = vld [vmem:[%s9 + $0xb0] sm:$0xff]
  %v756 = vld [vmem:[%s9 + $0xb8] sm:$0xff]
  %v757 = vld [vmem:[%s9 + $0xc0] sm:$0xff]
  %v758 = vld [vmem:[%s9 + $0xc8] sm:$0xff]
  %v759 = vld [vmem:[%s9 + $0xd0] sm:$0xff]
  %v760 = vld [vmem:[%s9 + $0xd8] sm:$0xff]
  %v761 = vld [vmem:[%s9 + $0xe0] sm:$0xff]
  %v762 = vld [vmem:[%s9 + $0xe8] sm:$0xff]
  %v763 = vld [vmem:[%s9 + $0xf0] sm:$0xff]
  %v764 = vld [vmem:[%s9 + $0xf8] sm:$0xff]
  %v765 = vld [vmem:[%s9 + $0x100] sm:$0xff]
  %v766 = vld [vmem:[%s9 + $0x108] sm:$0xff]
  %v767 = vld [vmem:[%s9 + $0x110] sm:$0xff]
  %v768 = vld [vmem:[%s9 + $0x118] sm:$0xff]
  %s769 = scalar_lea.vmem %s8, 3
  %v770 = vld [vmem:[%s769] sm:$0x1]
  %v772 = vlaneseq
  %v773 = vshrl.u32 %v772, 7
  %v774 = vsub.s32 0, %v773
  %v775 = vrot.slane %v770, %v774
  %v777 = vsel %vm174, %v726, 0
  %779 = vmatprep.subr.mxu0 0.0
  %780 = vmatpush1.msra.mxu0 %v748
  %781 = vmatprep.subr.mxu0 0.0
  %782 = vmatpush1.msra.mxu0 %v747
  %783 = vmatprep.subr.mxu0 0.0
  %784 = vmatpush1.msra.mxu0 %v746
  %785 = vmatprep.subr.mxu0 0.0
  %786 = vmatpush1.msra.mxu0 %v745
  %787 = vmatprep.subr.mxu0 0.0
  %788 = vmatpush1.msra.mxu0 %v744
  %789 = vmatprep.subr.mxu0 0.0
  %790 = vmatpush1.msra.mxu0 %v743
  %791 = vmatprep.subr.mxu0 0.0
  %792 = vmatpush1.msra.mxu0 %v742
  %793 = vmatprep.subr.mxu0 0.0
  %794 = vmatpush1.msra.mxu0 %v741
  %795 = vmatprep.subr.mxu0 0.0
  %796 = vmatpush1.msra.mxu0 %v740
  %797 = vmatprep.subr.mxu0 0.0
  %798 = vmatpush1.msra.mxu0 %v739
  %799 = vmatprep.subr.mxu0 0.0
  %800 = vmatpush1.msra.mxu0 %v738
  %801 = vmatprep.subr.mxu0 0.0
  %802 = vmatpush1.msra.mxu0 %v737
  %803 = vmatprep.subr.mxu0 0.0
  %804 = vmatpush1.msra.mxu0 %v736
  %805 = vmatprep.subr.mxu0 0.0
  %806 = vmatpush1.msra.mxu0 %v735
  %807 = vmatprep.subr.mxu0 0.0
  %808 = vmatpush1.msra.mxu0 %v734
  %809 = vmatprep.subr.mxu0 0.0
  %810 = vmatpush1.msra.mxu0 %v733
  %811 = vmatprep.subr.mxu0 0.0
  %812 = vmatpush2.msra.mxu0 %v764
  %813 = vmatprep.subr.mxu0 0.0
  %814 = vmatpush2.msra.mxu0 %v763
  %815 = vmatprep.subr.mxu0 0.0
  %816 = vmatpush2.msra.mxu0 %v762
  %817 = vmatprep.subr.mxu0 0.0
  %818 = vmatpush2.msra.mxu0 %v761
  %819 = vmatprep.subr.mxu0 0.0
  %820 = vmatpush2.msra.mxu0 %v760
  %821 = vmatprep.subr.mxu0 0.0
  %822 = vmatpush2.msra.mxu0 %v759
  %823 = vmatprep.subr.mxu0 0.0
  %824 = vmatpush2.msra.mxu0 %v758
  %825 = vmatprep.subr.mxu0 0.0
  %826 = vmatpush2.msra.mxu0 %v757
  %827 = vmatprep.subr.mxu0 0.0
  %828 = vmatpush2.msra.mxu0 %v756
  %829 = vmatprep.subr.mxu0 0.0
  %830 = vmatpush2.msra.mxu0 %v755
  %831 = vmatprep.subr.mxu0 0.0
  %832 = vmatpush2.msra.mxu0 %v754
  %833 = vmatprep.subr.mxu0 0.0
  %834 = vmatpush2.msra.mxu0 %v753
  %835 = vmatprep.subr.mxu0 0.0
  %836 = vmatpush2.msra.mxu0 %v752
  %837 = vmatprep.subr.mxu0 0.0
  %838 = vmatpush2.msra.mxu0 %v751
  %839 = vmatprep.subr.mxu0 0.0
  %840 = vmatpush2.msra.mxu0 %v750
  %841 = vmatprep.subr.mxu0 0.0
  %842 = vmatpush2.msra.mxu0 %v749
  %843 = vmatprep.mubr.f32.mxu0 %v728
  %844 = vmatmul.mubr.f32.gmra.mxu0 %v732
  %v845 = vpop.f32.mrf.mxu0
  %v846 = vadd.f32 %v775, %v845
  %v847 = vpop.f32.mrf.mxu0
  %848 = vdwg.mxu0
  %849 = vmatprep.subr.mxu0 0.0
  %850 = vmatpush1.msra.mxu0 0.0
  %851 = vmatprep.subr.mxu0 0.0
  %852 = vmatpush1.msra.mxu0 0.0
  %853 = vmatprep.subr.mxu0 0.0
  %854 = vmatpush1.msra.mxu0 0.0
  %855 = vmatprep.subr.mxu0 0.0
  %856 = vmatpush1.msra.mxu0 0.0
  %857 = vmatprep.subr.mxu0 0.0
  %858 = vmatpush1.msra.mxu0 0.0
  %859 = vmatprep.subr.mxu0 0.0
  %860 = vmatpush1.msra.mxu0 0.0
  %861 = vmatprep.subr.mxu0 0.0
  %862 = vmatpush1.msra.mxu0 0.0
  %863 = vmatprep.subr.mxu0 0.0
  %864 = vmatpush1.msra.mxu0 0.0
  %865 = vmatprep.subr.mxu0 0.0
  %866 = vmatpush1.msra.mxu0 0.0
  %867 = vmatprep.subr.mxu0 0.0
  %868 = vmatpush1.msra.mxu0 0.0
  %869 = vmatprep.subr.mxu0 0.0
  %870 = vmatpush1.msra.mxu0 0.0
  %871 = vmatprep.subr.mxu0 0.0
  %872 = vmatpush1.msra.mxu0 0.0
  %873 = vmatprep.subr.mxu0 0.0
  %874 = vmatpush1.msra.mxu0 %v768
  %875 = vmatprep.subr.mxu0 0.0
  %876 = vmatpush1.msra.mxu0 %v767
  %877 = vmatprep.subr.mxu0 0.0
  %878 = vmatpush1.msra.mxu0 %v766
  %879 = vmatprep.subr.mxu0 0.0
  %880 = vmatpush1.msra.mxu0 %v765
  %881 = vmatprep.subr.mxu0 0.0
  %882 = vmatpush2.msra.mxu0 0.0
  %883 = vmatprep.subr.mxu0 0.0
  %884 = vmatpush2.msra.mxu0 0.0
  %885 = vmatprep.subr.mxu0 0.0
  %886 = vmatpush2.msra.mxu0 0.0
  %887 = vmatprep.subr.mxu0 0.0
  %888 = vmatpush2.msra.mxu0 0.0
  %889 = vmatprep.subr.mxu0 0.0
  %890 = vmatpush2.msra.mxu0 0.0
  %891 = vmatprep.subr.mxu0 0.0
  %892 = vmatpush2.msra.mxu0 0.0
  %893 = vmatprep.subr.mxu0 0.0
  %894 = vmatpush2.msra.mxu0 0.0
  %895 = vmatprep.subr.mxu0 0.0
  %896 = vmatpush2.msra.mxu0 0.0
  %897 = vmatprep.subr.mxu0 0.0
  %898 = vmatpush2.msra.mxu0 0.0
  %899 = vmatprep.subr.mxu0 0.0
  %900 = vmatpush2.msra.mxu0 0.0
  %901 = vmatprep.subr.mxu0 0.0
  %902 = vmatpush2.msra.mxu0 0.0
  %903 = vmatprep.subr.mxu0 0.0
  %904 = vmatpush2.msra.mxu0 0.0
  %905 = vmatprep.subr.mxu0 0.0
  %906 = vmatpush2.msra.mxu0 0.0
  %907 = vmatprep.subr.mxu0 0.0
  %908 = vmatpush2.msra.mxu0 0.0
  %909 = vmatprep.subr.mxu0 0.0
  %910 = vmatpush2.msra.mxu0 0.0
  %911 = vmatprep.subr.mxu0 0.0
  %912 = vmatpush2.msra.mxu0 0.0
  %913 = vmatprep.mubr.f32.mxu0 0.0
  %914 = vmatmul.mubr.f32.gmra.mxu0 %v777
  %v915 = vpop.f32.mrf.mxu0
  %v916 = vadd.f32 %v846, %v915
  %v917 = vpop.f32.mrf.mxu0
  %918 = vdwg.mxu0
  %s919 = scalar_lea.vmem %s9, 288
  %v920 = vld [vmem:[%s919] sm:$0xff]
  %v921 = vld [vmem:[%s919 + $0x8] sm:$0xff]
  %v922 = vld [vmem:[%s919 + $0x10] sm:$0xff]
  %v923 = vld [vmem:[%s919 + $0x18] sm:$0xff]
  %v924 = vld [vmem:[%s919 + $0x20] sm:$0xff]
  %v925 = vld [vmem:[%s919 + $0x28] sm:$0xff]
  %v926 = vld [vmem:[%s919 + $0x30] sm:$0xff]
  %v927 = vld [vmem:[%s919 + $0x38] sm:$0xff]
  %v928 = vld [vmem:[%s919 + $0x40] sm:$0xff]
  %v929 = vld [vmem:[%s919 + $0x48] sm:$0xff]
  %v930 = vld [vmem:[%s919 + $0x50] sm:$0xff]
  %v931 = vld [vmem:[%s919 + $0x58] sm:$0xff]
  %v932 = vld [vmem:[%s919 + $0x60] sm:$0xff]
  %v933 = vld [vmem:[%s919 + $0x68] sm:$0xff]
  %v934 = vld [vmem:[%s919 + $0x70] sm:$0xff]
  %v935 = vld [vmem:[%s919 + $0x78] sm:$0xff]
  %v936 = vld [vmem:[%s919 + $0x80] sm:$0xff]
  %v937 = vld [vmem:[%s919 + $0x88] sm:$0xff]
  %v938 = vld [vmem:[%s919 + $0x90] sm:$0xff]
  %v939 = vld [vmem:[%s919 + $0x98] sm:$0xff]
  %v940 = vld [vmem:[%s919 + $0xa0] sm:$0xff]
  %v941 = vld [vmem:[%s919 + $0xa8] sm:$0xff]
  %v942 = vld [vmem:[%s919 + $0xb0] sm:$0xff]
  %v943 = vld [vmem:[%s919 + $0xb8] sm:$0xff]
  %v944 = vld [vmem:[%s919 + $0xc0] sm:$0xff]
  %v945 = vld [vmem:[%s919 + $0xc8] sm:$0xff]
  %v946 = vld [vmem:[%s919 + $0xd0] sm:$0xff]
  %v947 = vld [vmem:[%s919 + $0xd8] sm:$0xff]
  %v948 = vld [vmem:[%s919 + $0xe0] sm:$0xff]
  %v949 = vld [vmem:[%s919 + $0xe8] sm:$0xff]
  %v950 = vld [vmem:[%s919 + $0xf0] sm:$0xff]
  %v951 = vld [vmem:[%s919 + $0xf8] sm:$0xff]
  %v952 = vld [vmem:[%s919 + $0x100] sm:$0xff]
  %v953 = vld [vmem:[%s919 + $0x108] sm:$0xff]
  %v954 = vld [vmem:[%s919 + $0x110] sm:$0xff]
  %v955 = vld [vmem:[%s919 + $0x118] sm:$0xff]
  %s956 = scalar_lea.vmem %s8, 4
  %v957 = vld [vmem:[%s956] sm:$0x1]
  %v959 = vlaneseq
  %v960 = vshrl.u32 %v959, 7
  %v961 = vsub.s32 0, %v960
  %v962 = vrot.slane %v957, %v961
  %964 = vmatprep.subr.mxu0 0.0
  %965 = vmatpush1.msra.mxu0 %v935
  %966 = vmatprep.subr.mxu0 0.0
  %967 = vmatpush1.msra.mxu0 %v934
  %968 = vmatprep.subr.mxu0 0.0
  %969 = vmatpush1.msra.mxu0 %v933
  %970 = vmatprep.subr.mxu0 0.0
  %971 = vmatpush1.msra.mxu0 %v932
  %972 = vmatprep.subr.mxu0 0.0
  %973 = vmatpush1.msra.mxu0 %v931
  %974 = vmatprep.subr.mxu0 0.0
  %975 = vmatpush1.msra.mxu0 %v930
  %976 = vmatprep.subr.mxu0 0.0
  %977 = vmatpush1.msra.mxu0 %v929
  %978 = vmatprep.subr.mxu0 0.0
  %979 = vmatpush1.msra.mxu0 %v928
  %980 = vmatprep.subr.mxu0 0.0
  %981 = vmatpush1.msra.mxu0 %v927
  %982 = vmatprep.subr.mxu0 0.0
  %983 = vmatpush1.msra.mxu0 %v926
  %984 = vmatprep.subr.mxu0 0.0
  %985 = vmatpush1.msra.mxu0 %v925
  %986 = vmatprep.subr.mxu0 0.0
  %987 = vmatpush1.msra.mxu0 %v924
  %988 = vmatprep.subr.mxu0 0.0
  %989 = vmatpush1.msra.mxu0 %v923
  %990 = vmatprep.subr.mxu0 0.0
  %991 = vmatpush1.msra.mxu0 %v922
  %992 = vmatprep.subr.mxu0 0.0
  %993 = vmatpush1.msra.mxu0 %v921
  %994 = vmatprep.subr.mxu0 0.0
  %995 = vmatpush1.msra.mxu0 %v920
  %996 = vmatprep.subr.mxu0 0.0
  %997 = vmatpush2.msra.mxu0 %v951
  %998 = vmatprep.subr.mxu0 0.0
  %999 = vmatpush2.msra.mxu0 %v950
  %1000 = vmatprep.subr.mxu0 0.0
  %1001 = vmatpush2.msra.mxu0 %v949
  %1002 = vmatprep.subr.mxu0 0.0
  %1003 = vmatpush2.msra.mxu0 %v948
  %1004 = vmatprep.subr.mxu0 0.0
  %1005 = vmatpush2.msra.mxu0 %v947
  %1006 = vmatprep.subr.mxu0 0.0
  %1007 = vmatpush2.msra.mxu0 %v946
  %1008 = vmatprep.subr.mxu0 0.0
  %1009 = vmatpush2.msra.mxu0 %v945
  %1010 = vmatprep.subr.mxu0 0.0
  %1011 = vmatpush2.msra.mxu0 %v944
  %1012 = vmatprep.subr.mxu0 0.0
  %1013 = vmatpush2.msra.mxu0 %v943
  %1014 = vmatprep.subr.mxu0 0.0
  %1015 = vmatpush2.msra.mxu0 %v942
  %1016 = vmatprep.subr.mxu0 0.0
  %1017 = vmatpush2.msra.mxu0 %v941
  %1018 = vmatprep.subr.mxu0 0.0
  %1019 = vmatpush2.msra.mxu0 %v940
  %1020 = vmatprep.subr.mxu0 0.0
  %1021 = vmatpush2.msra.mxu0 %v939
  %1022 = vmatprep.subr.mxu0 0.0
  %1023 = vmatpush2.msra.mxu0 %v938
  %1024 = vmatprep.subr.mxu0 0.0
  %1025 = vmatpush2.msra.mxu0 %v937
  %1026 = vmatprep.subr.mxu0 0.0
  %1027 = vmatpush2.msra.mxu0 %v936
  %1028 = vmatprep.mubr.f32.mxu0 %v728
  %1029 = vmatmul.mubr.f32.gmra.mxu0 %v732
  %v1030 = vpop.f32.mrf.mxu0
  %v1031 = vadd.f32 %v962, %v1030
  %v1032 = vpop.f32.mrf.mxu0
  %1033 = vdwg.mxu0
  %1034 = vmatprep.subr.mxu0 0.0
  %1035 = vmatpush1.msra.mxu0 0.0
  %1036 = vmatprep.subr.mxu0 0.0
  %1037 = vmatpush1.msra.mxu0 0.0
  %1038 = vmatprep.subr.mxu0 0.0
  %1039 = vmatpush1.msra.mxu0 0.0
  %1040 = vmatprep.subr.mxu0 0.0
  %1041 = vmatpush1.msra.mxu0 0.0
  %1042 = vmatprep.subr.mxu0 0.0
  %1043 = vmatpush1.msra.mxu0 0.0
  %1044 = vmatprep.subr.mxu0 0.0
  %1045 = vmatpush1.msra.mxu0 0.0
  %1046 = vmatprep.subr.mxu0 0.0
  %1047 = vmatpush1.msra.mxu0 0.0
  %1048 = vmatprep.subr.mxu0 0.0
  %1049 = vmatpush1.msra.mxu0 0.0
  %1050 = vmatprep.subr.mxu0 0.0
  %1051 = vmatpush1.msra.mxu0 0.0
  %1052 = vmatprep.subr.mxu0 0.0
  %1053 = vmatpush1.msra.mxu0 0.0
  %1054 = vmatprep.subr.mxu0 0.0
  %1055 = vmatpush1.msra.mxu0 0.0
  %1056 = vmatprep.subr.mxu0 0.0
  %1057 = vmatpush1.msra.mxu0 0.0
  %1058 = vmatprep.subr.mxu0 0.0
  %1059 = vmatpush1.msra.mxu0 %v955
  %1060 = vmatprep.subr.mxu0 0.0
  %1061 = vmatpush1.msra.mxu0 %v954
  %1062 = vmatprep.subr.mxu0 0.0
  %1063 = vmatpush1.msra.mxu0 %v953
  %1064 = vmatprep.subr.mxu0 0.0
  %1065 = vmatpush1.msra.mxu0 %v952
  %1066 = vmatprep.subr.mxu0 0.0
  %1067 = vmatpush2.msra.mxu0 0.0
  %1068 = vmatprep.subr.mxu0 0.0
  %1069 = vmatpush2.msra.mxu0 0.0
  %1070 = vmatprep.subr.mxu0 0.0
  %1071 = vmatpush2.msra.mxu0 0.0
  %1072 = vmatprep.subr.mxu0 0.0
  %1073 = vmatpush2.msra.mxu0 0.0
  %1074 = vmatprep.subr.mxu0 0.0
  %1075 = vmatpush2.msra.mxu0 0.0
  %1076 = vmatprep.subr.mxu0 0.0
  %1077 = vmatpush2.msra.mxu0 0.0
  %1078 = vmatprep.subr.mxu0 0.0
  %1079 = vmatpush2.msra.mxu0 0.0
  %1080 = vmatprep.subr.mxu0 0.0
  %1081 = vmatpush2.msra.mxu0 0.0
  %1082 = vmatprep.subr.mxu0 0.0
  %1083 = vmatpush2.msra.mxu0 0.0
  %1084 = vmatprep.subr.mxu0 0.0
  %1085 = vmatpush2.msra.mxu0 0.0
  %1086 = vmatprep.subr.mxu0 0.0
  %1087 = vmatpush2.msra.mxu0 0.0
  %1088 = vmatprep.subr.mxu0 0.0
  %1089 = vmatpush2.msra.mxu0 0.0
  %1090 = vmatprep.subr.mxu0 0.0
  %1091 = vmatpush2.msra.mxu0 0.0
  %1092 = vmatprep.subr.mxu0 0.0
  %1093 = vmatpush2.msra.mxu0 0.0
  %1094 = vmatprep.subr.mxu0 0.0
  %1095 = vmatpush2.msra.mxu0 0.0
  %1096 = vmatprep.subr.mxu0 0.0
  %1097 = vmatpush2.msra.mxu0 0.0
  %1098 = vmatprep.mubr.f32.mxu0 0.0
  %1099 = vmatmul.mubr.f32.gmra.mxu0 %v777
  %v1100 = vpop.f32.mrf.mxu0
  %v1101 = vadd.f32 %v1031, %v1100
  %v1102 = vpop.f32.mrf.mxu0
  %1103 = vdwg.mxu0
  %s1104 = scalar_lea.vmem %s9, 576
  %v1105 = vld [vmem:[%s1104] sm:$0xff]
  %v1106 = vld [vmem:[%s1104 + $0x8] sm:$0xff]
  %v1107 = vld [vmem:[%s1104 + $0x10] sm:$0xff]
  %v1108 = vld [vmem:[%s1104 + $0x18] sm:$0xff]
  %v1109 = vld [vmem:[%s1104 + $0x20] sm:$0xff]
  %v1110 = vld [vmem:[%s1104 + $0x28] sm:$0xff]
  %v1111 = vld [vmem:[%s1104 + $0x30] sm:$0xff]
  %v1112 = vld [vmem:[%s1104 + $0x38] sm:$0xff]
  %v1113 = vld [vmem:[%s1104 + $0x40] sm:$0xff]
  %v1114 = vld [vmem:[%s1104 + $0x48] sm:$0xff]
  %v1115 = vld [vmem:[%s1104 + $0x50] sm:$0xff]
  %v1116 = vld [vmem:[%s1104 + $0x58] sm:$0xff]
  %v1117 = vld [vmem:[%s1104 + $0x60] sm:$0xff]
  %v1118 = vld [vmem:[%s1104 + $0x68] sm:$0xff]
  %v1119 = vld [vmem:[%s1104 + $0x70] sm:$0xff]
  %v1120 = vld [vmem:[%s1104 + $0x78] sm:$0xff]
  %v1121 = vld [vmem:[%s1104 + $0x80] sm:$0xff]
  %v1122 = vld [vmem:[%s1104 + $0x88] sm:$0xff]
  %v1123 = vld [vmem:[%s1104 + $0x90] sm:$0xff]
  %v1124 = vld [vmem:[%s1104 + $0x98] sm:$0xff]
  %v1125 = vld [vmem:[%s1104 + $0xa0] sm:$0xff]
  %v1126 = vld [vmem:[%s1104 + $0xa8] sm:$0xff]
  %v1127 = vld [vmem:[%s1104 + $0xb0] sm:$0xff]
  %v1128 = vld [vmem:[%s1104 + $0xb8] sm:$0xff]
  %v1129 = vld [vmem:[%s1104 + $0xc0] sm:$0xff]
  %v1130 = vld [vmem:[%s1104 + $0xc8] sm:$0xff]
  %v1131 = vld [vmem:[%s1104 + $0xd0] sm:$0xff]
  %v1132 = vld [vmem:[%s1104 + $0xd8] sm:$0xff]
  %v1133 = vld [vmem:[%s1104 + $0xe0] sm:$0xff]
  %v1134 = vld [vmem:[%s1104 + $0xe8] sm:$0xff]
  %v1135 = vld [vmem:[%s1104 + $0xf0] sm:$0xff]
  %v1136 = vld [vmem:[%s1104 + $0xf8] sm:$0xff]
  %v1137 = vld [vmem:[%s1104 + $0x100] sm:$0xff]
  %v1138 = vld [vmem:[%s1104 + $0x108] sm:$0xff]
  %v1139 = vld [vmem:[%s1104 + $0x110] sm:$0xff]
  %v1140 = vld [vmem:[%s1104 + $0x118] sm:$0xff]
  %s1141 = scalar_lea.vmem %s8, 5
  %v1142 = vld [vmem:[%s1141] sm:$0x1]
  %v1144 = vlaneseq
  %v1145 = vshrl.u32 %v1144, 7
  %v1146 = vsub.s32 0, %v1145
  %v1147 = vrot.slane %v1142, %v1146
  %1149 = vmatprep.subr.mxu0 0.0
  %1150 = vmatpush1.msra.mxu0 %v1120
  %1151 = vmatprep.subr.mxu0 0.0
  %1152 = vmatpush1.msra.mxu0 %v1119
  %1153 = vmatprep.subr.mxu0 0.0
  %1154 = vmatpush1.msra.mxu0 %v1118
  %1155 = vmatprep.subr.mxu0 0.0
  %1156 = vmatpush1.msra.mxu0 %v1117
  %1157 = vmatprep.subr.mxu0 0.0
  %1158 = vmatpush1.msra.mxu0 %v1116
  %1159 = vmatprep.subr.mxu0 0.0
  %1160 = vmatpush1.msra.mxu0 %v1115
  %1161 = vmatprep.subr.mxu0 0.0
  %1162 = vmatpush1.msra.mxu0 %v1114
  %1163 = vmatprep.subr.mxu0 0.0
  %1164 = vmatpush1.msra.mxu0 %v1113
  %1165 = vmatprep.subr.mxu0 0.0
  %1166 = vmatpush1.msra.mxu0 %v1112
  %1167 = vmatprep.subr.mxu0 0.0
  %1168 = vmatpush1.msra.mxu0 %v1111
  %1169 = vmatprep.subr.mxu0 0.0
  %1170 = vmatpush1.msra.mxu0 %v1110
  %1171 = vmatprep.subr.mxu0 0.0
  %1172 = vmatpush1.msra.mxu0 %v1109
  %1173 = vmatprep.subr.mxu0 0.0
  %1174 = vmatpush1.msra.mxu0 %v1108
  %1175 = vmatprep.subr.mxu0 0.0
  %1176 = vmatpush1.msra.mxu0 %v1107
  %1177 = vmatprep.subr.mxu0 0.0
  %1178 = vmatpush1.msra.mxu0 %v1106
  %1179 = vmatprep.subr.mxu0 0.0
  %1180 = vmatpush1.msra.mxu0 %v1105
  %1181 = vmatprep.subr.mxu0 0.0
  %1182 = vmatpush2.msra.mxu0 %v1136
  %1183 = vmatprep.subr.mxu0 0.0
  %1184 = vmatpush2.msra.mxu0 %v1135
  %1185 = vmatprep.subr.mxu0 0.0
  %1186 = vmatpush2.msra.mxu0 %v1134
  %1187 = vmatprep.subr.mxu0 0.0
  %1188 = vmatpush2.msra.mxu0 %v1133
  %1189 = vmatprep.subr.mxu0 0.0
  %1190 = vmatpush2.msra.mxu0 %v1132
  %1191 = vmatprep.subr.mxu0 0.0
  %1192 = vmatpush2.msra.mxu0 %v1131
  %1193 = vmatprep.subr.mxu0 0.0
  %1194 = vmatpush2.msra.mxu0 %v1130
  %1195 = vmatprep.subr.mxu0 0.0
  %1196 = vmatpush2.msra.mxu0 %v1129
  %1197 = vmatprep.subr.mxu0 0.0
  %1198 = vmatpush2.msra.mxu0 %v1128
  %1199 = vmatprep.subr.mxu0 0.0
  %1200 = vmatpush2.msra.mxu0 %v1127
  %1201 = vmatprep.subr.mxu0 0.0
  %1202 = vmatpush2.msra.mxu0 %v1126
  %1203 = vmatprep.subr.mxu0 0.0
  %1204 = vmatpush2.msra.mxu0 %v1125
  %1205 = vmatprep.subr.mxu0 0.0
  %1206 = vmatpush2.msra.mxu0 %v1124
  %1207 = vmatprep.subr.mxu0 0.0
  %1208 = vmatpush2.msra.mxu0 %v1123
  %1209 = vmatprep.subr.mxu0 0.0
  %1210 = vmatpush2.msra.mxu0 %v1122
  %1211 = vmatprep.subr.mxu0 0.0
  %1212 = vmatpush2.msra.mxu0 %v1121
  %1213 = vmatprep.mubr.f32.mxu0 %v728
  %1214 = vmatmul.mubr.f32.gmra.mxu0 %v732
  %v1215 = vpop.f32.mrf.mxu0
  %v1216 = vadd.f32 %v1147, %v1215
  %v1217 = vpop.f32.mrf.mxu0
  %1218 = vdwg.mxu0
  %1219 = vmatprep.subr.mxu0 0.0
  %1220 = vmatpush1.msra.mxu0 0.0
  %1221 = vmatprep.subr.mxu0 0.0
  %1222 = vmatpush1.msra.mxu0 0.0
  %1223 = vmatprep.subr.mxu0 0.0
  %1224 = vmatpush1.msra.mxu0 0.0
  %1225 = vmatprep.subr.mxu0 0.0
  %1226 = vmatpush1.msra.mxu0 0.0
  %1227 = vmatprep.subr.mxu0 0.0
  %1228 = vmatpush1.msra.mxu0 0.0
  %1229 = vmatprep.subr.mxu0 0.0
  %1230 = vmatpush1.msra.mxu0 0.0
  %1231 = vmatprep.subr.mxu0 0.0
  %1232 = vmatpush1.msra.mxu0 0.0
  %1233 = vmatprep.subr.mxu0 0.0
  %1234 = vmatpush1.msra.mxu0 0.0
  %1235 = vmatprep.subr.mxu0 0.0
  %1236 = vmatpush1.msra.mxu0 0.0
  %1237 = vmatprep.subr.mxu0 0.0
  %1238 = vmatpush1.msra.mxu0 0.0
  %1239 = vmatprep.subr.mxu0 0.0
  %1240 = vmatpush1.msra.mxu0 0.0
  %1241 = vmatprep.subr.mxu0 0.0
  %1242 = vmatpush1.msra.mxu0 0.0
  %1243 = vmatprep.subr.mxu0 0.0
  %1244 = vmatpush1.msra.mxu0 %v1140
  %1245 = vmatprep.subr.mxu0 0.0
  %1246 = vmatpush1.msra.mxu0 %v1139
  %1247 = vmatprep.subr.mxu0 0.0
  %1248 = vmatpush1.msra.mxu0 %v1138
  %1249 = vmatprep.subr.mxu0 0.0
  %1250 = vmatpush1.msra.mxu0 %v1137
  %1251 = vmatprep.subr.mxu0 0.0
  %1252 = vmatpush2.msra.mxu0 0.0
  %1253 = vmatprep.subr.mxu0 0.0
  %1254 = vmatpush2.msra.mxu0 0.0
  %1255 = vmatprep.subr.mxu0 0.0
  %1256 = vmatpush2.msra.mxu0 0.0
  %1257 = vmatprep.subr.mxu0 0.0
  %1258 = vmatpush2.msra.mxu0 0.0
  %1259 = vmatprep.subr.mxu0 0.0
  %1260 = vmatpush2.msra.mxu0 0.0
  %1261 = vmatprep.subr.mxu0 0.0
  %1262 = vmatpush2.msra.mxu0 0.0
  %1263 = vmatprep.subr.mxu0 0.0
  %1264 = vmatpush2.msra.mxu0 0.0
  %1265 = vmatprep.subr.mxu0 0.0
  %1266 = vmatpush2.msra.mxu0 0.0
  %1267 = vmatprep.subr.mxu0 0.0
  %1268 = vmatpush2.msra.mxu0 0.0
  %1269 = vmatprep.subr.mxu0 0.0
  %1270 = vmatpush2.msra.mxu0 0.0
  %1271 = vmatprep.subr.mxu0 0.0
  %1272 = vmatpush2.msra.mxu0 0.0
  %1273 = vmatprep.subr.mxu0 0.0
  %1274 = vmatpush2.msra.mxu0 0.0
  %1275 = vmatprep.subr.mxu0 0.0
  %1276 = vmatpush2.msra.mxu0 0.0
  %1277 = vmatprep.subr.mxu0 0.0
  %1278 = vmatpush2.msra.mxu0 0.0
  %1279 = vmatprep.subr.mxu0 0.0
  %1280 = vmatpush2.msra.mxu0 0.0
  %1281 = vmatprep.subr.mxu0 0.0
  %1282 = vmatpush2.msra.mxu0 0.0
  %1283 = vmatprep.mubr.f32.mxu0 0.0
  %1284 = vmatmul.mubr.f32.gmra.mxu0 %v777
  %v1285 = vpop.f32.mrf.mxu0
  %v1286 = vadd.f32 %v1216, %v1285
  %v1287 = vpop.f32.mrf.mxu0
  %1288 = vdwg.mxu0
  %v1289 = vld [vmem:[%s10] sm:$0xff]
  %v1290 = vld [vmem:[%s10 + $0x8] sm:$0xff]
  %v1291 = vld [vmem:[%s10 + $0x10] sm:$0xff]
  %v1292 = vld [vmem:[%s10 + $0x18] sm:$0xff]
  %s1293 = scalar_lea.vmem %s8, 12
  %v1294 = vld [vmem:[%s1293] sm:$0x1]
  %v1296 = vlaneseq
  %v1297 = vshrl.u32 %v1296, 7
  %v1298 = vsub.s32 0, %v1297
  %v1299 = vrot.slane %v1294, %v1298
  %v1302 = vsel %vm174, %v57, 0
  %1304 = vmatprep.subr.mxu0 0.0
  %1305 = vmatpush1.msra.mxu0 0.0
  %1306 = vmatprep.subr.mxu0 0.0
  %1307 = vmatpush1.msra.mxu0 0.0
  %1308 = vmatprep.subr.mxu0 0.0
  %1309 = vmatpush1.msra.mxu0 0.0
  %1310 = vmatprep.subr.mxu0 0.0
  %1311 = vmatpush1.msra.mxu0 0.0
  %1312 = vmatprep.subr.mxu0 0.0
  %1313 = vmatpush1.msra.mxu0 0.0
  %1314 = vmatprep.subr.mxu0 0.0
  %1315 = vmatpush1.msra.mxu0 0.0
  %1316 = vmatprep.subr.mxu0 0.0
  %1317 = vmatpush1.msra.mxu0 0.0
  %1318 = vmatprep.subr.mxu0 0.0
  %1319 = vmatpush1.msra.mxu0 0.0
  %1320 = vmatprep.subr.mxu0 0.0
  %1321 = vmatpush1.msra.mxu0 0.0
  %1322 = vmatprep.subr.mxu0 0.0
  %1323 = vmatpush1.msra.mxu0 0.0
  %1324 = vmatprep.subr.mxu0 0.0
  %1325 = vmatpush1.msra.mxu0 0.0
  %1326 = vmatprep.subr.mxu0 0.0
  %1327 = vmatpush1.msra.mxu0 0.0
  %1328 = vmatprep.subr.mxu0 0.0
  %1329 = vmatpush1.msra.mxu0 %v1292
  %1330 = vmatprep.subr.mxu0 0.0
  %1331 = vmatpush1.msra.mxu0 %v1291
  %1332 = vmatprep.subr.mxu0 0.0
  %1333 = vmatpush1.msra.mxu0 %v1290
  %1334 = vmatprep.subr.mxu0 0.0
  %1335 = vmatpush1.msra.mxu0 %v1289
  %1336 = vmatprep.subr.mxu0 0.0
  %1337 = vmatpush2.msra.mxu0 0.0
  %1338 = vmatprep.subr.mxu0 0.0
  %1339 = vmatpush2.msra.mxu0 0.0
  %1340 = vmatprep.subr.mxu0 0.0
  %1341 = vmatpush2.msra.mxu0 0.0
  %1342 = vmatprep.subr.mxu0 0.0
  %1343 = vmatpush2.msra.mxu0 0.0
  %1344 = vmatprep.subr.mxu0 0.0
  %1345 = vmatpush2.msra.mxu0 0.0
  %1346 = vmatprep.subr.mxu0 0.0
  %1347 = vmatpush2.msra.mxu0 0.0
  %1348 = vmatprep.subr.mxu0 0.0
  %1349 = vmatpush2.msra.mxu0 0.0
  %1350 = vmatprep.subr.mxu0 0.0
  %1351 = vmatpush2.msra.mxu0 0.0
  %1352 = vmatprep.subr.mxu0 0.0
  %1353 = vmatpush2.msra.mxu0 0.0
  %1354 = vmatprep.subr.mxu0 0.0
  %1355 = vmatpush2.msra.mxu0 0.0
  %1356 = vmatprep.subr.mxu0 0.0
  %1357 = vmatpush2.msra.mxu0 0.0
  %1358 = vmatprep.subr.mxu0 0.0
  %1359 = vmatpush2.msra.mxu0 0.0
  %1360 = vmatprep.subr.mxu0 0.0
  %1361 = vmatpush2.msra.mxu0 0.0
  %1362 = vmatprep.subr.mxu0 0.0
  %1363 = vmatpush2.msra.mxu0 0.0
  %1364 = vmatprep.subr.mxu0 0.0
  %1365 = vmatpush2.msra.mxu0 0.0
  %1366 = vmatprep.subr.mxu0 0.0
  %1367 = vmatpush2.msra.mxu0 0.0
  %1368 = vmatprep.mubr.f32.mxu0 0.0
  %1369 = vmatmul.mubr.f32.gmra.mxu0 %v1302
  %v1370 = vpop.f32.mrf.mxu0
  %v1371 = vadd.f32 %v1299, %v1370
  %v1372 = vpop.f32.mrf.mxu0
  %1373 = vdwg.mxu0
  %s1374 = scalar_lea.vmem %s10, 32
  %v1375 = vld [vmem:[%s1374] sm:$0xff]
  %v1376 = vld [vmem:[%s1374 + $0x8] sm:$0xff]
  %v1377 = vld [vmem:[%s1374 + $0x10] sm:$0xff]
  %v1378 = vld [vmem:[%s1374 + $0x18] sm:$0xff]
  %s1379 = scalar_lea.vmem %s8, 13
  %v1380 = vld [vmem:[%s1379] sm:$0x1]
  %v1382 = vlaneseq
  %v1383 = vshrl.u32 %v1382, 7
  %v1384 = vsub.s32 0, %v1383
  %v1385 = vrot.slane %v1380, %v1384
  %1387 = vmatprep.subr.mxu0 0.0
  %1388 = vmatpush1.msra.mxu0 0.0
  %1389 = vmatprep.subr.mxu0 0.0
  %1390 = vmatpush1.msra.mxu0 0.0
  %1391 = vmatprep.subr.mxu0 0.0
  %1392 = vmatpush1.msra.mxu0 0.0
  %1393 = vmatprep.subr.mxu0 0.0
  %1394 = vmatpush1.msra.mxu0 0.0
  %1395 = vmatprep.subr.mxu0 0.0
  %1396 = vmatpush1.msra.mxu0 0.0
  %1397 = vmatprep.subr.mxu0 0.0
  %1398 = vmatpush1.msra.mxu0 0.0
  %1399 = vmatprep.subr.mxu0 0.0
  %1400 = vmatpush1.msra.mxu0 0.0
  %1401 = vmatprep.subr.mxu0 0.0
  %1402 = vmatpush1.msra.mxu0 0.0
  %1403 = vmatprep.subr.mxu0 0.0
  %1404 = vmatpush1.msra.mxu0 0.0
  %1405 = vmatprep.subr.mxu0 0.0
  %1406 = vmatpush1.msra.mxu0 0.0
  %1407 = vmatprep.subr.mxu0 0.0
  %1408 = vmatpush1.msra.mxu0 0.0
  %1409 = vmatprep.subr.mxu0 0.0
  %1410 = vmatpush1.msra.mxu0 0.0
  %1411 = vmatprep.subr.mxu0 0.0
  %1412 = vmatpush1.msra.mxu0 %v1378
  %1413 = vmatprep.subr.mxu0 0.0
  %1414 = vmatpush1.msra.mxu0 %v1377
  %1415 = vmatprep.subr.mxu0 0.0
  %1416 = vmatpush1.msra.mxu0 %v1376
  %1417 = vmatprep.subr.mxu0 0.0
  %1418 = vmatpush1.msra.mxu0 %v1375
  %1419 = vmatprep.subr.mxu0 0.0
  %1420 = vmatpush2.msra.mxu0 0.0
  %1421 = vmatprep.subr.mxu0 0.0
  %1422 = vmatpush2.msra.mxu0 0.0
  %1423 = vmatprep.subr.mxu0 0.0
  %1424 = vmatpush2.msra.mxu0 0.0
  %1425 = vmatprep.subr.mxu0 0.0
  %1426 = vmatpush2.msra.mxu0 0.0
  %1427 = vmatprep.subr.mxu0 0.0
  %1428 = vmatpush2.msra.mxu0 0.0
  %1429 = vmatprep.subr.mxu0 0.0
  %1430 = vmatpush2.msra.mxu0 0.0
  %1431 = vmatprep.subr.mxu0 0.0
  %1432 = vmatpush2.msra.mxu0 0.0
  %1433 = vmatprep.subr.mxu0 0.0
  %1434 = vmatpush2.msra.mxu0 0.0
  %1435 = vmatprep.subr.mxu0 0.0
  %1436 = vmatpush2.msra.mxu0 0.0
  %1437 = vmatprep.subr.mxu0 0.0
  %1438 = vmatpush2.msra.mxu0 0.0
  %1439 = vmatprep.subr.mxu0 0.0
  %1440 = vmatpush2.msra.mxu0 0.0
  %1441 = vmatprep.subr.mxu0 0.0
  %1442 = vmatpush2.msra.mxu0 0.0
  %1443 = vmatprep.subr.mxu0 0.0
  %1444 = vmatpush2.msra.mxu0 0.0
  %1445 = vmatprep.subr.mxu0 0.0
  %1446 = vmatpush2.msra.mxu0 0.0
  %1447 = vmatprep.subr.mxu0 0.0
  %1448 = vmatpush2.msra.mxu0 0.0
  %1449 = vmatprep.subr.mxu0 0.0
  %1450 = vmatpush2.msra.mxu0 0.0
  %1451 = vmatprep.mubr.f32.mxu0 0.0
  %1452 = vmatmul.mubr.f32.gmra.mxu0 %v1302
  %v1453 = vpop.f32.mrf.mxu0
  %v1454 = vadd.f32 %v1385, %v1453
  %v1455 = vpop.f32.mrf.mxu0
  %1456 = vdwg.mxu0
  %s1457 = scalar_lea.vmem %s10, 64
  %v1458 = vld [vmem:[%s1457] sm:$0xff]
  %v1459 = vld [vmem:[%s1457 + $0x8] sm:$0xff]
  %v1460 = vld [vmem:[%s1457 + $0x10] sm:$0xff]
  %v1461 = vld [vmem:[%s1457 + $0x18] sm:$0xff]
  %s1462 = scalar_lea.vmem %s8, 14
  %v1463 = vld [vmem:[%s1462] sm:$0x1]
  %v1465 = vlaneseq
  %v1466 = vshrl.u32 %v1465, 7
  %v1467 = vsub.s32 0, %v1466
  %v1468 = vrot.slane %v1463, %v1467
  %1470 = vmatprep.subr.mxu0 0.0
  %1471 = vmatpush1.msra.mxu0 0.0
  %1472 = vmatprep.subr.mxu0 0.0
  %1473 = vmatpush1.msra.mxu0 0.0
  %1474 = vmatprep.subr.mxu0 0.0
  %1475 = vmatpush1.msra.mxu0 0.0
  %1476 = vmatprep.subr.mxu0 0.0
  %1477 = vmatpush1.msra.mxu0 0.0
  %1478 = vmatprep.subr.mxu0 0.0
  %1479 = vmatpush1.msra.mxu0 0.0
  %1480 = vmatprep.subr.mxu0 0.0
  %1481 = vmatpush1.msra.mxu0 0.0
  %1482 = vmatprep.subr.mxu0 0.0
  %1483 = vmatpush1.msra.mxu0 0.0
  %1484 = vmatprep.subr.mxu0 0.0
  %1485 = vmatpush1.msra.mxu0 0.0
  %1486 = vmatprep.subr.mxu0 0.0
  %1487 = vmatpush1.msra.mxu0 0.0
  %1488 = vmatprep.subr.mxu0 0.0
  %1489 = vmatpush1.msra.mxu0 0.0
  %1490 = vmatprep.subr.mxu0 0.0
  %1491 = vmatpush1.msra.mxu0 0.0
  %1492 = vmatprep.subr.mxu0 0.0
  %1493 = vmatpush1.msra.mxu0 0.0
  %1494 = vmatprep.subr.mxu0 0.0
  %1495 = vmatpush1.msra.mxu0 %v1461
  %1496 = vmatprep.subr.mxu0 0.0
  %1497 = vmatpush1.msra.mxu0 %v1460
  %1498 = vmatprep.subr.mxu0 0.0
  %1499 = vmatpush1.msra.mxu0 %v1459
  %1500 = vmatprep.subr.mxu0 0.0
  %1501 = vmatpush1.msra.mxu0 %v1458
  %1502 = vmatprep.subr.mxu0 0.0
  %1503 = vmatpush2.msra.mxu0 0.0
  %1504 = vmatprep.subr.mxu0 0.0
  %1505 = vmatpush2.msra.mxu0 0.0
  %1506 = vmatprep.subr.mxu0 0.0
  %1507 = vmatpush2.msra.mxu0 0.0
  %1508 = vmatprep.subr.mxu0 0.0
  %1509 = vmatpush2.msra.mxu0 0.0
  %1510 = vmatprep.subr.mxu0 0.0
  %1511 = vmatpush2.msra.mxu0 0.0
  %1512 = vmatprep.subr.mxu0 0.0
  %1513 = vmatpush2.msra.mxu0 0.0
  %1514 = vmatprep.subr.mxu0 0.0
  %1515 = vmatpush2.msra.mxu0 0.0
  %1516 = vmatprep.subr.mxu0 0.0
  %1517 = vmatpush2.msra.mxu0 0.0
  %1518 = vmatprep.subr.mxu0 0.0
  %1519 = vmatpush2.msra.mxu0 0.0
  %1520 = vmatprep.subr.mxu0 0.0
  %1521 = vmatpush2.msra.mxu0 0.0
  %1522 = vmatprep.subr.mxu0 0.0
  %1523 = vmatpush2.msra.mxu0 0.0
  %1524 = vmatprep.subr.mxu0 0.0
  %1525 = vmatpush2.msra.mxu0 0.0
  %1526 = vmatprep.subr.mxu0 0.0
  %1527 = vmatpush2.msra.mxu0 0.0
  %1528 = vmatprep.subr.mxu0 0.0
  %1529 = vmatpush2.msra.mxu0 0.0
  %1530 = vmatprep.subr.mxu0 0.0
  %1531 = vmatpush2.msra.mxu0 0.0
  %1532 = vmatprep.subr.mxu0 0.0
  %1533 = vmatpush2.msra.mxu0 0.0
  %1534 = vmatprep.mubr.f32.mxu0 0.0
  %1535 = vmatmul.mubr.f32.gmra.mxu0 %v1302
  %v1536 = vpop.f32.mrf.mxu0
  %v1537 = vadd.f32 %v1468, %v1536
  %v1538 = vpop.f32.mrf.mxu0
  %1539 = vdwg.mxu0
  %v1540 = vadd.f32 %v916, %v1371
  %v1541 = vxor.u32 %v1540, 2147483648
  %v1542 = vmul.f32 %v1541, 1.442695
  %v1543 = vpow.pop %v1542
  %v1544 = vadd.f32 %v1543, 1.0
  %v1545 = vrcp.pop %v1544
  %v1546 = vmul.f32 1.0, %v1545
  %v1547 = vadd.f32 %v1101, %v1454
  %v1548 = vxor.u32 %v1547, 2147483648
  %v1549 = vmul.f32 %v1548, 1.442695
  %v1550 = vpow.pop %v1549
  %v1551 = vadd.f32 %v1550, 1.0
  %v1552 = vrcp.pop %v1551
  %v1553 = vmul.f32 1.0, %v1552
  %v1554 = vmul.f32 %v1546, %v1537
  %v1555 = vadd.f32 %v1286, %v1554
  %v1556 = vtanh.pop %v1555
  %v1557 = vsub.f32 1.0, %v1553
  %v1558 = vmul.f32 %v1557, %v1556
  %v1559 = vmul.f32 %v1553, %v57
  %v1560 = vadd.f32 %v1558, %v1559
  %v1561 = vld [vmem:[%s11] sm:$0xff]
  %v1562 = vld [vmem:[%s11 + $0x8] sm:$0xff]
  %v1563 = vld [vmem:[%s11 + $0x10] sm:$0xff]
  %v1564 = vld [vmem:[%s11 + $0x18] sm:$0xff]
  %v1565 = vld [vmem:[%s12] sm:$0xff]
  %v1566 = vld [vmem:[%s12 + $0x8] sm:$0xff]
  %v1567 = vld [vmem:[%s12 + $0x10] sm:$0xff]
  %v1568 = vld [vmem:[%s12 + $0x18] sm:$0xff]
  %v1569 = vld [vmem:[%s12 + $0x20] sm:$0xff]
  %v1570 = vld [vmem:[%s12 + $0x28] sm:$0xff]
  %v1571 = vld [vmem:[%s12 + $0x30] sm:$0xff]
  %v1572 = vld [vmem:[%s12 + $0x38] sm:$0xff]
  %v1573 = vld [vmem:[%s12 + $0x40] sm:$0xff]
  %v1574 = vld [vmem:[%s12 + $0x48] sm:$0xff]
  %v1575 = vld [vmem:[%s12 + $0x50] sm:$0xff]
  %v1576 = vld [vmem:[%s12 + $0x58] sm:$0xff]
  %v1577 = vld [vmem:[%s12 + $0x60] sm:$0xff]
  %v1578 = vld [vmem:[%s12 + $0x68] sm:$0xff]
  %v1579 = vld [vmem:[%s12 + $0x70] sm:$0xff]
  %v1580 = vld [vmem:[%s12 + $0x78] sm:$0xff]
  %v1581 = vld [vmem:[%s12 + $0x80] sm:$0xff]
  %v1582 = vld [vmem:[%s12 + $0x88] sm:$0xff]
  %v1583 = vld [vmem:[%s12 + $0x90] sm:$0xff]
  %v1584 = vld [vmem:[%s12 + $0x98] sm:$0xff]
  %v1585 = vld [vmem:[%s12 + $0xa0] sm:$0xff]
  %v1586 = vld [vmem:[%s12 + $0xa8] sm:$0xff]
  %v1587 = vld [vmem:[%s12 + $0xb0] sm:$0xff]
  %v1588 = vld [vmem:[%s12 + $0xb8] sm:$0xff]
  %v1590 = vsel %vm91, %v722, 0
  %1592 = vmatprep.subr.mxu0 0.0
  %1593 = vmatpush1.msra.mxu0 %v1580
  %1594 = vmatprep.subr.mxu0 0.0
  %1595 = vmatpush1.msra.mxu0 %v1579
  %1596 = vmatprep.subr.mxu0 0.0
  %1597 = vmatpush1.msra.mxu0 %v1578
  %1598 = vmatprep.subr.mxu0 0.0
  %1599 = vmatpush1.msra.mxu0 %v1577
  %1600 = vmatprep.subr.mxu0 0.0
  %1601 = vmatpush1.msra.mxu0 %v1576
  %1602 = vmatprep.subr.mxu0 0.0
  %1603 = vmatpush1.msra.mxu0 %v1575
  %1604 = vmatprep.subr.mxu0 0.0
  %1605 = vmatpush1.msra.mxu0 %v1574
  %1606 = vmatprep.subr.mxu0 0.0
  %1607 = vmatpush1.msra.mxu0 %v1573
  %1608 = vmatprep.subr.mxu0 0.0
  %1609 = vmatpush1.msra.mxu0 %v1572
  %1610 = vmatprep.subr.mxu0 0.0
  %1611 = vmatpush1.msra.mxu0 %v1571
  %1612 = vmatprep.subr.mxu0 0.0
  %1613 = vmatpush1.msra.mxu0 %v1570
  %1614 = vmatprep.subr.mxu0 0.0
  %1615 = vmatpush1.msra.mxu0 %v1569
  %1616 = vmatprep.subr.mxu0 0.0
  %1617 = vmatpush1.msra.mxu0 %v1568
  %1618 = vmatprep.subr.mxu0 0.0
  %1619 = vmatpush1.msra.mxu0 %v1567
  %1620 = vmatprep.subr.mxu0 0.0
  %1621 = vmatpush1.msra.mxu0 %v1566
  %1622 = vmatprep.subr.mxu0 0.0
  %1623 = vmatpush1.msra.mxu0 %v1565
  %1624 = vmatprep.subr.mxu0 0.0
  %1625 = vmatpush2.msra.mxu0 0.0
  %1626 = vmatprep.subr.mxu0 0.0
  %1627 = vmatpush2.msra.mxu0 0.0
  %1628 = vmatprep.subr.mxu0 0.0
  %1629 = vmatpush2.msra.mxu0 0.0
  %1630 = vmatprep.subr.mxu0 0.0
  %1631 = vmatpush2.msra.mxu0 0.0
  %1632 = vmatprep.subr.mxu0 0.0
  %1633 = vmatpush2.msra.mxu0 0.0
  %1634 = vmatprep.subr.mxu0 0.0
  %1635 = vmatpush2.msra.mxu0 0.0
  %1636 = vmatprep.subr.mxu0 0.0
  %1637 = vmatpush2.msra.mxu0 0.0
  %1638 = vmatprep.subr.mxu0 0.0
  %1639 = vmatpush2.msra.mxu0 0.0
  %1640 = vmatprep.subr.mxu0 0.0
  %1641 = vmatpush2.msra.mxu0 %v1588
  %1642 = vmatprep.subr.mxu0 0.0
  %1643 = vmatpush2.msra.mxu0 %v1587
  %1644 = vmatprep.subr.mxu0 0.0
  %1645 = vmatpush2.msra.mxu0 %v1586
  %1646 = vmatprep.subr.mxu0 0.0
  %1647 = vmatpush2.msra.mxu0 %v1585
  %1648 = vmatprep.subr.mxu0 0.0
  %1649 = vmatpush2.msra.mxu0 %v1584
  %1650 = vmatprep.subr.mxu0 0.0
  %1651 = vmatpush2.msra.mxu0 %v1583
  %1652 = vmatprep.subr.mxu0 0.0
  %1653 = vmatpush2.msra.mxu0 %v1582
  %1654 = vmatprep.subr.mxu0 0.0
  %1655 = vmatpush2.msra.mxu0 %v1581
  %1656 = vmatprep.mubr.f32.mxu0 %v1590
  %1657 = vmatmul.mubr.f32.gmra.mxu0 %v721
  %v1658 = vpop.f32.mrf.mxu0
  %v1659 = vadd.f32 0.0, %v1658
  %v1660 = vpop.f32.mrf.mxu0
  %1661 = vdwg.mxu0
  %v1663 = vsel %vm174, %v1560, 0
  %1665 = vmatprep.subr.mxu0 0.0
  %1666 = vmatpush1.msra.mxu0 0.0
  %1667 = vmatprep.subr.mxu0 0.0
  %1668 = vmatpush1.msra.mxu0 0.0
  %1669 = vmatprep.subr.mxu0 0.0
  %1670 = vmatpush1.msra.mxu0 0.0
  %1671 = vmatprep.subr.mxu0 0.0
  %1672 = vmatpush1.msra.mxu0 0.0
  %1673 = vmatprep.subr.mxu0 0.0
  %1674 = vmatpush1.msra.mxu0 0.0
  %1675 = vmatprep.subr.mxu0 0.0
  %1676 = vmatpush1.msra.mxu0 0.0
  %1677 = vmatprep.subr.mxu0 0.0
  %1678 = vmatpush1.msra.mxu0 0.0
  %1679 = vmatprep.subr.mxu0 0.0
  %1680 = vmatpush1.msra.mxu0 0.0
  %1681 = vmatprep.subr.mxu0 0.0
  %1682 = vmatpush1.msra.mxu0 0.0
  %1683 = vmatprep.subr.mxu0 0.0
  %1684 = vmatpush1.msra.mxu0 0.0
  %1685 = vmatprep.subr.mxu0 0.0
  %1686 = vmatpush1.msra.mxu0 0.0
  %1687 = vmatprep.subr.mxu0 0.0
  %1688 = vmatpush1.msra.mxu0 0.0
  %1689 = vmatprep.subr.mxu0 0.0
  %1690 = vmatpush1.msra.mxu0 %v1564
  %1691 = vmatprep.subr.mxu0 0.0
  %1692 = vmatpush1.msra.mxu0 %v1563
  %1693 = vmatprep.subr.mxu0 0.0
  %1694 = vmatpush1.msra.mxu0 %v1562
  %1695 = vmatprep.subr.mxu0 0.0
  %1696 = vmatpush1.msra.mxu0 %v1561
  %1697 = vmatprep.subr.mxu0 0.0
  %1698 = vmatpush2.msra.mxu0 0.0
  %1699 = vmatprep.subr.mxu0 0.0
  %1700 = vmatpush2.msra.mxu0 0.0
  %1701 = vmatprep.subr.mxu0 0.0
  %1702 = vmatpush2.msra.mxu0 0.0
  %1703 = vmatprep.subr.mxu0 0.0
  %1704 = vmatpush2.msra.mxu0 0.0
  %1705 = vmatprep.subr.mxu0 0.0
  %1706 = vmatpush2.msra.mxu0 0.0
  %1707 = vmatprep.subr.mxu0 0.0
  %1708 = vmatpush2.msra.mxu0 0.0
  %1709 = vmatprep.subr.mxu0 0.0
  %1710 = vmatpush2.msra.mxu0 0.0
  %1711 = vmatprep.subr.mxu0 0.0
  %1712 = vmatpush2.msra.mxu0 0.0
  %1713 = vmatprep.subr.mxu0 0.0
  %1714 = vmatpush2.msra.mxu0 0.0
  %1715 = vmatprep.subr.mxu0 0.0
  %1716 = vmatpush2.msra.mxu0 0.0
  %1717 = vmatprep.subr.mxu0 0.0
  %1718 = vmatpush2.msra.mxu0 0.0
  %1719 = vmatprep.subr.mxu0 0.0
  %1720 = vmatpush2.msra.mxu0 0.0
  %1721 = vmatprep.subr.mxu0 0.0
  %1722 = vmatpush2.msra.mxu0 0.0
  %1723 = vmatprep.subr.mxu0 0.0
  %1724 = vmatpush2.msra.mxu0 0.0
  %1725 = vmatprep.subr.mxu0 0.0
  %1726 = vmatpush2.msra.mxu0 0.0
  %1727 = vmatprep.subr.mxu0 0.0
  %1728 = vmatpush2.msra.mxu0 0.0
  %1729 = vmatprep.mubr.f32.mxu0 0.0
  %1730 = vmatmul.mubr.f32.gmra.mxu0 %v1663
  %v1731 = vpop.f32.mrf.mxu0
  %v1732 = vadd.f32 %v1659, %v1731
  %v1733 = vpop.f32.mrf.mxu0
  %1734 = vdwg.mxu0
  %v1735 = vld [vmem:[%s13] sm:$0x1]
  %v1737 = vlaneseq
  %v1738 = vshrl.u32 %v1737, 7
  %v1739 = vsub.s32 0, %v1738
  %v1740 = vrot.slane %v1735, %v1739
  %v1742 = vadd.f32 %v1732, %v1740
  %vm1743 = vcmask 123904
  %v1744 = vsel %vm1743, %v1742, -inf
  %1745 = vmax.xlane.f32.xlu0 %v1744
  %v1746 = vpop.xlane.xlu0 %1745
  %v1747 = vsub.f32 %v1742, %v1746
  %v1748 = vmul.f32 %v1747, 1.442695
  %v1749 = vpow.pop %v1748
  %v1750 = vsel %vm1743, %v1749, 0.0
  %1751 = vadd.xlane.f32.xlu0 %v1750
  %v1752 = vpop.xlane.xlu0 %1751
  %v1753 = vrcp.pop %v1752
  %v1754 = vmul.f32 %v1749, %v1753
  %v1755 = vld [vmem:[%s7] sm:$0xff]
  %v1756 = vld [vmem:[%s7 + $0x8] sm:$0xff]
  %s1757 = scalar_lea.vmem %s6, 64
  %v1758 = vld [vmem:[%s1757] sm:$0xff]
  %v1759 = vld [vmem:[%s1757 + $0x8] sm:$0xff]
  %v1760 = vld [vmem:[%s1757 + $0x10] sm:$0xff]
  %v1761 = vld [vmem:[%s1757 + $0x18] sm:$0xff]
  %v1762 = vld [vmem:[%s1757 + $0x20] sm:$0xff]
  %v1763 = vld [vmem:[%s1757 + $0x28] sm:$0xff]
  %v1764 = vld [vmem:[%s1757 + $0x30] sm:$0xff]
  %v1765 = vld [vmem:[%s1757 + $0x38] sm:$0xff]
  %v1767 = vsel %vm91, %v53, 0
  %1769 = vmatprep.subr.mxu0 0.0
  %1770 = vmatpush1.msra.mxu0 0.0
  %1771 = vmatprep.subr.mxu0 0.0
  %1772 = vmatpush1.msra.mxu0 0.0
  %1773 = vmatprep.subr.mxu0 0.0
  %1774 = vmatpush1.msra.mxu0 0.0
  %1775 = vmatprep.subr.mxu0 0.0
  %1776 = vmatpush1.msra.mxu0 0.0
  %1777 = vmatprep.subr.mxu0 0.0
  %1778 = vmatpush1.msra.mxu0 0.0
  %1779 = vmatprep.subr.mxu0 0.0
  %1780 = vmatpush1.msra.mxu0 0.0
  %1781 = vmatprep.subr.mxu0 0.0
  %1782 = vmatpush1.msra.mxu0 0.0
  %1783 = vmatprep.subr.mxu0 0.0
  %1784 = vmatpush1.msra.mxu0 0.0
  %1785 = vmatprep.subr.mxu0 0.0
  %1786 = vmatpush1.msra.mxu0 %v1765
  %1787 = vmatprep.subr.mxu0 0.0
  %1788 = vmatpush1.msra.mxu0 %v1764
  %1789 = vmatprep.subr.mxu0 0.0
  %1790 = vmatpush1.msra.mxu0 %v1763
  %1791 = vmatprep.subr.mxu0 0.0
  %1792 = vmatpush1.msra.mxu0 %v1762
  %1793 = vmatprep.subr.mxu0 0.0
  %1794 = vmatpush1.msra.mxu0 %v1761
  %1795 = vmatprep.subr.mxu0 0.0
  %1796 = vmatpush1.msra.mxu0 %v1760
  %1797 = vmatprep.subr.mxu0 0.0
  %1798 = vmatpush1.msra.mxu0 %v1759
  %1799 = vmatprep.subr.mxu0 0.0
  %1800 = vmatpush1.msra.mxu0 %v1758
  %1801 = vmatprep.subr.mxu0 0.0
  %1802 = vmatpush2.msra.mxu0 0.0
  %1803 = vmatprep.subr.mxu0 0.0
  %1804 = vmatpush2.msra.mxu0 0.0
  %1805 = vmatprep.subr.mxu0 0.0
  %1806 = vmatpush2.msra.mxu0 0.0
  %1807 = vmatprep.subr.mxu0 0.0
  %1808 = vmatpush2.msra.mxu0 0.0
  %1809 = vmatprep.subr.mxu0 0.0
  %1810 = vmatpush2.msra.mxu0 0.0
  %1811 = vmatprep.subr.mxu0 0.0
  %1812 = vmatpush2.msra.mxu0 0.0
  %1813 = vmatprep.subr.mxu0 0.0
  %1814 = vmatpush2.msra.mxu0 0.0
  %1815 = vmatprep.subr.mxu0 0.0
  %1816 = vmatpush2.msra.mxu0 0.0
  %1817 = vmatprep.subr.mxu0 0.0
  %1818 = vmatpush2.msra.mxu0 0.0
  %1819 = vmatprep.subr.mxu0 0.0
  %1820 = vmatpush2.msra.mxu0 0.0
  %1821 = vmatprep.subr.mxu0 0.0
  %1822 = vmatpush2.msra.mxu0 0.0
  %1823 = vmatprep.subr.mxu0 0.0
  %1824 = vmatpush2.msra.mxu0 0.0
  %1825 = vmatprep.subr.mxu0 0.0
  %1826 = vmatpush2.msra.mxu0 0.0
  %1827 = vmatprep.subr.mxu0 0.0
  %1828 = vmatpush2.msra.mxu0 0.0
  %1829 = vmatprep.subr.mxu0 0.0
  %1830 = vmatpush2.msra.mxu0 0.0
  %1831 = vmatprep.subr.mxu0 0.0
  %1832 = vmatpush2.msra.mxu0 0.0
  %1833 = vmatprep.mubr.f32.mxu0 0.0
  %1834 = vmatmul.mubr.f32.gmra.mxu0 %v1767
  %v1835 = vpop.f32.mrf.mxu0
  %v1836 = vadd.f32 0.0, %v1835
  %v1837 = vpop.f32.mrf.mxu0
  %1838 = vdwg.mxu0
  %vm1839 = vcmask 130048
  %v1841 = vsel %vm1839, %v1754, 0
  %1843 = vmatprep.subr.mxu0 0.0
  %1844 = vmatpush1.msra.mxu0 0.0
  %1845 = vmatprep.subr.mxu0 0.0
  %1846 = vmatpush1.msra.mxu0 0.0
  %1847 = vmatprep.subr.mxu0 0.0
  %1848 = vmatpush1.msra.mxu0 0.0
  %1849 = vmatprep.subr.mxu0 0.0
  %1850 = vmatpush1.msra.mxu0 0.0
  %1851 = vmatprep.subr.mxu0 0.0
  %1852 = vmatpush1.msra.mxu0 0.0
  %1853 = vmatprep.subr.mxu0 0.0
  %1854 = vmatpush1.msra.mxu0 0.0
  %1855 = vmatprep.subr.mxu0 0.0
  %1856 = vmatpush1.msra.mxu0 0.0
  %1857 = vmatprep.subr.mxu0 0.0
  %1858 = vmatpush1.msra.mxu0 0.0
  %1859 = vmatprep.subr.mxu0 0.0
  %1860 = vmatpush1.msra.mxu0 0.0
  %1861 = vmatprep.subr.mxu0 0.0
  %1862 = vmatpush1.msra.mxu0 0.0
  %1863 = vmatprep.subr.mxu0 0.0
  %1864 = vmatpush1.msra.mxu0 0.0
  %1865 = vmatprep.subr.mxu0 0.0
  %1866 = vmatpush1.msra.mxu0 0.0
  %1867 = vmatprep.subr.mxu0 0.0
  %1868 = vmatpush1.msra.mxu0 0.0
  %1869 = vmatprep.subr.mxu0 0.0
  %1870 = vmatpush1.msra.mxu0 0.0
  %1871 = vmatprep.subr.mxu0 0.0
  %1872 = vmatpush1.msra.mxu0 %v1756
  %1873 = vmatprep.subr.mxu0 0.0
  %1874 = vmatpush1.msra.mxu0 %v1755
  %1875 = vmatprep.subr.mxu0 0.0
  %1876 = vmatpush2.msra.mxu0 0.0
  %1877 = vmatprep.subr.mxu0 0.0
  %1878 = vmatpush2.msra.mxu0 0.0
  %1879 = vmatprep.subr.mxu0 0.0
  %1880 = vmatpush2.msra.mxu0 0.0
  %1881 = vmatprep.subr.mxu0 0.0
  %1882 = vmatpush2.msra.mxu0 0.0
  %1883 = vmatprep.subr.mxu0 0.0
  %1884 = vmatpush2.msra.mxu0 0.0
  %1885 = vmatprep.subr.mxu0 0.0
  %1886 = vmatpush2.msra.mxu0 0.0
  %1887 = vmatprep.subr.mxu0 0.0
  %1888 = vmatpush2.msra.mxu0 0.0
  %1889 = vmatprep.subr.mxu0 0.0
  %1890 = vmatpush2.msra.mxu0 0.0
  %1891 = vmatprep.subr.mxu0 0.0
  %1892 = vmatpush2.msra.mxu0 0.0
  %1893 = vmatprep.subr.mxu0 0.0
  %1894 = vmatpush2.msra.mxu0 0.0
  %1895 = vmatprep.subr.mxu0 0.0
  %1896 = vmatpush2.msra.mxu0 0.0
  %1897 = vmatprep.subr.mxu0 0.0
  %1898 = vmatpush2.msra.mxu0 0.0
  %1899 = vmatprep.subr.mxu0 0.0
  %1900 = vmatpush2.msra.mxu0 0.0
  %1901 = vmatprep.subr.mxu0 0.0
  %1902 = vmatpush2.msra.mxu0 0.0
  %1903 = vmatprep.subr.mxu0 0.0
  %1904 = vmatpush2.msra.mxu0 0.0
  %1905 = vmatprep.subr.mxu0 0.0
  %1906 = vmatpush2.msra.mxu0 0.0
  %1907 = vmatprep.mubr.f32.mxu0 0.0
  %1908 = vmatmul.mubr.f32.gmra.mxu0 %v1841
  %v1909 = vpop.f32.mrf.mxu0
  %v1910 = vadd.f32 %v1836, %v1909
  %v1911 = vpop.f32.mrf.mxu0
  %1912 = vdwg.mxu0
  %s1913 = scalar_lea.vmem %s8, 1
  %v1914 = vld [vmem:[%s1913] sm:$0x1]
  %v1916 = vlaneseq
  %v1917 = vshrl.u32 %v1916, 7
  %v1918 = vsub.s32 0, %v1917
  %v1919 = vrot.slane %v1914, %v1918
  %v1921 = vadd.f32 %v1910, %v1919
  %v1922 = vtanh.pop %v1921
  %s1923 = scalar_lea.vmem %s2, 64
  %v1924 = vld [vmem:[%s1923] sm:$0xff]
  %v1925 = vld [vmem:[%s1923 + $0x8] sm:$0xff]
  %v1926 = vld [vmem:[%s1923 + $0x10] sm:$0xff]
  %v1927 = vld [vmem:[%s1923 + $0x18] sm:$0xff]
  %v1928 = vld [vmem:[%s1923 + $0x20] sm:$0xff]
  %v1929 = vld [vmem:[%s1923 + $0x28] sm:$0xff]
  %v1930 = vld [vmem:[%s1923 + $0x30] sm:$0xff]
  %v1931 = vld [vmem:[%s1923 + $0x38] sm:$0xff]
  %v1933 = vsel %vm174, %v1922, 0
  %1935 = vmatprep.subr.mxu0 0.0
  %1936 = vmatpush1.msra.mxu0 0.0
  %1937 = vmatprep.subr.mxu0 0.0
  %1938 = vmatpush1.msra.mxu0 0.0
  %1939 = vmatprep.subr.mxu0 0.0
  %1940 = vmatpush1.msra.mxu0 0.0
  %1941 = vmatprep.subr.mxu0 0.0
  %1942 = vmatpush1.msra.mxu0 0.0
  %1943 = vmatprep.subr.mxu0 0.0
  %1944 = vmatpush1.msra.mxu0 0.0
  %1945 = vmatprep.subr.mxu0 0.0
  %1946 = vmatpush1.msra.mxu0 0.0
  %1947 = vmatprep.subr.mxu0 0.0
  %1948 = vmatpush1.msra.mxu0 0.0
  %1949 = vmatprep.subr.mxu0 0.0
  %1950 = vmatpush1.msra.mxu0 0.0
  %1951 = vmatprep.subr.mxu0 0.0
  %1952 = vmatpush1.msra.mxu0 0.0
  %1953 = vmatprep.subr.mxu0 0.0
  %1954 = vmatpush1.msra.mxu0 0.0
  %1955 = vmatprep.subr.mxu0 0.0
  %1956 = vmatpush1.msra.mxu0 0.0
  %1957 = vmatprep.subr.mxu0 0.0
  %1958 = vmatpush1.msra.mxu0 0.0
  %1959 = vmatprep.subr.mxu0 %v1931
  %1960 = vmatpush1.msra.mxu0 %v1930
  %1961 = vmatprep.subr.mxu0 %v1929
  %1962 = vmatpush1.msra.mxu0 %v1928
  %1963 = vmatprep.subr.mxu0 %v1927
  %1964 = vmatpush1.msra.mxu0 %v1926
  %1965 = vmatprep.subr.mxu0 %v1925
  %1966 = vmatpush1.msra.mxu0 %v1924
  %1967 = vmatprep.subr.mxu0 0.0
  %1968 = vmatpush2.msra.mxu0 0.0
  %1969 = vmatprep.subr.mxu0 0.0
  %1970 = vmatpush2.msra.mxu0 0.0
  %1971 = vmatprep.subr.mxu0 0.0
  %1972 = vmatpush2.msra.mxu0 0.0
  %1973 = vmatprep.subr.mxu0 0.0
  %1974 = vmatpush2.msra.mxu0 0.0
  %1975 = vmatprep.subr.mxu0 0.0
  %1976 = vmatpush2.msra.mxu0 0.0
  %1977 = vmatprep.subr.mxu0 0.0
  %1978 = vmatpush2.msra.mxu0 0.0
  %1979 = vmatprep.subr.mxu0 0.0
  %1980 = vmatpush2.msra.mxu0 0.0
  %1981 = vmatprep.subr.mxu0 0.0
  %1982 = vmatpush2.msra.mxu0 0.0
  %1983 = vmatprep.subr.mxu0 0.0
  %1984 = vmatpush2.msra.mxu0 0.0
  %1985 = vmatprep.subr.mxu0 0.0
  %1986 = vmatpush2.msra.mxu0 0.0
  %1987 = vmatprep.subr.mxu0 0.0
  %1988 = vmatpush2.msra.mxu0 0.0
  %1989 = vmatprep.subr.mxu0 0.0
  %1990 = vmatpush2.msra.mxu0 0.0
  %1991 = vmatprep.subr.mxu0 0.0
  %1992 = vmatpush2.msra.mxu0 0.0
  %1993 = vmatprep.subr.mxu0 0.0
  %1994 = vmatpush2.msra.mxu0 0.0
  %1995 = vmatprep.subr.mxu0 0.0
  %1996 = vmatpush2.msra.mxu0 0.0
  %1997 = vmatprep.subr.mxu0 0.0
  %1998 = vmatpush2.msra.mxu0 0.0
  %1999 = vmatprep.mubr.f32.mxu0 0.0
  %2000 = vmatmul.mubr.f32.gmra.mxu0 %v1933
  %v2001 = vpop.f32.mrf.mxu0
  %v2002 = vadd.f32 0.0, %v2001
  %v2003 = vpop.f32.mrf.mxu0
  %v2004 = vadd.f32 0.0, %v2003
  %2005 = vdwg.mxu0
  %s2006 = scalar_lea.vmem %s3, 384
  %v2007 = vld [vmem:[%s2006] sm:$0xff]
  %v2008 = vld [vmem:[%s2006 + $0x8] sm:$0xff]
  %v2009 = vld [vmem:[%s2006 + $0x10] sm:$0xff]
  %v2010 = vld [vmem:[%s2006 + $0x18] sm:$0xff]
  %v2011 = vld [vmem:[%s2006 + $0x20] sm:$0xff]
  %v2012 = vld [vmem:[%s2006 + $0x28] sm:$0xff]
  %v2013 = vld [vmem:[%s2006 + $0x30] sm:$0xff]
  %v2014 = vld [vmem:[%s2006 + $0x38] sm:$0xff]
  %v2015 = vld [vmem:[%s2006 + $0x40] sm:$0xff]
  %v2016 = vld [vmem:[%s2006 + $0x48] sm:$0xff]
  %v2017 = vld [vmem:[%s2006 + $0x50] sm:$0xff]
  %v2018 = vld [vmem:[%s2006 + $0x58] sm:$0xff]
  %v2019 = vld [vmem:[%s2006 + $0x60] sm:$0xff]
  %v2020 = vld [vmem:[%s2006 + $0x68] sm:$0xff]
  %v2021 = vld [vmem:[%s2006 + $0x70] sm:$0xff]
  %v2022 = vld [vmem:[%s2006 + $0x78] sm:$0xff]
  %v2023 = vld [vmem:[%s2006 + $0x80] sm:$0xff]
  %v2024 = vld [vmem:[%s2006 + $0x88] sm:$0xff]
  %v2025 = vld [vmem:[%s2006 + $0x90] sm:$0xff]
  %v2026 = vld [vmem:[%s2006 + $0x98] sm:$0xff]
  %v2027 = vld [vmem:[%s2006 + $0xa0] sm:$0xff]
  %v2028 = vld [vmem:[%s2006 + $0xa8] sm:$0xff]
  %v2029 = vld [vmem:[%s2006 + $0xb0] sm:$0xff]
  %v2030 = vld [vmem:[%s2006 + $0xb8] sm:$0xff]
  %v2031 = vld [vmem:[%s2006 + $0xc0] sm:$0xff]
  %v2032 = vld [vmem:[%s2006 + $0xc8] sm:$0xff]
  %v2033 = vld [vmem:[%s2006 + $0xd0] sm:$0xff]
  %v2034 = vld [vmem:[%s2006 + $0xd8] sm:$0xff]
  %v2035 = vld [vmem:[%s2006 + $0xe0] sm:$0xff]
  %v2036 = vld [vmem:[%s2006 + $0xe8] sm:$0xff]
  %v2037 = vld [vmem:[%s2006 + $0xf0] sm:$0xff]
  %v2038 = vld [vmem:[%s2006 + $0xf8] sm:$0xff]
  %v2039 = vld [vmem:[%s2006 + $0x100] sm:$0xff]
  %v2040 = vld [vmem:[%s2006 + $0x108] sm:$0xff]
  %v2041 = vld [vmem:[%s2006 + $0x110] sm:$0xff]
  %v2042 = vld [vmem:[%s2006 + $0x118] sm:$0xff]
  %v2043 = vld [vmem:[%s2006 + $0x120] sm:$0xff]
  %v2044 = vld [vmem:[%s2006 + $0x128] sm:$0xff]
  %v2045 = vld [vmem:[%s2006 + $0x130] sm:$0xff]
  %v2046 = vld [vmem:[%s2006 + $0x138] sm:$0xff]
  %v2047 = vld [vmem:[%s2006 + $0x140] sm:$0xff]
  %v2048 = vld [vmem:[%s2006 + $0x148] sm:$0xff]
  %v2049 = vld [vmem:[%s2006 + $0x150] sm:$0xff]
  %v2050 = vld [vmem:[%s2006 + $0x158] sm:$0xff]
  %v2051 = vld [vmem:[%s2006 + $0x160] sm:$0xff]
  %v2052 = vld [vmem:[%s2006 + $0x168] sm:$0xff]
  %v2053 = vld [vmem:[%s2006 + $0x170] sm:$0xff]
  %v2054 = vld [vmem:[%s2006 + $0x178] sm:$0xff]
  %2055 = vmatprep.subr.mxu0 %v2038
  %2056 = vmatpush1.msra.mxu0 %v2037
  %2057 = vmatprep.subr.mxu0 %v2036
  %2058 = vmatpush1.msra.mxu0 %v2035
  %2059 = vmatprep.subr.mxu0 %v2034
  %2060 = vmatpush1.msra.mxu0 %v2033
  %2061 = vmatprep.subr.mxu0 %v2032
  %2062 = vmatpush1.msra.mxu0 %v2031
  %2063 = vmatprep.subr.mxu0 %v2030
  %2064 = vmatpush1.msra.mxu0 %v2029
  %2065 = vmatprep.subr.mxu0 %v2028
  %2066 = vmatpush1.msra.mxu0 %v2027
  %2067 = vmatprep.subr.mxu0 %v2026
  %2068 = vmatpush1.msra.mxu0 %v2025
  %2069 = vmatprep.subr.mxu0 %v2024
  %2070 = vmatpush1.msra.mxu0 %v2023
  %2071 = vmatprep.subr.mxu0 %v2022
  %2072 = vmatpush1.msra.mxu0 %v2021
  %2073 = vmatprep.subr.mxu0 %v2020
  %2074 = vmatpush1.msra.mxu0 %v2019
  %2075 = vmatprep.subr.mxu0 %v2018
  %2076 = vmatpush1.msra.mxu0 %v2017
  %2077 = vmatprep.subr.mxu0 %v2016
  %2078 = vmatpush1.msra.mxu0 %v2015
  %2079 = vmatprep.subr.mxu0 %v2014
  %2080 = vmatpush1.msra.mxu0 %v2013
  %2081 = vmatprep.subr.mxu0 %v2012
  %2082 = vmatpush1.msra.mxu0 %v2011
  %2083 = vmatprep.subr.mxu0 %v2010
  %2084 = vmatpush1.msra.mxu0 %v2009
  %2085 = vmatprep.subr.mxu0 %v2008
  %2086 = vmatpush1.msra.mxu0 %v2007
  %2087 = vmatprep.subr.mxu0 0.0
  %2088 = vmatpush2.msra.mxu0 0.0
  %2089 = vmatprep.subr.mxu0 0.0
  %2090 = vmatpush2.msra.mxu0 0.0
  %2091 = vmatprep.subr.mxu0 0.0
  %2092 = vmatpush2.msra.mxu0 0.0
  %2093 = vmatprep.subr.mxu0 0.0
  %2094 = vmatpush2.msra.mxu0 0.0
  %2095 = vmatprep.subr.mxu0 0.0
  %2096 = vmatpush2.msra.mxu0 0.0
  %2097 = vmatprep.subr.mxu0 0.0
  %2098 = vmatpush2.msra.mxu0 0.0
  %2099 = vmatprep.subr.mxu0 0.0
  %2100 = vmatpush2.msra.mxu0 0.0
  %2101 = vmatprep.subr.mxu0 0.0
  %2102 = vmatpush2.msra.mxu0 0.0
  %2103 = vmatprep.subr.mxu0 %v2054
  %2104 = vmatpush2.msra.mxu0 %v2053
  %2105 = vmatprep.subr.mxu0 %v2052
  %2106 = vmatpush2.msra.mxu0 %v2051
  %2107 = vmatprep.subr.mxu0 %v2050
  %2108 = vmatpush2.msra.mxu0 %v2049
  %2109 = vmatprep.subr.mxu0 %v2048
  %2110 = vmatpush2.msra.mxu0 %v2047
  %2111 = vmatprep.subr.mxu0 %v2046
  %2112 = vmatpush2.msra.mxu0 %v2045
  %2113 = vmatprep.subr.mxu0 %v2044
  %2114 = vmatpush2.msra.mxu0 %v2043
  %2115 = vmatprep.subr.mxu0 %v2042
  %2116 = vmatpush2.msra.mxu0 %v2041
  %2117 = vmatprep.subr.mxu0 %v2040
  %2118 = vmatpush2.msra.mxu0 %v2039
  %2119 = vmatprep.mubr.f32.mxu0 %v298
  %2120 = vmatmul.mubr.f32.gmra.mxu0 %v47
  %v2121 = vpop.f32.mrf.mxu0
  %v2122 = vadd.f32 0.0, %v2121
  %v2123 = vpop.f32.mrf.mxu0
  %v2124 = vadd.f32 0.0, %v2123
  %2125 = vmatprep.mubr.f32.mxu0 %v301
  %2126 = vmatmul.mubr.f32.gmra.mxu0 %v49
  %v2127 = vpop.f32.mrf.mxu0
  %v2128 = vadd.f32 0.0, %v2127
  %v2129 = vpop.f32.mrf.mxu0
  %v2130 = vadd.f32 0.0, %v2129
  %2131 = vdwg.mxu0
  %v2134 = vcombine.low %v2002, %v2004
  %v2136 = vunpack.c.l.s4 1966171168
  %v2137 = vunpack.c.0.s8 %v2136
  %v2138 = vlaneseq
  %v2139 = vshrl.u32 %v2138, 7
  %v2140 = vsub.s32 %v2137, %v2139
  %v2141 = vrot.slane %v2134, %v2140
  %v2142 = vcombine.high %v2141, %v2141
  %v2144 = vunpack.c.l.s4 1966171168
  %v2145 = vunpack.c.0.s8 %v2144
  %v2146 = vlaneseq
  %v2147 = vshrl.u32 %v2146, 7
  %v2148 = vsub.s32 %v2145, %v2147
  %v2149 = vrot.slane %v2141, %v2148
  %v2151 = vunpack.c.l.s4 1966171168
  %v2152 = vunpack.c.0.s8 %v2151
  %v2153 = vlaneseq
  %v2154 = vshrl.u32 %v2153, 7
  %v2155 = vsub.s32 %v2152, %v2154
  %v2156 = vrot.slane %v2142, %v2155
  %v2157 = vlaneseq
  %v2158 = vshrl.u32 %v2157, 7
  %v2159 = vsub.s32 0, %v2158
  %v2160 = vrot.slane %v2149, %v2159
  %v2161 = vlaneseq
  %v2162 = vshrl.u32 %v2161, 7
  %v2163 = vsub.s32 1, %v2162
  %v2164 = vrot.slane %v2149, %v2163
  %v2165 = vlaneseq
  %v2166 = vshrl.u32 %v2165, 7
  %v2167 = vsub.s32 0, %v2166
  %v2168 = vrot.slane %v2156, %v2167
  %v2169 = vlaneseq
  %v2170 = vshrl.u32 %v2169, 7
  %v2171 = vsub.s32 1, %v2170
  %v2172 = vrot.slane %v2156, %v2171
  %v2177 = vadd.f32 %v2160, %v2122
  %v2178 = vadd.f32 %v2164, %v2124
  %v2179 = vadd.f32 %v2168, %v2128
  %v2180 = vadd.f32 %v2172, %v2130
  %s2181 = scalar_lea.vmem %s4, 2
  %v2182 = vld [vmem:[%s2181] sm:$0x3]
  %v2184 = vlaneseq
  %v2185 = vshrl.u32 %v2184, 7
  %v2186 = vsub.s32 0, %v2185
  %v2187 = vrot.slane %v2182, %v2186
  %v2188 = vlaneseq
  %v2189 = vshrl.u32 %v2188, 7
  %v2190 = vsub.s32 1, %v2189
  %v2191 = vrot.slane %v2182, %v2190
  %v2194 = vadd.f32 %v2177, %v2187
  %v2195 = vadd.f32 %v2178, %v2191
  %v2196 = vadd.f32 %v2179, %v2187
  %v2197 = vadd.f32 %v2180, %v2191
  %v2198 = vtanh.pop %v2194
  %v2199 = vtanh.pop %v2195
  %v2200 = vtanh.pop %v2196
  %v2201 = vtanh.pop %v2197
  %s2202 = scalar_lea.vmem %s5, 192
  %v2203 = vld [vmem:[%s2202] sm:$0xff]
  %v2204 = vld [vmem:[%s2202 + $0x8] sm:$0xff]
  %v2205 = vld [vmem:[%s2202 + $0x10] sm:$0xff]
  %v2206 = vld [vmem:[%s2202 + $0x18] sm:$0xff]
  %v2207 = vld [vmem:[%s2202 + $0x20] sm:$0xff]
  %v2208 = vld [vmem:[%s2202 + $0x28] sm:$0xff]
  %v2209 = vld [vmem:[%s2202 + $0x30] sm:$0xff]
  %v2210 = vld [vmem:[%s2202 + $0x38] sm:$0xff]
  %v2211 = vld [vmem:[%s2202 + $0x40] sm:$0xff]
  %v2212 = vld [vmem:[%s2202 + $0x48] sm:$0xff]
  %v2213 = vld [vmem:[%s2202 + $0x50] sm:$0xff]
  %v2214 = vld [vmem:[%s2202 + $0x58] sm:$0xff]
  %v2215 = vld [vmem:[%s2202 + $0x60] sm:$0xff]
  %v2216 = vld [vmem:[%s2202 + $0x68] sm:$0xff]
  %v2217 = vld [vmem:[%s2202 + $0x70] sm:$0xff]
  %v2218 = vld [vmem:[%s2202 + $0x78] sm:$0xff]
  %v2219 = vld [vmem:[%s2202 + $0x80] sm:$0xff]
  %v2220 = vld [vmem:[%s2202 + $0x88] sm:$0xff]
  %v2221 = vld [vmem:[%s2202 + $0x90] sm:$0xff]
  %v2222 = vld [vmem:[%s2202 + $0x98] sm:$0xff]
  %v2223 = vld [vmem:[%s2202 + $0xa0] sm:$0xff]
  %v2224 = vld [vmem:[%s2202 + $0xa8] sm:$0xff]
  %v2225 = vld [vmem:[%s2202 + $0xb0] sm:$0xff]
  %v2226 = vld [vmem:[%s2202 + $0xb8] sm:$0xff]
  %v2228 = vsel %vm91, %v2199, 0
  %v2231 = vsel %vm91, %v2201, 0
  %2233 = vmatprep.subr.mxu0 0.0
  %2234 = vmatpush1.msra.mxu0 %v2218
  %2235 = vmatprep.subr.mxu0 0.0
  %2236 = vmatpush1.msra.mxu0 %v2217
  %2237 = vmatprep.subr.mxu0 0.0
  %2238 = vmatpush1.msra.mxu0 %v2216
  %2239 = vmatprep.subr.mxu0 0.0
  %2240 = vmatpush1.msra.mxu0 %v2215
  %2241 = vmatprep.subr.mxu0 0.0
  %2242 = vmatpush1.msra.mxu0 %v2214
  %2243 = vmatprep.subr.mxu0 0.0
  %2244 = vmatpush1.msra.mxu0 %v2213
  %2245 = vmatprep.subr.mxu0 0.0
  %2246 = vmatpush1.msra.mxu0 %v2212
  %2247 = vmatprep.subr.mxu0 0.0
  %2248 = vmatpush1.msra.mxu0 %v2211
  %2249 = vmatprep.subr.mxu0 0.0
  %2250 = vmatpush1.msra.mxu0 %v2210
  %2251 = vmatprep.subr.mxu0 0.0
  %2252 = vmatpush1.msra.mxu0 %v2209
  %2253 = vmatprep.subr.mxu0 0.0
  %2254 = vmatpush1.msra.mxu0 %v2208
  %2255 = vmatprep.subr.mxu0 0.0
  %2256 = vmatpush1.msra.mxu0 %v2207
  %2257 = vmatprep.subr.mxu0 0.0
  %2258 = vmatpush1.msra.mxu0 %v2206
  %2259 = vmatprep.subr.mxu0 0.0
  %2260 = vmatpush1.msra.mxu0 %v2205
  %2261 = vmatprep.subr.mxu0 0.0
  %2262 = vmatpush1.msra.mxu0 %v2204
  %2263 = vmatprep.subr.mxu0 0.0
  %2264 = vmatpush1.msra.mxu0 %v2203
  %2265 = vmatprep.subr.mxu0 0.0
  %2266 = vmatpush2.msra.mxu0 0.0
  %2267 = vmatprep.subr.mxu0 0.0
  %2268 = vmatpush2.msra.mxu0 0.0
  %2269 = vmatprep.subr.mxu0 0.0
  %2270 = vmatpush2.msra.mxu0 0.0
  %2271 = vmatprep.subr.mxu0 0.0
  %2272 = vmatpush2.msra.mxu0 0.0
  %2273 = vmatprep.subr.mxu0 0.0
  %2274 = vmatpush2.msra.mxu0 0.0
  %2275 = vmatprep.subr.mxu0 0.0
  %2276 = vmatpush2.msra.mxu0 0.0
  %2277 = vmatprep.subr.mxu0 0.0
  %2278 = vmatpush2.msra.mxu0 0.0
  %2279 = vmatprep.subr.mxu0 0.0
  %2280 = vmatpush2.msra.mxu0 0.0
  %2281 = vmatprep.subr.mxu0 0.0
  %2282 = vmatpush2.msra.mxu0 %v2226
  %2283 = vmatprep.subr.mxu0 0.0
  %2284 = vmatpush2.msra.mxu0 %v2225
  %2285 = vmatprep.subr.mxu0 0.0
  %2286 = vmatpush2.msra.mxu0 %v2224
  %2287 = vmatprep.subr.mxu0 0.0
  %2288 = vmatpush2.msra.mxu0 %v2223
  %2289 = vmatprep.subr.mxu0 0.0
  %2290 = vmatpush2.msra.mxu0 %v2222
  %2291 = vmatprep.subr.mxu0 0.0
  %2292 = vmatpush2.msra.mxu0 %v2221
  %2293 = vmatprep.subr.mxu0 0.0
  %2294 = vmatpush2.msra.mxu0 %v2220
  %2295 = vmatprep.subr.mxu0 0.0
  %2296 = vmatpush2.msra.mxu0 %v2219
  %2297 = vmatprep.mubr.f32.mxu0 %v2228
  %2298 = vmatmul.mubr.f32.gmra.mxu0 %v2198
  %v2299 = vpop.f32.mrf.mxu0
  %v2300 = vadd.f32 0.0, %v2299
  %v2301 = vpop.f32.mrf.mxu0
  %2302 = vmatprep.mubr.f32.mxu0 %v2231
  %2303 = vmatmul.mubr.f32.gmra.mxu0 %v2200
  %v2304 = vpop.f32.mrf.mxu0
  %v2305 = vadd.f32 0.0, %v2304
  %v2306 = vpop.f32.mrf.mxu0
  %2307 = vdwg.mxu0
  %v2308 = vsel %vm554, %v2300, -inf
  %v2309 = vrot.slane %v2308, 4
  %v2310 = vmax.f32 %v2308, %v2309
  %v2311 = vrot.slane %v2310, 2
  %v2312 = vmax.f32 %v2310, %v2311
  %v2313 = vrot.slane %v2312, 1
  %v2314 = vmax.f32 %v2312, %v2313
  %v2315 = vsel %vm554, %v2305, -inf
  %v2316 = vrot.slane %v2315, 4
  %v2317 = vmax.f32 %v2315, %v2316
  %v2318 = vrot.slane %v2317, 2
  %v2319 = vmax.f32 %v2317, %v2318
  %v2320 = vrot.slane %v2319, 1
  %v2321 = vmax.f32 %v2319, %v2320
  %v2322 = vsub.f32 %v2300, %v2314
  %v2323 = vsub.f32 %v2305, %v2321
  %v2324 = vmul.f32 %v2322, 1.442695
  %v2325 = vpow.pop %v2324
  %v2326 = vmul.f32 %v2323, 1.442695
  %v2327 = vpow.pop %v2326
  %v2328 = vsel %vm554, %v2325, 0.0
  %v2329 = vrot.slane %v2328, 4
  %v2330 = vadd.f32 %v2328, %v2329
  %v2331 = vrot.slane %v2330, 2
  %v2332 = vadd.f32 %v2330, %v2331
  %v2333 = vrot.slane %v2332, 1
  %v2334 = vadd.f32 %v2332, %v2333
  %v2335 = vsel %vm554, %v2327, 0.0
  %v2336 = vrot.slane %v2335, 4
  %v2337 = vadd.f32 %v2335, %v2336
  %v2338 = vrot.slane %v2337, 2
  %v2339 = vadd.f32 %v2337, %v2338
  %v2340 = vrot.slane %v2339, 1
  %v2341 = vadd.f32 %v2339, %v2340
  %v2342 = vrcp.pop %v2334
  %v2343 = vrcp.pop %v2341
  %v2344 = vmul.f32 %v2325, %v2342
  %v2345 = vmul.f32 %v2327, %v2343
  %v2347 = vsel %vm554, %v2344, 0
  %v2350 = vsel %vm554, %v2345, 0
  %2352 = vmatprep.subr.mxu0 0.0
  %2353 = vmatpush1.msra.mxu0 0.0
  %2354 = vmatprep.subr.mxu0 0.0
  %2355 = vmatpush1.msra.mxu0 0.0
  %2356 = vmatprep.subr.mxu0 0.0
  %2357 = vmatpush1.msra.mxu0 0.0
  %2358 = vmatprep.subr.mxu0 0.0
  %2359 = vmatpush1.msra.mxu0 0.0
  %2360 = vmatprep.subr.mxu0 0.0
  %2361 = vmatpush1.msra.mxu0 0.0
  %2362 = vmatprep.subr.mxu0 0.0
  %2363 = vmatpush1.msra.mxu0 0.0
  %2364 = vmatprep.subr.mxu0 0.0
  %2365 = vmatpush1.msra.mxu0 0.0
  %2366 = vmatprep.subr.mxu0 0.0
  %2367 = vmatpush1.msra.mxu0 0.0
  %2368 = vmatprep.subr.mxu0 0.0
  %2369 = vmatpush1.msra.mxu0 0.0
  %2370 = vmatprep.subr.mxu0 0.0
  %2371 = vmatpush1.msra.mxu0 0.0
  %2372 = vmatprep.subr.mxu0 0.0
  %2373 = vmatpush1.msra.mxu0 0.0
  %2374 = vmatprep.subr.mxu0 0.0
  %2375 = vmatpush1.msra.mxu0 0.0
  %2376 = vmatprep.subr.mxu0 0.0
  %2377 = vmatpush1.msra.mxu0 0.0
  %2378 = vmatprep.subr.mxu0 0.0
  %2379 = vmatpush1.msra.mxu0 0.0
  %2380 = vmatprep.subr.mxu0 0.0
  %2381 = vmatpush1.msra.mxu0 0.0
  %2382 = vmatprep.subr.mxu0 %v604
  %2383 = vmatpush1.msra.mxu0 %v601
  %2384 = vmatprep.subr.mxu0 0.0
  %2385 = vmatpush2.msra.mxu0 0.0
  %2386 = vmatprep.subr.mxu0 0.0
  %2387 = vmatpush2.msra.mxu0 0.0
  %2388 = vmatprep.subr.mxu0 0.0
  %2389 = vmatpush2.msra.mxu0 0.0
  %2390 = vmatprep.subr.mxu0 0.0
  %2391 = vmatpush2.msra.mxu0 0.0
  %2392 = vmatprep.subr.mxu0 0.0
  %2393 = vmatpush2.msra.mxu0 0.0
  %2394 = vmatprep.subr.mxu0 0.0
  %2395 = vmatpush2.msra.mxu0 0.0
  %2396 = vmatprep.subr.mxu0 0.0
  %2397 = vmatpush2.msra.mxu0 0.0
  %2398 = vmatprep.subr.mxu0 0.0
  %2399 = vmatpush2.msra.mxu0 0.0
  %2400 = vmatprep.subr.mxu0 0.0
  %2401 = vmatpush2.msra.mxu0 0.0
  %2402 = vmatprep.subr.mxu0 0.0
  %2403 = vmatpush2.msra.mxu0 0.0
  %2404 = vmatprep.subr.mxu0 0.0
  %2405 = vmatpush2.msra.mxu0 0.0
  %2406 = vmatprep.subr.mxu0 0.0
  %2407 = vmatpush2.msra.mxu0 0.0
  %2408 = vmatprep.subr.mxu0 0.0
  %2409 = vmatpush2.msra.mxu0 0.0
  %2410 = vmatprep.subr.mxu0 0.0
  %2411 = vmatpush2.msra.mxu0 0.0
  %2412 = vmatprep.subr.mxu0 0.0
  %2413 = vmatpush2.msra.mxu0 0.0
  %2414 = vmatprep.subr.mxu0 0.0
  %2415 = vmatpush2.msra.mxu0 0.0
  %2416 = vmatprep.mubr.f32.mxu0 0.0
  %2417 = vmatmul.mubr.f32.gmra.mxu0 %v2347
  %v2418 = vpop.f32.mrf.mxu0
  %v2419 = vadd.f32 0.0, %v2418
  %v2420 = vpop.f32.mrf.mxu0
  %v2421 = vadd.f32 0.0, %v2420
  %2422 = vmatprep.mubr.f32.mxu0 0.0
  %2423 = vmatmul.mubr.f32.gmra.mxu0 %v2350
  %v2424 = vpop.f32.mrf.mxu0
  %v2425 = vadd.f32 0.0, %v2424
  %v2426 = vpop.f32.mrf.mxu0
  %v2427 = vadd.f32 0.0, %v2426
  %2428 = vdwg.mxu0
  %v2429 = vmul.f32 %v2419, %v47
  %v2430 = vmul.f32 %v2421, %v48
  %v2431 = vmul.f32 %v2425, %v49
  %v2432 = vmul.f32 %v2427, %v50
  %v2433 = vrot.slane %v2429, 4
  %v2434 = vadd.f32 %v2429, %v2433
  %v2435 = vrot.slane %v2434, 2
  %v2436 = vadd.f32 %v2434, %v2435
  %v2437 = vrot.slane %v2436, 1
  %v2438 = vadd.f32 %v2436, %v2437
  %v2439 = vsel %vm91, %v2430, 0.0
  %v2440 = vrot.slane %v2439, 4
  %v2441 = vadd.f32 %v2439, %v2440
  %v2442 = vrot.slane %v2441, 2
  %v2443 = vadd.f32 %v2441, %v2442
  %v2444 = vrot.slane %v2443, 1
  %v2445 = vadd.f32 %v2443, %v2444
  %v2446 = vrot.slane %v2431, 4
  %v2447 = vadd.f32 %v2431, %v2446
  %v2448 = vrot.slane %v2447, 2
  %v2449 = vadd.f32 %v2447, %v2448
  %v2450 = vrot.slane %v2449, 1
  %v2451 = vadd.f32 %v2449, %v2450
  %v2452 = vsel %vm91, %v2432, 0.0
  %v2453 = vrot.slane %v2452, 4
  %v2454 = vadd.f32 %v2452, %v2453
  %v2455 = vrot.slane %v2454, 2
  %v2456 = vadd.f32 %v2454, %v2455
  %v2457 = vrot.slane %v2456, 1
  %v2458 = vadd.f32 %v2456, %v2457
  %2459 = vrot.lane.b32.xlu0 %v1922, 64
  %v2460 = vpop.permute.xlu0 %2459
  %v2466 = vsel %vm720, %v2451, %v2438
  %v2467 = vsel %vm720, %v2458, %v2445
  %2468 = vrot.lane.b32.xlu0 %v2466, 96
  %v2469 = vpop.permute.xlu0 %2468
  %2470 = vrot.lane.b32.xlu0 %v2467, 96
  %v2471 = vpop.permute.xlu0 %2470
  %v2472 = vsel %vm727, %v2469, %v2471
  %v2475 = vsel %vm91, %v55, %v2460
  %v2476 = vsel %vm727, %v2475, %v2469
  %s2477 = scalar_lea.vmem %s9, 864
  %v2478 = vld [vmem:[%s2477] sm:$0xff]
  %v2479 = vld [vmem:[%s2477 + $0x8] sm:$0xff]
  %v2480 = vld [vmem:[%s2477 + $0x10] sm:$0xff]
  %v2481 = vld [vmem:[%s2477 + $0x18] sm:$0xff]
  %v2482 = vld [vmem:[%s2477 + $0x20] sm:$0xff]
  %v2483 = vld [vmem:[%s2477 + $0x28] sm:$0xff]
  %v2484 = vld [vmem:[%s2477 + $0x30] sm:$0xff]
  %v2485 = vld [vmem:[%s2477 + $0x38] sm:$0xff]
  %v2486 = vld [vmem:[%s2477 + $0x40] sm:$0xff]
  %v2487 = vld [vmem:[%s2477 + $0x48] sm:$0xff]
  %v2488 = vld [vmem:[%s2477 + $0x50] sm:$0xff]
  %v2489 = vld [vmem:[%s2477 + $0x58] sm:$0xff]
  %v2490 = vld [vmem:[%s2477 + $0x60] sm:$0xff]
  %v2491 = vld [vmem:[%s2477 + $0x68] sm:$0xff]
  %v2492 = vld [vmem:[%s2477 + $0x70] sm:$0xff]
  %v2493 = vld [vmem:[%s2477 + $0x78] sm:$0xff]
  %v2494 = vld [vmem:[%s2477 + $0x80] sm:$0xff]
  %v2495 = vld [vmem:[%s2477 + $0x88] sm:$0xff]
  %v2496 = vld [vmem:[%s2477 + $0x90] sm:$0xff]
  %v2497 = vld [vmem:[%s2477 + $0x98] sm:$0xff]
  %v2498 = vld [vmem:[%s2477 + $0xa0] sm:$0xff]
  %v2499 = vld [vmem:[%s2477 + $0xa8] sm:$0xff]
  %v2500 = vld [vmem:[%s2477 + $0xb0] sm:$0xff]
  %v2501 = vld [vmem:[%s2477 + $0xb8] sm:$0xff]
  %v2502 = vld [vmem:[%s2477 + $0xc0] sm:$0xff]
  %v2503 = vld [vmem:[%s2477 + $0xc8] sm:$0xff]
  %v2504 = vld [vmem:[%s2477 + $0xd0] sm:$0xff]
  %v2505 = vld [vmem:[%s2477 + $0xd8] sm:$0xff]
  %v2506 = vld [vmem:[%s2477 + $0xe0] sm:$0xff]
  %v2507 = vld [vmem:[%s2477 + $0xe8] sm:$0xff]
  %v2508 = vld [vmem:[%s2477 + $0xf0] sm:$0xff]
  %v2509 = vld [vmem:[%s2477 + $0xf8] sm:$0xff]
  %v2510 = vld [vmem:[%s2477 + $0x100] sm:$0xff]
  %v2511 = vld [vmem:[%s2477 + $0x108] sm:$0xff]
  %v2512 = vld [vmem:[%s2477 + $0x110] sm:$0xff]
  %v2513 = vld [vmem:[%s2477 + $0x118] sm:$0xff]
  %s2514 = scalar_lea.vmem %s8, 6
  %v2515 = vld [vmem:[%s2514] sm:$0x1]
  %v2517 = vlaneseq
  %v2518 = vshrl.u32 %v2517, 7
  %v2519 = vsub.s32 0, %v2518
  %v2520 = vrot.slane %v2515, %v2519
  %v2522 = vsel %vm174, %v2471, 0
  %2524 = vmatprep.subr.mxu0 0.0
  %2525 = vmatpush1.msra.mxu0 %v2493
  %2526 = vmatprep.subr.mxu0 0.0
  %2527 = vmatpush1.msra.mxu0 %v2492
  %2528 = vmatprep.subr.mxu0 0.0
  %2529 = vmatpush1.msra.mxu0 %v2491
  %2530 = vmatprep.subr.mxu0 0.0
  %2531 = vmatpush1.msra.mxu0 %v2490
  %2532 = vmatprep.subr.mxu0 0.0
  %2533 = vmatpush1.msra.mxu0 %v2489
  %2534 = vmatprep.subr.mxu0 0.0
  %2535 = vmatpush1.msra.mxu0 %v2488
  %2536 = vmatprep.subr.mxu0 0.0
  %2537 = vmatpush1.msra.mxu0 %v2487
  %2538 = vmatprep.subr.mxu0 0.0
  %2539 = vmatpush1.msra.mxu0 %v2486
  %2540 = vmatprep.subr.mxu0 0.0
  %2541 = vmatpush1.msra.mxu0 %v2485
  %2542 = vmatprep.subr.mxu0 0.0
  %2543 = vmatpush1.msra.mxu0 %v2484
  %2544 = vmatprep.subr.mxu0 0.0
  %2545 = vmatpush1.msra.mxu0 %v2483
  %2546 = vmatprep.subr.mxu0 0.0
  %2547 = vmatpush1.msra.mxu0 %v2482
  %2548 = vmatprep.subr.mxu0 0.0
  %2549 = vmatpush1.msra.mxu0 %v2481
  %2550 = vmatprep.subr.mxu0 0.0
  %2551 = vmatpush1.msra.mxu0 %v2480
  %2552 = vmatprep.subr.mxu0 0.0
  %2553 = vmatpush1.msra.mxu0 %v2479
  %2554 = vmatprep.subr.mxu0 0.0
  %2555 = vmatpush1.msra.mxu0 %v2478
  %2556 = vmatprep.subr.mxu0 0.0
  %2557 = vmatpush2.msra.mxu0 %v2509
  %2558 = vmatprep.subr.mxu0 0.0
  %2559 = vmatpush2.msra.mxu0 %v2508
  %2560 = vmatprep.subr.mxu0 0.0
  %2561 = vmatpush2.msra.mxu0 %v2507
  %2562 = vmatprep.subr.mxu0 0.0
  %2563 = vmatpush2.msra.mxu0 %v2506
  %2564 = vmatprep.subr.mxu0 0.0
  %2565 = vmatpush2.msra.mxu0 %v2505
  %2566 = vmatprep.subr.mxu0 0.0
  %2567 = vmatpush2.msra.mxu0 %v2504
  %2568 = vmatprep.subr.mxu0 0.0
  %2569 = vmatpush2.msra.mxu0 %v2503
  %2570 = vmatprep.subr.mxu0 0.0
  %2571 = vmatpush2.msra.mxu0 %v2502
  %2572 = vmatprep.subr.mxu0 0.0
  %2573 = vmatpush2.msra.mxu0 %v2501
  %2574 = vmatprep.subr.mxu0 0.0
  %2575 = vmatpush2.msra.mxu0 %v2500
  %2576 = vmatprep.subr.mxu0 0.0
  %2577 = vmatpush2.msra.mxu0 %v2499
  %2578 = vmatprep.subr.mxu0 0.0
  %2579 = vmatpush2.msra.mxu0 %v2498
  %2580 = vmatprep.subr.mxu0 0.0
  %2581 = vmatpush2.msra.mxu0 %v2497
  %2582 = vmatprep.subr.mxu0 0.0
  %2583 = vmatpush2.msra.mxu0 %v2496
  %2584 = vmatprep.subr.mxu0 0.0
  %2585 = vmatpush2.msra.mxu0 %v2495
  %2586 = vmatprep.subr.mxu0 0.0
  %2587 = vmatpush2.msra.mxu0 %v2494
  %2588 = vmatprep.mubr.f32.mxu0 %v2472
  %2589 = vmatmul.mubr.f32.gmra.mxu0 %v2476
  %v2590 = vpop.f32.mrf.mxu0
  %v2591 = vadd.f32 %v2520, %v2590
  %v2592 = vpop.f32.mrf.mxu0
  %2593 = vdwg.mxu0
  %2594 = vmatprep.subr.mxu0 0.0
  %2595 = vmatpush1.msra.mxu0 0.0
  %2596 = vmatprep.subr.mxu0 0.0
  %2597 = vmatpush1.msra.mxu0 0.0
  %2598 = vmatprep.subr.mxu0 0.0
  %2599 = vmatpush1.msra.mxu0 0.0
  %2600 = vmatprep.subr.mxu0 0.0
  %2601 = vmatpush1.msra.mxu0 0.0
  %2602 = vmatprep.subr.mxu0 0.0
  %2603 = vmatpush1.msra.mxu0 0.0
  %2604 = vmatprep.subr.mxu0 0.0
  %2605 = vmatpush1.msra.mxu0 0.0
  %2606 = vmatprep.subr.mxu0 0.0
  %2607 = vmatpush1.msra.mxu0 0.0
  %2608 = vmatprep.subr.mxu0 0.0
  %2609 = vmatpush1.msra.mxu0 0.0
  %2610 = vmatprep.subr.mxu0 0.0
  %2611 = vmatpush1.msra.mxu0 0.0
  %2612 = vmatprep.subr.mxu0 0.0
  %2613 = vmatpush1.msra.mxu0 0.0
  %2614 = vmatprep.subr.mxu0 0.0
  %2615 = vmatpush1.msra.mxu0 0.0
  %2616 = vmatprep.subr.mxu0 0.0
  %2617 = vmatpush1.msra.mxu0 0.0
  %2618 = vmatprep.subr.mxu0 0.0
  %2619 = vmatpush1.msra.mxu0 %v2513
  %2620 = vmatprep.subr.mxu0 0.0
  %2621 = vmatpush1.msra.mxu0 %v2512
  %2622 = vmatprep.subr.mxu0 0.0
  %2623 = vmatpush1.msra.mxu0 %v2511
  %2624 = vmatprep.subr.mxu0 0.0
  %2625 = vmatpush1.msra.mxu0 %v2510
  %2626 = vmatprep.subr.mxu0 0.0
  %2627 = vmatpush2.msra.mxu0 0.0
  %2628 = vmatprep.subr.mxu0 0.0
  %2629 = vmatpush2.msra.mxu0 0.0
  %2630 = vmatprep.subr.mxu0 0.0
  %2631 = vmatpush2.msra.mxu0 0.0
  %2632 = vmatprep.subr.mxu0 0.0
  %2633 = vmatpush2.msra.mxu0 0.0
  %2634 = vmatprep.subr.mxu0 0.0
  %2635 = vmatpush2.msra.mxu0 0.0
  %2636 = vmatprep.subr.mxu0 0.0
  %2637 = vmatpush2.msra.mxu0 0.0
  %2638 = vmatprep.subr.mxu0 0.0
  %2639 = vmatpush2.msra.mxu0 0.0
  %2640 = vmatprep.subr.mxu0 0.0
  %2641 = vmatpush2.msra.mxu0 0.0
  %2642 = vmatprep.subr.mxu0 0.0
  %2643 = vmatpush2.msra.mxu0 0.0
  %2644 = vmatprep.subr.mxu0 0.0
  %2645 = vmatpush2.msra.mxu0 0.0
  %2646 = vmatprep.subr.mxu0 0.0
  %2647 = vmatpush2.msra.mxu0 0.0
  %2648 = vmatprep.subr.mxu0 0.0
  %2649 = vmatpush2.msra.mxu0 0.0
  %2650 = vmatprep.subr.mxu0 0.0
  %2651 = vmatpush2.msra.mxu0 0.0
  %2652 = vmatprep.subr.mxu0 0.0
  %2653 = vmatpush2.msra.mxu0 0.0
  %2654 = vmatprep.subr.mxu0 0.0
  %2655 = vmatpush2.msra.mxu0 0.0
  %2656 = vmatprep.subr.mxu0 0.0
  %2657 = vmatpush2.msra.mxu0 0.0
  %2658 = vmatprep.mubr.f32.mxu0 0.0
  %2659 = vmatmul.mubr.f32.gmra.mxu0 %v2522
  %v2660 = vpop.f32.mrf.mxu0
  %v2661 = vadd.f32 %v2591, %v2660
  %v2662 = vpop.f32.mrf.mxu0
  %2663 = vdwg.mxu0
  %s2664 = scalar_lea.vmem %s9, 1152
  %v2665 = vld [vmem:[%s2664] sm:$0xff]
  %v2666 = vld [vmem:[%s2664 + $0x8] sm:$0xff]
  %v2667 = vld [vmem:[%s2664 + $0x10] sm:$0xff]
  %v2668 = vld [vmem:[%s2664 + $0x18] sm:$0xff]
  %v2669 = vld [vmem:[%s2664 + $0x20] sm:$0xff]
  %v2670 = vld [vmem:[%s2664 + $0x28] sm:$0xff]
  %v2671 = vld [vmem:[%s2664 + $0x30] sm:$0xff]
  %v2672 = vld [vmem:[%s2664 + $0x38] sm:$0xff]
  %v2673 = vld [vmem:[%s2664 + $0x40] sm:$0xff]
  %v2674 = vld [vmem:[%s2664 + $0x48] sm:$0xff]
  %v2675 = vld [vmem:[%s2664 + $0x50] sm:$0xff]
  %v2676 = vld [vmem:[%s2664 + $0x58] sm:$0xff]
  %v2677 = vld [vmem:[%s2664 + $0x60] sm:$0xff]
  %v2678 = vld [vmem:[%s2664 + $0x68] sm:$0xff]
  %v2679 = vld [vmem:[%s2664 + $0x70] sm:$0xff]
  %v2680 = vld [vmem:[%s2664 + $0x78] sm:$0xff]
  %v2681 = vld [vmem:[%s2664 + $0x80] sm:$0xff]
  %v2682 = vld [vmem:[%s2664 + $0x88] sm:$0xff]
  %v2683 = vld [vmem:[%s2664 + $0x90] sm:$0xff]
  %v2684 = vld [vmem:[%s2664 + $0x98] sm:$0xff]
  %v2685 = vld [vmem:[%s2664 + $0xa0] sm:$0xff]
  %v2686 = vld [vmem:[%s2664 + $0xa8] sm:$0xff]
  %v2687 = vld [vmem:[%s2664 + $0xb0] sm:$0xff]
  %v2688 = vld [vmem:[%s2664 + $0xb8] sm:$0xff]
  %v2689 = vld [vmem:[%s2664 + $0xc0] sm:$0xff]
  %v2690 = vld [vmem:[%s2664 + $0xc8] sm:$0xff]
  %v2691 = vld [vmem:[%s2664 + $0xd0] sm:$0xff]
  %v2692 = vld [vmem:[%s2664 + $0xd8] sm:$0xff]
  %v2693 = vld [vmem:[%s2664 + $0xe0] sm:$0xff]
  %v2694 = vld [vmem:[%s2664 + $0xe8] sm:$0xff]
  %v2695 = vld [vmem:[%s2664 + $0xf0] sm:$0xff]
  %v2696 = vld [vmem:[%s2664 + $0xf8] sm:$0xff]
  %v2697 = vld [vmem:[%s2664 + $0x100] sm:$0xff]
  %v2698 = vld [vmem:[%s2664 + $0x108] sm:$0xff]
  %v2699 = vld [vmem:[%s2664 + $0x110] sm:$0xff]
  %v2700 = vld [vmem:[%s2664 + $0x118] sm:$0xff]
  %s2701 = scalar_lea.vmem %s8, 7
  %v2702 = vld [vmem:[%s2701] sm:$0x1]
  %v2704 = vlaneseq
  %v2705 = vshrl.u32 %v2704, 7
  %v2706 = vsub.s32 0, %v2705
  %v2707 = vrot.slane %v2702, %v2706
  %2709 = vmatprep.subr.mxu0 0.0
  %2710 = vmatpush1.msra.mxu0 %v2680
  %2711 = vmatprep.subr.mxu0 0.0
  %2712 = vmatpush1.msra.mxu0 %v2679
  %2713 = vmatprep.subr.mxu0 0.0
  %2714 = vmatpush1.msra.mxu0 %v2678
  %2715 = vmatprep.subr.mxu0 0.0
  %2716 = vmatpush1.msra.mxu0 %v2677
  %2717 = vmatprep.subr.mxu0 0.0
  %2718 = vmatpush1.msra.mxu0 %v2676
  %2719 = vmatprep.subr.mxu0 0.0
  %2720 = vmatpush1.msra.mxu0 %v2675
  %2721 = vmatprep.subr.mxu0 0.0
  %2722 = vmatpush1.msra.mxu0 %v2674
  %2723 = vmatprep.subr.mxu0 0.0
  %2724 = vmatpush1.msra.mxu0 %v2673
  %2725 = vmatprep.subr.mxu0 0.0
  %2726 = vmatpush1.msra.mxu0 %v2672
  %2727 = vmatprep.subr.mxu0 0.0
  %2728 = vmatpush1.msra.mxu0 %v2671
  %2729 = vmatprep.subr.mxu0 0.0
  %2730 = vmatpush1.msra.mxu0 %v2670
  %2731 = vmatprep.subr.mxu0 0.0
  %2732 = vmatpush1.msra.mxu0 %v2669
  %2733 = vmatprep.subr.mxu0 0.0
  %2734 = vmatpush1.msra.mxu0 %v2668
  %2735 = vmatprep.subr.mxu0 0.0
  %2736 = vmatpush1.msra.mxu0 %v2667
  %2737 = vmatprep.subr.mxu0 0.0
  %2738 = vmatpush1.msra.mxu0 %v2666
  %2739 = vmatprep.subr.mxu0 0.0
  %2740 = vmatpush1.msra.mxu0 %v2665
  %2741 = vmatprep.subr.mxu0 0.0
  %2742 = vmatpush2.msra.mxu0 %v2696
  %2743 = vmatprep.subr.mxu0 0.0
  %2744 = vmatpush2.msra.mxu0 %v2695
  %2745 = vmatprep.subr.mxu0 0.0
  %2746 = vmatpush2.msra.mxu0 %v2694
  %2747 = vmatprep.subr.mxu0 0.0
  %2748 = vmatpush2.msra.mxu0 %v2693
  %2749 = vmatprep.subr.mxu0 0.0
  %2750 = vmatpush2.msra.mxu0 %v2692
  %2751 = vmatprep.subr.mxu0 0.0
  %2752 = vmatpush2.msra.mxu0 %v2691
  %2753 = vmatprep.subr.mxu0 0.0
  %2754 = vmatpush2.msra.mxu0 %v2690
  %2755 = vmatprep.subr.mxu0 0.0
  %2756 = vmatpush2.msra.mxu0 %v2689
  %2757 = vmatprep.subr.mxu0 0.0
  %2758 = vmatpush2.msra.mxu0 %v2688
  %2759 = vmatprep.subr.mxu0 0.0
  %2760 = vmatpush2.msra.mxu0 %v2687
  %2761 = vmatprep.subr.mxu0 0.0
  %2762 = vmatpush2.msra.mxu0 %v2686
  %2763 = vmatprep.subr.mxu0 0.0
  %2764 = vmatpush2.msra.mxu0 %v2685
  %2765 = vmatprep.subr.mxu0 0.0
  %2766 = vmatpush2.msra.mxu0 %v2684
  %2767 = vmatprep.subr.mxu0 0.0
  %2768 = vmatpush2.msra.mxu0 %v2683
  %2769 = vmatprep.subr.mxu0 0.0
  %2770 = vmatpush2.msra.mxu0 %v2682
  %2771 = vmatprep.subr.mxu0 0.0
  %2772 = vmatpush2.msra.mxu0 %v2681
  %2773 = vmatprep.mubr.f32.mxu0 %v2472
  %2774 = vmatmul.mubr.f32.gmra.mxu0 %v2476
  %v2775 = vpop.f32.mrf.mxu0
  %v2776 = vadd.f32 %v2707, %v2775
  %v2777 = vpop.f32.mrf.mxu0
  %2778 = vdwg.mxu0
  %2779 = vmatprep.subr.mxu0 0.0
  %2780 = vmatpush1.msra.mxu0 0.0
  %2781 = vmatprep.subr.mxu0 0.0
  %2782 = vmatpush1.msra.mxu0 0.0
  %2783 = vmatprep.subr.mxu0 0.0
  %2784 = vmatpush1.msra.mxu0 0.0
  %2785 = vmatprep.subr.mxu0 0.0
  %2786 = vmatpush1.msra.mxu0 0.0
  %2787 = vmatprep.subr.mxu0 0.0
  %2788 = vmatpush1.msra.mxu0 0.0
  %2789 = vmatprep.subr.mxu0 0.0
  %2790 = vmatpush1.msra.mxu0 0.0
  %2791 = vmatprep.subr.mxu0 0.0
  %2792 = vmatpush1.msra.mxu0 0.0
  %2793 = vmatprep.subr.mxu0 0.0
  %2794 = vmatpush1.msra.mxu0 0.0
  %2795 = vmatprep.subr.mxu0 0.0
  %2796 = vmatpush1.msra.mxu0 0.0
  %2797 = vmatprep.subr.mxu0 0.0
  %2798 = vmatpush1.msra.mxu0 0.0
  %2799 = vmatprep.subr.mxu0 0.0
  %2800 = vmatpush1.msra.mxu0 0.0
  %2801 = vmatprep.subr.mxu0 0.0
  %2802 = vmatpush1.msra.mxu0 0.0
  %2803 = vmatprep.subr.mxu0 0.0
  %2804 = vmatpush1.msra.mxu0 %v2700
  %2805 = vmatprep.subr.mxu0 0.0
  %2806 = vmatpush1.msra.mxu0 %v2699
  %2807 = vmatprep.subr.mxu0 0.0
  %2808 = vmatpush1.msra.mxu0 %v2698
  %2809 = vmatprep.subr.mxu0 0.0
  %2810 = vmatpush1.msra.mxu0 %v2697
  %2811 = vmatprep.subr.mxu0 0.0
  %2812 = vmatpush2.msra.mxu0 0.0
  %2813 = vmatprep.subr.mxu0 0.0
  %2814 = vmatpush2.msra.mxu0 0.0
  %2815 = vmatprep.subr.mxu0 0.0
  %2816 = vmatpush2.msra.mxu0 0.0
  %2817 = vmatprep.subr.mxu0 0.0
  %2818 = vmatpush2.msra.mxu0 0.0
  %2819 = vmatprep.subr.mxu0 0.0
  %2820 = vmatpush2.msra.mxu0 0.0
  %2821 = vmatprep.subr.mxu0 0.0
  %2822 = vmatpush2.msra.mxu0 0.0
  %2823 = vmatprep.subr.mxu0 0.0
  %2824 = vmatpush2.msra.mxu0 0.0
  %2825 = vmatprep.subr.mxu0 0.0
  %2826 = vmatpush2.msra.mxu0 0.0
  %2827 = vmatprep.subr.mxu0 0.0
  %2828 = vmatpush2.msra.mxu0 0.0
  %2829 = vmatprep.subr.mxu0 0.0
  %2830 = vmatpush2.msra.mxu0 0.0
  %2831 = vmatprep.subr.mxu0 0.0
  %2832 = vmatpush2.msra.mxu0 0.0
  %2833 = vmatprep.subr.mxu0 0.0
  %2834 = vmatpush2.msra.mxu0 0.0
  %2835 = vmatprep.subr.mxu0 0.0
  %2836 = vmatpush2.msra.mxu0 0.0
  %2837 = vmatprep.subr.mxu0 0.0
  %2838 = vmatpush2.msra.mxu0 0.0
  %2839 = vmatprep.subr.mxu0 0.0
  %2840 = vmatpush2.msra.mxu0 0.0
  %2841 = vmatprep.subr.mxu0 0.0
  %2842 = vmatpush2.msra.mxu0 0.0
  %2843 = vmatprep.mubr.f32.mxu0 0.0
  %2844 = vmatmul.mubr.f32.gmra.mxu0 %v2522
  %v2845 = vpop.f32.mrf.mxu0
  %v2846 = vadd.f32 %v2776, %v2845
  %v2847 = vpop.f32.mrf.mxu0
  %2848 = vdwg.mxu0
  %s2849 = scalar_lea.vmem %s9, 1440
  %v2850 = vld [vmem:[%s2849] sm:$0xff]
  %v2851 = vld [vmem:[%s2849 + $0x8] sm:$0xff]
  %v2852 = vld [vmem:[%s2849 + $0x10] sm:$0xff]
  %v2853 = vld [vmem:[%s2849 + $0x18] sm:$0xff]
  %v2854 = vld [vmem:[%s2849 + $0x20] sm:$0xff]
  %v2855 = vld [vmem:[%s2849 + $0x28] sm:$0xff]
  %v2856 = vld [vmem:[%s2849 + $0x30] sm:$0xff]
  %v2857 = vld [vmem:[%s2849 + $0x38] sm:$0xff]
  %v2858 = vld [vmem:[%s2849 + $0x40] sm:$0xff]
  %v2859 = vld [vmem:[%s2849 + $0x48] sm:$0xff]
  %v2860 = vld [vmem:[%s2849 + $0x50] sm:$0xff]
  %v2861 = vld [vmem:[%s2849 + $0x58] sm:$0xff]
  %v2862 = vld [vmem:[%s2849 + $0x60] sm:$0xff]
  %v2863 = vld [vmem:[%s2849 + $0x68] sm:$0xff]
  %v2864 = vld [vmem:[%s2849 + $0x70] sm:$0xff]
  %v2865 = vld [vmem:[%s2849 + $0x78] sm:$0xff]
  %v2866 = vld [vmem:[%s2849 + $0x80] sm:$0xff]
  %v2867 = vld [vmem:[%s2849 + $0x88] sm:$0xff]
  %v2868 = vld [vmem:[%s2849 + $0x90] sm:$0xff]
  %v2869 = vld [vmem:[%s2849 + $0x98] sm:$0xff]
  %v2870 = vld [vmem:[%s2849 + $0xa0] sm:$0xff]
  %v2871 = vld [vmem:[%s2849 + $0xa8] sm:$0xff]
  %v2872 = vld [vmem:[%s2849 + $0xb0] sm:$0xff]
  %v2873 = vld [vmem:[%s2849 + $0xb8] sm:$0xff]
  %v2874 = vld [vmem:[%s2849 + $0xc0] sm:$0xff]
  %v2875 = vld [vmem:[%s2849 + $0xc8] sm:$0xff]
  %v2876 = vld [vmem:[%s2849 + $0xd0] sm:$0xff]
  %v2877 = vld [vmem:[%s2849 + $0xd8] sm:$0xff]
  %v2878 = vld [vmem:[%s2849 + $0xe0] sm:$0xff]
  %v2879 = vld [vmem:[%s2849 + $0xe8] sm:$0xff]
  %v2880 = vld [vmem:[%s2849 + $0xf0] sm:$0xff]
  %v2881 = vld [vmem:[%s2849 + $0xf8] sm:$0xff]
  %v2882 = vld [vmem:[%s2849 + $0x100] sm:$0xff]
  %v2883 = vld [vmem:[%s2849 + $0x108] sm:$0xff]
  %v2884 = vld [vmem:[%s2849 + $0x110] sm:$0xff]
  %v2885 = vld [vmem:[%s2849 + $0x118] sm:$0xff]
  %s2886 = scalar_lea.vmem %s8, 8
  %v2887 = vld [vmem:[%s2886] sm:$0x1]
  %v2889 = vlaneseq
  %v2890 = vshrl.u32 %v2889, 7
  %v2891 = vsub.s32 0, %v2890
  %v2892 = vrot.slane %v2887, %v2891
  %2894 = vmatprep.subr.mxu0 0.0
  %2895 = vmatpush1.msra.mxu0 %v2865
  %2896 = vmatprep.subr.mxu0 0.0
  %2897 = vmatpush1.msra.mxu0 %v2864
  %2898 = vmatprep.subr.mxu0 0.0
  %2899 = vmatpush1.msra.mxu0 %v2863
  %2900 = vmatprep.subr.mxu0 0.0
  %2901 = vmatpush1.msra.mxu0 %v2862
  %2902 = vmatprep.subr.mxu0 0.0
  %2903 = vmatpush1.msra.mxu0 %v2861
  %2904 = vmatprep.subr.mxu0 0.0
  %2905 = vmatpush1.msra.mxu0 %v2860
  %2906 = vmatprep.subr.mxu0 0.0
  %2907 = vmatpush1.msra.mxu0 %v2859
  %2908 = vmatprep.subr.mxu0 0.0
  %2909 = vmatpush1.msra.mxu0 %v2858
  %2910 = vmatprep.subr.mxu0 0.0
  %2911 = vmatpush1.msra.mxu0 %v2857
  %2912 = vmatprep.subr.mxu0 0.0
  %2913 = vmatpush1.msra.mxu0 %v2856
  %2914 = vmatprep.subr.mxu0 0.0
  %2915 = vmatpush1.msra.mxu0 %v2855
  %2916 = vmatprep.subr.mxu0 0.0
  %2917 = vmatpush1.msra.mxu0 %v2854
  %2918 = vmatprep.subr.mxu0 0.0
  %2919 = vmatpush1.msra.mxu0 %v2853
  %2920 = vmatprep.subr.mxu0 0.0
  %2921 = vmatpush1.msra.mxu0 %v2852
  %2922 = vmatprep.subr.mxu0 0.0
  %2923 = vmatpush1.msra.mxu0 %v2851
  %2924 = vmatprep.subr.mxu0 0.0
  %2925 = vmatpush1.msra.mxu0 %v2850
  %2926 = vmatprep.subr.mxu0 0.0
  %2927 = vmatpush2.msra.mxu0 %v2881
  %2928 = vmatprep.subr.mxu0 0.0
  %2929 = vmatpush2.msra.mxu0 %v2880
  %2930 = vmatprep.subr.mxu0 0.0
  %2931 = vmatpush2.msra.mxu0 %v2879
  %2932 = vmatprep.subr.mxu0 0.0
  %2933 = vmatpush2.msra.mxu0 %v2878
  %2934 = vmatprep.subr.mxu0 0.0
  %2935 = vmatpush2.msra.mxu0 %v2877
  %2936 = vmatprep.subr.mxu0 0.0
  %2937 = vmatpush2.msra.mxu0 %v2876
  %2938 = vmatprep.subr.mxu0 0.0
  %2939 = vmatpush2.msra.mxu0 %v2875
  %2940 = vmatprep.subr.mxu0 0.0
  %2941 = vmatpush2.msra.mxu0 %v2874
  %2942 = vmatprep.subr.mxu0 0.0
  %2943 = vmatpush2.msra.mxu0 %v2873
  %2944 = vmatprep.subr.mxu0 0.0
  %2945 = vmatpush2.msra.mxu0 %v2872
  %2946 = vmatprep.subr.mxu0 0.0
  %2947 = vmatpush2.msra.mxu0 %v2871
  %2948 = vmatprep.subr.mxu0 0.0
  %2949 = vmatpush2.msra.mxu0 %v2870
  %2950 = vmatprep.subr.mxu0 0.0
  %2951 = vmatpush2.msra.mxu0 %v2869
  %2952 = vmatprep.subr.mxu0 0.0
  %2953 = vmatpush2.msra.mxu0 %v2868
  %2954 = vmatprep.subr.mxu0 0.0
  %2955 = vmatpush2.msra.mxu0 %v2867
  %2956 = vmatprep.subr.mxu0 0.0
  %2957 = vmatpush2.msra.mxu0 %v2866
  %2958 = vmatprep.mubr.f32.mxu0 %v2472
  %2959 = vmatmul.mubr.f32.gmra.mxu0 %v2476
  %v2960 = vpop.f32.mrf.mxu0
  %v2961 = vadd.f32 %v2892, %v2960
  %v2962 = vpop.f32.mrf.mxu0
  %2963 = vdwg.mxu0
  %2964 = vmatprep.subr.mxu0 0.0
  %2965 = vmatpush1.msra.mxu0 0.0
  %2966 = vmatprep.subr.mxu0 0.0
  %2967 = vmatpush1.msra.mxu0 0.0
  %2968 = vmatprep.subr.mxu0 0.0
  %2969 = vmatpush1.msra.mxu0 0.0
  %2970 = vmatprep.subr.mxu0 0.0
  %2971 = vmatpush1.msra.mxu0 0.0
  %2972 = vmatprep.subr.mxu0 0.0
  %2973 = vmatpush1.msra.mxu0 0.0
  %2974 = vmatprep.subr.mxu0 0.0
  %2975 = vmatpush1.msra.mxu0 0.0
  %2976 = vmatprep.subr.mxu0 0.0
  %2977 = vmatpush1.msra.mxu0 0.0
  %2978 = vmatprep.subr.mxu0 0.0
  %2979 = vmatpush1.msra.mxu0 0.0
  %2980 = vmatprep.subr.mxu0 0.0
  %2981 = vmatpush1.msra.mxu0 0.0
  %2982 = vmatprep.subr.mxu0 0.0
  %2983 = vmatpush1.msra.mxu0 0.0
  %2984 = vmatprep.subr.mxu0 0.0
  %2985 = vmatpush1.msra.mxu0 0.0
  %2986 = vmatprep.subr.mxu0 0.0
  %2987 = vmatpush1.msra.mxu0 0.0
  %2988 = vmatprep.subr.mxu0 0.0
  %2989 = vmatpush1.msra.mxu0 %v2885
  %2990 = vmatprep.subr.mxu0 0.0
  %2991 = vmatpush1.msra.mxu0 %v2884
  %2992 = vmatprep.subr.mxu0 0.0
  %2993 = vmatpush1.msra.mxu0 %v2883
  %2994 = vmatprep.subr.mxu0 0.0
  %2995 = vmatpush1.msra.mxu0 %v2882
  %2996 = vmatprep.subr.mxu0 0.0
  %2997 = vmatpush2.msra.mxu0 0.0
  %2998 = vmatprep.subr.mxu0 0.0
  %2999 = vmatpush2.msra.mxu0 0.0
  %3000 = vmatprep.subr.mxu0 0.0
  %3001 = vmatpush2.msra.mxu0 0.0
  %3002 = vmatprep.subr.mxu0 0.0
  %3003 = vmatpush2.msra.mxu0 0.0
  %3004 = vmatprep.subr.mxu0 0.0
  %3005 = vmatpush2.msra.mxu0 0.0
  %3006 = vmatprep.subr.mxu0 0.0
  %3007 = vmatpush2.msra.mxu0 0.0
  %3008 = vmatprep.subr.mxu0 0.0
  %3009 = vmatpush2.msra.mxu0 0.0
  %3010 = vmatprep.subr.mxu0 0.0
  %3011 = vmatpush2.msra.mxu0 0.0
  %3012 = vmatprep.subr.mxu0 0.0
  %3013 = vmatpush2.msra.mxu0 0.0
  %3014 = vmatprep.subr.mxu0 0.0
  %3015 = vmatpush2.msra.mxu0 0.0
  %3016 = vmatprep.subr.mxu0 0.0
  %3017 = vmatpush2.msra.mxu0 0.0
  %3018 = vmatprep.subr.mxu0 0.0
  %3019 = vmatpush2.msra.mxu0 0.0
  %3020 = vmatprep.subr.mxu0 0.0
  %3021 = vmatpush2.msra.mxu0 0.0
  %3022 = vmatprep.subr.mxu0 0.0
  %3023 = vmatpush2.msra.mxu0 0.0
  %3024 = vmatprep.subr.mxu0 0.0
  %3025 = vmatpush2.msra.mxu0 0.0
  %3026 = vmatprep.subr.mxu0 0.0
  %3027 = vmatpush2.msra.mxu0 0.0
  %3028 = vmatprep.mubr.f32.mxu0 0.0
  %3029 = vmatmul.mubr.f32.gmra.mxu0 %v2522
  %v3030 = vpop.f32.mrf.mxu0
  %v3031 = vadd.f32 %v2961, %v3030
  %v3032 = vpop.f32.mrf.mxu0
  %3033 = vdwg.mxu0
  %s3034 = scalar_lea.vmem %s10, 96
  %v3035 = vld [vmem:[%s3034] sm:$0xff]
  %v3036 = vld [vmem:[%s3034 + $0x8] sm:$0xff]
  %v3037 = vld [vmem:[%s3034 + $0x10] sm:$0xff]
  %v3038 = vld [vmem:[%s3034 + $0x18] sm:$0xff]
  %s3039 = scalar_lea.vmem %s8, 15
  %v3040 = vld [vmem:[%s3039] sm:$0x1]
  %v3042 = vlaneseq
  %v3043 = vshrl.u32 %v3042, 7
  %v3044 = vsub.s32 0, %v3043
  %v3045 = vrot.slane %v3040, %v3044
  %3047 = vmatprep.subr.mxu0 0.0
  %3048 = vmatpush1.msra.mxu0 0.0
  %3049 = vmatprep.subr.mxu0 0.0
  %3050 = vmatpush1.msra.mxu0 0.0
  %3051 = vmatprep.subr.mxu0 0.0
  %3052 = vmatpush1.msra.mxu0 0.0
  %3053 = vmatprep.subr.mxu0 0.0
  %3054 = vmatpush1.msra.mxu0 0.0
  %3055 = vmatprep.subr.mxu0 0.0
  %3056 = vmatpush1.msra.mxu0 0.0
  %3057 = vmatprep.subr.mxu0 0.0
  %3058 = vmatpush1.msra.mxu0 0.0
  %3059 = vmatprep.subr.mxu0 0.0
  %3060 = vmatpush1.msra.mxu0 0.0
  %3061 = vmatprep.subr.mxu0 0.0
  %3062 = vmatpush1.msra.mxu0 0.0
  %3063 = vmatprep.subr.mxu0 0.0
  %3064 = vmatpush1.msra.mxu0 0.0
  %3065 = vmatprep.subr.mxu0 0.0
  %3066 = vmatpush1.msra.mxu0 0.0
  %3067 = vmatprep.subr.mxu0 0.0
  %3068 = vmatpush1.msra.mxu0 0.0
  %3069 = vmatprep.subr.mxu0 0.0
  %3070 = vmatpush1.msra.mxu0 0.0
  %3071 = vmatprep.subr.mxu0 0.0
  %3072 = vmatpush1.msra.mxu0 %v3038
  %3073 = vmatprep.subr.mxu0 0.0
  %3074 = vmatpush1.msra.mxu0 %v3037
  %3075 = vmatprep.subr.mxu0 0.0
  %3076 = vmatpush1.msra.mxu0 %v3036
  %3077 = vmatprep.subr.mxu0 0.0
  %3078 = vmatpush1.msra.mxu0 %v3035
  %3079 = vmatprep.subr.mxu0 0.0
  %3080 = vmatpush2.msra.mxu0 0.0
  %3081 = vmatprep.subr.mxu0 0.0
  %3082 = vmatpush2.msra.mxu0 0.0
  %3083 = vmatprep.subr.mxu0 0.0
  %3084 = vmatpush2.msra.mxu0 0.0
  %3085 = vmatprep.subr.mxu0 0.0
  %3086 = vmatpush2.msra.mxu0 0.0
  %3087 = vmatprep.subr.mxu0 0.0
  %3088 = vmatpush2.msra.mxu0 0.0
  %3089 = vmatprep.subr.mxu0 0.0
  %3090 = vmatpush2.msra.mxu0 0.0
  %3091 = vmatprep.subr.mxu0 0.0
  %3092 = vmatpush2.msra.mxu0 0.0
  %3093 = vmatprep.subr.mxu0 0.0
  %3094 = vmatpush2.msra.mxu0 0.0
  %3095 = vmatprep.subr.mxu0 0.0
  %3096 = vmatpush2.msra.mxu0 0.0
  %3097 = vmatprep.subr.mxu0 0.0
  %3098 = vmatpush2.msra.mxu0 0.0
  %3099 = vmatprep.subr.mxu0 0.0
  %3100 = vmatpush2.msra.mxu0 0.0
  %3101 = vmatprep.subr.mxu0 0.0
  %3102 = vmatpush2.msra.mxu0 0.0
  %3103 = vmatprep.subr.mxu0 0.0
  %3104 = vmatpush2.msra.mxu0 0.0
  %3105 = vmatprep.subr.mxu0 0.0
  %3106 = vmatpush2.msra.mxu0 0.0
  %3107 = vmatprep.subr.mxu0 0.0
  %3108 = vmatpush2.msra.mxu0 0.0
  %3109 = vmatprep.subr.mxu0 0.0
  %3110 = vmatpush2.msra.mxu0 0.0
  %3111 = vmatprep.mubr.f32.mxu0 0.0
  %3112 = vmatmul.mubr.f32.gmra.mxu0 %v1663
  %v3113 = vpop.f32.mrf.mxu0
  %v3114 = vadd.f32 %v3045, %v3113
  %v3115 = vpop.f32.mrf.mxu0
  %3116 = vdwg.mxu0
  %s3117 = scalar_lea.vmem %s10, 128
  %v3118 = vld [vmem:[%s3117] sm:$0xff]
  %v3119 = vld [vmem:[%s3117 + $0x8] sm:$0xff]
  %v3120 = vld [vmem:[%s3117 + $0x10] sm:$0xff]
  %v3121 = vld [vmem:[%s3117 + $0x18] sm:$0xff]
  %s3122 = scalar_lea.vmem %s8, 16
  %v3123 = vld [vmem:[%s3122] sm:$0x1]
  %v3125 = vlaneseq
  %v3126 = vshrl.u32 %v3125, 7
  %v3127 = vsub.s32 0, %v3126
  %v3128 = vrot.slane %v3123, %v3127
  %3130 = vmatprep.subr.mxu0 0.0
  %3131 = vmatpush1.msra.mxu0 0.0
  %3132 = vmatprep.subr.mxu0 0.0
  %3133 = vmatpush1.msra.mxu0 0.0
  %3134 = vmatprep.subr.mxu0 0.0
  %3135 = vmatpush1.msra.mxu0 0.0
  %3136 = vmatprep.subr.mxu0 0.0
  %3137 = vmatpush1.msra.mxu0 0.0
  %3138 = vmatprep.subr.mxu0 0.0
  %3139 = vmatpush1.msra.mxu0 0.0
  %3140 = vmatprep.subr.mxu0 0.0
  %3141 = vmatpush1.msra.mxu0 0.0
  %3142 = vmatprep.subr.mxu0 0.0
  %3143 = vmatpush1.msra.mxu0 0.0
  %3144 = vmatprep.subr.mxu0 0.0
  %3145 = vmatpush1.msra.mxu0 0.0
  %3146 = vmatprep.subr.mxu0 0.0
  %3147 = vmatpush1.msra.mxu0 0.0
  %3148 = vmatprep.subr.mxu0 0.0
  %3149 = vmatpush1.msra.mxu0 0.0
  %3150 = vmatprep.subr.mxu0 0.0
  %3151 = vmatpush1.msra.mxu0 0.0
  %3152 = vmatprep.subr.mxu0 0.0
  %3153 = vmatpush1.msra.mxu0 0.0
  %3154 = vmatprep.subr.mxu0 0.0
  %3155 = vmatpush1.msra.mxu0 %v3121
  %3156 = vmatprep.subr.mxu0 0.0
  %3157 = vmatpush1.msra.mxu0 %v3120
  %3158 = vmatprep.subr.mxu0 0.0
  %3159 = vmatpush1.msra.mxu0 %v3119
  %3160 = vmatprep.subr.mxu0 0.0
  %3161 = vmatpush1.msra.mxu0 %v3118
  %3162 = vmatprep.subr.mxu0 0.0
  %3163 = vmatpush2.msra.mxu0 0.0
  %3164 = vmatprep.subr.mxu0 0.0
  %3165 = vmatpush2.msra.mxu0 0.0
  %3166 = vmatprep.subr.mxu0 0.0
  %3167 = vmatpush2.msra.mxu0 0.0
  %3168 = vmatprep.subr.mxu0 0.0
  %3169 = vmatpush2.msra.mxu0 0.0
  %3170 = vmatprep.subr.mxu0 0.0
  %3171 = vmatpush2.msra.mxu0 0.0
  %3172 = vmatprep.subr.mxu0 0.0
  %3173 = vmatpush2.msra.mxu0 0.0
  %3174 = vmatprep.subr.mxu0 0.0
  %3175 = vmatpush2.msra.mxu0 0.0
  %3176 = vmatprep.subr.mxu0 0.0
  %3177 = vmatpush2.msra.mxu0 0.0
  %3178 = vmatprep.subr.mxu0 0.0
  %3179 = vmatpush2.msra.mxu0 0.0
  %3180 = vmatprep.subr.mxu0 0.0
  %3181 = vmatpush2.msra.mxu0 0.0
  %3182 = vmatprep.subr.mxu0 0.0
  %3183 = vmatpush2.msra.mxu0 0.0
  %3184 = vmatprep.subr.mxu0 0.0
  %3185 = vmatpush2.msra.mxu0 0.0
  %3186 = vmatprep.subr.mxu0 0.0
  %3187 = vmatpush2.msra.mxu0 0.0
  %3188 = vmatprep.subr.mxu0 0.0
  %3189 = vmatpush2.msra.mxu0 0.0
  %3190 = vmatprep.subr.mxu0 0.0
  %3191 = vmatpush2.msra.mxu0 0.0
  %3192 = vmatprep.subr.mxu0 0.0
  %3193 = vmatpush2.msra.mxu0 0.0
  %3194 = vmatprep.mubr.f32.mxu0 0.0
  %3195 = vmatmul.mubr.f32.gmra.mxu0 %v1663
  %v3196 = vpop.f32.mrf.mxu0
  %v3197 = vadd.f32 %v3128, %v3196
  %v3198 = vpop.f32.mrf.mxu0
  %3199 = vdwg.mxu0
  %s3200 = scalar_lea.vmem %s10, 160
  %v3201 = vld [vmem:[%s3200] sm:$0xff]
  %v3202 = vld [vmem:[%s3200 + $0x8] sm:$0xff]
  %v3203 = vld [vmem:[%s3200 + $0x10] sm:$0xff]
  %v3204 = vld [vmem:[%s3200 + $0x18] sm:$0xff]
  %s3205 = scalar_lea.vmem %s8, 17
  %v3206 = vld [vmem:[%s3205] sm:$0x1]
  %v3208 = vlaneseq
  %v3209 = vshrl.u32 %v3208, 7
  %v3210 = vsub.s32 0, %v3209
  %v3211 = vrot.slane %v3206, %v3210
  %3213 = vmatprep.subr.mxu0 0.0
  %3214 = vmatpush1.msra.mxu0 0.0
  %3215 = vmatprep.subr.mxu0 0.0
  %3216 = vmatpush1.msra.mxu0 0.0
  %3217 = vmatprep.subr.mxu0 0.0
  %3218 = vmatpush1.msra.mxu0 0.0
  %3219 = vmatprep.subr.mxu0 0.0
  %3220 = vmatpush1.msra.mxu0 0.0
  %3221 = vmatprep.subr.mxu0 0.0
  %3222 = vmatpush1.msra.mxu0 0.0
  %3223 = vmatprep.subr.mxu0 0.0
  %3224 = vmatpush1.msra.mxu0 0.0
  %3225 = vmatprep.subr.mxu0 0.0
  %3226 = vmatpush1.msra.mxu0 0.0
  %3227 = vmatprep.subr.mxu0 0.0
  %3228 = vmatpush1.msra.mxu0 0.0
  %3229 = vmatprep.subr.mxu0 0.0
  %3230 = vmatpush1.msra.mxu0 0.0
  %3231 = vmatprep.subr.mxu0 0.0
  %3232 = vmatpush1.msra.mxu0 0.0
  %3233 = vmatprep.subr.mxu0 0.0
  %3234 = vmatpush1.msra.mxu0 0.0
  %3235 = vmatprep.subr.mxu0 0.0
  %3236 = vmatpush1.msra.mxu0 0.0
  %3237 = vmatprep.subr.mxu0 0.0
  %3238 = vmatpush1.msra.mxu0 %v3204
  %3239 = vmatprep.subr.mxu0 0.0
  %3240 = vmatpush1.msra.mxu0 %v3203
  %3241 = vmatprep.subr.mxu0 0.0
  %3242 = vmatpush1.msra.mxu0 %v3202
  %3243 = vmatprep.subr.mxu0 0.0
  %3244 = vmatpush1.msra.mxu0 %v3201
  %3245 = vmatprep.subr.mxu0 0.0
  %3246 = vmatpush2.msra.mxu0 0.0
  %3247 = vmatprep.subr.mxu0 0.0
  %3248 = vmatpush2.msra.mxu0 0.0
  %3249 = vmatprep.subr.mxu0 0.0
  %3250 = vmatpush2.msra.mxu0 0.0
  %3251 = vmatprep.subr.mxu0 0.0
  %3252 = vmatpush2.msra.mxu0 0.0
  %3253 = vmatprep.subr.mxu0 0.0
  %3254 = vmatpush2.msra.mxu0 0.0
  %3255 = vmatprep.subr.mxu0 0.0
  %3256 = vmatpush2.msra.mxu0 0.0
  %3257 = vmatprep.subr.mxu0 0.0
  %3258 = vmatpush2.msra.mxu0 0.0
  %3259 = vmatprep.subr.mxu0 0.0
  %3260 = vmatpush2.msra.mxu0 0.0
  %3261 = vmatprep.subr.mxu0 0.0
  %3262 = vmatpush2.msra.mxu0 0.0
  %3263 = vmatprep.subr.mxu0 0.0
  %3264 = vmatpush2.msra.mxu0 0.0
  %3265 = vmatprep.subr.mxu0 0.0
  %3266 = vmatpush2.msra.mxu0 0.0
  %3267 = vmatprep.subr.mxu0 0.0
  %3268 = vmatpush2.msra.mxu0 0.0
  %3269 = vmatprep.subr.mxu0 0.0
  %3270 = vmatpush2.msra.mxu0 0.0
  %3271 = vmatprep.subr.mxu0 0.0
  %3272 = vmatpush2.msra.mxu0 0.0
  %3273 = vmatprep.subr.mxu0 0.0
  %3274 = vmatpush2.msra.mxu0 0.0
  %3275 = vmatprep.subr.mxu0 0.0
  %3276 = vmatpush2.msra.mxu0 0.0
  %3277 = vmatprep.mubr.f32.mxu0 0.0
  %3278 = vmatmul.mubr.f32.gmra.mxu0 %v1663
  %v3279 = vpop.f32.mrf.mxu0
  %v3280 = vadd.f32 %v3211, %v3279
  %v3281 = vpop.f32.mrf.mxu0
  %3282 = vdwg.mxu0
  %v3283 = vadd.f32 %v2661, %v3114
  %v3284 = vxor.u32 %v3283, 2147483648
  %v3285 = vmul.f32 %v3284, 1.442695
  %v3286 = vpow.pop %v3285
  %v3287 = vadd.f32 %v3286, 1.0
  %v3288 = vrcp.pop %v3287
  %v3289 = vmul.f32 1.0, %v3288
  %v3290 = vadd.f32 %v2846, %v3197
  %v3291 = vxor.u32 %v3290, 2147483648
  %v3292 = vmul.f32 %v3291, 1.442695
  %v3293 = vpow.pop %v3292
  %v3294 = vadd.f32 %v3293, 1.0
  %v3295 = vrcp.pop %v3294
  %v3296 = vmul.f32 1.0, %v3295
  %v3297 = vmul.f32 %v3289, %v3280
  %v3298 = vadd.f32 %v3031, %v3297
  %v3299 = vtanh.pop %v3298
  %v3300 = vsub.f32 1.0, %v3296
  %v3301 = vmul.f32 %v3300, %v3299
  %v3302 = vmul.f32 %v3296, %v1560
  %v3303 = vadd.f32 %v3301, %v3302
  %s3304 = scalar_lea.vmem %s11, 32
  %v3305 = vld [vmem:[%s3304] sm:$0xff]
  %v3306 = vld [vmem:[%s3304 + $0x8] sm:$0xff]
  %v3307 = vld [vmem:[%s3304 + $0x10] sm:$0xff]
  %v3308 = vld [vmem:[%s3304 + $0x18] sm:$0xff]
  %s3309 = scalar_lea.vmem %s12, 192
  %v3310 = vld [vmem:[%s3309] sm:$0xff]
  %v3311 = vld [vmem:[%s3309 + $0x8] sm:$0xff]
  %v3312 = vld [vmem:[%s3309 + $0x10] sm:$0xff]
  %v3313 = vld [vmem:[%s3309 + $0x18] sm:$0xff]
  %v3314 = vld [vmem:[%s3309 + $0x20] sm:$0xff]
  %v3315 = vld [vmem:[%s3309 + $0x28] sm:$0xff]
  %v3316 = vld [vmem:[%s3309 + $0x30] sm:$0xff]
  %v3317 = vld [vmem:[%s3309 + $0x38] sm:$0xff]
  %v3318 = vld [vmem:[%s3309 + $0x40] sm:$0xff]
  %v3319 = vld [vmem:[%s3309 + $0x48] sm:$0xff]
  %v3320 = vld [vmem:[%s3309 + $0x50] sm:$0xff]
  %v3321 = vld [vmem:[%s3309 + $0x58] sm:$0xff]
  %v3322 = vld [vmem:[%s3309 + $0x60] sm:$0xff]
  %v3323 = vld [vmem:[%s3309 + $0x68] sm:$0xff]
  %v3324 = vld [vmem:[%s3309 + $0x70] sm:$0xff]
  %v3325 = vld [vmem:[%s3309 + $0x78] sm:$0xff]
  %v3326 = vld [vmem:[%s3309 + $0x80] sm:$0xff]
  %v3327 = vld [vmem:[%s3309 + $0x88] sm:$0xff]
  %v3328 = vld [vmem:[%s3309 + $0x90] sm:$0xff]
  %v3329 = vld [vmem:[%s3309 + $0x98] sm:$0xff]
  %v3330 = vld [vmem:[%s3309 + $0xa0] sm:$0xff]
  %v3331 = vld [vmem:[%s3309 + $0xa8] sm:$0xff]
  %v3332 = vld [vmem:[%s3309 + $0xb0] sm:$0xff]
  %v3333 = vld [vmem:[%s3309 + $0xb8] sm:$0xff]
  %v3335 = vsel %vm91, %v2467, 0
  %3337 = vmatprep.subr.mxu0 0.0
  %3338 = vmatpush1.msra.mxu0 %v3325
  %3339 = vmatprep.subr.mxu0 0.0
  %3340 = vmatpush1.msra.mxu0 %v3324
  %3341 = vmatprep.subr.mxu0 0.0
  %3342 = vmatpush1.msra.mxu0 %v3323
  %3343 = vmatprep.subr.mxu0 0.0
  %3344 = vmatpush1.msra.mxu0 %v3322
  %3345 = vmatprep.subr.mxu0 0.0
  %3346 = vmatpush1.msra.mxu0 %v3321
  %3347 = vmatprep.subr.mxu0 0.0
  %3348 = vmatpush1.msra.mxu0 %v3320
  %3349 = vmatprep.subr.mxu0 0.0
  %3350 = vmatpush1.msra.mxu0 %v3319
  %3351 = vmatprep.subr.mxu0 0.0
  %3352 = vmatpush1.msra.mxu0 %v3318
  %3353 = vmatprep.subr.mxu0 0.0
  %3354 = vmatpush1.msra.mxu0 %v3317
  %3355 = vmatprep.subr.mxu0 0.0
  %3356 = vmatpush1.msra.mxu0 %v3316
  %3357 = vmatprep.subr.mxu0 0.0
  %3358 = vmatpush1.msra.mxu0 %v3315
  %3359 = vmatprep.subr.mxu0 0.0
  %3360 = vmatpush1.msra.mxu0 %v3314
  %3361 = vmatprep.subr.mxu0 0.0
  %3362 = vmatpush1.msra.mxu0 %v3313
  %3363 = vmatprep.subr.mxu0 0.0
  %3364 = vmatpush1.msra.mxu0 %v3312
  %3365 = vmatprep.subr.mxu0 0.0
  %3366 = vmatpush1.msra.mxu0 %v3311
  %3367 = vmatprep.subr.mxu0 0.0
  %3368 = vmatpush1.msra.mxu0 %v3310
  %3369 = vmatprep.subr.mxu0 0.0
  %3370 = vmatpush2.msra.mxu0 0.0
  %3371 = vmatprep.subr.mxu0 0.0
  %3372 = vmatpush2.msra.mxu0 0.0
  %3373 = vmatprep.subr.mxu0 0.0
  %3374 = vmatpush2.msra.mxu0 0.0
  %3375 = vmatprep.subr.mxu0 0.0
  %3376 = vmatpush2.msra.mxu0 0.0
  %3377 = vmatprep.subr.mxu0 0.0
  %3378 = vmatpush2.msra.mxu0 0.0
  %3379 = vmatprep.subr.mxu0 0.0
  %3380 = vmatpush2.msra.mxu0 0.0
  %3381 = vmatprep.subr.mxu0 0.0
  %3382 = vmatpush2.msra.mxu0 0.0
  %3383 = vmatprep.subr.mxu0 0.0
  %3384 = vmatpush2.msra.mxu0 0.0
  %3385 = vmatprep.subr.mxu0 0.0
  %3386 = vmatpush2.msra.mxu0 %v3333
  %3387 = vmatprep.subr.mxu0 0.0
  %3388 = vmatpush2.msra.mxu0 %v3332
  %3389 = vmatprep.subr.mxu0 0.0
  %3390 = vmatpush2.msra.mxu0 %v3331
  %3391 = vmatprep.subr.mxu0 0.0
  %3392 = vmatpush2.msra.mxu0 %v3330
  %3393 = vmatprep.subr.mxu0 0.0
  %3394 = vmatpush2.msra.mxu0 %v3329
  %3395 = vmatprep.subr.mxu0 0.0
  %3396 = vmatpush2.msra.mxu0 %v3328
  %3397 = vmatprep.subr.mxu0 0.0
  %3398 = vmatpush2.msra.mxu0 %v3327
  %3399 = vmatprep.subr.mxu0 0.0
  %3400 = vmatpush2.msra.mxu0 %v3326
  %3401 = vmatprep.mubr.f32.mxu0 %v3335
  %3402 = vmatmul.mubr.f32.gmra.mxu0 %v2466
  %v3403 = vpop.f32.mrf.mxu0
  %v3404 = vadd.f32 0.0, %v3403
  %v3405 = vpop.f32.mrf.mxu0
  %3406 = vdwg.mxu0
  %v3408 = vsel %vm174, %v3303, 0
  %3410 = vmatprep.subr.mxu0 0.0
  %3411 = vmatpush1.msra.mxu0 0.0
  %3412 = vmatprep.subr.mxu0 0.0
  %3413 = vmatpush1.msra.mxu0 0.0
  %3414 = vmatprep.subr.mxu0 0.0
  %3415 = vmatpush1.msra.mxu0 0.0
  %3416 = vmatprep.subr.mxu0 0.0
  %3417 = vmatpush1.msra.mxu0 0.0
  %3418 = vmatprep.subr.mxu0 0.0
  %3419 = vmatpush1.msra.mxu0 0.0
  %3420 = vmatprep.subr.mxu0 0.0
  %3421 = vmatpush1.msra.mxu0 0.0
  %3422 = vmatprep.subr.mxu0 0.0
  %3423 = vmatpush1.msra.mxu0 0.0
  %3424 = vmatprep.subr.mxu0 0.0
  %3425 = vmatpush1.msra.mxu0 0.0
  %3426 = vmatprep.subr.mxu0 0.0
  %3427 = vmatpush1.msra.mxu0 0.0
  %3428 = vmatprep.subr.mxu0 0.0
  %3429 = vmatpush1.msra.mxu0 0.0
  %3430 = vmatprep.subr.mxu0 0.0
  %3431 = vmatpush1.msra.mxu0 0.0
  %3432 = vmatprep.subr.mxu0 0.0
  %3433 = vmatpush1.msra.mxu0 0.0
  %3434 = vmatprep.subr.mxu0 0.0
  %3435 = vmatpush1.msra.mxu0 %v3308
  %3436 = vmatprep.subr.mxu0 0.0
  %3437 = vmatpush1.msra.mxu0 %v3307
  %3438 = vmatprep.subr.mxu0 0.0
  %3439 = vmatpush1.msra.mxu0 %v3306
  %3440 = vmatprep.subr.mxu0 0.0
  %3441 = vmatpush1.msra.mxu0 %v3305
  %3442 = vmatprep.subr.mxu0 0.0
  %3443 = vmatpush2.msra.mxu0 0.0
  %3444 = vmatprep.subr.mxu0 0.0
  %3445 = vmatpush2.msra.mxu0 0.0
  %3446 = vmatprep.subr.mxu0 0.0
  %3447 = vmatpush2.msra.mxu0 0.0
  %3448 = vmatprep.subr.mxu0 0.0
  %3449 = vmatpush2.msra.mxu0 0.0
  %3450 = vmatprep.subr.mxu0 0.0
  %3451 = vmatpush2.msra.mxu0 0.0
  %3452 = vmatprep.subr.mxu0 0.0
  %3453 = vmatpush2.msra.mxu0 0.0
  %3454 = vmatprep.subr.mxu0 0.0
  %3455 = vmatpush2.msra.mxu0 0.0
  %3456 = vmatprep.subr.mxu0 0.0
  %3457 = vmatpush2.msra.mxu0 0.0
  %3458 = vmatprep.subr.mxu0 0.0
  %3459 = vmatpush2.msra.mxu0 0.0
  %3460 = vmatprep.subr.mxu0 0.0
  %3461 = vmatpush2.msra.mxu0 0.0
  %3462 = vmatprep.subr.mxu0 0.0
  %3463 = vmatpush2.msra.mxu0 0.0
  %3464 = vmatprep.subr.mxu0 0.0
  %3465 = vmatpush2.msra.mxu0 0.0
  %3466 = vmatprep.subr.mxu0 0.0
  %3467 = vmatpush2.msra.mxu0 0.0
  %3468 = vmatprep.subr.mxu0 0.0
  %3469 = vmatpush2.msra.mxu0 0.0
  %3470 = vmatprep.subr.mxu0 0.0
  %3471 = vmatpush2.msra.mxu0 0.0
  %3472 = vmatprep.subr.mxu0 0.0
  %3473 = vmatpush2.msra.mxu0 0.0
  %3474 = vmatprep.mubr.f32.mxu0 0.0
  %3475 = vmatmul.mubr.f32.gmra.mxu0 %v3408
  %v3476 = vpop.f32.mrf.mxu0
  %v3477 = vadd.f32 %v3404, %v3476
  %v3478 = vpop.f32.mrf.mxu0
  %3479 = vdwg.mxu0
  %s3480 = scalar_lea.vmem %s13, 1
  %v3481 = vld [vmem:[%s3480] sm:$0x1]
  %v3483 = vlaneseq
  %v3484 = vshrl.u32 %v3483, 7
  %v3485 = vsub.s32 0, %v3484
  %v3486 = vrot.slane %v3481, %v3485
  %v3488 = vadd.f32 %v3477, %v3486
  %v3489 = vsel %vm1743, %v3488, -inf
  %3490 = vmax.xlane.f32.xlu0 %v3489
  %v3491 = vpop.xlane.xlu0 %3490
  %v3492 = vsub.f32 %v3488, %v3491
  %v3493 = vmul.f32 %v3492, 1.442695
  %v3494 = vpow.pop %v3493
  %v3495 = vsel %vm1743, %v3494, 0.0
  %3496 = vadd.xlane.f32.xlu0 %v3495
  %v3497 = vpop.xlane.xlu0 %3496
  %v3498 = vrcp.pop %v3497
  %v3499 = vmul.f32 %v3494, %v3498
  %s3500 = scalar_lea.vmem %s7, 16
  %v3501 = vld [vmem:[%s3500] sm:$0xff]
  %v3502 = vld [vmem:[%s3500 + $0x8] sm:$0xff]
  %s3503 = scalar_lea.vmem %s7, 32
  %v3504 = vld [vmem:[%s3503] sm:$0xff]
  %v3505 = vld [vmem:[%s3503 + $0x8] sm:$0xff]
  %v3507 = vsel %vm1839, %v3499, 0
  %3509 = vmatprep.subr.mxu0 0.0
  %3510 = vmatpush1.msra.mxu0 0.0
  %3511 = vmatprep.subr.mxu0 0.0
  %3512 = vmatpush1.msra.mxu0 0.0
  %3513 = vmatprep.subr.mxu0 0.0
  %3514 = vmatpush1.msra.mxu0 0.0
  %3515 = vmatprep.subr.mxu0 0.0
  %3516 = vmatpush1.msra.mxu0 0.0
  %3517 = vmatprep.subr.mxu0 0.0
  %3518 = vmatpush1.msra.mxu0 0.0
  %3519 = vmatprep.subr.mxu0 0.0
  %3520 = vmatpush1.msra.mxu0 0.0
  %3521 = vmatprep.subr.mxu0 0.0
  %3522 = vmatpush1.msra.mxu0 0.0
  %3523 = vmatprep.subr.mxu0 0.0
  %3524 = vmatpush1.msra.mxu0 0.0
  %3525 = vmatprep.subr.mxu0 0.0
  %3526 = vmatpush1.msra.mxu0 0.0
  %3527 = vmatprep.subr.mxu0 0.0
  %3528 = vmatpush1.msra.mxu0 0.0
  %3529 = vmatprep.subr.mxu0 0.0
  %3530 = vmatpush1.msra.mxu0 0.0
  %3531 = vmatprep.subr.mxu0 0.0
  %3532 = vmatpush1.msra.mxu0 0.0
  %3533 = vmatprep.subr.mxu0 0.0
  %3534 = vmatpush1.msra.mxu0 0.0
  %3535 = vmatprep.subr.mxu0 0.0
  %3536 = vmatpush1.msra.mxu0 0.0
  %3537 = vmatprep.subr.mxu0 0.0
  %3538 = vmatpush1.msra.mxu0 %v3505
  %3539 = vmatprep.subr.mxu0 0.0
  %3540 = vmatpush1.msra.mxu0 %v3504
  %3541 = vmatprep.subr.mxu0 0.0
  %3542 = vmatpush2.msra.mxu0 0.0
  %3543 = vmatprep.subr.mxu0 0.0
  %3544 = vmatpush2.msra.mxu0 0.0
  %3545 = vmatprep.subr.mxu0 0.0
  %3546 = vmatpush2.msra.mxu0 0.0
  %3547 = vmatprep.subr.mxu0 0.0
  %3548 = vmatpush2.msra.mxu0 0.0
  %3549 = vmatprep.subr.mxu0 0.0
  %3550 = vmatpush2.msra.mxu0 0.0
  %3551 = vmatprep.subr.mxu0 0.0
  %3552 = vmatpush2.msra.mxu0 0.0
  %3553 = vmatprep.subr.mxu0 0.0
  %3554 = vmatpush2.msra.mxu0 0.0
  %3555 = vmatprep.subr.mxu0 0.0
  %3556 = vmatpush2.msra.mxu0 0.0
  %3557 = vmatprep.subr.mxu0 0.0
  %3558 = vmatpush2.msra.mxu0 0.0
  %3559 = vmatprep.subr.mxu0 0.0
  %3560 = vmatpush2.msra.mxu0 0.0
  %3561 = vmatprep.subr.mxu0 0.0
  %3562 = vmatpush2.msra.mxu0 0.0
  %3563 = vmatprep.subr.mxu0 0.0
  %3564 = vmatpush2.msra.mxu0 0.0
  %3565 = vmatprep.subr.mxu0 0.0
  %3566 = vmatpush2.msra.mxu0 0.0
  %3567 = vmatprep.subr.mxu0 0.0
  %3568 = vmatpush2.msra.mxu0 0.0
  %3569 = vmatprep.subr.mxu0 0.0
  %3570 = vmatpush2.msra.mxu0 0.0
  %3571 = vmatprep.subr.mxu0 0.0
  %3572 = vmatpush2.msra.mxu0 0.0
  %3573 = vmatprep.mubr.f32.mxu0 0.0
  %3574 = vmatmul.mubr.f32.gmra.mxu0 %v3507
  %v3575 = vpop.f32.mrf.mxu0
  %v3576 = vadd.f32 0.0, %v3575
  %v3577 = vpop.f32.mrf.mxu0
  %3578 = vdwg.mxu0
  %3579 = vmatprep.subr.mxu0 0.0
  %3580 = vmatpush1.msra.mxu0 0.0
  %3581 = vmatprep.subr.mxu0 0.0
  %3582 = vmatpush1.msra.mxu0 0.0
  %3583 = vmatprep.subr.mxu0 0.0
  %3584 = vmatpush1.msra.mxu0 0.0
  %3585 = vmatprep.subr.mxu0 0.0
  %3586 = vmatpush1.msra.mxu0 0.0
  %3587 = vmatprep.subr.mxu0 0.0
  %3588 = vmatpush1.msra.mxu0 0.0
  %3589 = vmatprep.subr.mxu0 0.0
  %3590 = vmatpush1.msra.mxu0 0.0
  %3591 = vmatprep.subr.mxu0 0.0
  %3592 = vmatpush1.msra.mxu0 0.0
  %3593 = vmatprep.subr.mxu0 0.0
  %3594 = vmatpush1.msra.mxu0 0.0
  %3595 = vmatprep.subr.mxu0 0.0
  %3596 = vmatpush1.msra.mxu0 0.0
  %3597 = vmatprep.subr.mxu0 0.0
  %3598 = vmatpush1.msra.mxu0 0.0
  %3599 = vmatprep.subr.mxu0 0.0
  %3600 = vmatpush1.msra.mxu0 0.0
  %3601 = vmatprep.subr.mxu0 0.0
  %3602 = vmatpush1.msra.mxu0 0.0
  %3603 = vmatprep.subr.mxu0 0.0
  %3604 = vmatpush1.msra.mxu0 0.0
  %3605 = vmatprep.subr.mxu0 0.0
  %3606 = vmatpush1.msra.mxu0 0.0
  %3607 = vmatprep.subr.mxu0 0.0
  %3608 = vmatpush1.msra.mxu0 %v3502
  %3609 = vmatprep.subr.mxu0 0.0
  %3610 = vmatpush1.msra.mxu0 %v3501
  %3611 = vmatprep.subr.mxu0 0.0
  %3612 = vmatpush2.msra.mxu0 0.0
  %3613 = vmatprep.subr.mxu0 0.0
  %3614 = vmatpush2.msra.mxu0 0.0
  %3615 = vmatprep.subr.mxu0 0.0
  %3616 = vmatpush2.msra.mxu0 0.0
  %3617 = vmatprep.subr.mxu0 0.0
  %3618 = vmatpush2.msra.mxu0 0.0
  %3619 = vmatprep.subr.mxu0 0.0
  %3620 = vmatpush2.msra.mxu0 0.0
  %3621 = vmatprep.subr.mxu0 0.0
  %3622 = vmatpush2.msra.mxu0 0.0
  %3623 = vmatprep.subr.mxu0 0.0
  %3624 = vmatpush2.msra.mxu0 0.0
  %3625 = vmatprep.subr.mxu0 0.0
  %3626 = vmatpush2.msra.mxu0 0.0
  %3627 = vmatprep.subr.mxu0 0.0
  %3628 = vmatpush2.msra.mxu0 0.0
  %3629 = vmatprep.subr.mxu0 0.0
  %3630 = vmatpush2.msra.mxu0 0.0
  %3631 = vmatprep.subr.mxu0 0.0
  %3632 = vmatpush2.msra.mxu0 0.0
  %3633 = vmatprep.subr.mxu0 0.0
  %3634 = vmatpush2.msra.mxu0 0.0
  %3635 = vmatprep.subr.mxu0 0.0
  %3636 = vmatpush2.msra.mxu0 0.0
  %3637 = vmatprep.subr.mxu0 0.0
  %3638 = vmatpush2.msra.mxu0 0.0
  %3639 = vmatprep.subr.mxu0 0.0
  %3640 = vmatpush2.msra.mxu0 0.0
  %3641 = vmatprep.subr.mxu0 0.0
  %3642 = vmatpush2.msra.mxu0 0.0
  %3643 = vmatprep.mubr.f32.mxu0 0.0
  %3644 = vmatmul.mubr.f32.gmra.mxu0 %v1841
  %v3645 = vpop.f32.mrf.mxu0
  %v3646 = vadd.f32 %v3576, %v3645
  %v3647 = vpop.f32.mrf.mxu0
  %3648 = vdwg.mxu0
  %s3649 = scalar_lea.vmem %s6, 128
  %v3650 = vld [vmem:[%s3649] sm:$0xff]
  %v3651 = vld [vmem:[%s3649 + $0x8] sm:$0xff]
  %v3652 = vld [vmem:[%s3649 + $0x10] sm:$0xff]
  %v3653 = vld [vmem:[%s3649 + $0x18] sm:$0xff]
  %v3654 = vld [vmem:[%s3649 + $0x20] sm:$0xff]
  %v3655 = vld [vmem:[%s3649 + $0x28] sm:$0xff]
  %v3656 = vld [vmem:[%s3649 + $0x30] sm:$0xff]
  %v3657 = vld [vmem:[%s3649 + $0x38] sm:$0xff]
  %3658 = vmatprep.subr.mxu0 0.0
  %3659 = vmatpush1.msra.mxu0 0.0
  %3660 = vmatprep.subr.mxu0 0.0
  %3661 = vmatpush1.msra.mxu0 0.0
  %3662 = vmatprep.subr.mxu0 0.0
  %3663 = vmatpush1.msra.mxu0 0.0
  %3664 = vmatprep.subr.mxu0 0.0
  %3665 = vmatpush1.msra.mxu0 0.0
  %3666 = vmatprep.subr.mxu0 0.0
  %3667 = vmatpush1.msra.mxu0 0.0
  %3668 = vmatprep.subr.mxu0 0.0
  %3669 = vmatpush1.msra.mxu0 0.0
  %3670 = vmatprep.subr.mxu0 0.0
  %3671 = vmatpush1.msra.mxu0 0.0
  %3672 = vmatprep.subr.mxu0 0.0
  %3673 = vmatpush1.msra.mxu0 0.0
  %3674 = vmatprep.subr.mxu0 0.0
  %3675 = vmatpush1.msra.mxu0 %v3657
  %3676 = vmatprep.subr.mxu0 0.0
  %3677 = vmatpush1.msra.mxu0 %v3656
  %3678 = vmatprep.subr.mxu0 0.0
  %3679 = vmatpush1.msra.mxu0 %v3655
  %3680 = vmatprep.subr.mxu0 0.0
  %3681 = vmatpush1.msra.mxu0 %v3654
  %3682 = vmatprep.subr.mxu0 0.0
  %3683 = vmatpush1.msra.mxu0 %v3653
  %3684 = vmatprep.subr.mxu0 0.0
  %3685 = vmatpush1.msra.mxu0 %v3652
  %3686 = vmatprep.subr.mxu0 0.0
  %3687 = vmatpush1.msra.mxu0 %v3651
  %3688 = vmatprep.subr.mxu0 0.0
  %3689 = vmatpush1.msra.mxu0 %v3650
  %3690 = vmatprep.subr.mxu0 0.0
  %3691 = vmatpush2.msra.mxu0 0.0
  %3692 = vmatprep.subr.mxu0 0.0
  %3693 = vmatpush2.msra.mxu0 0.0
  %3694 = vmatprep.subr.mxu0 0.0
  %3695 = vmatpush2.msra.mxu0 0.0
  %3696 = vmatprep.subr.mxu0 0.0
  %3697 = vmatpush2.msra.mxu0 0.0
  %3698 = vmatprep.subr.mxu0 0.0
  %3699 = vmatpush2.msra.mxu0 0.0
  %3700 = vmatprep.subr.mxu0 0.0
  %3701 = vmatpush2.msra.mxu0 0.0
  %3702 = vmatprep.subr.mxu0 0.0
  %3703 = vmatpush2.msra.mxu0 0.0
  %3704 = vmatprep.subr.mxu0 0.0
  %3705 = vmatpush2.msra.mxu0 0.0
  %3706 = vmatprep.subr.mxu0 0.0
  %3707 = vmatpush2.msra.mxu0 0.0
  %3708 = vmatprep.subr.mxu0 0.0
  %3709 = vmatpush2.msra.mxu0 0.0
  %3710 = vmatprep.subr.mxu0 0.0
  %3711 = vmatpush2.msra.mxu0 0.0
  %3712 = vmatprep.subr.mxu0 0.0
  %3713 = vmatpush2.msra.mxu0 0.0
  %3714 = vmatprep.subr.mxu0 0.0
  %3715 = vmatpush2.msra.mxu0 0.0
  %3716 = vmatprep.subr.mxu0 0.0
  %3717 = vmatpush2.msra.mxu0 0.0
  %3718 = vmatprep.subr.mxu0 0.0
  %3719 = vmatpush2.msra.mxu0 0.0
  %3720 = vmatprep.subr.mxu0 0.0
  %3721 = vmatpush2.msra.mxu0 0.0
  %3722 = vmatprep.mubr.f32.mxu0 0.0
  %3723 = vmatmul.mubr.f32.gmra.mxu0 %v1767
  %v3724 = vpop.f32.mrf.mxu0
  %v3725 = vadd.f32 0.0, %v3724
  %v3726 = vpop.f32.mrf.mxu0
  %3727 = vdwg.mxu0
  %v3728 = vadd.f32 %v3646, %v3725
  %s3729 = scalar_lea.vmem %s8, 2
  %v3730 = vld [vmem:[%s3729] sm:$0x1]
  %v3732 = vlaneseq
  %v3733 = vshrl.u32 %v3732, 7
  %v3734 = vsub.s32 0, %v3733
  %v3735 = vrot.slane %v3730, %v3734
  %v3737 = vadd.f32 %v3728, %v3735
  %v3738 = vtanh.pop %v3737
  %s3739 = scalar_lea.vmem %s2, 128
  %v3740 = vld [vmem:[%s3739] sm:$0xff]
  %v3741 = vld [vmem:[%s3739 + $0x8] sm:$0xff]
  %v3742 = vld [vmem:[%s3739 + $0x10] sm:$0xff]
  %v3743 = vld [vmem:[%s3739 + $0x18] sm:$0xff]
  %v3744 = vld [vmem:[%s3739 + $0x20] sm:$0xff]
  %v3745 = vld [vmem:[%s3739 + $0x28] sm:$0xff]
  %v3746 = vld [vmem:[%s3739 + $0x30] sm:$0xff]
  %v3747 = vld [vmem:[%s3739 + $0x38] sm:$0xff]
  %v3749 = vsel %vm174, %v3738, 0
  %3751 = vmatprep.subr.mxu0 0.0
  %3752 = vmatpush1.msra.mxu0 0.0
  %3753 = vmatprep.subr.mxu0 0.0
  %3754 = vmatpush1.msra.mxu0 0.0
  %3755 = vmatprep.subr.mxu0 0.0
  %3756 = vmatpush1.msra.mxu0 0.0
  %3757 = vmatprep.subr.mxu0 0.0
  %3758 = vmatpush1.msra.mxu0 0.0
  %3759 = vmatprep.subr.mxu0 0.0
  %3760 = vmatpush1.msra.mxu0 0.0
  %3761 = vmatprep.subr.mxu0 0.0
  %3762 = vmatpush1.msra.mxu0 0.0
  %3763 = vmatprep.subr.mxu0 0.0
  %3764 = vmatpush1.msra.mxu0 0.0
  %3765 = vmatprep.subr.mxu0 0.0
  %3766 = vmatpush1.msra.mxu0 0.0
  %3767 = vmatprep.subr.mxu0 0.0
  %3768 = vmatpush1.msra.mxu0 0.0
  %3769 = vmatprep.subr.mxu0 0.0
  %3770 = vmatpush1.msra.mxu0 0.0
  %3771 = vmatprep.subr.mxu0 0.0
  %3772 = vmatpush1.msra.mxu0 0.0
  %3773 = vmatprep.subr.mxu0 0.0
  %3774 = vmatpush1.msra.mxu0 0.0
  %3775 = vmatprep.subr.mxu0 %v3747
  %3776 = vmatpush1.msra.mxu0 %v3746
  %3777 = vmatprep.subr.mxu0 %v3745
  %3778 = vmatpush1.msra.mxu0 %v3744
  %3779 = vmatprep.subr.mxu0 %v3743
  %3780 = vmatpush1.msra.mxu0 %v3742
  %3781 = vmatprep.subr.mxu0 %v3741
  %3782 = vmatpush1.msra.mxu0 %v3740
  %3783 = vmatprep.subr.mxu0 0.0
  %3784 = vmatpush2.msra.mxu0 0.0
  %3785 = vmatprep.subr.mxu0 0.0
  %3786 = vmatpush2.msra.mxu0 0.0
  %3787 = vmatprep.subr.mxu0 0.0
  %3788 = vmatpush2.msra.mxu0 0.0
  %3789 = vmatprep.subr.mxu0 0.0
  %3790 = vmatpush2.msra.mxu0 0.0
  %3791 = vmatprep.subr.mxu0 0.0
  %3792 = vmatpush2.msra.mxu0 0.0
  %3793 = vmatprep.subr.mxu0 0.0
  %3794 = vmatpush2.msra.mxu0 0.0
  %3795 = vmatprep.subr.mxu0 0.0
  %3796 = vmatpush2.msra.mxu0 0.0
  %3797 = vmatprep.subr.mxu0 0.0
  %3798 = vmatpush2.msra.mxu0 0.0
  %3799 = vmatprep.subr.mxu0 0.0
  %3800 = vmatpush2.msra.mxu0 0.0
  %3801 = vmatprep.subr.mxu0 0.0
  %3802 = vmatpush2.msra.mxu0 0.0
  %3803 = vmatprep.subr.mxu0 0.0
  %3804 = vmatpush2.msra.mxu0 0.0
  %3805 = vmatprep.subr.mxu0 0.0
  %3806 = vmatpush2.msra.mxu0 0.0
  %3807 = vmatprep.subr.mxu0 0.0
  %3808 = vmatpush2.msra.mxu0 0.0
  %3809 = vmatprep.subr.mxu0 0.0
  %3810 = vmatpush2.msra.mxu0 0.0
  %3811 = vmatprep.subr.mxu0 0.0
  %3812 = vmatpush2.msra.mxu0 0.0
  %3813 = vmatprep.subr.mxu0 0.0
  %3814 = vmatpush2.msra.mxu0 0.0
  %3815 = vmatprep.mubr.f32.mxu0 0.0
  %3816 = vmatmul.mubr.f32.gmra.mxu0 %v3749
  %v3817 = vpop.f32.mrf.mxu0
  %v3818 = vadd.f32 0.0, %v3817
  %v3819 = vpop.f32.mrf.mxu0
  %v3820 = vadd.f32 0.0, %v3819
  %3821 = vdwg.mxu0
  %s3822 = scalar_lea.vmem %s3, 768
  %v3823 = vld [vmem:[%s3822] sm:$0xff]
  %v3824 = vld [vmem:[%s3822 + $0x8] sm:$0xff]
  %v3825 = vld [vmem:[%s3822 + $0x10] sm:$0xff]
  %v3826 = vld [vmem:[%s3822 + $0x18] sm:$0xff]
  %v3827 = vld [vmem:[%s3822 + $0x20] sm:$0xff]
  %v3828 = vld [vmem:[%s3822 + $0x28] sm:$0xff]
  %v3829 = vld [vmem:[%s3822 + $0x30] sm:$0xff]
  %v3830 = vld [vmem:[%s3822 + $0x38] sm:$0xff]
  %v3831 = vld [vmem:[%s3822 + $0x40] sm:$0xff]
  %v3832 = vld [vmem:[%s3822 + $0x48] sm:$0xff]
  %v3833 = vld [vmem:[%s3822 + $0x50] sm:$0xff]
  %v3834 = vld [vmem:[%s3822 + $0x58] sm:$0xff]
  %v3835 = vld [vmem:[%s3822 + $0x60] sm:$0xff]
  %v3836 = vld [vmem:[%s3822 + $0x68] sm:$0xff]
  %v3837 = vld [vmem:[%s3822 + $0x70] sm:$0xff]
  %v3838 = vld [vmem:[%s3822 + $0x78] sm:$0xff]
  %v3839 = vld [vmem:[%s3822 + $0x80] sm:$0xff]
  %v3840 = vld [vmem:[%s3822 + $0x88] sm:$0xff]
  %v3841 = vld [vmem:[%s3822 + $0x90] sm:$0xff]
  %v3842 = vld [vmem:[%s3822 + $0x98] sm:$0xff]
  %v3843 = vld [vmem:[%s3822 + $0xa0] sm:$0xff]
  %v3844 = vld [vmem:[%s3822 + $0xa8] sm:$0xff]
  %v3845 = vld [vmem:[%s3822 + $0xb0] sm:$0xff]
  %v3846 = vld [vmem:[%s3822 + $0xb8] sm:$0xff]
  %v3847 = vld [vmem:[%s3822 + $0xc0] sm:$0xff]
  %v3848 = vld [vmem:[%s3822 + $0xc8] sm:$0xff]
  %v3849 = vld [vmem:[%s3822 + $0xd0] sm:$0xff]
  %v3850 = vld [vmem:[%s3822 + $0xd8] sm:$0xff]
  %v3851 = vld [vmem:[%s3822 + $0xe0] sm:$0xff]
  %v3852 = vld [vmem:[%s3822 + $0xe8] sm:$0xff]
  %v3853 = vld [vmem:[%s3822 + $0xf0] sm:$0xff]
  %v3854 = vld [vmem:[%s3822 + $0xf8] sm:$0xff]
  %v3855 = vld [vmem:[%s3822 + $0x100] sm:$0xff]
  %v3856 = vld [vmem:[%s3822 + $0x108] sm:$0xff]
  %v3857 = vld [vmem:[%s3822 + $0x110] sm:$0xff]
  %v3858 = vld [vmem:[%s3822 + $0x118] sm:$0xff]
  %v3859 = vld [vmem:[%s3822 + $0x120] sm:$0xff]
  %v3860 = vld [vmem:[%s3822 + $0x128] sm:$0xff]
  %v3861 = vld [vmem:[%s3822 + $0x130] sm:$0xff]
  %v3862 = vld [vmem:[%s3822 + $0x138] sm:$0xff]
  %v3863 = vld [vmem:[%s3822 + $0x140] sm:$0xff]
  %v3864 = vld [vmem:[%s3822 + $0x148] sm:$0xff]
  %v3865 = vld [vmem:[%s3822 + $0x150] sm:$0xff]
  %v3866 = vld [vmem:[%s3822 + $0x158] sm:$0xff]
  %v3867 = vld [vmem:[%s3822 + $0x160] sm:$0xff]
  %v3868 = vld [vmem:[%s3822 + $0x168] sm:$0xff]
  %v3869 = vld [vmem:[%s3822 + $0x170] sm:$0xff]
  %v3870 = vld [vmem:[%s3822 + $0x178] sm:$0xff]
  %3871 = vmatprep.subr.mxu0 %v3854
  %3872 = vmatpush1.msra.mxu0 %v3853
  %3873 = vmatprep.subr.mxu0 %v3852
  %3874 = vmatpush1.msra.mxu0 %v3851
  %3875 = vmatprep.subr.mxu0 %v3850
  %3876 = vmatpush1.msra.mxu0 %v3849
  %3877 = vmatprep.subr.mxu0 %v3848
  %3878 = vmatpush1.msra.mxu0 %v3847
  %3879 = vmatprep.subr.mxu0 %v3846
  %3880 = vmatpush1.msra.mxu0 %v3845
  %3881 = vmatprep.subr.mxu0 %v3844
  %3882 = vmatpush1.msra.mxu0 %v3843
  %3883 = vmatprep.subr.mxu0 %v3842
  %3884 = vmatpush1.msra.mxu0 %v3841
  %3885 = vmatprep.subr.mxu0 %v3840
  %3886 = vmatpush1.msra.mxu0 %v3839
  %3887 = vmatprep.subr.mxu0 %v3838
  %3888 = vmatpush1.msra.mxu0 %v3837
  %3889 = vmatprep.subr.mxu0 %v3836
  %3890 = vmatpush1.msra.mxu0 %v3835
  %3891 = vmatprep.subr.mxu0 %v3834
  %3892 = vmatpush1.msra.mxu0 %v3833
  %3893 = vmatprep.subr.mxu0 %v3832
  %3894 = vmatpush1.msra.mxu0 %v3831
  %3895 = vmatprep.subr.mxu0 %v3830
  %3896 = vmatpush1.msra.mxu0 %v3829
  %3897 = vmatprep.subr.mxu0 %v3828
  %3898 = vmatpush1.msra.mxu0 %v3827
  %3899 = vmatprep.subr.mxu0 %v3826
  %3900 = vmatpush1.msra.mxu0 %v3825
  %3901 = vmatprep.subr.mxu0 %v3824
  %3902 = vmatpush1.msra.mxu0 %v3823
  %3903 = vmatprep.subr.mxu0 0.0
  %3904 = vmatpush2.msra.mxu0 0.0
  %3905 = vmatprep.subr.mxu0 0.0
  %3906 = vmatpush2.msra.mxu0 0.0
  %3907 = vmatprep.subr.mxu0 0.0
  %3908 = vmatpush2.msra.mxu0 0.0
  %3909 = vmatprep.subr.mxu0 0.0
  %3910 = vmatpush2.msra.mxu0 0.0
  %3911 = vmatprep.subr.mxu0 0.0
  %3912 = vmatpush2.msra.mxu0 0.0
  %3913 = vmatprep.subr.mxu0 0.0
  %3914 = vmatpush2.msra.mxu0 0.0
  %3915 = vmatprep.subr.mxu0 0.0
  %3916 = vmatpush2.msra.mxu0 0.0
  %3917 = vmatprep.subr.mxu0 0.0
  %3918 = vmatpush2.msra.mxu0 0.0
  %3919 = vmatprep.subr.mxu0 %v3870
  %3920 = vmatpush2.msra.mxu0 %v3869
  %3921 = vmatprep.subr.mxu0 %v3868
  %3922 = vmatpush2.msra.mxu0 %v3867
  %3923 = vmatprep.subr.mxu0 %v3866
  %3924 = vmatpush2.msra.mxu0 %v3865
  %3925 = vmatprep.subr.mxu0 %v3864
  %3926 = vmatpush2.msra.mxu0 %v3863
  %3927 = vmatprep.subr.mxu0 %v3862
  %3928 = vmatpush2.msra.mxu0 %v3861
  %3929 = vmatprep.subr.mxu0 %v3860
  %3930 = vmatpush2.msra.mxu0 %v3859
  %3931 = vmatprep.subr.mxu0 %v3858
  %3932 = vmatpush2.msra.mxu0 %v3857
  %3933 = vmatprep.subr.mxu0 %v3856
  %3934 = vmatpush2.msra.mxu0 %v3855
  %3935 = vmatprep.mubr.f32.mxu0 %v298
  %3936 = vmatmul.mubr.f32.gmra.mxu0 %v47
  %v3937 = vpop.f32.mrf.mxu0
  %v3938 = vadd.f32 0.0, %v3937
  %v3939 = vpop.f32.mrf.mxu0
  %v3940 = vadd.f32 0.0, %v3939
  %3941 = vmatprep.mubr.f32.mxu0 %v301
  %3942 = vmatmul.mubr.f32.gmra.mxu0 %v49
  %v3943 = vpop.f32.mrf.mxu0
  %v3944 = vadd.f32 0.0, %v3943
  %v3945 = vpop.f32.mrf.mxu0
  %v3946 = vadd.f32 0.0, %v3945
  %3947 = vdwg.mxu0
  %v3950 = vcombine.low %v3818, %v3820
  %v3952 = vunpack.c.l.s4 1966171168
  %v3953 = vunpack.c.0.s8 %v3952
  %v3954 = vlaneseq
  %v3955 = vshrl.u32 %v3954, 7
  %v3956 = vsub.s32 %v3953, %v3955
  %v3957 = vrot.slane %v3950, %v3956
  %v3958 = vcombine.high %v3957, %v3957
  %v3960 = vunpack.c.l.s4 1966171168
  %v3961 = vunpack.c.0.s8 %v3960
  %v3962 = vlaneseq
  %v3963 = vshrl.u32 %v3962, 7
  %v3964 = vsub.s32 %v3961, %v3963
  %v3965 = vrot.slane %v3957, %v3964
  %v3967 = vunpack.c.l.s4 1966171168
  %v3968 = vunpack.c.0.s8 %v3967
  %v3969 = vlaneseq
  %v3970 = vshrl.u32 %v3969, 7
  %v3971 = vsub.s32 %v3968, %v3970
  %v3972 = vrot.slane %v3958, %v3971
  %v3973 = vlaneseq
  %v3974 = vshrl.u32 %v3973, 7
  %v3975 = vsub.s32 0, %v3974
  %v3976 = vrot.slane %v3965, %v3975
  %v3977 = vlaneseq
  %v3978 = vshrl.u32 %v3977, 7
  %v3979 = vsub.s32 1, %v3978
  %v3980 = vrot.slane %v3965, %v3979
  %v3981 = vlaneseq
  %v3982 = vshrl.u32 %v3981, 7
  %v3983 = vsub.s32 0, %v3982
  %v3984 = vrot.slane %v3972, %v3983
  %v3985 = vlaneseq
  %v3986 = vshrl.u32 %v3985, 7
  %v3987 = vsub.s32 1, %v3986
  %v3988 = vrot.slane %v3972, %v3987
  %v3993 = vadd.f32 %v3976, %v3938
  %v3994 = vadd.f32 %v3980, %v3940
  %v3995 = vadd.f32 %v3984, %v3944
  %v3996 = vadd.f32 %v3988, %v3946
  %s3997 = scalar_lea.vmem %s4, 4
  %v3998 = vld [vmem:[%s3997] sm:$0x3]
  %v4000 = vlaneseq
  %v4001 = vshrl.u32 %v4000, 7
  %v4002 = vsub.s32 0, %v4001
  %v4003 = vrot.slane %v3998, %v4002
  %v4004 = vlaneseq
  %v4005 = vshrl.u32 %v4004, 7
  %v4006 = vsub.s32 1, %v4005
  %v4007 = vrot.slane %v3998, %v4006
  %v4010 = vadd.f32 %v3993, %v4003
  %v4011 = vadd.f32 %v3994, %v4007
  %v4012 = vadd.f32 %v3995, %v4003
  %v4013 = vadd.f32 %v3996, %v4007
  %v4014 = vtanh.pop %v4010
  %v4015 = vtanh.pop %v4011
  %v4016 = vtanh.pop %v4012
  %v4017 = vtanh.pop %v4013
  %s4018 = scalar_lea.vmem %s5, 384
  %v4019 = vld [vmem:[%s4018] sm:$0xff]
  %v4020 = vld [vmem:[%s4018 + $0x8] sm:$0xff]
  %v4021 = vld [vmem:[%s4018 + $0x10] sm:$0xff]
  %v4022 = vld [vmem:[%s4018 + $0x18] sm:$0xff]
  %v4023 = vld [vmem:[%s4018 + $0x20] sm:$0xff]
  %v4024 = vld [vmem:[%s4018 + $0x28] sm:$0xff]
  %v4025 = vld [vmem:[%s4018 + $0x30] sm:$0xff]
  %v4026 = vld [vmem:[%s4018 + $0x38] sm:$0xff]
  %v4027 = vld [vmem:[%s4018 + $0x40] sm:$0xff]
  %v4028 = vld [vmem:[%s4018 + $0x48] sm:$0xff]
  %v4029 = vld [vmem:[%s4018 + $0x50] sm:$0xff]
  %v4030 = vld [vmem:[%s4018 + $0x58] sm:$0xff]
  %v4031 = vld [vmem:[%s4018 + $0x60] sm:$0xff]
  %v4032 = vld [vmem:[%s4018 + $0x68] sm:$0xff]
  %v4033 = vld [vmem:[%s4018 + $0x70] sm:$0xff]
  %v4034 = vld [vmem:[%s4018 + $0x78] sm:$0xff]
  %v4035 = vld [vmem:[%s4018 + $0x80] sm:$0xff]
  %v4036 = vld [vmem:[%s4018 + $0x88] sm:$0xff]
  %v4037 = vld [vmem:[%s4018 + $0x90] sm:$0xff]
  %v4038 = vld [vmem:[%s4018 + $0x98] sm:$0xff]
  %v4039 = vld [vmem:[%s4018 + $0xa0] sm:$0xff]
  %v4040 = vld [vmem:[%s4018 + $0xa8] sm:$0xff]
  %v4041 = vld [vmem:[%s4018 + $0xb0] sm:$0xff]
  %v4042 = vld [vmem:[%s4018 + $0xb8] sm:$0xff]
  %v4044 = vsel %vm91, %v4015, 0
  %v4047 = vsel %vm91, %v4017, 0
  %4049 = vmatprep.subr.mxu0 0.0
  %4050 = vmatpush1.msra.mxu0 %v4034
  %4051 = vmatprep.subr.mxu0 0.0
  %4052 = vmatpush1.msra.mxu0 %v4033
  %4053 = vmatprep.subr.mxu0 0.0
  %4054 = vmatpush1.msra.mxu0 %v4032
  %4055 = vmatprep.subr.mxu0 0.0
  %4056 = vmatpush1.msra.mxu0 %v4031
  %4057 = vmatprep.subr.mxu0 0.0
  %4058 = vmatpush1.msra.mxu0 %v4030
  %4059 = vmatprep.subr.mxu0 0.0
  %4060 = vmatpush1.msra.mxu0 %v4029
  %4061 = vmatprep.subr.mxu0 0.0
  %4062 = vmatpush1.msra.mxu0 %v4028
  %4063 = vmatprep.subr.mxu0 0.0
  %4064 = vmatpush1.msra.mxu0 %v4027
  %4065 = vmatprep.subr.mxu0 0.0
  %4066 = vmatpush1.msra.mxu0 %v4026
  %4067 = vmatprep.subr.mxu0 0.0
  %4068 = vmatpush1.msra.mxu0 %v4025
  %4069 = vmatprep.subr.mxu0 0.0
  %4070 = vmatpush1.msra.mxu0 %v4024
  %4071 = vmatprep.subr.mxu0 0.0
  %4072 = vmatpush1.msra.mxu0 %v4023
  %4073 = vmatprep.subr.mxu0 0.0
  %4074 = vmatpush1.msra.mxu0 %v4022
  %4075 = vmatprep.subr.mxu0 0.0
  %4076 = vmatpush1.msra.mxu0 %v4021
  %4077 = vmatprep.subr.mxu0 0.0
  %4078 = vmatpush1.msra.mxu0 %v4020
  %4079 = vmatprep.subr.mxu0 0.0
  %4080 = vmatpush1.msra.mxu0 %v4019
  %4081 = vmatprep.subr.mxu0 0.0
  %4082 = vmatpush2.msra.mxu0 0.0
  %4083 = vmatprep.subr.mxu0 0.0
  %4084 = vmatpush2.msra.mxu0 0.0
  %4085 = vmatprep.subr.mxu0 0.0
  %4086 = vmatpush2.msra.mxu0 0.0
  %4087 = vmatprep.subr.mxu0 0.0
  %4088 = vmatpush2.msra.mxu0 0.0
  %4089 = vmatprep.subr.mxu0 0.0
  %4090 = vmatpush2.msra.mxu0 0.0
  %4091 = vmatprep.subr.mxu0 0.0
  %4092 = vmatpush2.msra.mxu0 0.0
  %4093 = vmatprep.subr.mxu0 0.0
  %4094 = vmatpush2.msra.mxu0 0.0
  %4095 = vmatprep.subr.mxu0 0.0
  %4096 = vmatpush2.msra.mxu0 0.0
  %4097 = vmatprep.subr.mxu0 0.0
  %4098 = vmatpush2.msra.mxu0 %v4042
  %4099 = vmatprep.subr.mxu0 0.0
  %4100 = vmatpush2.msra.mxu0 %v4041
  %4101 = vmatprep.subr.mxu0 0.0
  %4102 = vmatpush2.msra.mxu0 %v4040
  %4103 = vmatprep.subr.mxu0 0.0
  %4104 = vmatpush2.msra.mxu0 %v4039
  %4105 = vmatprep.subr.mxu0 0.0
  %4106 = vmatpush2.msra.mxu0 %v4038
  %4107 = vmatprep.subr.mxu0 0.0
  %4108 = vmatpush2.msra.mxu0 %v4037
  %4109 = vmatprep.subr.mxu0 0.0
  %4110 = vmatpush2.msra.mxu0 %v4036
  %4111 = vmatprep.subr.mxu0 0.0
  %4112 = vmatpush2.msra.mxu0 %v4035
  %4113 = vmatprep.mubr.f32.mxu0 %v4044
  %4114 = vmatmul.mubr.f32.gmra.mxu0 %v4014
  %v4115 = vpop.f32.mrf.mxu0
  %v4116 = vadd.f32 0.0, %v4115
  %v4117 = vpop.f32.mrf.mxu0
  %4118 = vmatprep.mubr.f32.mxu0 %v4047
  %4119 = vmatmul.mubr.f32.gmra.mxu0 %v4016
  %v4120 = vpop.f32.mrf.mxu0
  %v4121 = vadd.f32 0.0, %v4120
  %v4122 = vpop.f32.mrf.mxu0
  %4123 = vdwg.mxu0
  %v4124 = vsel %vm554, %v4116, -inf
  %v4125 = vrot.slane %v4124, 4
  %v4126 = vmax.f32 %v4124, %v4125
  %v4127 = vrot.slane %v4126, 2
  %v4128 = vmax.f32 %v4126, %v4127
  %v4129 = vrot.slane %v4128, 1
  %v4130 = vmax.f32 %v4128, %v4129
  %v4131 = vsel %vm554, %v4121, -inf
  %v4132 = vrot.slane %v4131, 4
  %v4133 = vmax.f32 %v4131, %v4132
  %v4134 = vrot.slane %v4133, 2
  %v4135 = vmax.f32 %v4133, %v4134
  %v4136 = vrot.slane %v4135, 1
  %v4137 = vmax.f32 %v4135, %v4136
  %v4138 = vsub.f32 %v4116, %v4130
  %v4139 = vsub.f32 %v4121, %v4137
  %v4140 = vmul.f32 %v4138, 1.442695
  %v4141 = vpow.pop %v4140
  %v4142 = vmul.f32 %v4139, 1.442695
  %v4143 = vpow.pop %v4142
  %v4144 = vsel %vm554, %v4141, 0.0
  %v4145 = vrot.slane %v4144, 4
  %v4146 = vadd.f32 %v4144, %v4145
  %v4147 = vrot.slane %v4146, 2
  %v4148 = vadd.f32 %v4146, %v4147
  %v4149 = vrot.slane %v4148, 1
  %v4150 = vadd.f32 %v4148, %v4149
  %v4151 = vsel %vm554, %v4143, 0.0
  %v4152 = vrot.slane %v4151, 4
  %v4153 = vadd.f32 %v4151, %v4152
  %v4154 = vrot.slane %v4153, 2
  %v4155 = vadd.f32 %v4153, %v4154
  %v4156 = vrot.slane %v4155, 1
  %v4157 = vadd.f32 %v4155, %v4156
  %v4158 = vrcp.pop %v4150
  %v4159 = vrcp.pop %v4157
  %v4160 = vmul.f32 %v4141, %v4158
  %v4161 = vmul.f32 %v4143, %v4159
  %v4163 = vsel %vm554, %v4160, 0
  %v4166 = vsel %vm554, %v4161, 0
  %4168 = vmatprep.subr.mxu0 0.0
  %4169 = vmatpush1.msra.mxu0 0.0
  %4170 = vmatprep.subr.mxu0 0.0
  %4171 = vmatpush1.msra.mxu0 0.0
  %4172 = vmatprep.subr.mxu0 0.0
  %4173 = vmatpush1.msra.mxu0 0.0
  %4174 = vmatprep.subr.mxu0 0.0
  %4175 = vmatpush1.msra.mxu0 0.0
  %4176 = vmatprep.subr.mxu0 0.0
  %4177 = vmatpush1.msra.mxu0 0.0
  %4178 = vmatprep.subr.mxu0 0.0
  %4179 = vmatpush1.msra.mxu0 0.0
  %4180 = vmatprep.subr.mxu0 0.0
  %4181 = vmatpush1.msra.mxu0 0.0
  %4182 = vmatprep.subr.mxu0 0.0
  %4183 = vmatpush1.msra.mxu0 0.0
  %4184 = vmatprep.subr.mxu0 0.0
  %4185 = vmatpush1.msra.mxu0 0.0
  %4186 = vmatprep.subr.mxu0 0.0
  %4187 = vmatpush1.msra.mxu0 0.0
  %4188 = vmatprep.subr.mxu0 0.0
  %4189 = vmatpush1.msra.mxu0 0.0
  %4190 = vmatprep.subr.mxu0 0.0
  %4191 = vmatpush1.msra.mxu0 0.0
  %4192 = vmatprep.subr.mxu0 0.0
  %4193 = vmatpush1.msra.mxu0 0.0
  %4194 = vmatprep.subr.mxu0 0.0
  %4195 = vmatpush1.msra.mxu0 0.0
  %4196 = vmatprep.subr.mxu0 0.0
  %4197 = vmatpush1.msra.mxu0 0.0
  %4198 = vmatprep.subr.mxu0 %v604
  %4199 = vmatpush1.msra.mxu0 %v601
  %4200 = vmatprep.subr.mxu0 0.0
  %4201 = vmatpush2.msra.mxu0 0.0
  %4202 = vmatprep.subr.mxu0 0.0
  %4203 = vmatpush2.msra.mxu0 0.0
  %4204 = vmatprep.subr.mxu0 0.0
  %4205 = vmatpush2.msra.mxu0 0.0
  %4206 = vmatprep.subr.mxu0 0.0
  %4207 = vmatpush2.msra.mxu0 0.0
  %4208 = vmatprep.subr.mxu0 0.0
  %4209 = vmatpush2.msra.mxu0 0.0
  %4210 = vmatprep.subr.mxu0 0.0
  %4211 = vmatpush2.msra.mxu0 0.0
  %4212 = vmatprep.subr.mxu0 0.0
  %4213 = vmatpush2.msra.mxu0 0.0
  %4214 = vmatprep.subr.mxu0 0.0
  %4215 = vmatpush2.msra.mxu0 0.0
  %4216 = vmatprep.subr.mxu0 0.0
  %4217 = vmatpush2.msra.mxu0 0.0
  %4218 = vmatprep.subr.mxu0 0.0
  %4219 = vmatpush2.msra.mxu0 0.0
  %4220 = vmatprep.subr.mxu0 0.0
  %4221 = vmatpush2.msra.mxu0 0.0
  %4222 = vmatprep.subr.mxu0 0.0
  %4223 = vmatpush2.msra.mxu0 0.0
  %4224 = vmatprep.subr.mxu0 0.0
  %4225 = vmatpush2.msra.mxu0 0.0
  %4226 = vmatprep.subr.mxu0 0.0
  %4227 = vmatpush2.msra.mxu0 0.0
  %4228 = vmatprep.subr.mxu0 0.0
  %4229 = vmatpush2.msra.mxu0 0.0
  %4230 = vmatprep.subr.mxu0 0.0
  %4231 = vmatpush2.msra.mxu0 0.0
  %4232 = vmatprep.mubr.f32.mxu0 0.0
  %4233 = vmatmul.mubr.f32.gmra.mxu0 %v4163
  %v4234 = vpop.f32.mrf.mxu0
  %v4235 = vadd.f32 0.0, %v4234
  %v4236 = vpop.f32.mrf.mxu0
  %v4237 = vadd.f32 0.0, %v4236
  %4238 = vmatprep.mubr.f32.mxu0 0.0
  %4239 = vmatmul.mubr.f32.gmra.mxu0 %v4166
  %v4240 = vpop.f32.mrf.mxu0
  %v4241 = vadd.f32 0.0, %v4240
  %v4242 = vpop.f32.mrf.mxu0
  %v4243 = vadd.f32 0.0, %v4242
  %4244 = vdwg.mxu0
  %v4245 = vmul.f32 %v4235, %v47
  %v4246 = vmul.f32 %v4237, %v48
  %v4247 = vmul.f32 %v4241, %v49
  %v4248 = vmul.f32 %v4243, %v50
  %v4249 = vrot.slane %v4245, 4
  %v4250 = vadd.f32 %v4245, %v4249
  %v4251 = vrot.slane %v4250, 2
  %v4252 = vadd.f32 %v4250, %v4251
  %v4253 = vrot.slane %v4252, 1
  %v4254 = vadd.f32 %v4252, %v4253
  %v4255 = vsel %vm91, %v4246, 0.0
  %v4256 = vrot.slane %v4255, 4
  %v4257 = vadd.f32 %v4255, %v4256
  %v4258 = vrot.slane %v4257, 2
  %v4259 = vadd.f32 %v4257, %v4258
  %v4260 = vrot.slane %v4259, 1
  %v4261 = vadd.f32 %v4259, %v4260
  %v4262 = vrot.slane %v4247, 4
  %v4263 = vadd.f32 %v4247, %v4262
  %v4264 = vrot.slane %v4263, 2
  %v4265 = vadd.f32 %v4263, %v4264
  %v4266 = vrot.slane %v4265, 1
  %v4267 = vadd.f32 %v4265, %v4266
  %v4268 = vsel %vm91, %v4248, 0.0
  %v4269 = vrot.slane %v4268, 4
  %v4270 = vadd.f32 %v4268, %v4269
  %v4271 = vrot.slane %v4270, 2
  %v4272 = vadd.f32 %v4270, %v4271
  %v4273 = vrot.slane %v4272, 1
  %v4274 = vadd.f32 %v4272, %v4273
  %4275 = vrot.lane.b32.xlu0 %v3738, 64
  %v4276 = vpop.permute.xlu0 %4275
  %v4282 = vsel %vm720, %v4267, %v4254
  %v4283 = vsel %vm720, %v4274, %v4261
  %4284 = vrot.lane.b32.xlu0 %v4282, 96
  %v4285 = vpop.permute.xlu0 %4284
  %4286 = vrot.lane.b32.xlu0 %v4283, 96
  %v4287 = vpop.permute.xlu0 %4286
  %v4288 = vsel %vm727, %v4285, %v4287
  %v4291 = vsel %vm91, %v55, %v4276
  %v4292 = vsel %vm727, %v4291, %v4285
  %s4293 = scalar_lea.vmem %s9, 1728
  %v4294 = vld [vmem:[%s4293] sm:$0xff]
  %v4295 = vld [vmem:[%s4293 + $0x8] sm:$0xff]
  %v4296 = vld [vmem:[%s4293 + $0x10] sm:$0xff]
  %v4297 = vld [vmem:[%s4293 + $0x18] sm:$0xff]
  %v4298 = vld [vmem:[%s4293 + $0x20] sm:$0xff]
  %v4299 = vld [vmem:[%s4293 + $0x28] sm:$0xff]
  %v4300 = vld [vmem:[%s4293 + $0x30] sm:$0xff]
  %v4301 = vld [vmem:[%s4293 + $0x38] sm:$0xff]
  %v4302 = vld [vmem:[%s4293 + $0x40] sm:$0xff]
  %v4303 = vld [vmem:[%s4293 + $0x48] sm:$0xff]
  %v4304 = vld [vmem:[%s4293 + $0x50] sm:$0xff]
  %v4305 = vld [vmem:[%s4293 + $0x58] sm:$0xff]
  %v4306 = vld [vmem:[%s4293 + $0x60] sm:$0xff]
  %v4307 = vld [vmem:[%s4293 + $0x68] sm:$0xff]
  %v4308 = vld [vmem:[%s4293 + $0x70] sm:$0xff]
  %v4309 = vld [vmem:[%s4293 + $0x78] sm:$0xff]
  %v4310 = vld [vmem:[%s4293 + $0x80] sm:$0xff]
  %v4311 = vld [vmem:[%s4293 + $0x88] sm:$0xff]
  %v4312 = vld [vmem:[%s4293 + $0x90] sm:$0xff]
  %v4313 = vld [vmem:[%s4293 + $0x98] sm:$0xff]
  %v4314 = vld [vmem:[%s4293 + $0xa0] sm:$0xff]
  %v4315 = vld [vmem:[%s4293 + $0xa8] sm:$0xff]
  %v4316 = vld [vmem:[%s4293 + $0xb0] sm:$0xff]
  %v4317 = vld [vmem:[%s4293 + $0xb8] sm:$0xff]
  %v4318 = vld [vmem:[%s4293 + $0xc0] sm:$0xff]
  %v4319 = vld [vmem:[%s4293 + $0xc8] sm:$0xff]
  %v4320 = vld [vmem:[%s4293 + $0xd0] sm:$0xff]
  %v4321 = vld [vmem:[%s4293 + $0xd8] sm:$0xff]
  %v4322 = vld [vmem:[%s4293 + $0xe0] sm:$0xff]
  %v4323 = vld [vmem:[%s4293 + $0xe8] sm:$0xff]
  %v4324 = vld [vmem:[%s4293 + $0xf0] sm:$0xff]
  %v4325 = vld [vmem:[%s4293 + $0xf8] sm:$0xff]
  %v4326 = vld [vmem:[%s4293 + $0x100] sm:$0xff]
  %v4327 = vld [vmem:[%s4293 + $0x108] sm:$0xff]
  %v4328 = vld [vmem:[%s4293 + $0x110] sm:$0xff]
  %v4329 = vld [vmem:[%s4293 + $0x118] sm:$0xff]
  %s4330 = scalar_lea.vmem %s8, 9
  %v4331 = vld [vmem:[%s4330] sm:$0x1]
  %v4333 = vlaneseq
  %v4334 = vshrl.u32 %v4333, 7
  %v4335 = vsub.s32 0, %v4334
  %v4336 = vrot.slane %v4331, %v4335
  %v4338 = vsel %vm174, %v4287, 0
  %4340 = vmatprep.subr.mxu0 0.0
  %4341 = vmatpush1.msra.mxu0 %v4309
  %4342 = vmatprep.subr.mxu0 0.0
  %4343 = vmatpush1.msra.mxu0 %v4308
  %4344 = vmatprep.subr.mxu0 0.0
  %4345 = vmatpush1.msra.mxu0 %v4307
  %4346 = vmatprep.subr.mxu0 0.0
  %4347 = vmatpush1.msra.mxu0 %v4306
  %4348 = vmatprep.subr.mxu0 0.0
  %4349 = vmatpush1.msra.mxu0 %v4305
  %4350 = vmatprep.subr.mxu0 0.0
  %4351 = vmatpush1.msra.mxu0 %v4304
  %4352 = vmatprep.subr.mxu0 0.0
  %4353 = vmatpush1.msra.mxu0 %v4303
  %4354 = vmatprep.subr.mxu0 0.0
  %4355 = vmatpush1.msra.mxu0 %v4302
  %4356 = vmatprep.subr.mxu0 0.0
  %4357 = vmatpush1.msra.mxu0 %v4301
  %4358 = vmatprep.subr.mxu0 0.0
  %4359 = vmatpush1.msra.mxu0 %v4300
  %4360 = vmatprep.subr.mxu0 0.0
  %4361 = vmatpush1.msra.mxu0 %v4299
  %4362 = vmatprep.subr.mxu0 0.0
  %4363 = vmatpush1.msra.mxu0 %v4298
  %4364 = vmatprep.subr.mxu0 0.0
  %4365 = vmatpush1.msra.mxu0 %v4297
  %4366 = vmatprep.subr.mxu0 0.0
  %4367 = vmatpush1.msra.mxu0 %v4296
  %4368 = vmatprep.subr.mxu0 0.0
  %4369 = vmatpush1.msra.mxu0 %v4295
  %4370 = vmatprep.subr.mxu0 0.0
  %4371 = vmatpush1.msra.mxu0 %v4294
  %4372 = vmatprep.subr.mxu0 0.0
  %4373 = vmatpush2.msra.mxu0 %v4325
  %4374 = vmatprep.subr.mxu0 0.0
  %4375 = vmatpush2.msra.mxu0 %v4324
  %4376 = vmatprep.subr.mxu0 0.0
  %4377 = vmatpush2.msra.mxu0 %v4323
  %4378 = vmatprep.subr.mxu0 0.0
  %4379 = vmatpush2.msra.mxu0 %v4322
  %4380 = vmatprep.subr.mxu0 0.0
  %4381 = vmatpush2.msra.mxu0 %v4321
  %4382 = vmatprep.subr.mxu0 0.0
  %4383 = vmatpush2.msra.mxu0 %v4320
  %4384 = vmatprep.subr.mxu0 0.0
  %4385 = vmatpush2.msra.mxu0 %v4319
  %4386 = vmatprep.subr.mxu0 0.0
  %4387 = vmatpush2.msra.mxu0 %v4318
  %4388 = vmatprep.subr.mxu0 0.0
  %4389 = vmatpush2.msra.mxu0 %v4317
  %4390 = vmatprep.subr.mxu0 0.0
  %4391 = vmatpush2.msra.mxu0 %v4316
  %4392 = vmatprep.subr.mxu0 0.0
  %4393 = vmatpush2.msra.mxu0 %v4315
  %4394 = vmatprep.subr.mxu0 0.0
  %4395 = vmatpush2.msra.mxu0 %v4314
  %4396 = vmatprep.subr.mxu0 0.0
  %4397 = vmatpush2.msra.mxu0 %v4313
  %4398 = vmatprep.subr.mxu0 0.0
  %4399 = vmatpush2.msra.mxu0 %v4312
  %4400 = vmatprep.subr.mxu0 0.0
  %4401 = vmatpush2.msra.mxu0 %v4311
  %4402 = vmatprep.subr.mxu0 0.0
  %4403 = vmatpush2.msra.mxu0 %v4310
  %4404 = vmatprep.mubr.f32.mxu0 %v4288
  %4405 = vmatmul.mubr.f32.gmra.mxu0 %v4292
  %v4406 = vpop.f32.mrf.mxu0
  %v4407 = vadd.f32 %v4336, %v4406
  %v4408 = vpop.f32.mrf.mxu0
  %4409 = vdwg.mxu0
  %4410 = vmatprep.subr.mxu0 0.0
  %4411 = vmatpush1.msra.mxu0 0.0
  %4412 = vmatprep.subr.mxu0 0.0
  %4413 = vmatpush1.msra.mxu0 0.0
  %4414 = vmatprep.subr.mxu0 0.0
  %4415 = vmatpush1.msra.mxu0 0.0
  %4416 = vmatprep.subr.mxu0 0.0
  %4417 = vmatpush1.msra.mxu0 0.0
  %4418 = vmatprep.subr.mxu0 0.0
  %4419 = vmatpush1.msra.mxu0 0.0
  %4420 = vmatprep.subr.mxu0 0.0
  %4421 = vmatpush1.msra.mxu0 0.0
  %4422 = vmatprep.subr.mxu0 0.0
  %4423 = vmatpush1.msra.mxu0 0.0
  %4424 = vmatprep.subr.mxu0 0.0
  %4425 = vmatpush1.msra.mxu0 0.0
  %4426 = vmatprep.subr.mxu0 0.0
  %4427 = vmatpush1.msra.mxu0 0.0
  %4428 = vmatprep.subr.mxu0 0.0
  %4429 = vmatpush1.msra.mxu0 0.0
  %4430 = vmatprep.subr.mxu0 0.0
  %4431 = vmatpush1.msra.mxu0 0.0
  %4432 = vmatprep.subr.mxu0 0.0
  %4433 = vmatpush1.msra.mxu0 0.0
  %4434 = vmatprep.subr.mxu0 0.0
  %4435 = vmatpush1.msra.mxu0 %v4329
  %4436 = vmatprep.subr.mxu0 0.0
  %4437 = vmatpush1.msra.mxu0 %v4328
  %4438 = vmatprep.subr.mxu0 0.0
  %4439 = vmatpush1.msra.mxu0 %v4327
  %4440 = vmatprep.subr.mxu0 0.0
  %4441 = vmatpush1.msra.mxu0 %v4326
  %4442 = vmatprep.subr.mxu0 0.0
  %4443 = vmatpush2.msra.mxu0 0.0
  %4444 = vmatprep.subr.mxu0 0.0
  %4445 = vmatpush2.msra.mxu0 0.0
  %4446 = vmatprep.subr.mxu0 0.0
  %4447 = vmatpush2.msra.mxu0 0.0
  %4448 = vmatprep.subr.mxu0 0.0
  %4449 = vmatpush2.msra.mxu0 0.0
  %4450 = vmatprep.subr.mxu0 0.0
  %4451 = vmatpush2.msra.mxu0 0.0
  %4452 = vmatprep.subr.mxu0 0.0
  %4453 = vmatpush2.msra.mxu0 0.0
  %4454 = vmatprep.subr.mxu0 0.0
  %4455 = vmatpush2.msra.mxu0 0.0
  %4456 = vmatprep.subr.mxu0 0.0
  %4457 = vmatpush2.msra.mxu0 0.0
  %4458 = vmatprep.subr.mxu0 0.0
  %4459 = vmatpush2.msra.mxu0 0.0
  %4460 = vmatprep.subr.mxu0 0.0
  %4461 = vmatpush2.msra.mxu0 0.0
  %4462 = vmatprep.subr.mxu0 0.0
  %4463 = vmatpush2.msra.mxu0 0.0
  %4464 = vmatprep.subr.mxu0 0.0
  %4465 = vmatpush2.msra.mxu0 0.0
  %4466 = vmatprep.subr.mxu0 0.0
  %4467 = vmatpush2.msra.mxu0 0.0
  %4468 = vmatprep.subr.mxu0 0.0
  %4469 = vmatpush2.msra.mxu0 0.0
  %4470 = vmatprep.subr.mxu0 0.0
  %4471 = vmatpush2.msra.mxu0 0.0
  %4472 = vmatprep.subr.mxu0 0.0
  %4473 = vmatpush2.msra.mxu0 0.0
  %4474 = vmatprep.mubr.f32.mxu0 0.0
  %4475 = vmatmul.mubr.f32.gmra.mxu0 %v4338
  %v4476 = vpop.f32.mrf.mxu0
  %v4477 = vadd.f32 %v4407, %v4476
  %v4478 = vpop.f32.mrf.mxu0
  %4479 = vdwg.mxu0
  %s4480 = scalar_lea.vmem %s9, 2016
  %v4481 = vld [vmem:[%s4480] sm:$0xff]
  %v4482 = vld [vmem:[%s4480 + $0x8] sm:$0xff]
  %v4483 = vld [vmem:[%s4480 + $0x10] sm:$0xff]
  %v4484 = vld [vmem:[%s4480 + $0x18] sm:$0xff]
  %v4485 = vld [vmem:[%s4480 + $0x20] sm:$0xff]
  %v4486 = vld [vmem:[%s4480 + $0x28] sm:$0xff]
  %v4487 = vld [vmem:[%s4480 + $0x30] sm:$0xff]
  %v4488 = vld [vmem:[%s4480 + $0x38] sm:$0xff]
  %v4489 = vld [vmem:[%s4480 + $0x40] sm:$0xff]
  %v4490 = vld [vmem:[%s4480 + $0x48] sm:$0xff]
  %v4491 = vld [vmem:[%s4480 + $0x50] sm:$0xff]
  %v4492 = vld [vmem:[%s4480 + $0x58] sm:$0xff]
  %v4493 = vld [vmem:[%s4480 + $0x60] sm:$0xff]
  %v4494 = vld [vmem:[%s4480 + $0x68] sm:$0xff]
  %v4495 = vld [vmem:[%s4480 + $0x70] sm:$0xff]
  %v4496 = vld [vmem:[%s4480 + $0x78] sm:$0xff]
  %v4497 = vld [vmem:[%s4480 + $0x80] sm:$0xff]
  %v4498 = vld [vmem:[%s4480 + $0x88] sm:$0xff]
  %v4499 = vld [vmem:[%s4480 + $0x90] sm:$0xff]
  %v4500 = vld [vmem:[%s4480 + $0x98] sm:$0xff]
  %v4501 = vld [vmem:[%s4480 + $0xa0] sm:$0xff]
  %v4502 = vld [vmem:[%s4480 + $0xa8] sm:$0xff]
  %v4503 = vld [vmem:[%s4480 + $0xb0] sm:$0xff]
  %v4504 = vld [vmem:[%s4480 + $0xb8] sm:$0xff]
  %v4505 = vld [vmem:[%s4480 + $0xc0] sm:$0xff]
  %v4506 = vld [vmem:[%s4480 + $0xc8] sm:$0xff]
  %v4507 = vld [vmem:[%s4480 + $0xd0] sm:$0xff]
  %v4508 = vld [vmem:[%s4480 + $0xd8] sm:$0xff]
  %v4509 = vld [vmem:[%s4480 + $0xe0] sm:$0xff]
  %v4510 = vld [vmem:[%s4480 + $0xe8] sm:$0xff]
  %v4511 = vld [vmem:[%s4480 + $0xf0] sm:$0xff]
  %v4512 = vld [vmem:[%s4480 + $0xf8] sm:$0xff]
  %v4513 = vld [vmem:[%s4480 + $0x100] sm:$0xff]
  %v4514 = vld [vmem:[%s4480 + $0x108] sm:$0xff]
  %v4515 = vld [vmem:[%s4480 + $0x110] sm:$0xff]
  %v4516 = vld [vmem:[%s4480 + $0x118] sm:$0xff]
  %s4517 = scalar_lea.vmem %s8, 10
  %v4518 = vld [vmem:[%s4517] sm:$0x1]
  %v4520 = vlaneseq
  %v4521 = vshrl.u32 %v4520, 7
  %v4522 = vsub.s32 0, %v4521
  %v4523 = vrot.slane %v4518, %v4522
  %4525 = vmatprep.subr.mxu0 0.0
  %4526 = vmatpush1.msra.mxu0 %v4496
  %4527 = vmatprep.subr.mxu0 0.0
  %4528 = vmatpush1.msra.mxu0 %v4495
  %4529 = vmatprep.subr.mxu0 0.0
  %4530 = vmatpush1.msra.mxu0 %v4494
  %4531 = vmatprep.subr.mxu0 0.0
  %4532 = vmatpush1.msra.mxu0 %v4493
  %4533 = vmatprep.subr.mxu0 0.0
  %4534 = vmatpush1.msra.mxu0 %v4492
  %4535 = vmatprep.subr.mxu0 0.0
  %4536 = vmatpush1.msra.mxu0 %v4491
  %4537 = vmatprep.subr.mxu0 0.0
  %4538 = vmatpush1.msra.mxu0 %v4490
  %4539 = vmatprep.subr.mxu0 0.0
  %4540 = vmatpush1.msra.mxu0 %v4489
  %4541 = vmatprep.subr.mxu0 0.0
  %4542 = vmatpush1.msra.mxu0 %v4488
  %4543 = vmatprep.subr.mxu0 0.0
  %4544 = vmatpush1.msra.mxu0 %v4487
  %4545 = vmatprep.subr.mxu0 0.0
  %4546 = vmatpush1.msra.mxu0 %v4486
  %4547 = vmatprep.subr.mxu0 0.0
  %4548 = vmatpush1.msra.mxu0 %v4485
  %4549 = vmatprep.subr.mxu0 0.0
  %4550 = vmatpush1.msra.mxu0 %v4484
  %4551 = vmatprep.subr.mxu0 0.0
  %4552 = vmatpush1.msra.mxu0 %v4483
  %4553 = vmatprep.subr.mxu0 0.0
  %4554 = vmatpush1.msra.mxu0 %v4482
  %4555 = vmatprep.subr.mxu0 0.0
  %4556 = vmatpush1.msra.mxu0 %v4481
  %4557 = vmatprep.subr.mxu0 0.0
  %4558 = vmatpush2.msra.mxu0 %v4512
  %4559 = vmatprep.subr.mxu0 0.0
  %4560 = vmatpush2.msra.mxu0 %v4511
  %4561 = vmatprep.subr.mxu0 0.0
  %4562 = vmatpush2.msra.mxu0 %v4510
  %4563 = vmatprep.subr.mxu0 0.0
  %4564 = vmatpush2.msra.mxu0 %v4509
  %4565 = vmatprep.subr.mxu0 0.0
  %4566 = vmatpush2.msra.mxu0 %v4508
  %4567 = vmatprep.subr.mxu0 0.0
  %4568 = vmatpush2.msra.mxu0 %v4507
  %4569 = vmatprep.subr.mxu0 0.0
  %4570 = vmatpush2.msra.mxu0 %v4506
  %4571 = vmatprep.subr.mxu0 0.0
  %4572 = vmatpush2.msra.mxu0 %v4505
  %4573 = vmatprep.subr.mxu0 0.0
  %4574 = vmatpush2.msra.mxu0 %v4504
  %4575 = vmatprep.subr.mxu0 0.0
  %4576 = vmatpush2.msra.mxu0 %v4503
  %4577 = vmatprep.subr.mxu0 0.0
  %4578 = vmatpush2.msra.mxu0 %v4502
  %4579 = vmatprep.subr.mxu0 0.0
  %4580 = vmatpush2.msra.mxu0 %v4501
  %4581 = vmatprep.subr.mxu0 0.0
  %4582 = vmatpush2.msra.mxu0 %v4500
  %4583 = vmatprep.subr.mxu0 0.0
  %4584 = vmatpush2.msra.mxu0 %v4499
  %4585 = vmatprep.subr.mxu0 0.0
  %4586 = vmatpush2.msra.mxu0 %v4498
  %4587 = vmatprep.subr.mxu0 0.0
  %4588 = vmatpush2.msra.mxu0 %v4497
  %4589 = vmatprep.mubr.f32.mxu0 %v4288
  %4590 = vmatmul.mubr.f32.gmra.mxu0 %v4292
  %v4591 = vpop.f32.mrf.mxu0
  %v4592 = vadd.f32 %v4523, %v4591
  %v4593 = vpop.f32.mrf.mxu0
  %4594 = vdwg.mxu0
  %4595 = vmatprep.subr.mxu0 0.0
  %4596 = vmatpush1.msra.mxu0 0.0
  %4597 = vmatprep.subr.mxu0 0.0
  %4598 = vmatpush1.msra.mxu0 0.0
  %4599 = vmatprep.subr.mxu0 0.0
  %4600 = vmatpush1.msra.mxu0 0.0
  %4601 = vmatprep.subr.mxu0 0.0
  %4602 = vmatpush1.msra.mxu0 0.0
  %4603 = vmatprep.subr.mxu0 0.0
  %4604 = vmatpush1.msra.mxu0 0.0
  %4605 = vmatprep.subr.mxu0 0.0
  %4606 = vmatpush1.msra.mxu0 0.0
  %4607 = vmatprep.subr.mxu0 0.0
  %4608 = vmatpush1.msra.mxu0 0.0
  %4609 = vmatprep.subr.mxu0 0.0
  %4610 = vmatpush1.msra.mxu0 0.0
  %4611 = vmatprep.subr.mxu0 0.0
  %4612 = vmatpush1.msra.mxu0 0.0
  %4613 = vmatprep.subr.mxu0 0.0
  %4614 = vmatpush1.msra.mxu0 0.0
  %4615 = vmatprep.subr.mxu0 0.0
  %4616 = vmatpush1.msra.mxu0 0.0
  %4617 = vmatprep.subr.mxu0 0.0
  %4618 = vmatpush1.msra.mxu0 0.0
  %4619 = vmatprep.subr.mxu0 0.0
  %4620 = vmatpush1.msra.mxu0 %v4516
  %4621 = vmatprep.subr.mxu0 0.0
  %4622 = vmatpush1.msra.mxu0 %v4515
  %4623 = vmatprep.subr.mxu0 0.0
  %4624 = vmatpush1.msra.mxu0 %v4514
  %4625 = vmatprep.subr.mxu0 0.0
  %4626 = vmatpush1.msra.mxu0 %v4513
  %4627 = vmatprep.subr.mxu0 0.0
  %4628 = vmatpush2.msra.mxu0 0.0
  %4629 = vmatprep.subr.mxu0 0.0
  %4630 = vmatpush2.msra.mxu0 0.0
  %4631 = vmatprep.subr.mxu0 0.0
  %4632 = vmatpush2.msra.mxu0 0.0
  %4633 = vmatprep.subr.mxu0 0.0
  %4634 = vmatpush2.msra.mxu0 0.0
  %4635 = vmatprep.subr.mxu0 0.0
  %4636 = vmatpush2.msra.mxu0 0.0
  %4637 = vmatprep.subr.mxu0 0.0
  %4638 = vmatpush2.msra.mxu0 0.0
  %4639 = vmatprep.subr.mxu0 0.0
  %4640 = vmatpush2.msra.mxu0 0.0
  %4641 = vmatprep.subr.mxu0 0.0
  %4642 = vmatpush2.msra.mxu0 0.0
  %4643 = vmatprep.subr.mxu0 0.0
  %4644 = vmatpush2.msra.mxu0 0.0
  %4645 = vmatprep.subr.mxu0 0.0
  %4646 = vmatpush2.msra.mxu0 0.0
  %4647 = vmatprep.subr.mxu0 0.0
  %4648 = vmatpush2.msra.mxu0 0.0
  %4649 = vmatprep.subr.mxu0 0.0
  %4650 = vmatpush2.msra.mxu0 0.0
  %4651 = vmatprep.subr.mxu0 0.0
  %4652 = vmatpush2.msra.mxu0 0.0
  %4653 = vmatprep.subr.mxu0 0.0
  %4654 = vmatpush2.msra.mxu0 0.0
  %4655 = vmatprep.subr.mxu0 0.0
  %4656 = vmatpush2.msra.mxu0 0.0
  %4657 = vmatprep.subr.mxu0 0.0
  %4658 = vmatpush2.msra.mxu0 0.0
  %4659 = vmatprep.mubr.f32.mxu0 0.0
  %4660 = vmatmul.mubr.f32.gmra.mxu0 %v4338
  %v4661 = vpop.f32.mrf.mxu0
  %v4662 = vadd.f32 %v4592, %v4661
  %v4663 = vpop.f32.mrf.mxu0
  %4664 = vdwg.mxu0
  %s4665 = scalar_lea.vmem %s9, 2304
  %v4666 = vld [vmem:[%s4665] sm:$0xff]
  %v4667 = vld [vmem:[%s4665 + $0x8] sm:$0xff]
  %v4668 = vld [vmem:[%s4665 + $0x10] sm:$0xff]
  %v4669 = vld [vmem:[%s4665 + $0x18] sm:$0xff]
  %v4670 = vld [vmem:[%s4665 + $0x20] sm:$0xff]
  %v4671 = vld [vmem:[%s4665 + $0x28] sm:$0xff]
  %v4672 = vld [vmem:[%s4665 + $0x30] sm:$0xff]
  %v4673 = vld [vmem:[%s4665 + $0x38] sm:$0xff]
  %v4674 = vld [vmem:[%s4665 + $0x40] sm:$0xff]
  %v4675 = vld [vmem:[%s4665 + $0x48] sm:$0xff]
  %v4676 = vld [vmem:[%s4665 + $0x50] sm:$0xff]
  %v4677 = vld [vmem:[%s4665 + $0x58] sm:$0xff]
  %v4678 = vld [vmem:[%s4665 + $0x60] sm:$0xff]
  %v4679 = vld [vmem:[%s4665 + $0x68] sm:$0xff]
  %v4680 = vld [vmem:[%s4665 + $0x70] sm:$0xff]
  %v4681 = vld [vmem:[%s4665 + $0x78] sm:$0xff]
  %v4682 = vld [vmem:[%s4665 + $0x80] sm:$0xff]
  %v4683 = vld [vmem:[%s4665 + $0x88] sm:$0xff]
  %v4684 = vld [vmem:[%s4665 + $0x90] sm:$0xff]
  %v4685 = vld [vmem:[%s4665 + $0x98] sm:$0xff]
  %v4686 = vld [vmem:[%s4665 + $0xa0] sm:$0xff]
  %v4687 = vld [vmem:[%s4665 + $0xa8] sm:$0xff]
  %v4688 = vld [vmem:[%s4665 + $0xb0] sm:$0xff]
  %v4689 = vld [vmem:[%s4665 + $0xb8] sm:$0xff]
  %v4690 = vld [vmem:[%s4665 + $0xc0] sm:$0xff]
  %v4691 = vld [vmem:[%s4665 + $0xc8] sm:$0xff]
  %v4692 = vld [vmem:[%s4665 + $0xd0] sm:$0xff]
  %v4693 = vld [vmem:[%s4665 + $0xd8] sm:$0xff]
  %v4694 = vld [vmem:[%s4665 + $0xe0] sm:$0xff]
  %v4695 = vld [vmem:[%s4665 + $0xe8] sm:$0xff]
  %v4696 = vld [vmem:[%s4665 + $0xf0] sm:$0xff]
  %v4697 = vld [vmem:[%s4665 + $0xf8] sm:$0xff]
  %v4698 = vld [vmem:[%s4665 + $0x100] sm:$0xff]
  %v4699 = vld [vmem:[%s4665 + $0x108] sm:$0xff]
  %v4700 = vld [vmem:[%s4665 + $0x110] sm:$0xff]
  %v4701 = vld [vmem:[%s4665 + $0x118] sm:$0xff]
  %s4702 = scalar_lea.vmem %s8, 11
  %v4703 = vld [vmem:[%s4702] sm:$0x1]
  %v4705 = vlaneseq
  %v4706 = vshrl.u32 %v4705, 7
  %v4707 = vsub.s32 0, %v4706
  %v4708 = vrot.slane %v4703, %v4707
  %4710 = vmatprep.subr.mxu0 0.0
  %4711 = vmatpush1.msra.mxu0 %v4681
  %4712 = vmatprep.subr.mxu0 0.0
  %4713 = vmatpush1.msra.mxu0 %v4680
  %4714 = vmatprep.subr.mxu0 0.0
  %4715 = vmatpush1.msra.mxu0 %v4679
  %4716 = vmatprep.subr.mxu0 0.0
  %4717 = vmatpush1.msra.mxu0 %v4678
  %4718 = vmatprep.subr.mxu0 0.0
  %4719 = vmatpush1.msra.mxu0 %v4677
  %4720 = vmatprep.subr.mxu0 0.0
  %4721 = vmatpush1.msra.mxu0 %v4676
  %4722 = vmatprep.subr.mxu0 0.0
  %4723 = vmatpush1.msra.mxu0 %v4675
  %4724 = vmatprep.subr.mxu0 0.0
  %4725 = vmatpush1.msra.mxu0 %v4674
  %4726 = vmatprep.subr.mxu0 0.0
  %4727 = vmatpush1.msra.mxu0 %v4673
  %4728 = vmatprep.subr.mxu0 0.0
  %4729 = vmatpush1.msra.mxu0 %v4672
  %4730 = vmatprep.subr.mxu0 0.0
  %4731 = vmatpush1.msra.mxu0 %v4671
  %4732 = vmatprep.subr.mxu0 0.0
  %4733 = vmatpush1.msra.mxu0 %v4670
  %4734 = vmatprep.subr.mxu0 0.0
  %4735 = vmatpush1.msra.mxu0 %v4669
  %4736 = vmatprep.subr.mxu0 0.0
  %4737 = vmatpush1.msra.mxu0 %v4668
  %4738 = vmatprep.subr.mxu0 0.0
  %4739 = vmatpush1.msra.mxu0 %v4667
  %4740 = vmatprep.subr.mxu0 0.0
  %4741 = vmatpush1.msra.mxu0 %v4666
  %4742 = vmatprep.subr.mxu0 0.0
  %4743 = vmatpush2.msra.mxu0 %v4697
  %4744 = vmatprep.subr.mxu0 0.0
  %4745 = vmatpush2.msra.mxu0 %v4696
  %4746 = vmatprep.subr.mxu0 0.0
  %4747 = vmatpush2.msra.mxu0 %v4695
  %4748 = vmatprep.subr.mxu0 0.0
  %4749 = vmatpush2.msra.mxu0 %v4694
  %4750 = vmatprep.subr.mxu0 0.0
  %4751 = vmatpush2.msra.mxu0 %v4693
  %4752 = vmatprep.subr.mxu0 0.0
  %4753 = vmatpush2.msra.mxu0 %v4692
  %4754 = vmatprep.subr.mxu0 0.0
  %4755 = vmatpush2.msra.mxu0 %v4691
  %4756 = vmatprep.subr.mxu0 0.0
  %4757 = vmatpush2.msra.mxu0 %v4690
  %4758 = vmatprep.subr.mxu0 0.0
  %4759 = vmatpush2.msra.mxu0 %v4689
  %4760 = vmatprep.subr.mxu0 0.0
  %4761 = vmatpush2.msra.mxu0 %v4688
  %4762 = vmatprep.subr.mxu0 0.0
  %4763 = vmatpush2.msra.mxu0 %v4687
  %4764 = vmatprep.subr.mxu0 0.0
  %4765 = vmatpush2.msra.mxu0 %v4686
  %4766 = vmatprep.subr.mxu0 0.0
  %4767 = vmatpush2.msra.mxu0 %v4685
  %4768 = vmatprep.subr.mxu0 0.0
  %4769 = vmatpush2.msra.mxu0 %v4684
  %4770 = vmatprep.subr.mxu0 0.0
  %4771 = vmatpush2.msra.mxu0 %v4683
  %4772 = vmatprep.subr.mxu0 0.0
  %4773 = vmatpush2.msra.mxu0 %v4682
  %4774 = vmatprep.mubr.f32.mxu0 %v4288
  %4775 = vmatmul.mubr.f32.gmra.mxu0 %v4292
  %v4776 = vpop.f32.mrf.mxu0
  %v4777 = vadd.f32 %v4708, %v4776
  %v4778 = vpop.f32.mrf.mxu0
  %4779 = vdwg.mxu0
  %4780 = vmatprep.subr.mxu0 0.0
  %4781 = vmatpush1.msra.mxu0 0.0
  %4782 = vmatprep.subr.mxu0 0.0
  %4783 = vmatpush1.msra.mxu0 0.0
  %4784 = vmatprep.subr.mxu0 0.0
  %4785 = vmatpush1.msra.mxu0 0.0
  %4786 = vmatprep.subr.mxu0 0.0
  %4787 = vmatpush1.msra.mxu0 0.0
  %4788 = vmatprep.subr.mxu0 0.0
  %4789 = vmatpush1.msra.mxu0 0.0
  %4790 = vmatprep.subr.mxu0 0.0
  %4791 = vmatpush1.msra.mxu0 0.0
  %4792 = vmatprep.subr.mxu0 0.0
  %4793 = vmatpush1.msra.mxu0 0.0
  %4794 = vmatprep.subr.mxu0 0.0
  %4795 = vmatpush1.msra.mxu0 0.0
  %4796 = vmatprep.subr.mxu0 0.0
  %4797 = vmatpush1.msra.mxu0 0.0
  %4798 = vmatprep.subr.mxu0 0.0
  %4799 = vmatpush1.msra.mxu0 0.0
  %4800 = vmatprep.subr.mxu0 0.0
  %4801 = vmatpush1.msra.mxu0 0.0
  %4802 = vmatprep.subr.mxu0 0.0
  %4803 = vmatpush1.msra.mxu0 0.0
  %4804 = vmatprep.subr.mxu0 0.0
  %4805 = vmatpush1.msra.mxu0 %v4701
  %4806 = vmatprep.subr.mxu0 0.0
  %4807 = vmatpush1.msra.mxu0 %v4700
  %4808 = vmatprep.subr.mxu0 0.0
  %4809 = vmatpush1.msra.mxu0 %v4699
  %4810 = vmatprep.subr.mxu0 0.0
  %4811 = vmatpush1.msra.mxu0 %v4698
  %4812 = vmatprep.subr.mxu0 0.0
  %4813 = vmatpush2.msra.mxu0 0.0
  %4814 = vmatprep.subr.mxu0 0.0
  %4815 = vmatpush2.msra.mxu0 0.0
  %4816 = vmatprep.subr.mxu0 0.0
  %4817 = vmatpush2.msra.mxu0 0.0
  %4818 = vmatprep.subr.mxu0 0.0
  %4819 = vmatpush2.msra.mxu0 0.0
  %4820 = vmatprep.subr.mxu0 0.0
  %4821 = vmatpush2.msra.mxu0 0.0
  %4822 = vmatprep.subr.mxu0 0.0
  %4823 = vmatpush2.msra.mxu0 0.0
  %4824 = vmatprep.subr.mxu0 0.0
  %4825 = vmatpush2.msra.mxu0 0.0
  %4826 = vmatprep.subr.mxu0 0.0
  %4827 = vmatpush2.msra.mxu0 0.0
  %4828 = vmatprep.subr.mxu0 0.0
  %4829 = vmatpush2.msra.mxu0 0.0
  %4830 = vmatprep.subr.mxu0 0.0
  %4831 = vmatpush2.msra.mxu0 0.0
  %4832 = vmatprep.subr.mxu0 0.0
  %4833 = vmatpush2.msra.mxu0 0.0
  %4834 = vmatprep.subr.mxu0 0.0
  %4835 = vmatpush2.msra.mxu0 0.0
  %4836 = vmatprep.subr.mxu0 0.0
  %4837 = vmatpush2.msra.mxu0 0.0
  %4838 = vmatprep.subr.mxu0 0.0
  %4839 = vmatpush2.msra.mxu0 0.0
  %4840 = vmatprep.subr.mxu0 0.0
  %4841 = vmatpush2.msra.mxu0 0.0
  %4842 = vmatprep.subr.mxu0 0.0
  %4843 = vmatpush2.msra.mxu0 0.0
  %4844 = vmatprep.mubr.f32.mxu0 0.0
  %4845 = vmatmul.mubr.f32.gmra.mxu0 %v4338
  %v4846 = vpop.f32.mrf.mxu0
  %v4847 = vadd.f32 %v4777, %v4846
  %v4848 = vpop.f32.mrf.mxu0
  %4849 = vdwg.mxu0
  %s4850 = scalar_lea.vmem %s10, 192
  %v4851 = vld [vmem:[%s4850] sm:$0xff]
  %v4852 = vld [vmem:[%s4850 + $0x8] sm:$0xff]
  %v4853 = vld [vmem:[%s4850 + $0x10] sm:$0xff]
  %v4854 = vld [vmem:[%s4850 + $0x18] sm:$0xff]
  %s4855 = scalar_lea.vmem %s8, 18
  %v4856 = vld [vmem:[%s4855] sm:$0x1]
  %v4858 = vlaneseq
  %v4859 = vshrl.u32 %v4858, 7
  %v4860 = vsub.s32 0, %v4859
  %v4861 = vrot.slane %v4856, %v4860
  %4863 = vmatprep.subr.mxu0 0.0
  %4864 = vmatpush1.msra.mxu0 0.0
  %4865 = vmatprep.subr.mxu0 0.0
  %4866 = vmatpush1.msra.mxu0 0.0
  %4867 = vmatprep.subr.mxu0 0.0
  %4868 = vmatpush1.msra.mxu0 0.0
  %4869 = vmatprep.subr.mxu0 0.0
  %4870 = vmatpush1.msra.mxu0 0.0
  %4871 = vmatprep.subr.mxu0 0.0
  %4872 = vmatpush1.msra.mxu0 0.0
  %4873 = vmatprep.subr.mxu0 0.0
  %4874 = vmatpush1.msra.mxu0 0.0
  %4875 = vmatprep.subr.mxu0 0.0
  %4876 = vmatpush1.msra.mxu0 0.0
  %4877 = vmatprep.subr.mxu0 0.0
  %4878 = vmatpush1.msra.mxu0 0.0
  %4879 = vmatprep.subr.mxu0 0.0
  %4880 = vmatpush1.msra.mxu0 0.0
  %4881 = vmatprep.subr.mxu0 0.0
  %4882 = vmatpush1.msra.mxu0 0.0
  %4883 = vmatprep.subr.mxu0 0.0
  %4884 = vmatpush1.msra.mxu0 0.0
  %4885 = vmatprep.subr.mxu0 0.0
  %4886 = vmatpush1.msra.mxu0 0.0
  %4887 = vmatprep.subr.mxu0 0.0
  %4888 = vmatpush1.msra.mxu0 %v4854
  %4889 = vmatprep.subr.mxu0 0.0
  %4890 = vmatpush1.msra.mxu0 %v4853
  %4891 = vmatprep.subr.mxu0 0.0
  %4892 = vmatpush1.msra.mxu0 %v4852
  %4893 = vmatprep.subr.mxu0 0.0
  %4894 = vmatpush1.msra.mxu0 %v4851
  %4895 = vmatprep.subr.mxu0 0.0
  %4896 = vmatpush2.msra.mxu0 0.0
  %4897 = vmatprep.subr.mxu0 0.0
  %4898 = vmatpush2.msra.mxu0 0.0
  %4899 = vmatprep.subr.mxu0 0.0
  %4900 = vmatpush2.msra.mxu0 0.0
  %4901 = vmatprep.subr.mxu0 0.0
  %4902 = vmatpush2.msra.mxu0 0.0
  %4903 = vmatprep.subr.mxu0 0.0
  %4904 = vmatpush2.msra.mxu0 0.0
  %4905 = vmatprep.subr.mxu0 0.0
  %4906 = vmatpush2.msra.mxu0 0.0
  %4907 = vmatprep.subr.mxu0 0.0
  %4908 = vmatpush2.msra.mxu0 0.0
  %4909 = vmatprep.subr.mxu0 0.0
  %4910 = vmatpush2.msra.mxu0 0.0
  %4911 = vmatprep.subr.mxu0 0.0
  %4912 = vmatpush2.msra.mxu0 0.0
  %4913 = vmatprep.subr.mxu0 0.0
  %4914 = vmatpush2.msra.mxu0 0.0
  %4915 = vmatprep.subr.mxu0 0.0
  %4916 = vmatpush2.msra.mxu0 0.0
  %4917 = vmatprep.subr.mxu0 0.0
  %4918 = vmatpush2.msra.mxu0 0.0
  %4919 = vmatprep.subr.mxu0 0.0
  %4920 = vmatpush2.msra.mxu0 0.0
  %4921 = vmatprep.subr.mxu0 0.0
  %4922 = vmatpush2.msra.mxu0 0.0
  %4923 = vmatprep.subr.mxu0 0.0
  %4924 = vmatpush2.msra.mxu0 0.0
  %4925 = vmatprep.subr.mxu0 0.0
  %4926 = vmatpush2.msra.mxu0 0.0
  %4927 = vmatprep.mubr.f32.mxu0 0.0
  %4928 = vmatmul.mubr.f32.gmra.mxu0 %v3408
  %v4929 = vpop.f32.mrf.mxu0
  %v4930 = vadd.f32 %v4861, %v4929
  %v4931 = vpop.f32.mrf.mxu0
  %4932 = vdwg.mxu0
  %s4933 = scalar_lea.vmem %s10, 224
  %v4934 = vld [vmem:[%s4933] sm:$0xff]
  %v4935 = vld [vmem:[%s4933 + $0x8] sm:$0xff]
  %v4936 = vld [vmem:[%s4933 + $0x10] sm:$0xff]
  %v4937 = vld [vmem:[%s4933 + $0x18] sm:$0xff]
  %s4938 = scalar_lea.vmem %s8, 19
  %v4939 = vld [vmem:[%s4938] sm:$0x1]
  %v4941 = vlaneseq
  %v4942 = vshrl.u32 %v4941, 7
  %v4943 = vsub.s32 0, %v4942
  %v4944 = vrot.slane %v4939, %v4943
  %4946 = vmatprep.subr.mxu0 0.0
  %4947 = vmatpush1.msra.mxu0 0.0
  %4948 = vmatprep.subr.mxu0 0.0
  %4949 = vmatpush1.msra.mxu0 0.0
  %4950 = vmatprep.subr.mxu0 0.0
  %4951 = vmatpush1.msra.mxu0 0.0
  %4952 = vmatprep.subr.mxu0 0.0
  %4953 = vmatpush1.msra.mxu0 0.0
  %4954 = vmatprep.subr.mxu0 0.0
  %4955 = vmatpush1.msra.mxu0 0.0
  %4956 = vmatprep.subr.mxu0 0.0
  %4957 = vmatpush1.msra.mxu0 0.0
  %4958 = vmatprep.subr.mxu0 0.0
  %4959 = vmatpush1.msra.mxu0 0.0
  %4960 = vmatprep.subr.mxu0 0.0
  %4961 = vmatpush1.msra.mxu0 0.0
  %4962 = vmatprep.subr.mxu0 0.0
  %4963 = vmatpush1.msra.mxu0 0.0
  %4964 = vmatprep.subr.mxu0 0.0
  %4965 = vmatpush1.msra.mxu0 0.0
  %4966 = vmatprep.subr.mxu0 0.0
  %4967 = vmatpush1.msra.mxu0 0.0
  %4968 = vmatprep.subr.mxu0 0.0
  %4969 = vmatpush1.msra.mxu0 0.0
  %4970 = vmatprep.subr.mxu0 0.0
  %4971 = vmatpush1.msra.mxu0 %v4937
  %4972 = vmatprep.subr.mxu0 0.0
  %4973 = vmatpush1.msra.mxu0 %v4936
  %4974 = vmatprep.subr.mxu0 0.0
  %4975 = vmatpush1.msra.mxu0 %v4935
  %4976 = vmatprep.subr.mxu0 0.0
  %4977 = vmatpush1.msra.mxu0 %v4934
  %4978 = vmatprep.subr.mxu0 0.0
  %4979 = vmatpush2.msra.mxu0 0.0
  %4980 = vmatprep.subr.mxu0 0.0
  %4981 = vmatpush2.msra.mxu0 0.0
  %4982 = vmatprep.subr.mxu0 0.0
  %4983 = vmatpush2.msra.mxu0 0.0
  %4984 = vmatprep.subr.mxu0 0.0
  %4985 = vmatpush2.msra.mxu0 0.0
  %4986 = vmatprep.subr.mxu0 0.0
  %4987 = vmatpush2.msra.mxu0 0.0
  %4988 = vmatprep.subr.mxu0 0.0
  %4989 = vmatpush2.msra.mxu0 0.0
  %4990 = vmatprep.subr.mxu0 0.0
  %4991 = vmatpush2.msra.mxu0 0.0
  %4992 = vmatprep.subr.mxu0 0.0
  %4993 = vmatpush2.msra.mxu0 0.0
  %4994 = vmatprep.subr.mxu0 0.0
  %4995 = vmatpush2.msra.mxu0 0.0
  %4996 = vmatprep.subr.mxu0 0.0
  %4997 = vmatpush2.msra.mxu0 0.0
  %4998 = vmatprep.subr.mxu0 0.0
  %4999 = vmatpush2.msra.mxu0 0.0
  %5000 = vmatprep.subr.mxu0 0.0
  %5001 = vmatpush2.msra.mxu0 0.0
  %5002 = vmatprep.subr.mxu0 0.0
  %5003 = vmatpush2.msra.mxu0 0.0
  %5004 = vmatprep.subr.mxu0 0.0
  %5005 = vmatpush2.msra.mxu0 0.0
  %5006 = vmatprep.subr.mxu0 0.0
  %5007 = vmatpush2.msra.mxu0 0.0
  %5008 = vmatprep.subr.mxu0 0.0
  %5009 = vmatpush2.msra.mxu0 0.0
  %5010 = vmatprep.mubr.f32.mxu0 0.0
  %5011 = vmatmul.mubr.f32.gmra.mxu0 %v3408
  %v5012 = vpop.f32.mrf.mxu0
  %v5013 = vadd.f32 %v4944, %v5012
  %v5014 = vpop.f32.mrf.mxu0
  %5015 = vdwg.mxu0
  %s5016 = scalar_lea.vmem %s10, 256
  %v5017 = vld [vmem:[%s5016] sm:$0xff]
  %v5018 = vld [vmem:[%s5016 + $0x8] sm:$0xff]
  %v5019 = vld [vmem:[%s5016 + $0x10] sm:$0xff]
  %v5020 = vld [vmem:[%s5016 + $0x18] sm:$0xff]
  %s5021 = scalar_lea.vmem %s8, 20
  %v5022 = vld [vmem:[%s5021] sm:$0x1]
  %v5024 = vlaneseq
  %v5025 = vshrl.u32 %v5024, 7
  %v5026 = vsub.s32 0, %v5025
  %v5027 = vrot.slane %v5022, %v5026
  %5029 = vmatprep.subr.mxu0 0.0
  %5030 = vmatpush1.msra.mxu0 0.0
  %5031 = vmatprep.subr.mxu0 0.0
  %5032 = vmatpush1.msra.mxu0 0.0
  %5033 = vmatprep.subr.mxu0 0.0
  %5034 = vmatpush1.msra.mxu0 0.0
  %5035 = vmatprep.subr.mxu0 0.0
  %5036 = vmatpush1.msra.mxu0 0.0
  %5037 = vmatprep.subr.mxu0 0.0
  %5038 = vmatpush1.msra.mxu0 0.0
  %5039 = vmatprep.subr.mxu0 0.0
  %5040 = vmatpush1.msra.mxu0 0.0
  %5041 = vmatprep.subr.mxu0 0.0
  %5042 = vmatpush1.msra.mxu0 0.0
  %5043 = vmatprep.subr.mxu0 0.0
  %5044 = vmatpush1.msra.mxu0 0.0
  %5045 = vmatprep.subr.mxu0 0.0
  %5046 = vmatpush1.msra.mxu0 0.0
  %5047 = vmatprep.subr.mxu0 0.0
  %5048 = vmatpush1.msra.mxu0 0.0
  %5049 = vmatprep.subr.mxu0 0.0
  %5050 = vmatpush1.msra.mxu0 0.0
  %5051 = vmatprep.subr.mxu0 0.0
  %5052 = vmatpush1.msra.mxu0 0.0
  %5053 = vmatprep.subr.mxu0 0.0
  %5054 = vmatpush1.msra.mxu0 %v5020
  %5055 = vmatprep.subr.mxu0 0.0
  %5056 = vmatpush1.msra.mxu0 %v5019
  %5057 = vmatprep.subr.mxu0 0.0
  %5058 = vmatpush1.msra.mxu0 %v5018
  %5059 = vmatprep.subr.mxu0 0.0
  %5060 = vmatpush1.msra.mxu0 %v5017
  %5061 = vmatprep.subr.mxu0 0.0
  %5062 = vmatpush2.msra.mxu0 0.0
  %5063 = vmatprep.subr.mxu0 0.0
  %5064 = vmatpush2.msra.mxu0 0.0
  %5065 = vmatprep.subr.mxu0 0.0
  %5066 = vmatpush2.msra.mxu0 0.0
  %5067 = vmatprep.subr.mxu0 0.0
  %5068 = vmatpush2.msra.mxu0 0.0
  %5069 = vmatprep.subr.mxu0 0.0
  %5070 = vmatpush2.msra.mxu0 0.0
  %5071 = vmatprep.subr.mxu0 0.0
  %5072 = vmatpush2.msra.mxu0 0.0
  %5073 = vmatprep.subr.mxu0 0.0
  %5074 = vmatpush2.msra.mxu0 0.0
  %5075 = vmatprep.subr.mxu0 0.0
  %5076 = vmatpush2.msra.mxu0 0.0
  %5077 = vmatprep.subr.mxu0 0.0
  %5078 = vmatpush2.msra.mxu0 0.0
  %5079 = vmatprep.subr.mxu0 0.0
  %5080 = vmatpush2.msra.mxu0 0.0
  %5081 = vmatprep.subr.mxu0 0.0
  %5082 = vmatpush2.msra.mxu0 0.0
  %5083 = vmatprep.subr.mxu0 0.0
  %5084 = vmatpush2.msra.mxu0 0.0
  %5085 = vmatprep.subr.mxu0 0.0
  %5086 = vmatpush2.msra.mxu0 0.0
  %5087 = vmatprep.subr.mxu0 0.0
  %5088 = vmatpush2.msra.mxu0 0.0
  %5089 = vmatprep.subr.mxu0 0.0
  %5090 = vmatpush2.msra.mxu0 0.0
  %5091 = vmatprep.subr.mxu0 0.0
  %5092 = vmatpush2.msra.mxu0 0.0
  %5093 = vmatprep.mubr.f32.mxu0 0.0
  %5094 = vmatmul.mubr.f32.gmra.mxu0 %v3408
  %v5095 = vpop.f32.mrf.mxu0
  %v5096 = vadd.f32 %v5027, %v5095
  %v5097 = vpop.f32.mrf.mxu0
  %5098 = vdwg.mxu0
  %v5099 = vadd.f32 %v4477, %v4930
  %v5100 = vxor.u32 %v5099, 2147483648
  %v5101 = vmul.f32 %v5100, 1.442695
  %v5102 = vpow.pop %v5101
  %v5103 = vadd.f32 %v5102, 1.0
  %v5104 = vrcp.pop %v5103
  %v5105 = vmul.f32 1.0, %v5104
  %v5106 = vadd.f32 %v4662, %v5013
  %v5107 = vxor.u32 %v5106, 2147483648
  %v5108 = vmul.f32 %v5107, 1.442695
  %v5109 = vpow.pop %v5108
  %v5110 = vadd.f32 %v5109, 1.0
  %v5111 = vrcp.pop %v5110
  %v5112 = vmul.f32 1.0, %v5111
  %v5113 = vmul.f32 %v5105, %v5096
  %v5114 = vadd.f32 %v4847, %v5113
  %v5115 = vtanh.pop %v5114
  %v5116 = vsub.f32 1.0, %v5112
  %v5117 = vmul.f32 %v5116, %v5115
  %v5118 = vmul.f32 %v5112, %v3303
  %v5119 = vadd.f32 %v5117, %v5118
  %s5120 = scalar_lea.vmem %s11, 64
  %v5121 = vld [vmem:[%s5120] sm:$0xff]
  %v5122 = vld [vmem:[%s5120 + $0x8] sm:$0xff]
  %v5123 = vld [vmem:[%s5120 + $0x10] sm:$0xff]
  %v5124 = vld [vmem:[%s5120 + $0x18] sm:$0xff]
  %s5125 = scalar_lea.vmem %s12, 384
  %v5126 = vld [vmem:[%s5125] sm:$0xff]
  %v5127 = vld [vmem:[%s5125 + $0x8] sm:$0xff]
  %v5128 = vld [vmem:[%s5125 + $0x10] sm:$0xff]
  %v5129 = vld [vmem:[%s5125 + $0x18] sm:$0xff]
  %v5130 = vld [vmem:[%s5125 + $0x20] sm:$0xff]
  %v5131 = vld [vmem:[%s5125 + $0x28] sm:$0xff]
  %v5132 = vld [vmem:[%s5125 + $0x30] sm:$0xff]
  %v5133 = vld [vmem:[%s5125 + $0x38] sm:$0xff]
  %v5134 = vld [vmem:[%s5125 + $0x40] sm:$0xff]
  %v5135 = vld [vmem:[%s5125 + $0x48] sm:$0xff]
  %v5136 = vld [vmem:[%s5125 + $0x50] sm:$0xff]
  %v5137 = vld [vmem:[%s5125 + $0x58] sm:$0xff]
  %v5138 = vld [vmem:[%s5125 + $0x60] sm:$0xff]
  %v5139 = vld [vmem:[%s5125 + $0x68] sm:$0xff]
  %v5140 = vld [vmem:[%s5125 + $0x70] sm:$0xff]
  %v5141 = vld [vmem:[%s5125 + $0x78] sm:$0xff]
  %v5142 = vld [vmem:[%s5125 + $0x80] sm:$0xff]
  %v5143 = vld [vmem:[%s5125 + $0x88] sm:$0xff]
  %v5144 = vld [vmem:[%s5125 + $0x90] sm:$0xff]
  %v5145 = vld [vmem:[%s5125 + $0x98] sm:$0xff]
  %v5146 = vld [vmem:[%s5125 + $0xa0] sm:$0xff]
  %v5147 = vld [vmem:[%s5125 + $0xa8] sm:$0xff]
  %v5148 = vld [vmem:[%s5125 + $0xb0] sm:$0xff]
  %v5149 = vld [vmem:[%s5125 + $0xb8] sm:$0xff]
  %v5151 = vsel %vm91, %v4283, 0
  %5153 = vmatprep.subr.mxu0 0.0
  %5154 = vmatpush1.msra.mxu0 %v5141
  %5155 = vmatprep.subr.mxu0 0.0
  %5156 = vmatpush1.msra.mxu0 %v5140
  %5157 = vmatprep.subr.mxu0 0.0
  %5158 = vmatpush1.msra.mxu0 %v5139
  %5159 = vmatprep.subr.mxu0 0.0
  %5160 = vmatpush1.msra.mxu0 %v5138
  %5161 = vmatprep.subr.mxu0 0.0
  %5162 = vmatpush1.msra.mxu0 %v5137
  %5163 = vmatprep.subr.mxu0 0.0
  %5164 = vmatpush1.msra.mxu0 %v5136
  %5165 = vmatprep.subr.mxu0 0.0
  %5166 = vmatpush1.msra.mxu0 %v5135
  %5167 = vmatprep.subr.mxu0 0.0
  %5168 = vmatpush1.msra.mxu0 %v5134
  %5169 = vmatprep.subr.mxu0 0.0
  %5170 = vmatpush1.msra.mxu0 %v5133
  %5171 = vmatprep.subr.mxu0 0.0
  %5172 = vmatpush1.msra.mxu0 %v5132
  %5173 = vmatprep.subr.mxu0 0.0
  %5174 = vmatpush1.msra.mxu0 %v5131
  %5175 = vmatprep.subr.mxu0 0.0
  %5176 = vmatpush1.msra.mxu0 %v5130
  %5177 = vmatprep.subr.mxu0 0.0
  %5178 = vmatpush1.msra.mxu0 %v5129
  %5179 = vmatprep.subr.mxu0 0.0
  %5180 = vmatpush1.msra.mxu0 %v5128
  %5181 = vmatprep.subr.mxu0 0.0
  %5182 = vmatpush1.msra.mxu0 %v5127
  %5183 = vmatprep.subr.mxu0 0.0
  %5184 = vmatpush1.msra.mxu0 %v5126
  %5185 = vmatprep.subr.mxu0 0.0
  %5186 = vmatpush2.msra.mxu0 0.0
  %5187 = vmatprep.subr.mxu0 0.0
  %5188 = vmatpush2.msra.mxu0 0.0
  %5189 = vmatprep.subr.mxu0 0.0
  %5190 = vmatpush2.msra.mxu0 0.0
  %5191 = vmatprep.subr.mxu0 0.0
  %5192 = vmatpush2.msra.mxu0 0.0
  %5193 = vmatprep.subr.mxu0 0.0
  %5194 = vmatpush2.msra.mxu0 0.0
  %5195 = vmatprep.subr.mxu0 0.0
  %5196 = vmatpush2.msra.mxu0 0.0
  %5197 = vmatprep.subr.mxu0 0.0
  %5198 = vmatpush2.msra.mxu0 0.0
  %5199 = vmatprep.subr.mxu0 0.0
  %5200 = vmatpush2.msra.mxu0 0.0
  %5201 = vmatprep.subr.mxu0 0.0
  %5202 = vmatpush2.msra.mxu0 %v5149
  %5203 = vmatprep.subr.mxu0 0.0
  %5204 = vmatpush2.msra.mxu0 %v5148
  %5205 = vmatprep.subr.mxu0 0.0
  %5206 = vmatpush2.msra.mxu0 %v5147
  %5207 = vmatprep.subr.mxu0 0.0
  %5208 = vmatpush2.msra.mxu0 %v5146
  %5209 = vmatprep.subr.mxu0 0.0
  %5210 = vmatpush2.msra.mxu0 %v5145
  %5211 = vmatprep.subr.mxu0 0.0
  %5212 = vmatpush2.msra.mxu0 %v5144
  %5213 = vmatprep.subr.mxu0 0.0
  %5214 = vmatpush2.msra.mxu0 %v5143
  %5215 = vmatprep.subr.mxu0 0.0
  %5216 = vmatpush2.msra.mxu0 %v5142
  %5217 = vmatprep.mubr.f32.mxu0 %v5151
  %5218 = vmatmul.mubr.f32.gmra.mxu0 %v4282
  %v5219 = vpop.f32.mrf.mxu0
  %v5220 = vadd.f32 0.0, %v5219
  %v5221 = vpop.f32.mrf.mxu0
  %5222 = vdwg.mxu0
  %v5224 = vsel %vm174, %v5119, 0
  %5226 = vmatprep.subr.mxu0 0.0
  %5227 = vmatpush1.msra.mxu0 0.0
  %5228 = vmatprep.subr.mxu0 0.0
  %5229 = vmatpush1.msra.mxu0 0.0
  %5230 = vmatprep.subr.mxu0 0.0
  %5231 = vmatpush1.msra.mxu0 0.0
  %5232 = vmatprep.subr.mxu0 0.0
  %5233 = vmatpush1.msra.mxu0 0.0
  %5234 = vmatprep.subr.mxu0 0.0
  %5235 = vmatpush1.msra.mxu0 0.0
  %5236 = vmatprep.subr.mxu0 0.0
  %5237 = vmatpush1.msra.mxu0 0.0
  %5238 = vmatprep.subr.mxu0 0.0
  %5239 = vmatpush1.msra.mxu0 0.0
  %5240 = vmatprep.subr.mxu0 0.0
  %5241 = vmatpush1.msra.mxu0 0.0
  %5242 = vmatprep.subr.mxu0 0.0
  %5243 = vmatpush1.msra.mxu0 0.0
  %5244 = vmatprep.subr.mxu0 0.0
  %5245 = vmatpush1.msra.mxu0 0.0
  %5246 = vmatprep.subr.mxu0 0.0
  %5247 = vmatpush1.msra.mxu0 0.0
  %5248 = vmatprep.subr.mxu0 0.0
  %5249 = vmatpush1.msra.mxu0 0.0
  %5250 = vmatprep.subr.mxu0 0.0
  %5251 = vmatpush1.msra.mxu0 %v5124
  %5252 = vmatprep.subr.mxu0 0.0
  %5253 = vmatpush1.msra.mxu0 %v5123
  %5254 = vmatprep.subr.mxu0 0.0
  %5255 = vmatpush1.msra.mxu0 %v5122
  %5256 = vmatprep.subr.mxu0 0.0
  %5257 = vmatpush1.msra.mxu0 %v5121
  %5258 = vmatprep.subr.mxu0 0.0
  %5259 = vmatpush2.msra.mxu0 0.0
  %5260 = vmatprep.subr.mxu0 0.0
  %5261 = vmatpush2.msra.mxu0 0.0
  %5262 = vmatprep.subr.mxu0 0.0
  %5263 = vmatpush2.msra.mxu0 0.0
  %5264 = vmatprep.subr.mxu0 0.0
  %5265 = vmatpush2.msra.mxu0 0.0
  %5266 = vmatprep.subr.mxu0 0.0
  %5267 = vmatpush2.msra.mxu0 0.0
  %5268 = vmatprep.subr.mxu0 0.0
  %5269 = vmatpush2.msra.mxu0 0.0
  %5270 = vmatprep.subr.mxu0 0.0
  %5271 = vmatpush2.msra.mxu0 0.0
  %5272 = vmatprep.subr.mxu0 0.0
  %5273 = vmatpush2.msra.mxu0 0.0
  %5274 = vmatprep.subr.mxu0 0.0
  %5275 = vmatpush2.msra.mxu0 0.0
  %5276 = vmatprep.subr.mxu0 0.0
  %5277 = vmatpush2.msra.mxu0 0.0
  %5278 = vmatprep.subr.mxu0 0.0
  %5279 = vmatpush2.msra.mxu0 0.0
  %5280 = vmatprep.subr.mxu0 0.0
  %5281 = vmatpush2.msra.mxu0 0.0
  %5282 = vmatprep.subr.mxu0 0.0
  %5283 = vmatpush2.msra.mxu0 0.0
  %5284 = vmatprep.subr.mxu0 0.0
  %5285 = vmatpush2.msra.mxu0 0.0
  %5286 = vmatprep.subr.mxu0 0.0
  %5287 = vmatpush2.msra.mxu0 0.0
  %5288 = vmatprep.subr.mxu0 0.0
  %5289 = vmatpush2.msra.mxu0 0.0
  %5290 = vmatprep.mubr.f32.mxu0 0.0
  %5291 = vmatmul.mubr.f32.gmra.mxu0 %v5224
  %v5292 = vpop.f32.mrf.mxu0
  %v5293 = vadd.f32 %v5220, %v5292
  %v5294 = vpop.f32.mrf.mxu0
  %5295 = vdwg.mxu0
  %s5296 = scalar_lea.vmem %s13, 2
  %v5297 = vld [vmem:[%s5296] sm:$0x1]
  %v5299 = vlaneseq
  %v5300 = vshrl.u32 %v5299, 7
  %v5301 = vsub.s32 0, %v5300
  %v5302 = vrot.slane %v5297, %v5301
  %v5304 = vadd.f32 %v5293, %v5302
  %v5305 = vxor.u32 %v5304, 2147483648
  %v5306 = vmul.f32 %v5305, 1.442695
  %v5307 = vpow.pop %v5306
  %v5308 = vadd.f32 %v5307, 1.0
  %v5309 = vrcp.pop %v5308
  %v5310 = vmul.f32 1.0, %v5309
  %5311 = vrot.lane.b32.xlu0 %v3499, 16
  %v5312 = vpop.permute.xlu0 %5311
  %5315 = vrot.lane.b32.xlu0 %v5310, 32
  %v5316 = vpop.permute.xlu0 %5315
  %5318 = vrot.lane.b32.xlu0 %v5119, 48
  %v5319 = vpop.permute.xlu0 %5318
  %v5321 = vsel %vm1839, %v1754, %v5312
  %v5322 = vsel %vm174, %v5321, %v5316
  %vm5323 = vcmask 392192
  %v5324 = vsel %vm5323, %v5322, %v5319
  %vm5325 = vcmask 648192
  %5326 = vst.msk [vmem:[%s14] sm:$0x3] %vm5325, %v5324
  // Predicated region
  $region58: #{cas_decoder_forward.1} parent=0 // pred_check
    _
  $region59: #{cas_decoder_forward.1} parent=0 // pred_check_branch
    %5328 = sbr.rel (0) target = $region61
  $region60: #{cas_decoder_forward.1} parent=0 // pred_region
    _
  $region61: #{cas_decoder_forward.1} parent=0 // pred_fallthru
    _
  // Predicated region
  $region62: #{cas_decoder_forward.1} parent=0 // pred_check
    _
  $region63: #{cas_decoder_forward.1} parent=0 // pred_check_branch
    %5330 = sbr.rel (0) target = $region65
  $region64: #{cas_decoder_forward.1} parent=0 // pred_region
    _
  $region65: #{cas_decoder_forward.1} parent=0 // pred_fallthru
    _

</llo_original>
